<compile_context>
chip_gen: v7x
topology: tpu7x:2x2x1
jax: 0.10.0
libtpu: 0.0.40
codegen_flags: <defaults>
</compile_context>

<pallas_src>
import math
from functools import partial

import jax
import jax.numpy as jnp
from jax.experimental import pallas as pl
from jax.experimental.pallas import tpu as pltpu

EPS = 1e-6
NEG_INF = -1e9          # additive attention-mask fill
PAD_NEG = -1e30         # vocab-padding logit fill
VMEM_LIMIT = 32 * 1024 * 1024


# ----------------------------------------------------------------------------
# In-kernel helpers
# ----------------------------------------------------------------------------

def _layernorm(x, alpha, beta, eps):
    # Matches the torch.std-based custom LayerNormalization:
    # unbiased variance (d-1) and (std + eps) in the denominator.
    d = x.shape[-1]
    mean = jnp.mean(x, axis=-1, keepdims=True)
    var = jnp.sum((x - mean) ** 2, axis=-1, keepdims=True) * (1.0 / (d - 1))
    std = jnp.sqrt(var)
    return alpha * (x - mean) / (std + eps) + beta


def _attention(q2d, k2d, v2d, mask_add, *, B, Sq, Sk, h, dk, scale):
    """q2d: (B*Sq, h*dk); k2d/v2d: (B*Sk, h*dk); mask_add: (B*Sq, Sk) additive f32.

    Heads/batches are static Python loops over 2-D slices so every op is a
    plain 2-D matmul / reduction (robust Mosaic lowering); the context is
    reassembled lane-contiguous as (B*Sq, h*dk) — no transposes, no HBM trips.
    """
    outs = []
    for b in range(B):
        qb = q2d[b * Sq:(b + 1) * Sq, :]
        kb = k2d[b * Sk:(b + 1) * Sk, :]
        vb = v2d[b * Sk:(b + 1) * Sk, :]
        mb = mask_add[b * Sq:(b + 1) * Sq, :]
        heads = []
        for hd in range(h):
            sl = slice(hd * dk, (hd + 1) * dk)
            s = jnp.dot(qb[:, sl], kb[:, sl].T,
                        preferred_element_type=jnp.float32) * scale + mb
            s = s - jnp.max(s, axis=-1, keepdims=True)
            p = jnp.exp(s)
            # approx reciprocal on the EUP slot; rows sum to ~1 (inference-only).
            p = p * pl.reciprocal(jnp.sum(p, axis=-1, keepdims=True), approx=True)
            heads.append(jnp.dot(p, vb[:, sl], preferred_element_type=jnp.float32))
        outs.append(jnp.concatenate(heads, axis=-1))
    return jnp.concatenate(outs, axis=0)


# ----------------------------------------------------------------------------
# Fused encoder-stack kernel  (grid = (num_layers,))
# ----------------------------------------------------------------------------

def _encoder_kernel(src_ref, mask_ref,
                    n0a_ref, n0b_ref, wqkv_ref, wo_ref,
                    n1a_ref, n1b_ref, w1_ref, b1_ref, w2_ref, b2_ref,
                    enca_ref, encb_ref,
                    mem_ref, x_scr,
                    *, B, Ss, h, dk, scale, eps):
    l = pl.program_id(0)
    D = h * dk

    @pl.when(l == 0)
    def _():
        x_scr[...] = src_ref[...]
        mem_ref[...] = jnp.zeros_like(mem_ref)

    x = x_scr[...]
    mask = mask_ref[...]

    # --- self-attention sublayer: x + W_o(attn(LN(x))) ----------------------
    xn = _layernorm(x, n0a_ref[0], n0b_ref[0], eps)
    qkv = jnp.dot(xn, wqkv_ref[0], preferred_element_type=jnp.float32)
    ctx = _attention(qkv[:, :D], qkv[:, D:2 * D], qkv[:, 2 * D:], mask,
                     B=B, Sq=Ss, Sk=Ss, h=h, dk=dk, scale=scale)
    x = x + jnp.dot(ctx, wo_ref[0], preferred_element_type=jnp.float32)

    # --- feed-forward sublayer: x + W2(relu(W1(LN(x)) + b1)) + b2 -----------
    xn = _layernorm(x, n1a_ref[0], n1b_ref[0], eps)
    hdn = jnp.maximum(
        jnp.dot(xn, w1_ref[0], preferred_element_type=jnp.float32) + b1_ref[0], 0.0)
    x = x + jnp.dot(hdn, w2_ref[0], preferred_element_type=jnp.float32) + b2_ref[0]

    x_scr[...] = x

    @pl.when(l == pl.num_programs(0) - 1)
    def _():
        # Encoder final LayerNorm fused here: memory is emitted pre-normalized,
        # so decoder layers never recompute it.
        mem_ref[...] = _layernorm(x, enca_ref[...], encb_ref[...], eps)


def encoder_forward(src_x2d, enc_mask, ew, enc_a, enc_b, *, B, Ss, h, eps=EPS):
    M, D = src_x2d.shape
    L = ew["w_qkv"].shape[0]
    F = ew["w1"].shape[2]
    dk = D // h
    scale = 1.0 / math.sqrt(dk)

    c = lambda l: (0, 0)          # constant (whole-array) blocks
    s = lambda l: (l, 0, 0)       # per-layer stacked blocks

    return pl.pallas_call(
        partial(_encoder_kernel, B=B, Ss=Ss, h=h, dk=dk, scale=scale, eps=eps),
        out_shape=jax.ShapeDtypeStruct((M, D), jnp.float32),
        grid=(L,),
        in_specs=[
            pl.BlockSpec((M, D), c),               # src embeddings
            pl.BlockSpec((M, Ss), c),              # additive src mask
            pl.BlockSpec((1, 1, D), s),            # norm0 alpha
            pl.BlockSpec((1, 1, D), s),            # norm0 bias
            pl.BlockSpec((1, D, 3 * D), s),        # fused W_qkv
            pl.BlockSpec((1, D, D), s),            # W_o
            pl.BlockSpec((1, 1, D), s),            # norm1 alpha
            pl.BlockSpec((1, 1, D), s),            # norm1 bias
            pl.BlockSpec((1, D, F), s),            # W1
            pl.BlockSpec((1, 1, F), s),            # b1
            pl.BlockSpec((1, F, D), s),            # W2
            pl.BlockSpec((1, 1, D), s),            # b2
            pl.BlockSpec((1, D), c),               # encoder final norm alpha
            pl.BlockSpec((1, D), c),               # encoder final norm bias
        ],
        out_specs=pl.BlockSpec((M, D), c),
        scratch_shapes=[pltpu.VMEM((M, D), jnp.float32)],
        compiler_params=pltpu.CompilerParams(
            dimension_semantics=("arbitrary",),    # layer axis is a carry
            vmem_limit_bytes=VMEM_LIMIT),
    )(src_x2d, enc_mask,
      ew["n0_a"], ew["n0_b"], ew["w_qkv"], ew["w_o"],
      ew["n1_a"], ew["n1_b"], ew["w1"], ew["b1"], ew["w2"], ew["b2"],
      enc_a, enc_b)


# ----------------------------------------------------------------------------
# Fused decoder-stack + projection kernel  (grid = (num_layers,))
# ----------------------------------------------------------------------------

def _decoder_kernel(tgt_ref, mem_ref, smask_ref, cmask_ref,
                    n0a_ref, n0b_ref, wqkvs_ref, wos_ref,
                    n1a_ref, n1b_ref, wqc_ref, wkvc_ref, woc_ref,
                    n2a_ref, n2b_ref, w1_ref, b1_ref, w2_ref, b2_ref,
                    deca_ref, decb_ref, pw_ref, pb_ref,
                    out_ref, y_scr,
                    *, B, Ss, St, h, dk, scale, eps):
    l = pl.program_id(0)
    D = h * dk

    @pl.when(l == 0)
    def _():
        y_scr[...] = tgt_ref[...]
        out_ref[...] = jnp.zeros_like(out_ref)

    y = y_scr[...]

    # --- masked self-attention sublayer --------------------------------------
    yn = _layernorm(y, n0a_ref[0], n0b_ref[0], eps)
    qkv = jnp.dot(yn, wqkvs_ref[0], preferred_element_type=jnp.float32)
    ctx = _attention(qkv[:, :D], qkv[:, D:2 * D], qkv[:, 2 * D:], smask_ref[...],
                     B=B, Sq=St, Sk=St, h=h, dk=dk, scale=scale)
    y = y + jnp.dot(ctx, wos_ref[0], preferred_element_type=jnp.float32)

    # --- cross-attention sublayer (memory is already LayerNorm'd) ------------
    yn = _layernorm(y, n1a_ref[0], n1b_ref[0], eps)
    q = jnp.dot(yn, wqc_ref[0], preferred_element_type=jnp.float32)
    kv = jnp.dot(mem_ref[...], wkvc_ref[0], preferred_element_type=jnp.float32)
    ctx = _attention(q, kv[:, :D], kv[:, D:], cmask_ref[...],
                     B=B, Sq=St, Sk=Ss, h=h, dk=dk, scale=scale)
    y = y + jnp.dot(ctx, woc_ref[0], preferred_element_type=jnp.float32)

    # --- feed-forward sublayer ------------------------------------------------
    yn = _layernorm(y, n2a_ref[0], n2b_ref[0], eps)
    hdn = jnp.maximum(
        jnp.dot(yn, w1_ref[0], preferred_element_type=jnp.float32) + b1_ref[0], 0.0)
    y = y + jnp.dot(hdn, w2_ref[0], preferred_element_type=jnp.float32) + b2_ref[0]

    y_scr[...] = y

    @pl.when(l == pl.num_programs(0) - 1)
    def _():
        # Final decoder LayerNorm + projection + exact log_softmax over the
        # lane-padded vocab (pad logits at -1e30 -> zero probability).
        yn = _layernorm(y, deca_ref[...], decb_ref[...], eps)
        logits = jnp.dot(yn, pw_ref[...],
                         preferred_element_type=jnp.float32) + pb_ref[...]
        m = jnp.max(logits, axis=-1, keepdims=True)
        z = logits - m
        lse = jnp.log(jnp.sum(jnp.exp(z), axis=-1, keepdims=True))
        out_ref[...] = z - lse


def decoder_forward(tgt_x2d, memory2d, self_mask, cross_mask, dw,
                    dec_a, dec_b, proj_wT, proj_b, *, B, Ss, St, h, eps=EPS):
    Mt, D = tgt_x2d.shape
    Ms = memory2d.shape[0]
    L = dw["w_qkv_self"].shape[0]
    F = dw["w1"].shape[2]
    Vp = proj_wT.shape[1]
    dk = D // h
    scale = 1.0 / math.sqrt(dk)

    c = lambda l: (0, 0)
    s = lambda l: (l, 0, 0)

    return pl.pallas_call(
        partial(_decoder_kernel, B=B, Ss=Ss, St=St, h=h, dk=dk, scale=scale, eps=eps),
        out_shape=jax.ShapeDtypeStruct((Mt, Vp), jnp.float32),
        grid=(L,),
        in_specs=[
            pl.BlockSpec((Mt, D), c),              # tgt embeddings
            pl.BlockSpec((Ms, D), c),              # encoder memory (normalized)
            pl.BlockSpec((Mt, St), c),             # additive self mask
            pl.BlockSpec((Mt, Ss), c),             # additive cross mask
            pl.BlockSpec((1, 1, D), s),            # norm0 alpha
            pl.BlockSpec((1, 1, D), s),            # norm0 bias
            pl.BlockSpec((1, D, 3 * D), s),        # fused self W_qkv
            pl.BlockSpec((1, D, D), s),            # self W_o
            pl.BlockSpec((1, 1, D), s),            # norm1 alpha
            pl.BlockSpec((1, 1, D), s),            # norm1 bias
            pl.BlockSpec((1, D, D), s),            # cross W_q
            pl.BlockSpec((1, D, 2 * D), s),        # fused cross W_kv
            pl.BlockSpec((1, D, D), s),            # cross W_o
            pl.BlockSpec((1, 1, D), s),            # norm2 alpha
            pl.BlockSpec((1, 1, D), s),            # norm2 bias
            pl.BlockSpec((1, D, F), s),            # W1
            pl.BlockSpec((1, 1, F), s),            # b1
            pl.BlockSpec((1, F, D), s),            # W2
            pl.BlockSpec((1, 1, D), s),            # b2
            pl.BlockSpec((1, D), c),               # decoder final norm alpha
            pl.BlockSpec((1, D), c),               # decoder final norm bias
            pl.BlockSpec((D, Vp), c),              # projection weight (padded)
            pl.BlockSpec((1, Vp), c),              # projection bias (padded)
        ],
        out_specs=pl.BlockSpec((Mt, Vp), c),       # lane-dense (Vp = k*128) store
        scratch_shapes=[pltpu.VMEM((Mt, D), jnp.float32)],
        compiler_params=pltpu.CompilerParams(
            dimension_semantics=("arbitrary",),
            vmem_limit_bytes=VMEM_LIMIT),
    )(tgt_x2d, memory2d, self_mask, cross_mask,
      dw["n0_a"], dw["n0_b"], dw["w_qkv_self"], dw["w_o_self"],
      dw["n1_a"], dw["n1_b"], dw["w_q_cross"], dw["w_kv_cross"], dw["w_o_cross"],
      dw["n2_a"], dw["n2_b"], dw["w1"], dw["b1"], dw["w2"], dw["b2"],
      dec_a, dec_b, proj_wT, proj_b)


# ----------------------------------------------------------------------------
# Forward pass (glue in plain JAX; all heavy math lives in the 2 kernels above)
# ----------------------------------------------------------------------------

def transformer_forward(params, src, tgt, src_mask=None, tgt_mask=None, *, h, tgt_vocab):
    """src: (B, S_src) int tokens; tgt: (B, S_tgt) int tokens.
    `h` and `tgt_vocab` are static Python ints (bound via functools.partial)."""
    d_model = params["src_emb"].shape[1]
    B, Ss = src.shape
    St = tgt.shape[1]

    if src_mask is None:
        src_mask = jnp.ones((B, 1, 1, Ss), jnp.int32)
    if tgt_mask is None:
        tgt_mask = jnp.ones((B, 1, St, St), jnp.int32)

    # Additive float masks (0 keep / -1e9 drop), flattened to (B*Sq, Sk).
    def additive(m, Sq, Sk):
        m = jnp.broadcast_to(m, (B, 1, Sq, Sk)).reshape(B * Sq, Sk)
        return jnp.where(m == 0, jnp.float32(NEG_INF), jnp.float32(0.0))

    enc_mask = additive(src_mask, Ss, Ss)
    cross_mask = additive(src_mask, St, Ss)
    self_mask = additive(tgt_mask, St, St)

    # TODO(synk): embedding gather + positional-encoding add stay in XLA.
    src_x = (jnp.take(params["src_emb"], src, axis=0) * math.sqrt(d_model)
             + params["src_pe"][:Ss][None, :, :]).reshape(B * Ss, d_model)
    tgt_x = (jnp.take(params["tgt_emb"], tgt, axis=0) * math.sqrt(d_model)
             + params["tgt_pe"][:St][None, :, :]).reshape(B * St, d_model)

    memory = encoder_forward(src_x, enc_mask, params["enc"],
                             params["enc_norm_a"], params["enc_norm_b"],
                             B=B, Ss=Ss, h=h)
    logp = decoder_forward(tgt_x, memory, self_mask, cross_mask, params["dec"],
                           params["dec_norm_a"], params["dec_norm_b"],
                           params["proj_wT"], params["proj_b"],
                           B=B, Ss=Ss, St=St, h=h)
    return logp[:, :tgt_vocab].reshape(B, St, tgt_vocab)


# ----------------------------------------------------------------------------
# Deterministic parameter construction (PyTorch layout) + one-time packing
# ----------------------------------------------------------------------------

def sinusoidal_pe(seq_len, d_model):
    pos = jnp.arange(seq_len, dtype=jnp.float32)[:, None]
    i = jnp.arange(0, d_model, 2, dtype=jnp.float32)
    div = jnp.exp(-i * (math.log(10000.0) / d_model))
    pe = jnp.zeros((seq_len, d_model), jnp.float32)
    pe = pe.at[:, 0::2].set(jnp.sin(pos * div))
    pe = pe.at[:, 1::2].set(jnp.cos(pos * div))
    return pe


def init_params(key, src_vocab, tgt_vocab, src_seq, tgt_seq,
                d_model=32, N=2, h=4, d_ff=64):
    """PyTorch-layout weights ((out, in) Linear weights, 1-D biases)."""
    def nrm(k, shape, scale=0.02):
        return jax.random.normal(k, shape, jnp.float32) * scale

    keys = iter(jax.random.split(key, 512))

    def attn_params():
        return {"w_q": nrm(next(keys), (d_model, d_model)),
                "w_k": nrm(next(keys), (d_model, d_model)),
                "w_v": nrm(next(keys), (d_model, d_model)),
                "w_o": nrm(next(keys), (d_model, d_model))}

    def ffn_params():
        return {"w1": nrm(next(keys), (d_ff, d_model)), "b1": jnp.zeros((d_ff,), jnp.float32),
                "w2": nrm(next(keys), (d_model, d_ff)), "b2": jnp.zeros((d_model,), jnp.float32)}

    def norm_params():
        return {"alpha": jnp.ones((d_model,), jnp.float32),
                "bias": jnp.zeros((d_model,), jnp.float32)}

    enc_layers = [{"self_attn": attn_params(), "ffn": ffn_params(),
                   "norm0": norm_params(), "norm1": norm_params()} for _ in range(N)]
    dec_layers = [{"self_attn": attn_params(), "cross_attn": attn_params(),
                   "ffn": ffn_params(), "norm0": norm_params(),
                   "norm1": norm_params(), "norm2": norm_params()} for _ in range(N)]

    return {
        "src_emb": nrm(next(keys), (src_vocab, d_model), 1.0),
        "tgt_emb": nrm(next(keys), (tgt_vocab, d_model), 1.0),
        "src_pe": sinusoidal_pe(src_seq, d_model),
        "tgt_pe": sinusoidal_pe(tgt_seq, d_model),
        "enc_layers": enc_layers,
        "enc_norm": norm_params(),
        "dec_layers": dec_layers,
        "dec_norm": norm_params(),
        "proj_w": nrm(next(keys), (tgt_vocab, d_model)),
        "proj_b": jnp.zeros((tgt_vocab,), jnp.float32),
    }


def pack_params(raw, lane=128):
    """One-time (outside jit) packing: weight pre-transpose, QKV/KV fusion,
    per-layer stacking into (L, ...) tensors for layer-grid prefetch, vocab pad."""
    D = raw["src_emb"].shape[1]

    def s_ln(layers, name, field):       # (L, 1, D)
        return jnp.stack([lp[name][field].reshape(1, D) for lp in layers])

    def s_bias(layers, field):           # (L, 1, F) / (L, 1, D)
        return jnp.stack([lp["ffn"][field].reshape(1, -1) for lp in layers])

    def pack_enc(layers):
        return {
            "n0_a": s_ln(layers, "norm0", "alpha"), "n0_b": s_ln(layers, "norm0", "bias"),
            "w_qkv": jnp.stack([jnp.concatenate(
                [lp["self_attn"]["w_q"].T, lp["self_attn"]["w_k"].T,
                 lp["self_attn"]["w_v"].T], axis=1) for lp in layers]),
            "w_o": jnp.stack([lp["self_attn"]["w_o"].T for lp in layers]),
            "n1_a": s_ln(layers, "norm1", "alpha"), "n1_b": s_ln(layers, "norm1", "bias"),
            "w1": jnp.stack([lp["ffn"]["w1"].T for lp in layers]),
            "b1": s_bias(layers, "b1"),
            "w2": jnp.stack([lp["ffn"]["w2"].T for lp in layers]),
            "b2": s_bias(layers, "b2"),
        }

    def pack_dec(layers):
        return {
            "n0_a": s_ln(layers, "norm0", "alpha"), "n0_b": s_ln(layers, "norm0", "bias"),
            "w_qkv_self": jnp.stack([jnp.concatenate(
                [lp["self_attn"]["w_q"].T, lp["self_attn"]["w_k"].T,
                 lp["self_attn"]["w_v"].T], axis=1) for lp in layers]),
            "w_o_self": jnp.stack([lp["self_attn"]["w_o"].T for lp in layers]),
            "n1_a": s_ln(layers, "norm1", "alpha"), "n1_b": s_ln(layers, "norm1", "bias"),
            "w_q_cross": jnp.stack([lp["cross_attn"]["w_q"].T for lp in layers]),
            "w_kv_cross": jnp.stack([jnp.concatenate(
                [lp["cross_attn"]["w_k"].T, lp["cross_attn"]["w_v"].T], axis=1)
                for lp in layers]),
            "w_o_cross": jnp.stack([lp["cross_attn"]["w_o"].T for lp in layers]),
            "n2_a": s_ln(layers, "norm2", "alpha"), "n2_b": s_ln(layers, "norm2", "bias"),
            "w1": jnp.stack([lp["ffn"]["w1"].T for lp in layers]),
            "b1": s_bias(layers, "b1"),
            "w2": jnp.stack([lp["ffn"]["w2"].T for lp in layers]),
            "b2": s_bias(layers, "b2"),
        }

    V = raw["proj_w"].shape[0]
    Vp = ((V + lane - 1) // lane) * lane
    proj_wT = jnp.pad(raw["proj_w"].T, ((0, 0), (0, Vp - V)))           # zeros in pad cols
    proj_b = jnp.pad(raw["proj_b"], (0, Vp - V),
                     constant_values=PAD_NEG).reshape(1, Vp)            # -1e30 in pad cols

    return {
        "src_emb": raw["src_emb"], "tgt_emb": raw["tgt_emb"],
        "src_pe": raw["src_pe"], "tgt_pe": raw["tgt_pe"],
        "enc": pack_enc(raw["enc_layers"]),
        "enc_norm_a": raw["enc_norm"]["alpha"].reshape(1, D),
        "enc_norm_b": raw["enc_norm"]["bias"].reshape(1, D),
        "dec": pack_dec(raw["dec_layers"]),
        "dec_norm_a": raw["dec_norm"]["alpha"].reshape(1, D),
        "dec_norm_b": raw["dec_norm"]["bias"].reshape(1, D),
        "proj_wT": proj_wT, "proj_b": proj_b,
    }


# ----------------------------------------------------------------------------
# Main
# ----------------------------------------------------------------------------

if __name__ == "__main__":
    B = 2
    SRC_SEQ = 8
    TGT_SEQ = 8
    D_MODEL = 32
    N_LAYERS = 2
    HEADS = 4
    D_FF = 64
    SRC_VOCAB = 100
    TGT_VOCAB = 100

    key = jax.random.PRNGKey(0)
    kp, ks, kt = jax.random.split(key, 3)

    raw_params = init_params(kp, SRC_VOCAB, TGT_VOCAB, SRC_SEQ, TGT_SEQ,
                             d_model=D_MODEL, N=N_LAYERS, h=HEADS, d_ff=D_FF)
    params = pack_params(raw_params)

    src = jax.random.randint(ks, (B, SRC_SEQ), 0, SRC_VOCAB, dtype=jnp.int32)
    tgt = jax.random.randint(kt, (B, TGT_SEQ), 0, TGT_VOCAB, dtype=jnp.int32)

    # src_mask: (B, 1, 1, S_src) all ones; tgt_mask: (B, 1, S_tgt, S_tgt) causal.
    src_mask = jnp.ones((B, 1, 1, SRC_SEQ), jnp.int32)
    causal = jnp.tril(jnp.ones((TGT_SEQ, TGT_SEQ), jnp.int32))
    tgt_mask = jnp.broadcast_to(causal[None, None, :, :], (B, 1, TGT_SEQ, TGT_SEQ))

    fwd = jax.jit(partial(transformer_forward, h=HEADS, tgt_vocab=TGT_VOCAB))
    out = fwd(params, src, tgt, src_mask, tgt_mask)
    out = jax.block_until_ready(out)

    assert out.shape == (B, TGT_SEQ, TGT_VOCAB), out.shape
    probs_sum = jnp.exp(out).sum(axis=-1)
    assert bool(jnp.all(jnp.isfinite(out))), "non-finite output"
    assert bool(jnp.allclose(probs_sum, 1.0, atol=1e-4)), "log_softmax rows do not normalize"

    print("KERNEL_OK")
</pallas_src>

<mosaic_0001>
module attributes {stable_mosaic.version = 11 : i64} {
  func.func @_encoder_kernel(%arg0: i32, %arg1: memref<16x32xf32, #tpu.memory_space<vmem>>, %arg2: memref<16x8xf32, #tpu.memory_space<vmem>>, %arg3: memref<1x1x32xf32, #tpu.memory_space<vmem>>, %arg4: memref<1x1x32xf32, #tpu.memory_space<vmem>>, %arg5: memref<1x32x96xf32, #tpu.memory_space<vmem>>, %arg6: memref<1x32x32xf32, #tpu.memory_space<vmem>>, %arg7: memref<1x1x32xf32, #tpu.memory_space<vmem>>, %arg8: memref<1x1x32xf32, #tpu.memory_space<vmem>>, %arg9: memref<1x32x64xf32, #tpu.memory_space<vmem>>, %arg10: memref<1x1x64xf32, #tpu.memory_space<vmem>>, %arg11: memref<1x64x32xf32, #tpu.memory_space<vmem>>, %arg12: memref<1x1x32xf32, #tpu.memory_space<vmem>>, %arg13: memref<1x32xf32, #tpu.memory_space<vmem>>, %arg14: memref<1x32xf32, #tpu.memory_space<vmem>>, %arg15: memref<16x32xf32, #tpu.memory_space<vmem>>, %arg16: memref<16x32xf32, #tpu.memory_space<vmem>>) attributes {dimension_semantics = [#tpu.dimension_semantics<arbitrary>], iteration_bounds = array<i64: 2>, scalar_prefetch = 0 : i64, scratch_operands = 1 : i64, tpu.core_type = #tpu.core_type<tc>, window_params = [{pipeline_mode = #tpu.pipeline_mode<synchronous>, transform_indices = @transform_0, window_bounds = array<i64: 16, 32>}, {pipeline_mode = #tpu.pipeline_mode<synchronous>, transform_indices = @transform_1, window_bounds = array<i64: 16, 8>}, {transform_indices = @transform_2, window_bounds = array<i64: 1, 1, 32>}, {transform_indices = @transform_3, window_bounds = array<i64: 1, 1, 32>}, {transform_indices = @transform_4, window_bounds = array<i64: 1, 32, 96>}, {transform_indices = @transform_5, window_bounds = array<i64: 1, 32, 32>}, {transform_indices = @transform_6, window_bounds = array<i64: 1, 1, 32>}, {transform_indices = @transform_7, window_bounds = array<i64: 1, 1, 32>}, {transform_indices = @transform_8, window_bounds = array<i64: 1, 32, 64>}, {transform_indices = @transform_9, window_bounds = array<i64: 1, 1, 64>}, {transform_indices = @transform_10, window_bounds = array<i64: 1, 64, 32>}, {transform_indices = @transform_11, window_bounds = array<i64: 1, 1, 32>}, {pipeline_mode = #tpu.pipeline_mode<synchronous>, transform_indices = @transform_12, window_bounds = array<i64: 1, 32>}, {pipeline_mode = #tpu.pipeline_mode<synchronous>, transform_indices = @transform_13, window_bounds = array<i64: 1, 32>}, {pipeline_mode = #tpu.pipeline_mode<synchronous>, transform_indices = @transform_14, window_bounds = array<i64: 16, 32>}]} {
    %c0_i32 = arith.constant 0 : i32
    %0 = arith.cmpi eq, %arg0, %c0_i32 : i32
    %1 = arith.extui %0 : i1 to i32
    %c0_i32_0 = arith.constant 0 : i32
    %2 = arith.cmpi ne, %1, %c0_i32_0 : i32
    scf.if %2 {
      %c0_91 = arith.constant 0 : index
      %c0_92 = arith.constant 0 : index
      %251 = vector.load %arg1[%c0_91, %c0_92] : memref<16x32xf32, #tpu.memory_space<vmem>>, vector<16x32xf32>
      %c0_93 = arith.constant 0 : index
      %c0_94 = arith.constant 0 : index
      %252 = vector.load %arg16[%c0_93, %c0_94] : memref<16x32xf32, #tpu.memory_space<vmem>>, vector<16x32xf32>
      tpu.vector_store %arg16[%c0_93, %c0_94], %251 {strides = array<i32>} : memref<16x32xf32, #tpu.memory_space<vmem>>, vector<16x32xf32>,
      %cst_95 = arith.constant 0.000000e+00 : f32
      %253 = vector.broadcast %cst_95 : f32 to vector<16x32xf32>
      %c0_96 = arith.constant 0 : index
      %c0_97 = arith.constant 0 : index
      %254 = vector.load %arg15[%c0_96, %c0_97] : memref<16x32xf32, #tpu.memory_space<vmem>>, vector<16x32xf32>
      tpu.vector_store %arg15[%c0_96, %c0_97], %253 {strides = array<i32>} : memref<16x32xf32, #tpu.memory_space<vmem>>, vector<16x32xf32>,
    } else {
    }
    %c0 = arith.constant 0 : index
    %c0_1 = arith.constant 0 : index
    %3 = vector.load %arg16[%c0, %c0_1] : memref<16x32xf32, #tpu.memory_space<vmem>>, vector<16x32xf32>
    %c0_2 = arith.constant 0 : index
    %c0_3 = arith.constant 0 : index
    %4 = vector.load %arg2[%c0_2, %c0_3] : memref<16x8xf32, #tpu.memory_space<vmem>>, vector<16x8xf32>
    %c0_4 = arith.constant 0 : index
    %c0_5 = arith.constant 0 : index
    %c0_6 = arith.constant 0 : index
    %5 = vector.load %arg3[%c0_4, %c0_5, %c0_6] : memref<1x1x32xf32, #tpu.memory_space<vmem>>, vector<1x1x32xf32>
    %6 = vector.shape_cast %5 : vector<1x1x32xf32> to vector<1x32xf32>
    %c0_7 = arith.constant 0 : index
    %c0_8 = arith.constant 0 : index
    %c0_9 = arith.constant 0 : index
    %7 = vector.load %arg4[%c0_7, %c0_8, %c0_9] : memref<1x1x32xf32, #tpu.memory_space<vmem>>, vector<1x1x32xf32>
    %8 = vector.shape_cast %7 : vector<1x1x32xf32> to vector<1x32xf32>
    %cst = arith.constant dense<0.000000e+00> : vector<16xf32>
    %9 = vector.multi_reduction <add>, %3, %cst [1] : vector<16x32xf32> to vector<16xf32>
    %10 = vector.shape_cast %9 : vector<16xf32> to vector<16x1xf32>
    %cst_10 = arith.constant 3.200000e+01 : f32
    %11 = vector.broadcast %cst_10 : f32 to vector<16x1xf32>
    %12 = arith.divf %10, %11 : vector<16x1xf32>
    %13 = vector.broadcast %12 : vector<16x1xf32> to vector<16x32xf32>
    %14 = arith.subf %3, %13 : vector<16x32xf32>
    %15 = arith.mulf %14, %14 : vector<16x32xf32>
    %cst_11 = arith.constant dense<0.000000e+00> : vector<16xf32>
    %16 = vector.multi_reduction <add>, %15, %cst_11 [1] : vector<16x32xf32> to vector<16xf32>
    %17 = vector.shape_cast %16 : vector<16xf32> to vector<16x1xf32>
    %cst_12 = arith.constant 0.0322580636 : f32
    %18 = vector.broadcast %cst_12 : f32 to vector<16x1xf32>
    %19 = arith.mulf %17, %18 : vector<16x1xf32>
    %20 = math.sqrt %19 : vector<16x1xf32>
    %21 = vector.broadcast %12 : vector<16x1xf32> to vector<16x32xf32>
    %22 = arith.subf %3, %21 : vector<16x32xf32>
    %23 = vector.broadcast %6 : vector<1x32xf32> to vector<16x32xf32>
    %24 = arith.mulf %23, %22 : vector<16x32xf32>
    %cst_13 = arith.constant 9.99999997E-7 : f32
    %25 = vector.broadcast %cst_13 : f32 to vector<16x1xf32>
    %26 = arith.addf %20, %25 : vector<16x1xf32>
    %27 = vector.broadcast %26 : vector<16x1xf32> to vector<16x32xf32>
    %28 = arith.divf %24, %27 : vector<16x32xf32>
    %29 = vector.broadcast %8 : vector<1x32xf32> to vector<16x32xf32>
    %30 = arith.addf %28, %29 : vector<16x32xf32>
    %c0_14 = arith.constant 0 : index
    %c0_15 = arith.constant 0 : index
    %c0_16 = arith.constant 0 : index
    %31 = vector.load %arg5[%c0_14, %c0_15, %c0_16] : memref<1x32x96xf32, #tpu.memory_space<vmem>>, vector<1x32x96xf32>
    %32 = vector.shape_cast %31 : vector<1x32x96xf32> to vector<32x96xf32>
    %cst_17 = arith.constant dense<0.000000e+00> : vector<16x96xf32>
    %33 = tpu.matmul %30, %32, %cst_17 {dimension_numbers = #tpu.dot_dimension_numbers<[1], [0], [0], [1], [0, 0, 1, 1], [], []>} : vector<16x32xf32>, vector<32x96xf32>, vector<16x96xf32> -> vector<16x96xf32>
    %34 = vector.extract_strided_slice %33 {offsets = [0, 0], sizes = [16, 32], strides = [1, 1]} : vector<16x96xf32> to vector<16x32xf32>
    %35 = vector.extract_strided_slice %33 {offsets = [0, 32], sizes = [16, 32], strides = [1, 1]} : vector<16x96xf32> to vector<16x32xf32>
    %36 = vector.extract_strided_slice %33 {offsets = [0, 64], sizes = [16, 32], strides = [1, 1]} : vector<16x96xf32> to vector<16x32xf32>
    %37 = vector.extract_strided_slice %34 {offsets = [0, 0], sizes = [8, 32], strides = [1, 1]} : vector<16x32xf32> to vector<8x32xf32>
    %38 = vector.extract_strided_slice %35 {offsets = [0, 0], sizes = [8, 32], strides = [1, 1]} : vector<16x32xf32> to vector<8x32xf32>
    %39 = vector.extract_strided_slice %36 {offsets = [0, 0], sizes = [8, 32], strides = [1, 1]} : vector<16x32xf32> to vector<8x32xf32>
    %40 = vector.extract_strided_slice %4 {offsets = [0, 0], sizes = [8, 8], strides = [1, 1]} : vector<16x8xf32> to vector<8x8xf32>
    %41 = vector.extract_strided_slice %37 {offsets = [0, 0], sizes = [8, 8], strides = [1, 1]} : vector<8x32xf32> to vector<8x8xf32>
    %42 = vector.extract_strided_slice %38 {offsets = [0, 0], sizes = [8, 8], strides = [1, 1]} : vector<8x32xf32> to vector<8x8xf32>
    %43 = tpu.transpose %42, [1, 0] : vector<8x8xf32> -> vector<8x8xf32>
    %cst_18 = arith.constant dense<0.000000e+00> : vector<8x8xf32>
    %44 = tpu.matmul %41, %43, %cst_18 {dimension_numbers = #tpu.dot_dimension_numbers<[1], [0], [0], [1], [0, 0, 1, 1], [], []>} : vector<8x8xf32>, vector<8x8xf32>, vector<8x8xf32> -> vector<8x8xf32>
    %cst_19 = arith.constant 0.353553385 : f32
    %45 = vector.broadcast %cst_19 : f32 to vector<8x8xf32>
    %46 = arith.mulf %44, %45 : vector<8x8xf32>
    %47 = arith.addf %46, %40 : vector<8x8xf32>
    %cst_20 = arith.constant dense<0xFF800000> : vector<8xf32>
    %48 = vector.multi_reduction <maximumf>, %47, %cst_20 [1] : vector<8x8xf32> to vector<8xf32>
    %49 = vector.shape_cast %48 : vector<8xf32> to vector<8x1xf32>
    %50 = vector.broadcast %49 : vector<8x1xf32> to vector<8x8xf32>
    %51 = arith.subf %47, %50 : vector<8x8xf32>
    %52 = math.exp %51 : vector<8x8xf32>
    %cst_21 = arith.constant dense<0.000000e+00> : vector<8xf32>
    %53 = vector.multi_reduction <add>, %52, %cst_21 [1] : vector<8x8xf32> to vector<8xf32>
    %54 = vector.shape_cast %53 : vector<8xf32> to vector<8x1xf32>
    %55 = tpu.reciprocal %54 {approx = true} : vector<8x1xf32> -> vector<8x1xf32>
    %56 = vector.broadcast %55 : vector<8x1xf32> to vector<8x8xf32>
    %57 = arith.mulf %52, %56 : vector<8x8xf32>
    %58 = vector.extract_strided_slice %39 {offsets = [0, 0], sizes = [8, 8], strides = [1, 1]} : vector<8x32xf32> to vector<8x8xf32>
    %cst_22 = arith.constant dense<0.000000e+00> : vector<8x8xf32>
    %59 = tpu.matmul %57, %58, %cst_22 {dimension_numbers = #tpu.dot_dimension_numbers<[1], [0], [0], [1], [0, 0, 1, 1], [], []>} : vector<8x8xf32>, vector<8x8xf32>, vector<8x8xf32> -> vector<8x8xf32>
    %60 = vector.extract_strided_slice %37 {offsets = [0, 8], sizes = [8, 8], strides = [1, 1]} : vector<8x32xf32> to vector<8x8xf32>
    %61 = vector.extract_strided_slice %38 {offsets = [0, 8], sizes = [8, 8], strides = [1, 1]} : vector<8x32xf32> to vector<8x8xf32>
    %62 = tpu.transpose %61, [1, 0] : vector<8x8xf32> -> vector<8x8xf32>
    %cst_23 = arith.constant dense<0.000000e+00> : vector<8x8xf32>
    %63 = tpu.matmul %60, %62, %cst_23 {dimension_numbers = #tpu.dot_dimension_numbers<[1], [0], [0], [1], [0, 0, 1, 1], [], []>} : vector<8x8xf32>, vector<8x8xf32>, vector<8x8xf32> -> vector<8x8xf32>
    %cst_24 = arith.constant 0.353553385 : f32
    %64 = vector.broadcast %cst_24 : f32 to vector<8x8xf32>
    %65 = arith.mulf %63, %64 : vector<8x8xf32>
    %66 = arith.addf %65, %40 : vector<8x8xf32>
    %cst_25 = arith.constant dense<0xFF800000> : vector<8xf32>
    %67 = vector.multi_reduction <maximumf>, %66, %cst_25 [1] : vector<8x8xf32> to vector<8xf32>
    %68 = vector.shape_cast %67 : vector<8xf32> to vector<8x1xf32>
    %69 = vector.broadcast %68 : vector<8x1xf32> to vector<8x8xf32>
    %70 = arith.subf %66, %69 : vector<8x8xf32>
    %71 = math.exp %70 : vector<8x8xf32>
    %cst_26 = arith.constant dense<0.000000e+00> : vector<8xf32>
    %72 = vector.multi_reduction <add>, %71, %cst_26 [1] : vector<8x8xf32> to vector<8xf32>
    %73 = vector.shape_cast %72 : vector<8xf32> to vector<8x1xf32>
    %74 = tpu.reciprocal %73 {approx = true} : vector<8x1xf32> -> vector<8x1xf32>
    %75 = vector.broadcast %74 : vector<8x1xf32> to vector<8x8xf32>
    %76 = arith.mulf %71, %75 : vector<8x8xf32>
    %77 = vector.extract_strided_slice %39 {offsets = [0, 8], sizes = [8, 8], strides = [1, 1]} : vector<8x32xf32> to vector<8x8xf32>
    %cst_27 = arith.constant dense<0.000000e+00> : vector<8x8xf32>
    %78 = tpu.matmul %76, %77, %cst_27 {dimension_numbers = #tpu.dot_dimension_numbers<[1], [0], [0], [1], [0, 0, 1, 1], [], []>} : vector<8x8xf32>, vector<8x8xf32>, vector<8x8xf32> -> vector<8x8xf32>
    %79 = vector.extract_strided_slice %37 {offsets = [0, 16], sizes = [8, 8], strides = [1, 1]} : vector<8x32xf32> to vector<8x8xf32>
    %80 = vector.extract_strided_slice %38 {offsets = [0, 16], sizes = [8, 8], strides = [1, 1]} : vector<8x32xf32> to vector<8x8xf32>
    %81 = tpu.transpose %80, [1, 0] : vector<8x8xf32> -> vector<8x8xf32>
    %cst_28 = arith.constant dense<0.000000e+00> : vector<8x8xf32>
    %82 = tpu.matmul %79, %81, %cst_28 {dimension_numbers = #tpu.dot_dimension_numbers<[1], [0], [0], [1], [0, 0, 1, 1], [], []>} : vector<8x8xf32>, vector<8x8xf32>, vector<8x8xf32> -> vector<8x8xf32>
    %cst_29 = arith.constant 0.353553385 : f32
    %83 = vector.broadcast %cst_29 : f32 to vector<8x8xf32>
    %84 = arith.mulf %82, %83 : vector<8x8xf32>
    %85 = arith.addf %84, %40 : vector<8x8xf32>
    %cst_30 = arith.constant dense<0xFF800000> : vector<8xf32>
    %86 = vector.multi_reduction <maximumf>, %85, %cst_30 [1] : vector<8x8xf32> to vector<8xf32>
    %87 = vector.shape_cast %86 : vector<8xf32> to vector<8x1xf32>
    %88 = vector.broadcast %87 : vector<8x1xf32> to vector<8x8xf32>
    %89 = arith.subf %85, %88 : vector<8x8xf32>
    %90 = math.exp %89 : vector<8x8xf32>
    %cst_31 = arith.constant dense<0.000000e+00> : vector<8xf32>
    %91 = vector.multi_reduction <add>, %90, %cst_31 [1] : vector<8x8xf32> to vector<8xf32>
    %92 = vector.shape_cast %91 : vector<8xf32> to vector<8x1xf32>
    %93 = tpu.reciprocal %92 {approx = true} : vector<8x1xf32> -> vector<8x1xf32>
    %94 = vector.broadcast %93 : vector<8x1xf32> to vector<8x8xf32>
    %95 = arith.mulf %90, %94 : vector<8x8xf32>
    %96 = vector.extract_strided_slice %39 {offsets = [0, 16], sizes = [8, 8], strides = [1, 1]} : vector<8x32xf32> to vector<8x8xf32>
    %cst_32 = arith.constant dense<0.000000e+00> : vector<8x8xf32>
    %97 = tpu.matmul %95, %96, %cst_32 {dimension_numbers = #tpu.dot_dimension_numbers<[1], [0], [0], [1], [0, 0, 1, 1], [], []>} : vector<8x8xf32>, vector<8x8xf32>, vector<8x8xf32> -> vector<8x8xf32>
    %98 = vector.extract_strided_slice %37 {offsets = [0, 24], sizes = [8, 8], strides = [1, 1]} : vector<8x32xf32> to vector<8x8xf32>
    %99 = vector.extract_strided_slice %38 {offsets = [0, 24], sizes = [8, 8], strides = [1, 1]} : vector<8x32xf32> to vector<8x8xf32>
    %100 = tpu.transpose %99, [1, 0] : vector<8x8xf32> -> vector<8x8xf32>
    %cst_33 = arith.constant dense<0.000000e+00> : vector<8x8xf32>
    %101 = tpu.matmul %98, %100, %cst_33 {dimension_numbers = #tpu.dot_dimension_numbers<[1], [0], [0], [1], [0, 0, 1, 1], [], []>} : vector<8x8xf32>, vector<8x8xf32>, vector<8x8xf32> -> vector<8x8xf32>
    %cst_34 = arith.constant 0.353553385 : f32
    %102 = vector.broadcast %cst_34 : f32 to vector<8x8xf32>
    %103 = arith.mulf %101, %102 : vector<8x8xf32>
    %104 = arith.addf %103, %40 : vector<8x8xf32>
    %cst_35 = arith.constant dense<0xFF800000> : vector<8xf32>
    %105 = vector.multi_reduction <maximumf>, %104, %cst_35 [1] : vector<8x8xf32> to vector<8xf32>
    %106 = vector.shape_cast %105 : vector<8xf32> to vector<8x1xf32>
    %107 = vector.broadcast %106 : vector<8x1xf32> to vector<8x8xf32>
    %108 = arith.subf %104, %107 : vector<8x8xf32>
    %109 = math.exp %108 : vector<8x8xf32>
    %cst_36 = arith.constant dense<0.000000e+00> : vector<8xf32>
    %110 = vector.multi_reduction <add>, %109, %cst_36 [1] : vector<8x8xf32> to vector<8xf32>
    %111 = vector.shape_cast %110 : vector<8xf32> to vector<8x1xf32>
    %112 = tpu.reciprocal %111 {approx = true} : vector<8x1xf32> -> vector<8x1xf32>
    %113 = vector.broadcast %112 : vector<8x1xf32> to vector<8x8xf32>
    %114 = arith.mulf %109, %113 : vector<8x8xf32>
    %115 = vector.extract_strided_slice %39 {offsets = [0, 24], sizes = [8, 8], strides = [1, 1]} : vector<8x32xf32> to vector<8x8xf32>
    %cst_37 = arith.constant dense<0.000000e+00> : vector<8x8xf32>
    %116 = tpu.matmul %114, %115, %cst_37 {dimension_numbers = #tpu.dot_dimension_numbers<[1], [0], [0], [1], [0, 0, 1, 1], [], []>} : vector<8x8xf32>, vector<8x8xf32>, vector<8x8xf32> -> vector<8x8xf32>
    %117 = tpu.concatenate %59, %78, %97, %116 in 1 : vector<8x8xf32>, vector<8x8xf32>, vector<8x8xf32>, vector<8x8xf32> -> vector<8x32xf32>
    %118 = vector.extract_strided_slice %34 {offsets = [8, 0], sizes = [8, 32], strides = [1, 1]} : vector<16x32xf32> to vector<8x32xf32>
    %119 = vector.extract_strided_slice %35 {offsets = [8, 0], sizes = [8, 32], strides = [1, 1]} : vector<16x32xf32> to vector<8x32xf32>
    %120 = vector.extract_strided_slice %36 {offsets = [8, 0], sizes = [8, 32], strides = [1, 1]} : vector<16x32xf32> to vector<8x32xf32>
    %121 = vector.extract_strided_slice %4 {offsets = [8, 0], sizes = [8, 8], strides = [1, 1]} : vector<16x8xf32> to vector<8x8xf32>
    %122 = vector.extract_strided_slice %118 {offsets = [0, 0], sizes = [8, 8], strides = [1, 1]} : vector<8x32xf32> to vector<8x8xf32>
    %123 = vector.extract_strided_slice %119 {offsets = [0, 0], sizes = [8, 8], strides = [1, 1]} : vector<8x32xf32> to vector<8x8xf32>
    %124 = tpu.transpose %123, [1, 0] : vector<8x8xf32> -> vector<8x8xf32>
    %cst_38 = arith.constant dense<0.000000e+00> : vector<8x8xf32>
    %125 = tpu.matmul %122, %124, %cst_38 {dimension_numbers = #tpu.dot_dimension_numbers<[1], [0], [0], [1], [0, 0, 1, 1], [], []>} : vector<8x8xf32>, vector<8x8xf32>, vector<8x8xf32> -> vector<8x8xf32>
    %cst_39 = arith.constant 0.353553385 : f32
    %126 = vector.broadcast %cst_39 : f32 to vector<8x8xf32>
    %127 = arith.mulf %125, %126 : vector<8x8xf32>
    %128 = arith.addf %127, %121 : vector<8x8xf32>
    %cst_40 = arith.constant dense<0xFF800000> : vector<8xf32>
    %129 = vector.multi_reduction <maximumf>, %128, %cst_40 [1] : vector<8x8xf32> to vector<8xf32>
    %130 = vector.shape_cast %129 : vector<8xf32> to vector<8x1xf32>
    %131 = vector.broadcast %130 : vector<8x1xf32> to vector<8x8xf32>
    %132 = arith.subf %128, %131 : vector<8x8xf32>
    %133 = math.exp %132 : vector<8x8xf32>
    %cst_41 = arith.constant dense<0.000000e+00> : vector<8xf32>
    %134 = vector.multi_reduction <add>, %133, %cst_41 [1] : vector<8x8xf32> to vector<8xf32>
    %135 = vector.shape_cast %134 : vector<8xf32> to vector<8x1xf32>
    %136 = tpu.reciprocal %135 {approx = true} : vector<8x1xf32> -> vector<8x1xf32>
    %137 = vector.broadcast %136 : vector<8x1xf32> to vector<8x8xf32>
    %138 = arith.mulf %133, %137 : vector<8x8xf32>
    %139 = vector.extract_strided_slice %120 {offsets = [0, 0], sizes = [8, 8], strides = [1, 1]} : vector<8x32xf32> to vector<8x8xf32>
    %cst_42 = arith.constant dense<0.000000e+00> : vector<8x8xf32>
    %140 = tpu.matmul %138, %139, %cst_42 {dimension_numbers = #tpu.dot_dimension_numbers<[1], [0], [0], [1], [0, 0, 1, 1], [], []>} : vector<8x8xf32>, vector<8x8xf32>, vector<8x8xf32> -> vector<8x8xf32>
    %141 = vector.extract_strided_slice %118 {offsets = [0, 8], sizes = [8, 8], strides = [1, 1]} : vector<8x32xf32> to vector<8x8xf32>
    %142 = vector.extract_strided_slice %119 {offsets = [0, 8], sizes = [8, 8], strides = [1, 1]} : vector<8x32xf32> to vector<8x8xf32>
    %143 = tpu.transpose %142, [1, 0] : vector<8x8xf32> -> vector<8x8xf32>
    %cst_43 = arith.constant dense<0.000000e+00> : vector<8x8xf32>
    %144 = tpu.matmul %141, %143, %cst_43 {dimension_numbers = #tpu.dot_dimension_numbers<[1], [0], [0], [1], [0, 0, 1, 1], [], []>} : vector<8x8xf32>, vector<8x8xf32>, vector<8x8xf32> -> vector<8x8xf32>
    %cst_44 = arith.constant 0.353553385 : f32
    %145 = vector.broadcast %cst_44 : f32 to vector<8x8xf32>
    %146 = arith.mulf %144, %145 : vector<8x8xf32>
    %147 = arith.addf %146, %121 : vector<8x8xf32>
    %cst_45 = arith.constant dense<0xFF800000> : vector<8xf32>
    %148 = vector.multi_reduction <maximumf>, %147, %cst_45 [1] : vector<8x8xf32> to vector<8xf32>
    %149 = vector.shape_cast %148 : vector<8xf32> to vector<8x1xf32>
    %150 = vector.broadcast %149 : vector<8x1xf32> to vector<8x8xf32>
    %151 = arith.subf %147, %150 : vector<8x8xf32>
    %152 = math.exp %151 : vector<8x8xf32>
    %cst_46 = arith.constant dense<0.000000e+00> : vector<8xf32>
    %153 = vector.multi_reduction <add>, %152, %cst_46 [1] : vector<8x8xf32> to vector<8xf32>
    %154 = vector.shape_cast %153 : vector<8xf32> to vector<8x1xf32>
    %155 = tpu.reciprocal %154 {approx = true} : vector<8x1xf32> -> vector<8x1xf32>
    %156 = vector.broadcast %155 : vector<8x1xf32> to vector<8x8xf32>
    %157 = arith.mulf %152, %156 : vector<8x8xf32>
    %158 = vector.extract_strided_slice %120 {offsets = [0, 8], sizes = [8, 8], strides = [1, 1]} : vector<8x32xf32> to vector<8x8xf32>
    %cst_47 = arith.constant dense<0.000000e+00> : vector<8x8xf32>
    %159 = tpu.matmul %157, %158, %cst_47 {dimension_numbers = #tpu.dot_dimension_numbers<[1], [0], [0], [1], [0, 0, 1, 1], [], []>} : vector<8x8xf32>, vector<8x8xf32>, vector<8x8xf32> -> vector<8x8xf32>
    %160 = vector.extract_strided_slice %118 {offsets = [0, 16], sizes = [8, 8], strides = [1, 1]} : vector<8x32xf32> to vector<8x8xf32>
    %161 = vector.extract_strided_slice %119 {offsets = [0, 16], sizes = [8, 8], strides = [1, 1]} : vector<8x32xf32> to vector<8x8xf32>
    %162 = tpu.transpose %161, [1, 0] : vector<8x8xf32> -> vector<8x8xf32>
    %cst_48 = arith.constant dense<0.000000e+00> : vector<8x8xf32>
    %163 = tpu.matmul %160, %162, %cst_48 {dimension_numbers = #tpu.dot_dimension_numbers<[1], [0], [0], [1], [0, 0, 1, 1], [], []>} : vector<8x8xf32>, vector<8x8xf32>, vector<8x8xf32> -> vector<8x8xf32>
    %cst_49 = arith.constant 0.353553385 : f32
    %164 = vector.broadcast %cst_49 : f32 to vector<8x8xf32>
    %165 = arith.mulf %163, %164 : vector<8x8xf32>
    %166 = arith.addf %165, %121 : vector<8x8xf32>
    %cst_50 = arith.constant dense<0xFF800000> : vector<8xf32>
    %167 = vector.multi_reduction <maximumf>, %166, %cst_50 [1] : vector<8x8xf32> to vector<8xf32>
    %168 = vector.shape_cast %167 : vector<8xf32> to vector<8x1xf32>
    %169 = vector.broadcast %168 : vector<8x1xf32> to vector<8x8xf32>
    %170 = arith.subf %166, %169 : vector<8x8xf32>
    %171 = math.exp %170 : vector<8x8xf32>
    %cst_51 = arith.constant dense<0.000000e+00> : vector<8xf32>
    %172 = vector.multi_reduction <add>, %171, %cst_51 [1] : vector<8x8xf32> to vector<8xf32>
    %173 = vector.shape_cast %172 : vector<8xf32> to vector<8x1xf32>
    %174 = tpu.reciprocal %173 {approx = true} : vector<8x1xf32> -> vector<8x1xf32>
    %175 = vector.broadcast %174 : vector<8x1xf32> to vector<8x8xf32>
    %176 = arith.mulf %171, %175 : vector<8x8xf32>
    %177 = vector.extract_strided_slice %120 {offsets = [0, 16], sizes = [8, 8], strides = [1, 1]} : vector<8x32xf32> to vector<8x8xf32>
    %cst_52 = arith.constant dense<0.000000e+00> : vector<8x8xf32>
    %178 = tpu.matmul %176, %177, %cst_52 {dimension_numbers = #tpu.dot_dimension_numbers<[1], [0], [0], [1], [0, 0, 1, 1], [], []>} : vector<8x8xf32>, vector<8x8xf32>, vector<8x8xf32> -> vector<8x8xf32>
    %179 = vector.extract_strided_slice %118 {offsets = [0, 24], sizes = [8, 8], strides = [1, 1]} : vector<8x32xf32> to vector<8x8xf32>
    %180 = vector.extract_strided_slice %119 {offsets = [0, 24], sizes = [8, 8], strides = [1, 1]} : vector<8x32xf32> to vector<8x8xf32>
    %181 = tpu.transpose %180, [1, 0] : vector<8x8xf32> -> vector<8x8xf32>
    %cst_53 = arith.constant dense<0.000000e+00> : vector<8x8xf32>
    %182 = tpu.matmul %179, %181, %cst_53 {dimension_numbers = #tpu.dot_dimension_numbers<[1], [0], [0], [1], [0, 0, 1, 1], [], []>} : vector<8x8xf32>, vector<8x8xf32>, vector<8x8xf32> -> vector<8x8xf32>
    %cst_54 = arith.constant 0.353553385 : f32
    %183 = vector.broadcast %cst_54 : f32 to vector<8x8xf32>
    %184 = arith.mulf %182, %183 : vector<8x8xf32>
    %185 = arith.addf %184, %121 : vector<8x8xf32>
    %cst_55 = arith.constant dense<0xFF800000> : vector<8xf32>
    %186 = vector.multi_reduction <maximumf>, %185, %cst_55 [1] : vector<8x8xf32> to vector<8xf32>
    %187 = vector.shape_cast %186 : vector<8xf32> to vector<8x1xf32>
    %188 = vector.broadcast %187 : vector<8x1xf32> to vector<8x8xf32>
    %189 = arith.subf %185, %188 : vector<8x8xf32>
    %190 = math.exp %189 : vector<8x8xf32>
    %cst_56 = arith.constant dense<0.000000e+00> : vector<8xf32>
    %191 = vector.multi_reduction <add>, %190, %cst_56 [1] : vector<8x8xf32> to vector<8xf32>
    %192 = vector.shape_cast %191 : vector<8xf32> to vector<8x1xf32>
    %193 = tpu.reciprocal %192 {approx = true} : vector<8x1xf32> -> vector<8x1xf32>
    %194 = vector.broadcast %193 : vector<8x1xf32> to vector<8x8xf32>
    %195 = arith.mulf %190, %194 : vector<8x8xf32>
    %196 = vector.extract_strided_slice %120 {offsets = [0, 24], sizes = [8, 8], strides = [1, 1]} : vector<8x32xf32> to vector<8x8xf32>
    %cst_57 = arith.constant dense<0.000000e+00> : vector<8x8xf32>
    %197 = tpu.matmul %195, %196, %cst_57 {dimension_numbers = #tpu.dot_dimension_numbers<[1], [0], [0], [1], [0, 0, 1, 1], [], []>} : vector<8x8xf32>, vector<8x8xf32>, vector<8x8xf32> -> vector<8x8xf32>
    %198 = tpu.concatenate %140, %159, %178, %197 in 1 : vector<8x8xf32>, vector<8x8xf32>, vector<8x8xf32>, vector<8x8xf32> -> vector<8x32xf32>
    %199 = tpu.concatenate %117, %198 in 0 : vector<8x32xf32>, vector<8x32xf32> -> vector<16x32xf32>
    %c0_58 = arith.constant 0 : index
    %c0_59 = arith.constant 0 : index
    %c0_60 = arith.constant 0 : index
    %200 = vector.load %arg6[%c0_58, %c0_59, %c0_60] : memref<1x32x32xf32, #tpu.memory_space<vmem>>, vector<1x32x32xf32>
    %201 = vector.shape_cast %200 : vector<1x32x32xf32> to vector<32x32xf32>
    %cst_61 = arith.constant dense<0.000000e+00> : vector<16x32xf32>
    %202 = tpu.matmul %199, %201, %cst_61 {dimension_numbers = #tpu.dot_dimension_numbers<[1], [0], [0], [1], [0, 0, 1, 1], [], []>} : vector<16x32xf32>, vector<32x32xf32>, vector<16x32xf32> -> vector<16x32xf32>
    %203 = arith.addf %3, %202 : vector<16x32xf32>
    %c0_62 = arith.constant 0 : index
    %c0_63 = arith.constant 0 : index
    %c0_64 = arith.constant 0 : index
    %204 = vector.load %arg7[%c0_62, %c0_63, %c0_64] : memref<1x1x32xf32, #tpu.memory_space<vmem>>, vector<1x1x32xf32>
    %205 = vector.shape_cast %204 : vector<1x1x32xf32> to vector<1x32xf32>
    %c0_65 = arith.constant 0 : index
    %c0_66 = arith.constant 0 : index
    %c0_67 = arith.constant 0 : index
    %206 = vector.load %arg8[%c0_65, %c0_66, %c0_67] : memref<1x1x32xf32, #tpu.memory_space<vmem>>, vector<1x1x32xf32>
    %207 = vector.shape_cast %206 : vector<1x1x32xf32> to vector<1x32xf32>
    %cst_68 = arith.constant dense<0.000000e+00> : vector<16xf32>
    %208 = vector.multi_reduction <add>, %203, %cst_68 [1] : vector<16x32xf32> to vector<16xf32>
    %209 = vector.shape_cast %208 : vector<16xf32> to vector<16x1xf32>
    %cst_69 = arith.constant 3.200000e+01 : f32
    %210 = vector.broadcast %cst_69 : f32 to vector<16x1xf32>
    %211 = arith.divf %209, %210 : vector<16x1xf32>
    %212 = vector.broadcast %211 : vector<16x1xf32> to vector<16x32xf32>
    %213 = arith.subf %203, %212 : vector<16x32xf32>
    %214 = arith.mulf %213, %213 : vector<16x32xf32>
    %cst_70 = arith.constant dense<0.000000e+00> : vector<16xf32>
    %215 = vector.multi_reduction <add>, %214, %cst_70 [1] : vector<16x32xf32> to vector<16xf32>
    %216 = vector.shape_cast %215 : vector<16xf32> to vector<16x1xf32>
    %cst_71 = arith.constant 0.0322580636 : f32
    %217 = vector.broadcast %cst_71 : f32 to vector<16x1xf32>
    %218 = arith.mulf %216, %217 : vector<16x1xf32>
    %219 = math.sqrt %218 : vector<16x1xf32>
    %220 = vector.broadcast %211 : vector<16x1xf32> to vector<16x32xf32>
    %221 = arith.subf %203, %220 : vector<16x32xf32>
    %222 = vector.broadcast %205 : vector<1x32xf32> to vector<16x32xf32>
    %223 = arith.mulf %222, %221 : vector<16x32xf32>
    %cst_72 = arith.constant 9.99999997E-7 : f32
    %224 = vector.broadcast %cst_72 : f32 to vector<16x1xf32>
    %225 = arith.addf %219, %224 : vector<16x1xf32>
    %226 = vector.broadcast %225 : vector<16x1xf32> to vector<16x32xf32>
    %227 = arith.divf %223, %226 : vector<16x32xf32>
    %228 = vector.broadcast %207 : vector<1x32xf32> to vector<16x32xf32>
    %229 = arith.addf %227, %228 : vector<16x32xf32>
    %c0_73 = arith.constant 0 : index
    %c0_74 = arith.constant 0 : index
    %c0_75 = arith.constant 0 : index
    %230 = vector.load %arg9[%c0_73, %c0_74, %c0_75] : memref<1x32x64xf32, #tpu.memory_space<vmem>>, vector<1x32x64xf32>
    %231 = vector.shape_cast %230 : vector<1x32x64xf32> to vector<32x64xf32>
    %cst_76 = arith.constant dense<0.000000e+00> : vector<16x64xf32>
    %232 = tpu.matmul %229, %231, %cst_76 {dimension_numbers = #tpu.dot_dimension_numbers<[1], [0], [0], [1], [0, 0, 1, 1], [], []>} : vector<16x32xf32>, vector<32x64xf32>, vector<16x64xf32> -> vector<16x64xf32>
    %c0_77 = arith.constant 0 : index
    %c0_78 = arith.constant 0 : index
    %c0_79 = arith.constant 0 : index
    %233 = vector.load %arg10[%c0_77, %c0_78, %c0_79] : memref<1x1x64xf32, #tpu.memory_space<vmem>>, vector<1x1x64xf32>
    %234 = vector.shape_cast %233 : vector<1x1x64xf32> to vector<1x64xf32>
    %235 = vector.broadcast %234 : vector<1x64xf32> to vector<16x64xf32>
    %236 = arith.addf %232, %235 : vector<16x64xf32>
    %cst_80 = arith.constant 0.000000e+00 : f32
    %237 = vector.broadcast %cst_80 : f32 to vector<16x64xf32>
    %238 = arith.maximumf %236, %237 : vector<16x64xf32>
    %c0_81 = arith.constant 0 : index
    %c0_82 = arith.constant 0 : index
    %c0_83 = arith.constant 0 : index
    %239 = vector.load %arg11[%c0_81, %c0_82, %c0_83] : memref<1x64x32xf32, #tpu.memory_space<vmem>>, vector<1x64x32xf32>
    %240 = vector.shape_cast %239 : vector<1x64x32xf32> to vector<64x32xf32>
    %cst_84 = arith.constant dense<0.000000e+00> : vector<16x32xf32>
    %241 = tpu.matmul %238, %240, %cst_84 {dimension_numbers = #tpu.dot_dimension_numbers<[1], [0], [0], [1], [0, 0, 1, 1], [], []>} : vector<16x64xf32>, vector<64x32xf32>, vector<16x32xf32> -> vector<16x32xf32>
    %242 = arith.addf %203, %241 : vector<16x32xf32>
    %c0_85 = arith.constant 0 : index
    %c0_86 = arith.constant 0 : index
    %c0_87 = arith.constant 0 : index
    %243 = vector.load %arg12[%c0_85, %c0_86, %c0_87] : memref<1x1x32xf32, #tpu.memory_space<vmem>>, vector<1x1x32xf32>
    %244 = vector.shape_cast %243 : vector<1x1x32xf32> to vector<1x32xf32>
    %245 = vector.broadcast %244 : vector<1x32xf32> to vector<16x32xf32>
    %246 = arith.addf %242, %245 : vector<16x32xf32>
    %c0_88 = arith.constant 0 : index
    %c0_89 = arith.constant 0 : index
    %247 = vector.load %arg16[%c0_88, %c0_89] : memref<16x32xf32, #tpu.memory_space<vmem>>, vector<16x32xf32>
    tpu.vector_store %arg16[%c0_88, %c0_89], %246 {strides = array<i32>} : memref<16x32xf32, #tpu.memory_space<vmem>>, vector<16x32xf32>,
    %c1_i32 = arith.constant 1 : i32
    %248 = arith.cmpi eq, %arg0, %c1_i32 : i32
    %249 = arith.extui %248 : i1 to i32
    %c0_i32_90 = arith.constant 0 : i32
    %250 = arith.cmpi ne, %249, %c0_i32_90 : i32
    scf.if %250 {
      %c0_91 = arith.constant 0 : index
      %c0_92 = arith.constant 0 : index
      %251 = vector.load %arg13[%c0_91, %c0_92] : memref<1x32xf32, #tpu.memory_space<vmem>>, vector<1x32xf32>
      %c0_93 = arith.constant 0 : index
      %c0_94 = arith.constant 0 : index
      %252 = vector.load %arg14[%c0_93, %c0_94] : memref<1x32xf32, #tpu.memory_space<vmem>>, vector<1x32xf32>
      %cst_95 = arith.constant dense<0.000000e+00> : vector<16xf32>
      %253 = vector.multi_reduction <add>, %246, %cst_95 [1] : vector<16x32xf32> to vector<16xf32>
      %254 = vector.shape_cast %253 : vector<16xf32> to vector<16x1xf32>
      %cst_96 = arith.constant 3.200000e+01 : f32
      %255 = vector.broadcast %cst_96 : f32 to vector<16x1xf32>
      %256 = arith.divf %254, %255 : vector<16x1xf32>
      %257 = vector.broadcast %256 : vector<16x1xf32> to vector<16x32xf32>
      %258 = arith.subf %246, %257 : vector<16x32xf32>
      %259 = arith.mulf %258, %258 : vector<16x32xf32>
      %cst_97 = arith.constant dense<0.000000e+00> : vector<16xf32>
      %260 = vector.multi_reduction <add>, %259, %cst_97 [1] : vector<16x32xf32> to vector<16xf32>
      %261 = vector.shape_cast %260 : vector<16xf32> to vector<16x1xf32>
      %cst_98 = arith.constant 0.0322580636 : f32
      %262 = vector.broadcast %cst_98 : f32 to vector<16x1xf32>
      %263 = arith.mulf %261, %262 : vector<16x1xf32>
      %264 = math.sqrt %263 : vector<16x1xf32>
      %265 = vector.broadcast %256 : vector<16x1xf32> to vector<16x32xf32>
      %266 = arith.subf %246, %265 : vector<16x32xf32>
      %267 = vector.broadcast %251 : vector<1x32xf32> to vector<16x32xf32>
      %268 = arith.mulf %267, %266 : vector<16x32xf32>
      %cst_99 = arith.constant 9.99999997E-7 : f32
      %269 = vector.broadcast %cst_99 : f32 to vector<16x1xf32>
      %270 = arith.addf %264, %269 : vector<16x1xf32>
      %271 = vector.broadcast %270 : vector<16x1xf32> to vector<16x32xf32>
      %272 = arith.divf %268, %271 : vector<16x32xf32>
      %273 = vector.broadcast %252 : vector<1x32xf32> to vector<16x32xf32>
      %274 = arith.addf %272, %273 : vector<16x32xf32>
      %c0_100 = arith.constant 0 : index
      %c0_101 = arith.constant 0 : index
      %275 = vector.load %arg15[%c0_100, %c0_101] : memref<16x32xf32, #tpu.memory_space<vmem>>, vector<16x32xf32>
      tpu.vector_store %arg15[%c0_100, %c0_101], %274 {strides = array<i32>} : memref<16x32xf32, #tpu.memory_space<vmem>>, vector<16x32xf32>,
    } else {
    }
    return
  }
  func.func @transform_0(%arg0: i32) -> (i32, i32) {
    %c0_i32 = arith.constant 0 : i32
    %c0_i32_0 = arith.constant 0 : i32
    %c0_i32_1 = arith.constant 0 : i32
    return %c0_i32, %c0_i32_0 : i32, i32
  }
  func.func @transform_1(%arg0: i32) -> (i32, i32) {
    %c0_i32 = arith.constant 0 : i32
    %c0_i32_0 = arith.constant 0 : i32
    %c0_i32_1 = arith.constant 0 : i32
    return %c0_i32, %c0_i32_0 : i32, i32
  }
  func.func @transform_2(%arg0: i32) -> (i32, i32, i32) {
    %c0_i32 = arith.constant 0 : i32
    %c0_i32_0 = arith.constant 0 : i32
    %c0_i32_1 = arith.constant 0 : i32
    return %arg0, %c0_i32, %c0_i32_0 : i32, i32, i32
  }
  func.func @transform_3(%arg0: i32) -> (i32, i32, i32) {
    %c0_i32 = arith.constant 0 : i32
    %c0_i32_0 = arith.constant 0 : i32
    %c0_i32_1 = arith.constant 0 : i32
    return %arg0, %c0_i32, %c0_i32_0 : i32, i32, i32
  }
  func.func @transform_4(%arg0: i32) -> (i32, i32, i32) {
    %c0_i32 = arith.constant 0 : i32
    %c0_i32_0 = arith.constant 0 : i32
    %c0_i32_1 = arith.constant 0 : i32
    return %arg0, %c0_i32, %c0_i32_0 : i32, i32, i32
  }
  func.func @transform_5(%arg0: i32) -> (i32, i32, i32) {
    %c0_i32 = arith.constant 0 : i32
    %c0_i32_0 = arith.constant 0 : i32
    %c0_i32_1 = arith.constant 0 : i32
    return %arg0, %c0_i32, %c0_i32_0 : i32, i32, i32
  }
  func.func @transform_6(%arg0: i32) -> (i32, i32, i32) {
    %c0_i32 = arith.constant 0 : i32
    %c0_i32_0 = arith.constant 0 : i32
    %c0_i32_1 = arith.constant 0 : i32
    return %arg0, %c0_i32, %c0_i32_0 : i32, i32, i32
  }
  func.func @transform_7(%arg0: i32) -> (i32, i32, i32) {
    %c0_i32 = arith.constant 0 : i32
    %c0_i32_0 = arith.constant 0 : i32
    %c0_i32_1 = arith.constant 0 : i32
    return %arg0, %c0_i32, %c0_i32_0 : i32, i32, i32
  }
  func.func @transform_8(%arg0: i32) -> (i32, i32, i32) {
    %c0_i32 = arith.constant 0 : i32
    %c0_i32_0 = arith.constant 0 : i32
    %c0_i32_1 = arith.constant 0 : i32
    return %arg0, %c0_i32, %c0_i32_0 : i32, i32, i32
  }
  func.func @transform_9(%arg0: i32) -> (i32, i32, i32) {
    %c0_i32 = arith.constant 0 : i32
    %c0_i32_0 = arith.constant 0 : i32
    %c0_i32_1 = arith.constant 0 : i32
    return %arg0, %c0_i32, %c0_i32_0 : i32, i32, i32
  }
  func.func @transform_10(%arg0: i32) -> (i32, i32, i32) {
    %c0_i32 = arith.constant 0 : i32
    %c0_i32_0 = arith.constant 0 : i32
    %c0_i32_1 = arith.constant 0 : i32
    return %arg0, %c0_i32, %c0_i32_0 : i32, i32, i32
  }
  func.func @transform_11(%arg0: i32) -> (i32, i32, i32) {
    %c0_i32 = arith.constant 0 : i32
    %c0_i32_0 = arith.constant 0 : i32
    %c0_i32_1 = arith.constant 0 : i32
    return %arg0, %c0_i32, %c0_i32_0 : i32, i32, i32
  }
  func.func @transform_12(%arg0: i32) -> (i32, i32) {
    %c0_i32 = arith.constant 0 : i32
    %c0_i32_0 = arith.constant 0 : i32
    %c0_i32_1 = arith.constant 0 : i32
    return %c0_i32, %c0_i32_0 : i32, i32
  }
  func.func @transform_13(%arg0: i32) -> (i32, i32) {
    %c0_i32 = arith.constant 0 : i32
    %c0_i32_0 = arith.constant 0 : i32
    %c0_i32_1 = arith.constant 0 : i32
    return %c0_i32, %c0_i32_0 : i32, i32
  }
  func.func @transform_14(%arg0: i32) -> (i32, i32) {
    %c0_i32 = arith.constant 0 : i32
    %c0_i32_0 = arith.constant 0 : i32
    %c0_i32_1 = arith.constant 0 : i32
    return %c0_i32, %c0_i32_0 : i32, i32
  }
}

module attributes {stable_mosaic.version = 11 : i64} {
  func.func @_decoder_kernel(%arg0: i32, %arg1: memref<16x32xf32, #tpu.memory_space<vmem>>, %arg2: memref<16x32xf32, #tpu.memory_space<vmem>>, %arg3: memref<16x8xf32, #tpu.memory_space<vmem>>, %arg4: memref<16x8xf32, #tpu.memory_space<vmem>>, %arg5: memref<1x1x32xf32, #tpu.memory_space<vmem>>, %arg6: memref<1x1x32xf32, #tpu.memory_space<vmem>>, %arg7: memref<1x32x96xf32, #tpu.memory_space<vmem>>, %arg8: memref<1x32x32xf32, #tpu.memory_space<vmem>>, %arg9: memref<1x1x32xf32, #tpu.memory_space<vmem>>, %arg10: memref<1x1x32xf32, #tpu.memory_space<vmem>>, %arg11: memref<1x32x32xf32, #tpu.memory_space<vmem>>, %arg12: memref<1x32x64xf32, #tpu.memory_space<vmem>>, %arg13: memref<1x32x32xf32, #tpu.memory_space<vmem>>, %arg14: memref<1x1x32xf32, #tpu.memory_space<vmem>>, %arg15: memref<1x1x32xf32, #tpu.memory_space<vmem>>, %arg16: memref<1x32x64xf32, #tpu.memory_space<vmem>>, %arg17: memref<1x1x64xf32, #tpu.memory_space<vmem>>, %arg18: memref<1x64x32xf32, #tpu.memory_space<vmem>>, %arg19: memref<1x1x32xf32, #tpu.memory_space<vmem>>, %arg20: memref<1x32xf32, #tpu.memory_space<vmem>>, %arg21: memref<1x32xf32, #tpu.memory_space<vmem>>, %arg22: memref<32x128xf32, #tpu.memory_space<vmem>>, %arg23: memref<1x128xf32, #tpu.memory_space<vmem>>, %arg24: memref<16x128xf32, #tpu.memory_space<vmem>>, %arg25: memref<16x32xf32, #tpu.memory_space<vmem>>) attributes {dimension_semantics = [#tpu.dimension_semantics<arbitrary>], iteration_bounds = array<i64: 2>, scalar_prefetch = 0 : i64, scratch_operands = 1 : i64, tpu.core_type = #tpu.core_type<tc>, window_params = [{pipeline_mode = #tpu.pipeline_mode<synchronous>, transform_indices = @transform_0, window_bounds = array<i64: 16, 32>}, {pipeline_mode = #tpu.pipeline_mode<synchronous>, transform_indices = @transform_1, window_bounds = array<i64: 16, 32>}, {pipeline_mode = #tpu.pipeline_mode<synchronous>, transform_indices = @transform_2, window_bounds = array<i64: 16, 8>}, {pipeline_mode = #tpu.pipeline_mode<synchronous>, transform_indices = @transform_3, window_bounds = array<i64: 16, 8>}, {transform_indices = @transform_4, window_bounds = array<i64: 1, 1, 32>}, {transform_indices = @transform_5, window_bounds = array<i64: 1, 1, 32>}, {transform_indices = @transform_6, window_bounds = array<i64: 1, 32, 96>}, {transform_indices = @transform_7, window_bounds = array<i64: 1, 32, 32>}, {transform_indices = @transform_8, window_bounds = array<i64: 1, 1, 32>}, {transform_indices = @transform_9, window_bounds = array<i64: 1, 1, 32>}, {transform_indices = @transform_10, window_bounds = array<i64: 1, 32, 32>}, {transform_indices = @transform_11, window_bounds = array<i64: 1, 32, 64>}, {transform_indices = @transform_12, window_bounds = array<i64: 1, 32, 32>}, {transform_indices = @transform_13, window_bounds = array<i64: 1, 1, 32>}, {transform_indices = @transform_14, window_bounds = array<i64: 1, 1, 32>}, {transform_indices = @transform_15, window_bounds = array<i64: 1, 32, 64>}, {transform_indices = @transform_16, window_bounds = array<i64: 1, 1, 64>}, {transform_indices = @transform_17, window_bounds = array<i64: 1, 64, 32>}, {transform_indices = @transform_18, window_bounds = array<i64: 1, 1, 32>}, {pipeline_mode = #tpu.pipeline_mode<synchronous>, transform_indices = @transform_19, window_bounds = array<i64: 1, 32>}, {pipeline_mode = #tpu.pipeline_mode<synchronous>, transform_indices = @transform_20, window_bounds = array<i64: 1, 32>}, {pipeline_mode = #tpu.pipeline_mode<synchronous>, transform_indices = @transform_21, window_bounds = array<i64: 32, 128>}, {pipeline_mode = #tpu.pipeline_mode<synchronous>, transform_indices = @transform_22, window_bounds = array<i64: 1, 128>}, {pipeline_mode = #tpu.pipeline_mode<synchronous>, transform_indices = @transform_23, window_bounds = array<i64: 16, 128>}]} {
    %c0_i32 = arith.constant 0 : i32
    %0 = arith.cmpi eq, %arg0, %c0_i32 : i32
    %1 = arith.extui %0 : i1 to i32
    %c0_i32_0 = arith.constant 0 : i32
    %2 = arith.cmpi ne, %1, %c0_i32_0 : i32
    scf.if %2 {
      %c0_158 = arith.constant 0 : index
      %c0_159 = arith.constant 0 : index
      %454 = vector.load %arg1[%c0_158, %c0_159] : memref<16x32xf32, #tpu.memory_space<vmem>>, vector<16x32xf32>
      %c0_160 = arith.constant 0 : index
      %c0_161 = arith.constant 0 : index
      %455 = vector.load %arg25[%c0_160, %c0_161] : memref<16x32xf32, #tpu.memory_space<vmem>>, vector<16x32xf32>
      tpu.vector_store %arg25[%c0_160, %c0_161], %454 {strides = array<i32>} : memref<16x32xf32, #tpu.memory_space<vmem>>, vector<16x32xf32>,
      %cst_162 = arith.constant 0.000000e+00 : f32
      %456 = vector.broadcast %cst_162 : f32 to vector<16x128xf32>
      %c0_163 = arith.constant 0 : index
      %c0_164 = arith.constant 0 : index
      %457 = vector.load %arg24[%c0_163, %c0_164] : memref<16x128xf32, #tpu.memory_space<vmem>>, vector<16x128xf32>
      tpu.vector_store %arg24[%c0_163, %c0_164], %456 {strides = array<i32>} : memref<16x128xf32, #tpu.memory_space<vmem>>, vector<16x128xf32>,
    } else {
    }
    %c0 = arith.constant 0 : index
    %c0_1 = arith.constant 0 : index
    %3 = vector.load %arg25[%c0, %c0_1] : memref<16x32xf32, #tpu.memory_space<vmem>>, vector<16x32xf32>
    %c0_2 = arith.constant 0 : index
    %c0_3 = arith.constant 0 : index
    %c0_4 = arith.constant 0 : index
    %4 = vector.load %arg5[%c0_2, %c0_3, %c0_4] : memref<1x1x32xf32, #tpu.memory_space<vmem>>, vector<1x1x32xf32>
    %5 = vector.shape_cast %4 : vector<1x1x32xf32> to vector<1x32xf32>
    %c0_5 = arith.constant 0 : index
    %c0_6 = arith.constant 0 : index
    %c0_7 = arith.constant 0 : index
    %6 = vector.load %arg6[%c0_5, %c0_6, %c0_7] : memref<1x1x32xf32, #tpu.memory_space<vmem>>, vector<1x1x32xf32>
    %7 = vector.shape_cast %6 : vector<1x1x32xf32> to vector<1x32xf32>
    %cst = arith.constant dense<0.000000e+00> : vector<16xf32>
    %8 = vector.multi_reduction <add>, %3, %cst [1] : vector<16x32xf32> to vector<16xf32>
    %9 = vector.shape_cast %8 : vector<16xf32> to vector<16x1xf32>
    %cst_8 = arith.constant 3.200000e+01 : f32
    %10 = vector.broadcast %cst_8 : f32 to vector<16x1xf32>
    %11 = arith.divf %9, %10 : vector<16x1xf32>
    %12 = vector.broadcast %11 : vector<16x1xf32> to vector<16x32xf32>
    %13 = arith.subf %3, %12 : vector<16x32xf32>
    %14 = arith.mulf %13, %13 : vector<16x32xf32>
    %cst_9 = arith.constant dense<0.000000e+00> : vector<16xf32>
    %15 = vector.multi_reduction <add>, %14, %cst_9 [1] : vector<16x32xf32> to vector<16xf32>
    %16 = vector.shape_cast %15 : vector<16xf32> to vector<16x1xf32>
    %cst_10 = arith.constant 0.0322580636 : f32
    %17 = vector.broadcast %cst_10 : f32 to vector<16x1xf32>
    %18 = arith.mulf %16, %17 : vector<16x1xf32>
    %19 = math.sqrt %18 : vector<16x1xf32>
    %20 = vector.broadcast %11 : vector<16x1xf32> to vector<16x32xf32>
    %21 = arith.subf %3, %20 : vector<16x32xf32>
    %22 = vector.broadcast %5 : vector<1x32xf32> to vector<16x32xf32>
    %23 = arith.mulf %22, %21 : vector<16x32xf32>
    %cst_11 = arith.constant 9.99999997E-7 : f32
    %24 = vector.broadcast %cst_11 : f32 to vector<16x1xf32>
    %25 = arith.addf %19, %24 : vector<16x1xf32>
    %26 = vector.broadcast %25 : vector<16x1xf32> to vector<16x32xf32>
    %27 = arith.divf %23, %26 : vector<16x32xf32>
    %28 = vector.broadcast %7 : vector<1x32xf32> to vector<16x32xf32>
    %29 = arith.addf %27, %28 : vector<16x32xf32>
    %c0_12 = arith.constant 0 : index
    %c0_13 = arith.constant 0 : index
    %c0_14 = arith.constant 0 : index
    %30 = vector.load %arg7[%c0_12, %c0_13, %c0_14] : memref<1x32x96xf32, #tpu.memory_space<vmem>>, vector<1x32x96xf32>
    %31 = vector.shape_cast %30 : vector<1x32x96xf32> to vector<32x96xf32>
    %cst_15 = arith.constant dense<0.000000e+00> : vector<16x96xf32>
    %32 = tpu.matmul %29, %31, %cst_15 {dimension_numbers = #tpu.dot_dimension_numbers<[1], [0], [0], [1], [0, 0, 1, 1], [], []>} : vector<16x32xf32>, vector<32x96xf32>, vector<16x96xf32> -> vector<16x96xf32>
    %33 = vector.extract_strided_slice %32 {offsets = [0, 0], sizes = [16, 32], strides = [1, 1]} : vector<16x96xf32> to vector<16x32xf32>
    %34 = vector.extract_strided_slice %32 {offsets = [0, 32], sizes = [16, 32], strides = [1, 1]} : vector<16x96xf32> to vector<16x32xf32>
    %35 = vector.extract_strided_slice %32 {offsets = [0, 64], sizes = [16, 32], strides = [1, 1]} : vector<16x96xf32> to vector<16x32xf32>
    %c0_16 = arith.constant 0 : index
    %c0_17 = arith.constant 0 : index
    %36 = vector.load %arg3[%c0_16, %c0_17] : memref<16x8xf32, #tpu.memory_space<vmem>>, vector<16x8xf32>
    %37 = vector.extract_strided_slice %33 {offsets = [0, 0], sizes = [8, 32], strides = [1, 1]} : vector<16x32xf32> to vector<8x32xf32>
    %38 = vector.extract_strided_slice %34 {offsets = [0, 0], sizes = [8, 32], strides = [1, 1]} : vector<16x32xf32> to vector<8x32xf32>
    %39 = vector.extract_strided_slice %35 {offsets = [0, 0], sizes = [8, 32], strides = [1, 1]} : vector<16x32xf32> to vector<8x32xf32>
    %40 = vector.extract_strided_slice %36 {offsets = [0, 0], sizes = [8, 8], strides = [1, 1]} : vector<16x8xf32> to vector<8x8xf32>
    %41 = vector.extract_strided_slice %37 {offsets = [0, 0], sizes = [8, 8], strides = [1, 1]} : vector<8x32xf32> to vector<8x8xf32>
    %42 = vector.extract_strided_slice %38 {offsets = [0, 0], sizes = [8, 8], strides = [1, 1]} : vector<8x32xf32> to vector<8x8xf32>
    %43 = tpu.transpose %42, [1, 0] : vector<8x8xf32> -> vector<8x8xf32>
    %cst_18 = arith.constant dense<0.000000e+00> : vector<8x8xf32>
    %44 = tpu.matmul %41, %43, %cst_18 {dimension_numbers = #tpu.dot_dimension_numbers<[1], [0], [0], [1], [0, 0, 1, 1], [], []>} : vector<8x8xf32>, vector<8x8xf32>, vector<8x8xf32> -> vector<8x8xf32>
    %cst_19 = arith.constant 0.353553385 : f32
    %45 = vector.broadcast %cst_19 : f32 to vector<8x8xf32>
    %46 = arith.mulf %44, %45 : vector<8x8xf32>
    %47 = arith.addf %46, %40 : vector<8x8xf32>
    %cst_20 = arith.constant dense<0xFF800000> : vector<8xf32>
    %48 = vector.multi_reduction <maximumf>, %47, %cst_20 [1] : vector<8x8xf32> to vector<8xf32>
    %49 = vector.shape_cast %48 : vector<8xf32> to vector<8x1xf32>
    %50 = vector.broadcast %49 : vector<8x1xf32> to vector<8x8xf32>
    %51 = arith.subf %47, %50 : vector<8x8xf32>
    %52 = math.exp %51 : vector<8x8xf32>
    %cst_21 = arith.constant dense<0.000000e+00> : vector<8xf32>
    %53 = vector.multi_reduction <add>, %52, %cst_21 [1] : vector<8x8xf32> to vector<8xf32>
    %54 = vector.shape_cast %53 : vector<8xf32> to vector<8x1xf32>
    %55 = tpu.reciprocal %54 {approx = true} : vector<8x1xf32> -> vector<8x1xf32>
    %56 = vector.broadcast %55 : vector<8x1xf32> to vector<8x8xf32>
    %57 = arith.mulf %52, %56 : vector<8x8xf32>
    %58 = vector.extract_strided_slice %39 {offsets = [0, 0], sizes = [8, 8], strides = [1, 1]} : vector<8x32xf32> to vector<8x8xf32>
    %cst_22 = arith.constant dense<0.000000e+00> : vector<8x8xf32>
    %59 = tpu.matmul %57, %58, %cst_22 {dimension_numbers = #tpu.dot_dimension_numbers<[1], [0], [0], [1], [0, 0, 1, 1], [], []>} : vector<8x8xf32>, vector<8x8xf32>, vector<8x8xf32> -> vector<8x8xf32>
    %60 = vector.extract_strided_slice %37 {offsets = [0, 8], sizes = [8, 8], strides = [1, 1]} : vector<8x32xf32> to vector<8x8xf32>
    %61 = vector.extract_strided_slice %38 {offsets = [0, 8], sizes = [8, 8], strides = [1, 1]} : vector<8x32xf32> to vector<8x8xf32>
    %62 = tpu.transpose %61, [1, 0] : vector<8x8xf32> -> vector<8x8xf32>
    %cst_23 = arith.constant dense<0.000000e+00> : vector<8x8xf32>
    %63 = tpu.matmul %60, %62, %cst_23 {dimension_numbers = #tpu.dot_dimension_numbers<[1], [0], [0], [1], [0, 0, 1, 1], [], []>} : vector<8x8xf32>, vector<8x8xf32>, vector<8x8xf32> -> vector<8x8xf32>
    %cst_24 = arith.constant 0.353553385 : f32
    %64 = vector.broadcast %cst_24 : f32 to vector<8x8xf32>
    %65 = arith.mulf %63, %64 : vector<8x8xf32>
    %66 = arith.addf %65, %40 : vector<8x8xf32>
    %cst_25 = arith.constant dense<0xFF800000> : vector<8xf32>
    %67 = vector.multi_reduction <maximumf>, %66, %cst_25 [1] : vector<8x8xf32> to vector<8xf32>
    %68 = vector.shape_cast %67 : vector<8xf32> to vector<8x1xf32>
    %69 = vector.broadcast %68 : vector<8x1xf32> to vector<8x8xf32>
    %70 = arith.subf %66, %69 : vector<8x8xf32>
    %71 = math.exp %70 : vector<8x8xf32>
    %cst_26 = arith.constant dense<0.000000e+00> : vector<8xf32>
    %72 = vector.multi_reduction <add>, %71, %cst_26 [1] : vector<8x8xf32> to vector<8xf32>
    %73 = vector.shape_cast %72 : vector<8xf32> to vector<8x1xf32>
    %74 = tpu.reciprocal %73 {approx = true} : vector<8x1xf32> -> vector<8x1xf32>
    %75 = vector.broadcast %74 : vector<8x1xf32> to vector<8x8xf32>
    %76 = arith.mulf %71, %75 : vector<8x8xf32>
    %77 = vector.extract_strided_slice %39 {offsets = [0, 8], sizes = [8, 8], strides = [1, 1]} : vector<8x32xf32> to vector<8x8xf32>
    %cst_27 = arith.constant dense<0.000000e+00> : vector<8x8xf32>
    %78 = tpu.matmul %76, %77, %cst_27 {dimension_numbers = #tpu.dot_dimension_numbers<[1], [0], [0], [1], [0, 0, 1, 1], [], []>} : vector<8x8xf32>, vector<8x8xf32>, vector<8x8xf32> -> vector<8x8xf32>
    %79 = vector.extract_strided_slice %37 {offsets = [0, 16], sizes = [8, 8], strides = [1, 1]} : vector<8x32xf32> to vector<8x8xf32>
    %80 = vector.extract_strided_slice %38 {offsets = [0, 16], sizes = [8, 8], strides = [1, 1]} : vector<8x32xf32> to vector<8x8xf32>
    %81 = tpu.transpose %80, [1, 0] : vector<8x8xf32> -> vector<8x8xf32>
    %cst_28 = arith.constant dense<0.000000e+00> : vector<8x8xf32>
    %82 = tpu.matmul %79, %81, %cst_28 {dimension_numbers = #tpu.dot_dimension_numbers<[1], [0], [0], [1], [0, 0, 1, 1], [], []>} : vector<8x8xf32>, vector<8x8xf32>, vector<8x8xf32> -> vector<8x8xf32>
    %cst_29 = arith.constant 0.353553385 : f32
    %83 = vector.broadcast %cst_29 : f32 to vector<8x8xf32>
    %84 = arith.mulf %82, %83 : vector<8x8xf32>
    %85 = arith.addf %84, %40 : vector<8x8xf32>
    %cst_30 = arith.constant dense<0xFF800000> : vector<8xf32>
    %86 = vector.multi_reduction <maximumf>, %85, %cst_30 [1] : vector<8x8xf32> to vector<8xf32>
    %87 = vector.shape_cast %86 : vector<8xf32> to vector<8x1xf32>
    %88 = vector.broadcast %87 : vector<8x1xf32> to vector<8x8xf32>
    %89 = arith.subf %85, %88 : vector<8x8xf32>
    %90 = math.exp %89 : vector<8x8xf32>
    %cst_31 = arith.constant dense<0.000000e+00> : vector<8xf32>
    %91 = vector.multi_reduction <add>, %90, %cst_31 [1] : vector<8x8xf32> to vector<8xf32>
    %92 = vector.shape_cast %91 : vector<8xf32> to vector<8x1xf32>
    %93 = tpu.reciprocal %92 {approx = true} : vector<8x1xf32> -> vector<8x1xf32>
    %94 = vector.broadcast %93 : vector<8x1xf32> to vector<8x8xf32>
    %95 = arith.mulf %90, %94 : vector<8x8xf32>
    %96 = vector.extract_strided_slice %39 {offsets = [0, 16], sizes = [8, 8], strides = [1, 1]} : vector<8x32xf32> to vector<8x8xf32>
    %cst_32 = arith.constant dense<0.000000e+00> : vector<8x8xf32>
    %97 = tpu.matmul %95, %96, %cst_32 {dimension_numbers = #tpu.dot_dimension_numbers<[1], [0], [0], [1], [0, 0, 1, 1], [], []>} : vector<8x8xf32>, vector<8x8xf32>, vector<8x8xf32> -> vector<8x8xf32>
    %98 = vector.extract_strided_slice %37 {offsets = [0, 24], sizes = [8, 8], strides = [1, 1]} : vector<8x32xf32> to vector<8x8xf32>
    %99 = vector.extract_strided_slice %38 {offsets = [0, 24], sizes = [8, 8], strides = [1, 1]} : vector<8x32xf32> to vector<8x8xf32>
    %100 = tpu.transpose %99, [1, 0] : vector<8x8xf32> -> vector<8x8xf32>
    %cst_33 = arith.constant dense<0.000000e+00> : vector<8x8xf32>
    %101 = tpu.matmul %98, %100, %cst_33 {dimension_numbers = #tpu.dot_dimension_numbers<[1], [0], [0], [1], [0, 0, 1, 1], [], []>} : vector<8x8xf32>, vector<8x8xf32>, vector<8x8xf32> -> vector<8x8xf32>
    %cst_34 = arith.constant 0.353553385 : f32
    %102 = vector.broadcast %cst_34 : f32 to vector<8x8xf32>
    %103 = arith.mulf %101, %102 : vector<8x8xf32>
    %104 = arith.addf %103, %40 : vector<8x8xf32>
    %cst_35 = arith.constant dense<0xFF800000> : vector<8xf32>
    %105 = vector.multi_reduction <maximumf>, %104, %cst_35 [1] : vector<8x8xf32> to vector<8xf32>
    %106 = vector.shape_cast %105 : vector<8xf32> to vector<8x1xf32>
    %107 = vector.broadcast %106 : vector<8x1xf32> to vector<8x8xf32>
    %108 = arith.subf %104, %107 : vector<8x8xf32>
    %109 = math.exp %108 : vector<8x8xf32>
    %cst_36 = arith.constant dense<0.000000e+00> : vector<8xf32>
    %110 = vector.multi_reduction <add>, %109, %cst_36 [1] : vector<8x8xf32> to vector<8xf32>
    %111 = vector.shape_cast %110 : vector<8xf32> to vector<8x1xf32>
    %112 = tpu.reciprocal %111 {approx = true} : vector<8x1xf32> -> vector<8x1xf32>
    %113 = vector.broadcast %112 : vector<8x1xf32> to vector<8x8xf32>
    %114 = arith.mulf %109, %113 : vector<8x8xf32>
    %115 = vector.extract_strided_slice %39 {offsets = [0, 24], sizes = [8, 8], strides = [1, 1]} : vector<8x32xf32> to vector<8x8xf32>
    %cst_37 = arith.constant dense<0.000000e+00> : vector<8x8xf32>
    %116 = tpu.matmul %114, %115, %cst_37 {dimension_numbers = #tpu.dot_dimension_numbers<[1], [0], [0], [1], [0, 0, 1, 1], [], []>} : vector<8x8xf32>, vector<8x8xf32>, vector<8x8xf32> -> vector<8x8xf32>
    %117 = tpu.concatenate %59, %78, %97, %116 in 1 : vector<8x8xf32>, vector<8x8xf32>, vector<8x8xf32>, vector<8x8xf32> -> vector<8x32xf32>
    %118 = vector.extract_strided_slice %33 {offsets = [8, 0], sizes = [8, 32], strides = [1, 1]} : vector<16x32xf32> to vector<8x32xf32>
    %119 = vector.extract_strided_slice %34 {offsets = [8, 0], sizes = [8, 32], strides = [1, 1]} : vector<16x32xf32> to vector<8x32xf32>
    %120 = vector.extract_strided_slice %35 {offsets = [8, 0], sizes = [8, 32], strides = [1, 1]} : vector<16x32xf32> to vector<8x32xf32>
    %121 = vector.extract_strided_slice %36 {offsets = [8, 0], sizes = [8, 8], strides = [1, 1]} : vector<16x8xf32> to vector<8x8xf32>
    %122 = vector.extract_strided_slice %118 {offsets = [0, 0], sizes = [8, 8], strides = [1, 1]} : vector<8x32xf32> to vector<8x8xf32>
    %123 = vector.extract_strided_slice %119 {offsets = [0, 0], sizes = [8, 8], strides = [1, 1]} : vector<8x32xf32> to vector<8x8xf32>
    %124 = tpu.transpose %123, [1, 0] : vector<8x8xf32> -> vector<8x8xf32>
    %cst_38 = arith.constant dense<0.000000e+00> : vector<8x8xf32>
    %125 = tpu.matmul %122, %124, %cst_38 {dimension_numbers = #tpu.dot_dimension_numbers<[1], [0], [0], [1], [0, 0, 1, 1], [], []>} : vector<8x8xf32>, vector<8x8xf32>, vector<8x8xf32> -> vector<8x8xf32>
    %cst_39 = arith.constant 0.353553385 : f32
    %126 = vector.broadcast %cst_39 : f32 to vector<8x8xf32>
    %127 = arith.mulf %125, %126 : vector<8x8xf32>
    %128 = arith.addf %127, %121 : vector<8x8xf32>
    %cst_40 = arith.constant dense<0xFF800000> : vector<8xf32>
    %129 = vector.multi_reduction <maximumf>, %128, %cst_40 [1] : vector<8x8xf32> to vector<8xf32>
    %130 = vector.shape_cast %129 : vector<8xf32> to vector<8x1xf32>
    %131 = vector.broadcast %130 : vector<8x1xf32> to vector<8x8xf32>
    %132 = arith.subf %128, %131 : vector<8x8xf32>
    %133 = math.exp %132 : vector<8x8xf32>
    %cst_41 = arith.constant dense<0.000000e+00> : vector<8xf32>
    %134 = vector.multi_reduction <add>, %133, %cst_41 [1] : vector<8x8xf32> to vector<8xf32>
    %135 = vector.shape_cast %134 : vector<8xf32> to vector<8x1xf32>
    %136 = tpu.reciprocal %135 {approx = true} : vector<8x1xf32> -> vector<8x1xf32>
    %137 = vector.broadcast %136 : vector<8x1xf32> to vector<8x8xf32>
    %138 = arith.mulf %133, %137 : vector<8x8xf32>
    %139 = vector.extract_strided_slice %120 {offsets = [0, 0], sizes = [8, 8], strides = [1, 1]} : vector<8x32xf32> to vector<8x8xf32>
    %cst_42 = arith.constant dense<0.000000e+00> : vector<8x8xf32>
    %140 = tpu.matmul %138, %139, %cst_42 {dimension_numbers = #tpu.dot_dimension_numbers<[1], [0], [0], [1], [0, 0, 1, 1], [], []>} : vector<8x8xf32>, vector<8x8xf32>, vector<8x8xf32> -> vector<8x8xf32>
    %141 = vector.extract_strided_slice %118 {offsets = [0, 8], sizes = [8, 8], strides = [1, 1]} : vector<8x32xf32> to vector<8x8xf32>
    %142 = vector.extract_strided_slice %119 {offsets = [0, 8], sizes = [8, 8], strides = [1, 1]} : vector<8x32xf32> to vector<8x8xf32>
    %143 = tpu.transpose %142, [1, 0] : vector<8x8xf32> -> vector<8x8xf32>
    %cst_43 = arith.constant dense<0.000000e+00> : vector<8x8xf32>
    %144 = tpu.matmul %141, %143, %cst_43 {dimension_numbers = #tpu.dot_dimension_numbers<[1], [0], [0], [1], [0, 0, 1, 1], [], []>} : vector<8x8xf32>, vector<8x8xf32>, vector<8x8xf32> -> vector<8x8xf32>
    %cst_44 = arith.constant 0.353553385 : f32
    %145 = vector.broadcast %cst_44 : f32 to vector<8x8xf32>
    %146 = arith.mulf %144, %145 : vector<8x8xf32>
    %147 = arith.addf %146, %121 : vector<8x8xf32>
    %cst_45 = arith.constant dense<0xFF800000> : vector<8xf32>
    %148 = vector.multi_reduction <maximumf>, %147, %cst_45 [1] : vector<8x8xf32> to vector<8xf32>
    %149 = vector.shape_cast %148 : vector<8xf32> to vector<8x1xf32>
    %150 = vector.broadcast %149 : vector<8x1xf32> to vector<8x8xf32>
    %151 = arith.subf %147, %150 : vector<8x8xf32>
    %152 = math.exp %151 : vector<8x8xf32>
    %cst_46 = arith.constant dense<0.000000e+00> : vector<8xf32>
    %153 = vector.multi_reduction <add>, %152, %cst_46 [1] : vector<8x8xf32> to vector<8xf32>
    %154 = vector.shape_cast %153 : vector<8xf32> to vector<8x1xf32>
    %155 = tpu.reciprocal %154 {approx = true} : vector<8x1xf32> -> vector<8x1xf32>
    %156 = vector.broadcast %155 : vector<8x1xf32> to vector<8x8xf32>
    %157 = arith.mulf %152, %156 : vector<8x8xf32>
    %158 = vector.extract_strided_slice %120 {offsets = [0, 8], sizes = [8, 8], strides = [1, 1]} : vector<8x32xf32> to vector<8x8xf32>
    %cst_47 = arith.constant dense<0.000000e+00> : vector<8x8xf32>
    %159 = tpu.matmul %157, %158, %cst_47 {dimension_numbers = #tpu.dot_dimension_numbers<[1], [0], [0], [1], [0, 0, 1, 1], [], []>} : vector<8x8xf32>, vector<8x8xf32>, vector<8x8xf32> -> vector<8x8xf32>
    %160 = vector.extract_strided_slice %118 {offsets = [0, 16], sizes = [8, 8], strides = [1, 1]} : vector<8x32xf32> to vector<8x8xf32>
    %161 = vector.extract_strided_slice %119 {offsets = [0, 16], sizes = [8, 8], strides = [1, 1]} : vector<8x32xf32> to vector<8x8xf32>
    %162 = tpu.transpose %161, [1, 0] : vector<8x8xf32> -> vector<8x8xf32>
    %cst_48 = arith.constant dense<0.000000e+00> : vector<8x8xf32>
    %163 = tpu.matmul %160, %162, %cst_48 {dimension_numbers = #tpu.dot_dimension_numbers<[1], [0], [0], [1], [0, 0, 1, 1], [], []>} : vector<8x8xf32>, vector<8x8xf32>, vector<8x8xf32> -> vector<8x8xf32>
    %cst_49 = arith.constant 0.353553385 : f32
    %164 = vector.broadcast %cst_49 : f32 to vector<8x8xf32>
    %165 = arith.mulf %163, %164 : vector<8x8xf32>
    %166 = arith.addf %165, %121 : vector<8x8xf32>
    %cst_50 = arith.constant dense<0xFF800000> : vector<8xf32>
    %167 = vector.multi_reduction <maximumf>, %166, %cst_50 [1] : vector<8x8xf32> to vector<8xf32>
    %168 = vector.shape_cast %167 : vector<8xf32> to vector<8x1xf32>
    %169 = vector.broadcast %168 : vector<8x1xf32> to vector<8x8xf32>
    %170 = arith.subf %166, %169 : vector<8x8xf32>
    %171 = math.exp %170 : vector<8x8xf32>
    %cst_51 = arith.constant dense<0.000000e+00> : vector<8xf32>
    %172 = vector.multi_reduction <add>, %171, %cst_51 [1] : vector<8x8xf32> to vector<8xf32>
    %173 = vector.shape_cast %172 : vector<8xf32> to vector<8x1xf32>
    %174 = tpu.reciprocal %173 {approx = true} : vector<8x1xf32> -> vector<8x1xf32>
    %175 = vector.broadcast %174 : vector<8x1xf32> to vector<8x8xf32>
    %176 = arith.mulf %171, %175 : vector<8x8xf32>
    %177 = vector.extract_strided_slice %120 {offsets = [0, 16], sizes = [8, 8], strides = [1, 1]} : vector<8x32xf32> to vector<8x8xf32>
    %cst_52 = arith.constant dense<0.000000e+00> : vector<8x8xf32>
    %178 = tpu.matmul %176, %177, %cst_52 {dimension_numbers = #tpu.dot_dimension_numbers<[1], [0], [0], [1], [0, 0, 1, 1], [], []>} : vector<8x8xf32>, vector<8x8xf32>, vector<8x8xf32> -> vector<8x8xf32>
    %179 = vector.extract_strided_slice %118 {offsets = [0, 24], sizes = [8, 8], strides = [1, 1]} : vector<8x32xf32> to vector<8x8xf32>
    %180 = vector.extract_strided_slice %119 {offsets = [0, 24], sizes = [8, 8], strides = [1, 1]} : vector<8x32xf32> to vector<8x8xf32>
    %181 = tpu.transpose %180, [1, 0] : vector<8x8xf32> -> vector<8x8xf32>
    %cst_53 = arith.constant dense<0.000000e+00> : vector<8x8xf32>
    %182 = tpu.matmul %179, %181, %cst_53 {dimension_numbers = #tpu.dot_dimension_numbers<[1], [0], [0], [1], [0, 0, 1, 1], [], []>} : vector<8x8xf32>, vector<8x8xf32>, vector<8x8xf32> -> vector<8x8xf32>
    %cst_54 = arith.constant 0.353553385 : f32
    %183 = vector.broadcast %cst_54 : f32 to vector<8x8xf32>
    %184 = arith.mulf %182, %183 : vector<8x8xf32>
    %185 = arith.addf %184, %121 : vector<8x8xf32>
    %cst_55 = arith.constant dense<0xFF800000> : vector<8xf32>
    %186 = vector.multi_reduction <maximumf>, %185, %cst_55 [1] : vector<8x8xf32> to vector<8xf32>
    %187 = vector.shape_cast %186 : vector<8xf32> to vector<8x1xf32>
    %188 = vector.broadcast %187 : vector<8x1xf32> to vector<8x8xf32>
    %189 = arith.subf %185, %188 : vector<8x8xf32>
    %190 = math.exp %189 : vector<8x8xf32>
    %cst_56 = arith.constant dense<0.000000e+00> : vector<8xf32>
    %191 = vector.multi_reduction <add>, %190, %cst_56 [1] : vector<8x8xf32> to vector<8xf32>
    %192 = vector.shape_cast %191 : vector<8xf32> to vector<8x1xf32>
    %193 = tpu.reciprocal %192 {approx = true} : vector<8x1xf32> -> vector<8x1xf32>
    %194 = vector.broadcast %193 : vector<8x1xf32> to vector<8x8xf32>
    %195 = arith.mulf %190, %194 : vector<8x8xf32>
    %196 = vector.extract_strided_slice %120 {offsets = [0, 24], sizes = [8, 8], strides = [1, 1]} : vector<8x32xf32> to vector<8x8xf32>
    %cst_57 = arith.constant dense<0.000000e+00> : vector<8x8xf32>
    %197 = tpu.matmul %195, %196, %cst_57 {dimension_numbers = #tpu.dot_dimension_numbers<[1], [0], [0], [1], [0, 0, 1, 1], [], []>} : vector<8x8xf32>, vector<8x8xf32>, vector<8x8xf32> -> vector<8x8xf32>
    %198 = tpu.concatenate %140, %159, %178, %197 in 1 : vector<8x8xf32>, vector<8x8xf32>, vector<8x8xf32>, vector<8x8xf32> -> vector<8x32xf32>
    %199 = tpu.concatenate %117, %198 in 0 : vector<8x32xf32>, vector<8x32xf32> -> vector<16x32xf32>
    %c0_58 = arith.constant 0 : index
    %c0_59 = arith.constant 0 : index
    %c0_60 = arith.constant 0 : index
    %200 = vector.load %arg8[%c0_58, %c0_59, %c0_60] : memref<1x32x32xf32, #tpu.memory_space<vmem>>, vector<1x32x32xf32>
    %201 = vector.shape_cast %200 : vector<1x32x32xf32> to vector<32x32xf32>
    %cst_61 = arith.constant dense<0.000000e+00> : vector<16x32xf32>
    %202 = tpu.matmul %199, %201, %cst_61 {dimension_numbers = #tpu.dot_dimension_numbers<[1], [0], [0], [1], [0, 0, 1, 1], [], []>} : vector<16x32xf32>, vector<32x32xf32>, vector<16x32xf32> -> vector<16x32xf32>
    %203 = arith.addf %3, %202 : vector<16x32xf32>
    %c0_62 = arith.constant 0 : index
    %c0_63 = arith.constant 0 : index
    %c0_64 = arith.constant 0 : index
    %204 = vector.load %arg9[%c0_62, %c0_63, %c0_64] : memref<1x1x32xf32, #tpu.memory_space<vmem>>, vector<1x1x32xf32>
    %205 = vector.shape_cast %204 : vector<1x1x32xf32> to vector<1x32xf32>
    %c0_65 = arith.constant 0 : index
    %c0_66 = arith.constant 0 : index
    %c0_67 = arith.constant 0 : index
    %206 = vector.load %arg10[%c0_65, %c0_66, %c0_67] : memref<1x1x32xf32, #tpu.memory_space<vmem>>, vector<1x1x32xf32>
    %207 = vector.shape_cast %206 : vector<1x1x32xf32> to vector<1x32xf32>
    %cst_68 = arith.constant dense<0.000000e+00> : vector<16xf32>
    %208 = vector.multi_reduction <add>, %203, %cst_68 [1] : vector<16x32xf32> to vector<16xf32>
    %209 = vector.shape_cast %208 : vector<16xf32> to vector<16x1xf32>
    %cst_69 = arith.constant 3.200000e+01 : f32
    %210 = vector.broadcast %cst_69 : f32 to vector<16x1xf32>
    %211 = arith.divf %209, %210 : vector<16x1xf32>
    %212 = vector.broadcast %211 : vector<16x1xf32> to vector<16x32xf32>
    %213 = arith.subf %203, %212 : vector<16x32xf32>
    %214 = arith.mulf %213, %213 : vector<16x32xf32>
    %cst_70 = arith.constant dense<0.000000e+00> : vector<16xf32>
    %215 = vector.multi_reduction <add>, %214, %cst_70 [1] : vector<16x32xf32> to vector<16xf32>
    %216 = vector.shape_cast %215 : vector<16xf32> to vector<16x1xf32>
    %cst_71 = arith.constant 0.0322580636 : f32
    %217 = vector.broadcast %cst_71 : f32 to vector<16x1xf32>
    %218 = arith.mulf %216, %217 : vector<16x1xf32>
    %219 = math.sqrt %218 : vector<16x1xf32>
    %220 = vector.broadcast %211 : vector<16x1xf32> to vector<16x32xf32>
    %221 = arith.subf %203, %220 : vector<16x32xf32>
    %222 = vector.broadcast %205 : vector<1x32xf32> to vector<16x32xf32>
    %223 = arith.mulf %222, %221 : vector<16x32xf32>
    %cst_72 = arith.constant 9.99999997E-7 : f32
    %224 = vector.broadcast %cst_72 : f32 to vector<16x1xf32>
    %225 = arith.addf %219, %224 : vector<16x1xf32>
    %226 = vector.broadcast %225 : vector<16x1xf32> to vector<16x32xf32>
    %227 = arith.divf %223, %226 : vector<16x32xf32>
    %228 = vector.broadcast %207 : vector<1x32xf32> to vector<16x32xf32>
    %229 = arith.addf %227, %228 : vector<16x32xf32>
    %c0_73 = arith.constant 0 : index
    %c0_74 = arith.constant 0 : index
    %c0_75 = arith.constant 0 : index
    %230 = vector.load %arg11[%c0_73, %c0_74, %c0_75] : memref<1x32x32xf32, #tpu.memory_space<vmem>>, vector<1x32x32xf32>
    %231 = vector.shape_cast %230 : vector<1x32x32xf32> to vector<32x32xf32>
    %cst_76 = arith.constant dense<0.000000e+00> : vector<16x32xf32>
    %232 = tpu.matmul %229, %231, %cst_76 {dimension_numbers = #tpu.dot_dimension_numbers<[1], [0], [0], [1], [0, 0, 1, 1], [], []>} : vector<16x32xf32>, vector<32x32xf32>, vector<16x32xf32> -> vector<16x32xf32>
    %c0_77 = arith.constant 0 : index
    %c0_78 = arith.constant 0 : index
    %233 = vector.load %arg2[%c0_77, %c0_78] : memref<16x32xf32, #tpu.memory_space<vmem>>, vector<16x32xf32>
    %c0_79 = arith.constant 0 : index
    %c0_80 = arith.constant 0 : index
    %c0_81 = arith.constant 0 : index
    %234 = vector.load %arg12[%c0_79, %c0_80, %c0_81] : memref<1x32x64xf32, #tpu.memory_space<vmem>>, vector<1x32x64xf32>
    %235 = vector.shape_cast %234 : vector<1x32x64xf32> to vector<32x64xf32>
    %cst_82 = arith.constant dense<0.000000e+00> : vector<16x64xf32>
    %236 = tpu.matmul %233, %235, %cst_82 {dimension_numbers = #tpu.dot_dimension_numbers<[1], [0], [0], [1], [0, 0, 1, 1], [], []>} : vector<16x32xf32>, vector<32x64xf32>, vector<16x64xf32> -> vector<16x64xf32>
    %237 = vector.extract_strided_slice %236 {offsets = [0, 0], sizes = [16, 32], strides = [1, 1]} : vector<16x64xf32> to vector<16x32xf32>
    %238 = vector.extract_strided_slice %236 {offsets = [0, 32], sizes = [16, 32], strides = [1, 1]} : vector<16x64xf32> to vector<16x32xf32>
    %c0_83 = arith.constant 0 : index
    %c0_84 = arith.constant 0 : index
    %239 = vector.load %arg4[%c0_83, %c0_84] : memref<16x8xf32, #tpu.memory_space<vmem>>, vector<16x8xf32>
    %240 = vector.extract_strided_slice %232 {offsets = [0, 0], sizes = [8, 32], strides = [1, 1]} : vector<16x32xf32> to vector<8x32xf32>
    %241 = vector.extract_strided_slice %237 {offsets = [0, 0], sizes = [8, 32], strides = [1, 1]} : vector<16x32xf32> to vector<8x32xf32>
    %242 = vector.extract_strided_slice %238 {offsets = [0, 0], sizes = [8, 32], strides = [1, 1]} : vector<16x32xf32> to vector<8x32xf32>
    %243 = vector.extract_strided_slice %239 {offsets = [0, 0], sizes = [8, 8], strides = [1, 1]} : vector<16x8xf32> to vector<8x8xf32>
    %244 = vector.extract_strided_slice %240 {offsets = [0, 0], sizes = [8, 8], strides = [1, 1]} : vector<8x32xf32> to vector<8x8xf32>
    %245 = vector.extract_strided_slice %241 {offsets = [0, 0], sizes = [8, 8], strides = [1, 1]} : vector<8x32xf32> to vector<8x8xf32>
    %246 = tpu.transpose %245, [1, 0] : vector<8x8xf32> -> vector<8x8xf32>
    %cst_85 = arith.constant dense<0.000000e+00> : vector<8x8xf32>
    %247 = tpu.matmul %244, %246, %cst_85 {dimension_numbers = #tpu.dot_dimension_numbers<[1], [0], [0], [1], [0, 0, 1, 1], [], []>} : vector<8x8xf32>, vector<8x8xf32>, vector<8x8xf32> -> vector<8x8xf32>
    %cst_86 = arith.constant 0.353553385 : f32
    %248 = vector.broadcast %cst_86 : f32 to vector<8x8xf32>
    %249 = arith.mulf %247, %248 : vector<8x8xf32>
    %250 = arith.addf %249, %243 : vector<8x8xf32>
    %cst_87 = arith.constant dense<0xFF800000> : vector<8xf32>
    %251 = vector.multi_reduction <maximumf>, %250, %cst_87 [1] : vector<8x8xf32> to vector<8xf32>
    %252 = vector.shape_cast %251 : vector<8xf32> to vector<8x1xf32>
    %253 = vector.broadcast %252 : vector<8x1xf32> to vector<8x8xf32>
    %254 = arith.subf %250, %253 : vector<8x8xf32>
    %255 = math.exp %254 : vector<8x8xf32>
    %cst_88 = arith.constant dense<0.000000e+00> : vector<8xf32>
    %256 = vector.multi_reduction <add>, %255, %cst_88 [1] : vector<8x8xf32> to vector<8xf32>
    %257 = vector.shape_cast %256 : vector<8xf32> to vector<8x1xf32>
    %258 = tpu.reciprocal %257 {approx = true} : vector<8x1xf32> -> vector<8x1xf32>
    %259 = vector.broadcast %258 : vector<8x1xf32> to vector<8x8xf32>
    %260 = arith.mulf %255, %259 : vector<8x8xf32>
    %261 = vector.extract_strided_slice %242 {offsets = [0, 0], sizes = [8, 8], strides = [1, 1]} : vector<8x32xf32> to vector<8x8xf32>
    %cst_89 = arith.constant dense<0.000000e+00> : vector<8x8xf32>
    %262 = tpu.matmul %260, %261, %cst_89 {dimension_numbers = #tpu.dot_dimension_numbers<[1], [0], [0], [1], [0, 0, 1, 1], [], []>} : vector<8x8xf32>, vector<8x8xf32>, vector<8x8xf32> -> vector<8x8xf32>
    %263 = vector.extract_strided_slice %240 {offsets = [0, 8], sizes = [8, 8], strides = [1, 1]} : vector<8x32xf32> to vector<8x8xf32>
    %264 = vector.extract_strided_slice %241 {offsets = [0, 8], sizes = [8, 8], strides = [1, 1]} : vector<8x32xf32> to vector<8x8xf32>
    %265 = tpu.transpose %264, [1, 0] : vector<8x8xf32> -> vector<8x8xf32>
    %cst_90 = arith.constant dense<0.000000e+00> : vector<8x8xf32>
    %266 = tpu.matmul %263, %265, %cst_90 {dimension_numbers = #tpu.dot_dimension_numbers<[1], [0], [0], [1], [0, 0, 1, 1], [], []>} : vector<8x8xf32>, vector<8x8xf32>, vector<8x8xf32> -> vector<8x8xf32>
    %cst_91 = arith.constant 0.353553385 : f32
    %267 = vector.broadcast %cst_91 : f32 to vector<8x8xf32>
    %268 = arith.mulf %266, %267 : vector<8x8xf32>
    %269 = arith.addf %268, %243 : vector<8x8xf32>
    %cst_92 = arith.constant dense<0xFF800000> : vector<8xf32>
    %270 = vector.multi_reduction <maximumf>, %269, %cst_92 [1] : vector<8x8xf32> to vector<8xf32>
    %271 = vector.shape_cast %270 : vector<8xf32> to vector<8x1xf32>
    %272 = vector.broadcast %271 : vector<8x1xf32> to vector<8x8xf32>
    %273 = arith.subf %269, %272 : vector<8x8xf32>
    %274 = math.exp %273 : vector<8x8xf32>
    %cst_93 = arith.constant dense<0.000000e+00> : vector<8xf32>
    %275 = vector.multi_reduction <add>, %274, %cst_93 [1] : vector<8x8xf32> to vector<8xf32>
    %276 = vector.shape_cast %275 : vector<8xf32> to vector<8x1xf32>
    %277 = tpu.reciprocal %276 {approx = true} : vector<8x1xf32> -> vector<8x1xf32>
    %278 = vector.broadcast %277 : vector<8x1xf32> to vector<8x8xf32>
    %279 = arith.mulf %274, %278 : vector<8x8xf32>
    %280 = vector.extract_strided_slice %242 {offsets = [0, 8], sizes = [8, 8], strides = [1, 1]} : vector<8x32xf32> to vector<8x8xf32>
    %cst_94 = arith.constant dense<0.000000e+00> : vector<8x8xf32>
    %281 = tpu.matmul %279, %280, %cst_94 {dimension_numbers = #tpu.dot_dimension_numbers<[1], [0], [0], [1], [0, 0, 1, 1], [], []>} : vector<8x8xf32>, vector<8x8xf32>, vector<8x8xf32> -> vector<8x8xf32>
    %282 = vector.extract_strided_slice %240 {offsets = [0, 16], sizes = [8, 8], strides = [1, 1]} : vector<8x32xf32> to vector<8x8xf32>
    %283 = vector.extract_strided_slice %241 {offsets = [0, 16], sizes = [8, 8], strides = [1, 1]} : vector<8x32xf32> to vector<8x8xf32>
    %284 = tpu.transpose %283, [1, 0] : vector<8x8xf32> -> vector<8x8xf32>
    %cst_95 = arith.constant dense<0.000000e+00> : vector<8x8xf32>
    %285 = tpu.matmul %282, %284, %cst_95 {dimension_numbers = #tpu.dot_dimension_numbers<[1], [0], [0], [1], [0, 0, 1, 1], [], []>} : vector<8x8xf32>, vector<8x8xf32>, vector<8x8xf32> -> vector<8x8xf32>
    %cst_96 = arith.constant 0.353553385 : f32
    %286 = vector.broadcast %cst_96 : f32 to vector<8x8xf32>
    %287 = arith.mulf %285, %286 : vector<8x8xf32>
    %288 = arith.addf %287, %243 : vector<8x8xf32>
    %cst_97 = arith.constant dense<0xFF800000> : vector<8xf32>
    %289 = vector.multi_reduction <maximumf>, %288, %cst_97 [1] : vector<8x8xf32> to vector<8xf32>
    %290 = vector.shape_cast %289 : vector<8xf32> to vector<8x1xf32>
    %291 = vector.broadcast %290 : vector<8x1xf32> to vector<8x8xf32>
    %292 = arith.subf %288, %291 : vector<8x8xf32>
    %293 = math.exp %292 : vector<8x8xf32>
    %cst_98 = arith.constant dense<0.000000e+00> : vector<8xf32>
    %294 = vector.multi_reduction <add>, %293, %cst_98 [1] : vector<8x8xf32> to vector<8xf32>
    %295 = vector.shape_cast %294 : vector<8xf32> to vector<8x1xf32>
    %296 = tpu.reciprocal %295 {approx = true} : vector<8x1xf32> -> vector<8x1xf32>
    %297 = vector.broadcast %296 : vector<8x1xf32> to vector<8x8xf32>
    %298 = arith.mulf %293, %297 : vector<8x8xf32>
    %299 = vector.extract_strided_slice %242 {offsets = [0, 16], sizes = [8, 8], strides = [1, 1]} : vector<8x32xf32> to vector<8x8xf32>
    %cst_99 = arith.constant dense<0.000000e+00> : vector<8x8xf32>
    %300 = tpu.matmul %298, %299, %cst_99 {dimension_numbers = #tpu.dot_dimension_numbers<[1], [0], [0], [1], [0, 0, 1, 1], [], []>} : vector<8x8xf32>, vector<8x8xf32>, vector<8x8xf32> -> vector<8x8xf32>
    %301 = vector.extract_strided_slice %240 {offsets = [0, 24], sizes = [8, 8], strides = [1, 1]} : vector<8x32xf32> to vector<8x8xf32>
    %302 = vector.extract_strided_slice %241 {offsets = [0, 24], sizes = [8, 8], strides = [1, 1]} : vector<8x32xf32> to vector<8x8xf32>
    %303 = tpu.transpose %302, [1, 0] : vector<8x8xf32> -> vector<8x8xf32>
    %cst_100 = arith.constant dense<0.000000e+00> : vector<8x8xf32>
    %304 = tpu.matmul %301, %303, %cst_100 {dimension_numbers = #tpu.dot_dimension_numbers<[1], [0], [0], [1], [0, 0, 1, 1], [], []>} : vector<8x8xf32>, vector<8x8xf32>, vector<8x8xf32> -> vector<8x8xf32>
    %cst_101 = arith.constant 0.353553385 : f32
    %305 = vector.broadcast %cst_101 : f32 to vector<8x8xf32>
    %306 = arith.mulf %304, %305 : vector<8x8xf32>
    %307 = arith.addf %306, %243 : vector<8x8xf32>
    %cst_102 = arith.constant dense<0xFF800000> : vector<8xf32>
    %308 = vector.multi_reduction <maximumf>, %307, %cst_102 [1] : vector<8x8xf32> to vector<8xf32>
    %309 = vector.shape_cast %308 : vector<8xf32> to vector<8x1xf32>
    %310 = vector.broadcast %309 : vector<8x1xf32> to vector<8x8xf32>
    %311 = arith.subf %307, %310 : vector<8x8xf32>
    %312 = math.exp %311 : vector<8x8xf32>
    %cst_103 = arith.constant dense<0.000000e+00> : vector<8xf32>
    %313 = vector.multi_reduction <add>, %312, %cst_103 [1] : vector<8x8xf32> to vector<8xf32>
    %314 = vector.shape_cast %313 : vector<8xf32> to vector<8x1xf32>
    %315 = tpu.reciprocal %314 {approx = true} : vector<8x1xf32> -> vector<8x1xf32>
    %316 = vector.broadcast %315 : vector<8x1xf32> to vector<8x8xf32>
    %317 = arith.mulf %312, %316 : vector<8x8xf32>
    %318 = vector.extract_strided_slice %242 {offsets = [0, 24], sizes = [8, 8], strides = [1, 1]} : vector<8x32xf32> to vector<8x8xf32>
    %cst_104 = arith.constant dense<0.000000e+00> : vector<8x8xf32>
    %319 = tpu.matmul %317, %318, %cst_104 {dimension_numbers = #tpu.dot_dimension_numbers<[1], [0], [0], [1], [0, 0, 1, 1], [], []>} : vector<8x8xf32>, vector<8x8xf32>, vector<8x8xf32> -> vector<8x8xf32>
    %320 = tpu.concatenate %262, %281, %300, %319 in 1 : vector<8x8xf32>, vector<8x8xf32>, vector<8x8xf32>, vector<8x8xf32> -> vector<8x32xf32>
    %321 = vector.extract_strided_slice %232 {offsets = [8, 0], sizes = [8, 32], strides = [1, 1]} : vector<16x32xf32> to vector<8x32xf32>
    %322 = vector.extract_strided_slice %237 {offsets = [8, 0], sizes = [8, 32], strides = [1, 1]} : vector<16x32xf32> to vector<8x32xf32>
    %323 = vector.extract_strided_slice %238 {offsets = [8, 0], sizes = [8, 32], strides = [1, 1]} : vector<16x32xf32> to vector<8x32xf32>
    %324 = vector.extract_strided_slice %239 {offsets = [8, 0], sizes = [8, 8], strides = [1, 1]} : vector<16x8xf32> to vector<8x8xf32>
    %325 = vector.extract_strided_slice %321 {offsets = [0, 0], sizes = [8, 8], strides = [1, 1]} : vector<8x32xf32> to vector<8x8xf32>
    %326 = vector.extract_strided_slice %322 {offsets = [0, 0], sizes = [8, 8], strides = [1, 1]} : vector<8x32xf32> to vector<8x8xf32>
    %327 = tpu.transpose %326, [1, 0] : vector<8x8xf32> -> vector<8x8xf32>
    %cst_105 = arith.constant dense<0.000000e+00> : vector<8x8xf32>
    %328 = tpu.matmul %325, %327, %cst_105 {dimension_numbers = #tpu.dot_dimension_numbers<[1], [0], [0], [1], [0, 0, 1, 1], [], []>} : vector<8x8xf32>, vector<8x8xf32>, vector<8x8xf32> -> vector<8x8xf32>
    %cst_106 = arith.constant 0.353553385 : f32
    %329 = vector.broadcast %cst_106 : f32 to vector<8x8xf32>
    %330 = arith.mulf %328, %329 : vector<8x8xf32>
    %331 = arith.addf %330, %324 : vector<8x8xf32>
    %cst_107 = arith.constant dense<0xFF800000> : vector<8xf32>
    %332 = vector.multi_reduction <maximumf>, %331, %cst_107 [1] : vector<8x8xf32> to vector<8xf32>
    %333 = vector.shape_cast %332 : vector<8xf32> to vector<8x1xf32>
    %334 = vector.broadcast %333 : vector<8x1xf32> to vector<8x8xf32>
    %335 = arith.subf %331, %334 : vector<8x8xf32>
    %336 = math.exp %335 : vector<8x8xf32>
    %cst_108 = arith.constant dense<0.000000e+00> : vector<8xf32>
    %337 = vector.multi_reduction <add>, %336, %cst_108 [1] : vector<8x8xf32> to vector<8xf32>
    %338 = vector.shape_cast %337 : vector<8xf32> to vector<8x1xf32>
    %339 = tpu.reciprocal %338 {approx = true} : vector<8x1xf32> -> vector<8x1xf32>
    %340 = vector.broadcast %339 : vector<8x1xf32> to vector<8x8xf32>
    %341 = arith.mulf %336, %340 : vector<8x8xf32>
    %342 = vector.extract_strided_slice %323 {offsets = [0, 0], sizes = [8, 8], strides = [1, 1]} : vector<8x32xf32> to vector<8x8xf32>
    %cst_109 = arith.constant dense<0.000000e+00> : vector<8x8xf32>
    %343 = tpu.matmul %341, %342, %cst_109 {dimension_numbers = #tpu.dot_dimension_numbers<[1], [0], [0], [1], [0, 0, 1, 1], [], []>} : vector<8x8xf32>, vector<8x8xf32>, vector<8x8xf32> -> vector<8x8xf32>
    %344 = vector.extract_strided_slice %321 {offsets = [0, 8], sizes = [8, 8], strides = [1, 1]} : vector<8x32xf32> to vector<8x8xf32>
    %345 = vector.extract_strided_slice %322 {offsets = [0, 8], sizes = [8, 8], strides = [1, 1]} : vector<8x32xf32> to vector<8x8xf32>
    %346 = tpu.transpose %345, [1, 0] : vector<8x8xf32> -> vector<8x8xf32>
    %cst_110 = arith.constant dense<0.000000e+00> : vector<8x8xf32>
    %347 = tpu.matmul %344, %346, %cst_110 {dimension_numbers = #tpu.dot_dimension_numbers<[1], [0], [0], [1], [0, 0, 1, 1], [], []>} : vector<8x8xf32>, vector<8x8xf32>, vector<8x8xf32> -> vector<8x8xf32>
    %cst_111 = arith.constant 0.353553385 : f32
    %348 = vector.broadcast %cst_111 : f32 to vector<8x8xf32>
    %349 = arith.mulf %347, %348 : vector<8x8xf32>
    %350 = arith.addf %349, %324 : vector<8x8xf32>
    %cst_112 = arith.constant dense<0xFF800000> : vector<8xf32>
    %351 = vector.multi_reduction <maximumf>, %350, %cst_112 [1] : vector<8x8xf32> to vector<8xf32>
    %352 = vector.shape_cast %351 : vector<8xf32> to vector<8x1xf32>
    %353 = vector.broadcast %352 : vector<8x1xf32> to vector<8x8xf32>
    %354 = arith.subf %350, %353 : vector<8x8xf32>
    %355 = math.exp %354 : vector<8x8xf32>
    %cst_113 = arith.constant dense<0.000000e+00> : vector<8xf32>
    %356 = vector.multi_reduction <add>, %355, %cst_113 [1] : vector<8x8xf32> to vector<8xf32>
    %357 = vector.shape_cast %356 : vector<8xf32> to vector<8x1xf32>
    %358 = tpu.reciprocal %357 {approx = true} : vector<8x1xf32> -> vector<8x1xf32>
    %359 = vector.broadcast %358 : vector<8x1xf32> to vector<8x8xf32>
    %360 = arith.mulf %355, %359 : vector<8x8xf32>
    %361 = vector.extract_strided_slice %323 {offsets = [0, 8], sizes = [8, 8], strides = [1, 1]} : vector<8x32xf32> to vector<8x8xf32>
    %cst_114 = arith.constant dense<0.000000e+00> : vector<8x8xf32>
    %362 = tpu.matmul %360, %361, %cst_114 {dimension_numbers = #tpu.dot_dimension_numbers<[1], [0], [0], [1], [0, 0, 1, 1], [], []>} : vector<8x8xf32>, vector<8x8xf32>, vector<8x8xf32> -> vector<8x8xf32>
    %363 = vector.extract_strided_slice %321 {offsets = [0, 16], sizes = [8, 8], strides = [1, 1]} : vector<8x32xf32> to vector<8x8xf32>
    %364 = vector.extract_strided_slice %322 {offsets = [0, 16], sizes = [8, 8], strides = [1, 1]} : vector<8x32xf32> to vector<8x8xf32>
    %365 = tpu.transpose %364, [1, 0] : vector<8x8xf32> -> vector<8x8xf32>
    %cst_115 = arith.constant dense<0.000000e+00> : vector<8x8xf32>
    %366 = tpu.matmul %363, %365, %cst_115 {dimension_numbers = #tpu.dot_dimension_numbers<[1], [0], [0], [1], [0, 0, 1, 1], [], []>} : vector<8x8xf32>, vector<8x8xf32>, vector<8x8xf32> -> vector<8x8xf32>
    %cst_116 = arith.constant 0.353553385 : f32
    %367 = vector.broadcast %cst_116 : f32 to vector<8x8xf32>
    %368 = arith.mulf %366, %367 : vector<8x8xf32>
    %369 = arith.addf %368, %324 : vector<8x8xf32>
    %cst_117 = arith.constant dense<0xFF800000> : vector<8xf32>
    %370 = vector.multi_reduction <maximumf>, %369, %cst_117 [1] : vector<8x8xf32> to vector<8xf32>
    %371 = vector.shape_cast %370 : vector<8xf32> to vector<8x1xf32>
    %372 = vector.broadcast %371 : vector<8x1xf32> to vector<8x8xf32>
    %373 = arith.subf %369, %372 : vector<8x8xf32>
    %374 = math.exp %373 : vector<8x8xf32>
    %cst_118 = arith.constant dense<0.000000e+00> : vector<8xf32>
    %375 = vector.multi_reduction <add>, %374, %cst_118 [1] : vector<8x8xf32> to vector<8xf32>
    %376 = vector.shape_cast %375 : vector<8xf32> to vector<8x1xf32>
    %377 = tpu.reciprocal %376 {approx = true} : vector<8x1xf32> -> vector<8x1xf32>
    %378 = vector.broadcast %377 : vector<8x1xf32> to vector<8x8xf32>
    %379 = arith.mulf %374, %378 : vector<8x8xf32>
    %380 = vector.extract_strided_slice %323 {offsets = [0, 16], sizes = [8, 8], strides = [1, 1]} : vector<8x32xf32> to vector<8x8xf32>
    %cst_119 = arith.constant dense<0.000000e+00> : vector<8x8xf32>
    %381 = tpu.matmul %379, %380, %cst_119 {dimension_numbers = #tpu.dot_dimension_numbers<[1], [0], [0], [1], [0, 0, 1, 1], [], []>} : vector<8x8xf32>, vector<8x8xf32>, vector<8x8xf32> -> vector<8x8xf32>
    %382 = vector.extract_strided_slice %321 {offsets = [0, 24], sizes = [8, 8], strides = [1, 1]} : vector<8x32xf32> to vector<8x8xf32>
    %383 = vector.extract_strided_slice %322 {offsets = [0, 24], sizes = [8, 8], strides = [1, 1]} : vector<8x32xf32> to vector<8x8xf32>
    %384 = tpu.transpose %383, [1, 0] : vector<8x8xf32> -> vector<8x8xf32>
    %cst_120 = arith.constant dense<0.000000e+00> : vector<8x8xf32>
    %385 = tpu.matmul %382, %384, %cst_120 {dimension_numbers = #tpu.dot_dimension_numbers<[1], [0], [0], [1], [0, 0, 1, 1], [], []>} : vector<8x8xf32>, vector<8x8xf32>, vector<8x8xf32> -> vector<8x8xf32>
    %cst_121 = arith.constant 0.353553385 : f32
    %386 = vector.broadcast %cst_121 : f32 to vector<8x8xf32>
    %387 = arith.mulf %385, %386 : vector<8x8xf32>
    %388 = arith.addf %387, %324 : vector<8x8xf32>
    %cst_122 = arith.constant dense<0xFF800000> : vector<8xf32>
    %389 = vector.multi_reduction <maximumf>, %388, %cst_122 [1] : vector<8x8xf32> to vector<8xf32>
    %390 = vector.shape_cast %389 : vector<8xf32> to vector<8x1xf32>
    %391 = vector.broadcast %390 : vector<8x1xf32> to vector<8x8xf32>
    %392 = arith.subf %388, %391 : vector<8x8xf32>
    %393 = math.exp %392 : vector<8x8xf32>
    %cst_123 = arith.constant dense<0.000000e+00> : vector<8xf32>
    %394 = vector.multi_reduction <add>, %393, %cst_123 [1] : vector<8x8xf32> to vector<8xf32>
    %395 = vector.shape_cast %394 : vector<8xf32> to vector<8x1xf32>
    %396 = tpu.reciprocal %395 {approx = true} : vector<8x1xf32> -> vector<8x1xf32>
    %397 = vector.broadcast %396 : vector<8x1xf32> to vector<8x8xf32>
    %398 = arith.mulf %393, %397 : vector<8x8xf32>
    %399 = vector.extract_strided_slice %323 {offsets = [0, 24], sizes = [8, 8], strides = [1, 1]} : vector<8x32xf32> to vector<8x8xf32>
    %cst_124 = arith.constant dense<0.000000e+00> : vector<8x8xf32>
    %400 = tpu.matmul %398, %399, %cst_124 {dimension_numbers = #tpu.dot_dimension_numbers<[1], [0], [0], [1], [0, 0, 1, 1], [], []>} : vector<8x8xf32>, vector<8x8xf32>, vector<8x8xf32> -> vector<8x8xf32>
    %401 = tpu.concatenate %343, %362, %381, %400 in 1 : vector<8x8xf32>, vector<8x8xf32>, vector<8x8xf32>, vector<8x8xf32> -> vector<8x32xf32>
    %402 = tpu.concatenate %320, %401 in 0 : vector<8x32xf32>, vector<8x32xf32> -> vector<16x32xf32>
    %c0_125 = arith.constant 0 : index
    %c0_126 = arith.constant 0 : index
    %c0_127 = arith.constant 0 : index
    %403 = vector.load %arg13[%c0_125, %c0_126, %c0_127] : memref<1x32x32xf32, #tpu.memory_space<vmem>>, vector<1x32x32xf32>
    %404 = vector.shape_cast %403 : vector<1x32x32xf32> to vector<32x32xf32>
    %cst_128 = arith.constant dense<0.000000e+00> : vector<16x32xf32>
    %405 = tpu.matmul %402, %404, %cst_128 {dimension_numbers = #tpu.dot_dimension_numbers<[1], [0], [0], [1], [0, 0, 1, 1], [], []>} : vector<16x32xf32>, vector<32x32xf32>, vector<16x32xf32> -> vector<16x32xf32>
    %406 = arith.addf %203, %405 : vector<16x32xf32>
    %c0_129 = arith.constant 0 : index
    %c0_130 = arith.constant 0 : index
    %c0_131 = arith.constant 0 : index
    %407 = vector.load %arg14[%c0_129, %c0_130, %c0_131] : memref<1x1x32xf32, #tpu.memory_space<vmem>>, vector<1x1x32xf32>
    %408 = vector.shape_cast %407 : vector<1x1x32xf32> to vector<1x32xf32>
    %c0_132 = arith.constant 0 : index
    %c0_133 = arith.constant 0 : index
    %c0_134 = arith.constant 0 : index
    %409 = vector.load %arg15[%c0_132, %c0_133, %c0_134] : memref<1x1x32xf32, #tpu.memory_space<vmem>>, vector<1x1x32xf32>
    %410 = vector.shape_cast %409 : vector<1x1x32xf32> to vector<1x32xf32>
    %cst_135 = arith.constant dense<0.000000e+00> : vector<16xf32>
    %411 = vector.multi_reduction <add>, %406, %cst_135 [1] : vector<16x32xf32> to vector<16xf32>
    %412 = vector.shape_cast %411 : vector<16xf32> to vector<16x1xf32>
    %cst_136 = arith.constant 3.200000e+01 : f32
    %413 = vector.broadcast %cst_136 : f32 to vector<16x1xf32>
    %414 = arith.divf %412, %413 : vector<16x1xf32>
    %415 = vector.broadcast %414 : vector<16x1xf32> to vector<16x32xf32>
    %416 = arith.subf %406, %415 : vector<16x32xf32>
    %417 = arith.mulf %416, %416 : vector<16x32xf32>
    %cst_137 = arith.constant dense<0.000000e+00> : vector<16xf32>
    %418 = vector.multi_reduction <add>, %417, %cst_137 [1] : vector<16x32xf32> to vector<16xf32>
    %419 = vector.shape_cast %418 : vector<16xf32> to vector<16x1xf32>
    %cst_138 = arith.constant 0.0322580636 : f32
    %420 = vector.broadcast %cst_138 : f32 to vector<16x1xf32>
    %421 = arith.mulf %419, %420 : vector<16x1xf32>
    %422 = math.sqrt %421 : vector<16x1xf32>
    %423 = vector.broadcast %414 : vector<16x1xf32> to vector<16x32xf32>
    %424 = arith.subf %406, %423 : vector<16x32xf32>
    %425 = vector.broadcast %408 : vector<1x32xf32> to vector<16x32xf32>
    %426 = arith.mulf %425, %424 : vector<16x32xf32>
    %cst_139 = arith.constant 9.99999997E-7 : f32
    %427 = vector.broadcast %cst_139 : f32 to vector<16x1xf32>
    %428 = arith.addf %422, %427 : vector<16x1xf32>
    %429 = vector.broadcast %428 : vector<16x1xf32> to vector<16x32xf32>
    %430 = arith.divf %426, %429 : vector<16x32xf32>
    %431 = vector.broadcast %410 : vector<1x32xf32> to vector<16x32xf32>
    %432 = arith.addf %430, %431 : vector<16x32xf32>
    %c0_140 = arith.constant 0 : index
    %c0_141 = arith.constant 0 : index
    %c0_142 = arith.constant 0 : index
    %433 = vector.load %arg16[%c0_140, %c0_141, %c0_142] : memref<1x32x64xf32, #tpu.memory_space<vmem>>, vector<1x32x64xf32>
    %434 = vector.shape_cast %433 : vector<1x32x64xf32> to vector<32x64xf32>
    %cst_143 = arith.constant dense<0.000000e+00> : vector<16x64xf32>
    %435 = tpu.matmul %432, %434, %cst_143 {dimension_numbers = #tpu.dot_dimension_numbers<[1], [0], [0], [1], [0, 0, 1, 1], [], []>} : vector<16x32xf32>, vector<32x64xf32>, vector<16x64xf32> -> vector<16x64xf32>
    %c0_144 = arith.constant 0 : index
    %c0_145 = arith.constant 0 : index
    %c0_146 = arith.constant 0 : index
    %436 = vector.load %arg17[%c0_144, %c0_145, %c0_146] : memref<1x1x64xf32, #tpu.memory_space<vmem>>, vector<1x1x64xf32>
    %437 = vector.shape_cast %436 : vector<1x1x64xf32> to vector<1x64xf32>
    %438 = vector.broadcast %437 : vector<1x64xf32> to vector<16x64xf32>
    %439 = arith.addf %435, %438 : vector<16x64xf32>
    %cst_147 = arith.constant 0.000000e+00 : f32
    %440 = vector.broadcast %cst_147 : f32 to vector<16x64xf32>
    %441 = arith.maximumf %439, %440 : vector<16x64xf32>
    %c0_148 = arith.constant 0 : index
    %c0_149 = arith.constant 0 : index
    %c0_150 = arith.constant 0 : index
    %442 = vector.load %arg18[%c0_148, %c0_149, %c0_150] : memref<1x64x32xf32, #tpu.memory_space<vmem>>, vector<1x64x32xf32>
    %443 = vector.shape_cast %442 : vector<1x64x32xf32> to vector<64x32xf32>
    %cst_151 = arith.constant dense<0.000000e+00> : vector<16x32xf32>
    %444 = tpu.matmul %441, %443, %cst_151 {dimension_numbers = #tpu.dot_dimension_numbers<[1], [0], [0], [1], [0, 0, 1, 1], [], []>} : vector<16x64xf32>, vector<64x32xf32>, vector<16x32xf32> -> vector<16x32xf32>
    %445 = arith.addf %406, %444 : vector<16x32xf32>
    %c0_152 = arith.constant 0 : index
    %c0_153 = arith.constant 0 : index
    %c0_154 = arith.constant 0 : index
    %446 = vector.load %arg19[%c0_152, %c0_153, %c0_154] : memref<1x1x32xf32, #tpu.memory_space<vmem>>, vector<1x1x32xf32>
    %447 = vector.shape_cast %446 : vector<1x1x32xf32> to vector<1x32xf32>
    %448 = vector.broadcast %447 : vector<1x32xf32> to vector<16x32xf32>
    %449 = arith.addf %445, %448 : vector<16x32xf32>
    %c0_155 = arith.constant 0 : index
    %c0_156 = arith.constant 0 : index
    %450 = vector.load %arg25[%c0_155, %c0_156] : memref<16x32xf32, #tpu.memory_space<vmem>>, vector<16x32xf32>
    tpu.vector_store %arg25[%c0_155, %c0_156], %449 {strides = array<i32>} : memref<16x32xf32, #tpu.memory_space<vmem>>, vector<16x32xf32>,
    %c1_i32 = arith.constant 1 : i32
    %451 = arith.cmpi eq, %arg0, %c1_i32 : i32
    %452 = arith.extui %451 : i1 to i32
    %c0_i32_157 = arith.constant 0 : i32
    %453 = arith.cmpi ne, %452, %c0_i32_157 : i32
    scf.if %453 {
      %c0_158 = arith.constant 0 : index
      %c0_159 = arith.constant 0 : index
      %454 = vector.load %arg20[%c0_158, %c0_159] : memref<1x32xf32, #tpu.memory_space<vmem>>, vector<1x32xf32>
      %c0_160 = arith.constant 0 : index
      %c0_161 = arith.constant 0 : index
      %455 = vector.load %arg21[%c0_160, %c0_161] : memref<1x32xf32, #tpu.memory_space<vmem>>, vector<1x32xf32>
      %cst_162 = arith.constant dense<0.000000e+00> : vector<16xf32>
      %456 = vector.multi_reduction <add>, %449, %cst_162 [1] : vector<16x32xf32> to vector<16xf32>
      %457 = vector.shape_cast %456 : vector<16xf32> to vector<16x1xf32>
      %cst_163 = arith.constant 3.200000e+01 : f32
      %458 = vector.broadcast %cst_163 : f32 to vector<16x1xf32>
      %459 = arith.divf %457, %458 : vector<16x1xf32>
      %460 = vector.broadcast %459 : vector<16x1xf32> to vector<16x32xf32>
      %461 = arith.subf %449, %460 : vector<16x32xf32>
      %462 = arith.mulf %461, %461 : vector<16x32xf32>
      %cst_164 = arith.constant dense<0.000000e+00> : vector<16xf32>
      %463 = vector.multi_reduction <add>, %462, %cst_164 [1] : vector<16x32xf32> to vector<16xf32>
      %464 = vector.shape_cast %463 : vector<16xf32> to vector<16x1xf32>
      %cst_165 = arith.constant 0.0322580636 : f32
      %465 = vector.broadcast %cst_165 : f32 to vector<16x1xf32>
      %466 = arith.mulf %464, %465 : vector<16x1xf32>
      %467 = math.sqrt %466 : vector<16x1xf32>
      %468 = vector.broadcast %459 : vector<16x1xf32> to vector<16x32xf32>
      %469 = arith.subf %449, %468 : vector<16x32xf32>
      %470 = vector.broadcast %454 : vector<1x32xf32> to vector<16x32xf32>
      %471 = arith.mulf %470, %469 : vector<16x32xf32>
      %cst_166 = arith.constant 9.99999997E-7 : f32
      %472 = vector.broadcast %cst_166 : f32 to vector<16x1xf32>
      %473 = arith.addf %467, %472 : vector<16x1xf32>
      %474 = vector.broadcast %473 : vector<16x1xf32> to vector<16x32xf32>
      %475 = arith.divf %471, %474 : vector<16x32xf32>
      %476 = vector.broadcast %455 : vector<1x32xf32> to vector<16x32xf32>
      %477 = arith.addf %475, %476 : vector<16x32xf32>
      %c0_167 = arith.constant 0 : index
      %c0_168 = arith.constant 0 : index
      %478 = vector.load %arg22[%c0_167, %c0_168] : memref<32x128xf32, #tpu.memory_space<vmem>>, vector<32x128xf32>
      %cst_169 = arith.constant dense<0.000000e+00> : vector<16x128xf32>
      %479 = tpu.matmul %477, %478, %cst_169 {dimension_numbers = #tpu.dot_dimension_numbers<[1], [0], [0], [1], [0, 0, 1, 1], [], []>} : vector<16x32xf32>, vector<32x128xf32>, vector<16x128xf32> -> vector<16x128xf32>
      %c0_170 = arith.constant 0 : index
      %c0_171 = arith.constant 0 : index
      %480 = vector.load %arg23[%c0_170, %c0_171] : memref<1x128xf32, #tpu.memory_space<vmem>>, vector<1x128xf32>
      %481 = vector.broadcast %480 : vector<1x128xf32> to vector<16x128xf32>
      %482 = arith.addf %479, %481 : vector<16x128xf32>
      %cst_172 = arith.constant dense<0xFF800000> : vector<16xf32>
      %483 = vector.multi_reduction <maximumf>, %482, %cst_172 [1] : vector<16x128xf32> to vector<16xf32>
      %484 = vector.shape_cast %483 : vector<16xf32> to vector<16x1xf32>
      %485 = vector.broadcast %484 : vector<16x1xf32> to vector<16x128xf32>
      %486 = arith.subf %482, %485 : vector<16x128xf32>
      %487 = math.exp %486 : vector<16x128xf32>
      %cst_173 = arith.constant dense<0.000000e+00> : vector<16xf32>
      %488 = vector.multi_reduction <add>, %487, %cst_173 [1] : vector<16x128xf32> to vector<16xf32>
      %489 = vector.shape_cast %488 : vector<16xf32> to vector<16x1xf32>
      %490 = math.log %489 : vector<16x1xf32>
      %491 = vector.broadcast %490 : vector<16x1xf32> to vector<16x128xf32>
      %492 = arith.subf %486, %491 : vector<16x128xf32>
      %c0_174 = arith.constant 0 : index
      %c0_175 = arith.constant 0 : index
      %493 = vector.load %arg24[%c0_174, %c0_175] : memref<16x128xf32, #tpu.memory_space<vmem>>, vector<16x128xf32>
      tpu.vector_store %arg24[%c0_174, %c0_175], %492 {strides = array<i32>} : memref<16x128xf32, #tpu.memory_space<vmem>>, vector<16x128xf32>,
    } else {
    }
    return
  }
  func.func @transform_0(%arg0: i32) -> (i32, i32) {
    %c0_i32 = arith.constant 0 : i32
    %c0_i32_0 = arith.constant 0 : i32
    %c0_i32_1 = arith.constant 0 : i32
    return %c0_i32, %c0_i32_0 : i32, i32
  }
  func.func @transform_1(%arg0: i32) -> (i32, i32) {
    %c0_i32 = arith.constant 0 : i32
    %c0_i32_0 = arith.constant 0 : i32
    %c0_i32_1 = arith.constant 0 : i32
    return %c0_i32, %c0_i32_0 : i32, i32
  }
  func.func @transform_2(%arg0: i32) -> (i32, i32) {
    %c0_i32 = arith.constant 0 : i32
    %c0_i32_0 = arith.constant 0 : i32
    %c0_i32_1 = arith.constant 0 : i32
    return %c0_i32, %c0_i32_0 : i32, i32
  }
  func.func @transform_3(%arg0: i32) -> (i32, i32) {
    %c0_i32 = arith.constant 0 : i32
    %c0_i32_0 = arith.constant 0 : i32
    %c0_i32_1 = arith.constant 0 : i32
    return %c0_i32, %c0_i32_0 : i32, i32
  }
  func.func @transform_4(%arg0: i32) -> (i32, i32, i32) {
    %c0_i32 = arith.constant 0 : i32
    %c0_i32_0 = arith.constant 0 : i32
    %c0_i32_1 = arith.constant 0 : i32
    return %arg0, %c0_i32, %c0_i32_0 : i32, i32, i32
  }
  func.func @transform_5(%arg0: i32) -> (i32, i32, i32) {
    %c0_i32 = arith.constant 0 : i32
    %c0_i32_0 = arith.constant 0 : i32
    %c0_i32_1 = arith.constant 0 : i32
    return %arg0, %c0_i32, %c0_i32_0 : i32, i32, i32
  }
  func.func @transform_6(%arg0: i32) -> (i32, i32, i32) {
    %c0_i32 = arith.constant 0 : i32
    %c0_i32_0 = arith.constant 0 : i32
    %c0_i32_1 = arith.constant 0 : i32
    return %arg0, %c0_i32, %c0_i32_0 : i32, i32, i32
  }
  func.func @transform_7(%arg0: i32) -> (i32, i32, i32) {
    %c0_i32 = arith.constant 0 : i32
    %c0_i32_0 = arith.constant 0 : i32
    %c0_i32_1 = arith.constant 0 : i32
    return %arg0, %c0_i32, %c0_i32_0 : i32, i32, i32
  }
  func.func @transform_8(%arg0: i32) -> (i32, i32, i32) {
    %c0_i32 = arith.constant 0 : i32
    %c0_i32_0 = arith.constant 0 : i32
    %c0_i32_1 = arith.constant 0 : i32
    return %arg0, %c0_i32, %c0_i32_0 : i32, i32, i32
  }
  func.func @transform_9(%arg0: i32) -> (i32, i32, i32) {
    %c0_i32 = arith.constant 0 : i32
    %c0_i32_0 = arith.constant 0 : i32
    %c0_i32_1 = arith.constant 0 : i32
    return %arg0, %c0_i32, %c0_i32_0 : i32, i32, i32
  }
  func.func @transform_10(%arg0: i32) -> (i32, i32, i32) {
    %c0_i32 = arith.constant 0 : i32
    %c0_i32_0 = arith.constant 0 : i32
    %c0_i32_1 = arith.constant 0 : i32
    return %arg0, %c0_i32, %c0_i32_0 : i32, i32, i32
  }
  func.func @transform_11(%arg0: i32) -> (i32, i32, i32) {
    %c0_i32 = arith.constant 0 : i32
    %c0_i32_0 = arith.constant 0 : i32
    %c0_i32_1 = arith.constant 0 : i32
    return %arg0, %c0_i32, %c0_i32_0 : i32, i32, i32
  }
  func.func @transform_12(%arg0: i32) -> (i32, i32, i32) {
    %c0_i32 = arith.constant 0 : i32
    %c0_i32_0 = arith.constant 0 : i32
    %c0_i32_1 = arith.constant 0 : i32
    return %arg0, %c0_i32, %c0_i32_0 : i32, i32, i32
  }
  func.func @transform_13(%arg0: i32) -> (i32, i32, i32) {
    %c0_i32 = arith.constant 0 : i32
    %c0_i32_0 = arith.constant 0 : i32
    %c0_i32_1 = arith.constant 0 : i32
    return %arg0, %c0_i32, %c0_i32_0 : i32, i32, i32
  }
  func.func @transform_14(%arg0: i32) -> (i32, i32, i32) {
    %c0_i32 = arith.constant 0 : i32
    %c0_i32_0 = arith.constant 0 : i32
    %c0_i32_1 = arith.constant 0 : i32
    return %arg0, %c0_i32, %c0_i32_0 : i32, i32, i32
  }
  func.func @transform_15(%arg0: i32) -> (i32, i32, i32) {
    %c0_i32 = arith.constant 0 : i32
    %c0_i32_0 = arith.constant 0 : i32
    %c0_i32_1 = arith.constant 0 : i32
    return %arg0, %c0_i32, %c0_i32_0 : i32, i32, i32
  }
  func.func @transform_16(%arg0: i32) -> (i32, i32, i32) {
    %c0_i32 = arith.constant 0 : i32
    %c0_i32_0 = arith.constant 0 : i32
    %c0_i32_1 = arith.constant 0 : i32
    return %arg0, %c0_i32, %c0_i32_0 : i32, i32, i32
  }
  func.func @transform_17(%arg0: i32) -> (i32, i32, i32) {
    %c0_i32 = arith.constant 0 : i32
    %c0_i32_0 = arith.constant 0 : i32
    %c0_i32_1 = arith.constant 0 : i32
    return %arg0, %c0_i32, %c0_i32_0 : i32, i32, i32
  }
  func.func @transform_18(%arg0: i32) -> (i32, i32, i32) {
    %c0_i32 = arith.constant 0 : i32
    %c0_i32_0 = arith.constant 0 : i32
    %c0_i32_1 = arith.constant 0 : i32
    return %arg0, %c0_i32, %c0_i32_0 : i32, i32, i32
  }
  func.func @transform_19(%arg0: i32) -> (i32, i32) {
    %c0_i32 = arith.constant 0 : i32
    %c0_i32_0 = arith.constant 0 : i32
    %c0_i32_1 = arith.constant 0 : i32
    return %c0_i32, %c0_i32_0 : i32, i32
  }
  func.func @transform_20(%arg0: i32) -> (i32, i32) {
    %c0_i32 = arith.constant 0 : i32
    %c0_i32_0 = arith.constant 0 : i32
    %c0_i32_1 = arith.constant 0 : i32
    return %c0_i32, %c0_i32_0 : i32, i32
  }
  func.func @transform_21(%arg0: i32) -> (i32, i32) {
    %c0_i32 = arith.constant 0 : i32
    %c0_i32_0 = arith.constant 0 : i32
    %c0_i32_1 = arith.constant 0 : i32
    return %c0_i32, %c0_i32_0 : i32, i32
  }
  func.func @transform_22(%arg0: i32) -> (i32, i32) {
    %c0_i32 = arith.constant 0 : i32
    %c0_i32_0 = arith.constant 0 : i32
    %c0_i32_1 = arith.constant 0 : i32
    return %c0_i32, %c0_i32_0 : i32, i32
  }
  func.func @transform_23(%arg0: i32) -> (i32, i32) {
    %c0_i32 = arith.constant 0 : i32
    %c0_i32_0 = arith.constant 0 : i32
    %c0_i32_1 = arith.constant 0 : i32
    return %c0_i32, %c0_i32_0 : i32, i32
  }
}

</mosaic_0001>

<llo_original>
// kernel: transformer_forward.2
$region0: #{transformer_forward.2}
  #allocation0 [shape = 'u32[]', space=smem, size = 0x4, offset = 0x4, fixed_abs, tag = 'smem constant byte address 0x4 - core index']
  #allocation1 [shape = 'u32[144,128]{1,0:T(1,128)}', space=vmem, size = 0x12000, scoped, tag = 'internal scratch']
  #allocation2 [shape = 'f32[16,32]{1,0:T(8,128)}', space=vmem, size = 0x2000, scoped, tag = 'scratch operand']
  %s0 = inlined_call_operand.vmem [shape: f32[16,32], index: 0, kind: input, shape index: {}]
  %s1 = inlined_call_operand.vmem [shape: f32[16,8], index: 1, kind: input, shape index: {}]
  %s2 = inlined_call_operand.vmem [shape: f32[2,1,32], index: 2, kind: input, shape index: {}]
  %s3 = inlined_call_operand.vmem [shape: f32[2,1,32], index: 3, kind: input, shape index: {}]
  %s4 = inlined_call_operand.vmem [shape: f32[2,32,96], index: 4, kind: input, shape index: {}]
  %s5 = inlined_call_operand.vmem [shape: f32[2,32,32], index: 5, kind: input, shape index: {}]
  %s6 = inlined_call_operand.vmem [shape: f32[2,1,32], index: 6, kind: input, shape index: {}]
  %s7 = inlined_call_operand.vmem [shape: f32[2,1,32], index: 7, kind: input, shape index: {}]
  %s8 = inlined_call_operand.vmem [shape: f32[2,32,64], index: 8, kind: input, shape index: {}]
  %s9 = inlined_call_operand.vmem [shape: f32[2,1,64], index: 9, kind: input, shape index: {}]
  %s10 = inlined_call_operand.vmem [shape: f32[2,64,32], index: 10, kind: input, shape index: {}]
  %s11 = inlined_call_operand.vmem [shape: f32[2,1,32], index: 11, kind: input, shape index: {}]
  %s12 = inlined_call_operand.vmem [shape: f32[1,32], index: 12, kind: input, shape index: {}]
  %s13 = inlined_call_operand.vmem [shape: f32[1,32], index: 13, kind: input, shape index: {}]
  %s14 = inlined_call_operand.vmem [shape: f32[16,32], index: 14, kind: output, shape index: {}]
  %s15 = sld [smem:[#allocation0]]
  $region97: #{transformer_forward.2} parent=0
    _
  %s17 = ssub.s32 1, %s15
  %s18 = scalar_select 0, %s17, %s15
  loop: start=0, step=1, limit=4
  $region2: #{transformer_forward.2} parent=0 // loop_pre_header
    _
  $region3: #{transformer_forward.2} parent=0 // loop_header
    %s20 = sphi 0, %s24
    %p21 = scmp.ge.s32.totalorder %s20, 4
    %s28 = sphi 0, %s28
    %s30 = sphi 0, %s28
    %s31 = sphi 0, %s30
    %s45 = sphi 0, %s31
    %s49 = sphi 0, %s49
    %s51 = sphi 0, %s49
    %s52 = sphi 0, %s51
    %s66 = sphi 0, %s52
    %s72 = sphi 0, %s74
    %s75 = sphi 0, %s72
    %s76 = sphi 0, %s75
    %s92 = sphi 0, %s76
    %s98 = sphi 0, %s100
    %s101 = sphi 0, %s98
    %s102 = sphi 0, %s101
    %s118 = sphi 0, %s102
    %s124 = sphi 0, %s126
    %s127 = sphi 0, %s124
    %s128 = sphi 0, %s127
    %s144 = sphi 0, %s128
    %s150 = sphi 0, %s152
    %s153 = sphi 0, %s150
    %s154 = sphi 0, %s153
    %s170 = sphi 0, %s154
    %s176 = sphi 0, %s178
    %s179 = sphi 0, %s176
    %s180 = sphi 0, %s179
    %s196 = sphi 0, %s180
    %s202 = sphi 0, %s204
    %s205 = sphi 0, %s202
    %s206 = sphi 0, %s205
    %s222 = sphi 0, %s206
    %s228 = sphi 0, %s230
    %s231 = sphi 0, %s228
    %s232 = sphi 0, %s231
    %s248 = sphi 0, %s232
    %s254 = sphi 0, %s256
    %s257 = sphi 0, %s254
    %s258 = sphi 0, %s257
    %s274 = sphi 0, %s258
    %s280 = sphi 0, %s282
    %s283 = sphi 0, %s280
    %s284 = sphi 0, %s283
    %s300 = sphi 0, %s284
    %s306 = sphi 0, %s308
    %s309 = sphi 0, %s306
    %s310 = sphi 0, %s309
    %s326 = sphi 0, %s310
    %s330 = sphi 0, %s330
    %s332 = sphi 0, %s330
    %s333 = sphi 0, %s332
    %s347 = sphi 0, %s333
    %s351 = sphi 0, %s351
    %s353 = sphi 0, %s351
    %s354 = sphi 0, %s353
    %s368 = sphi 0, %s354
    %s372 = sphi 0, %s372
    %s374 = sphi 0, %s372
    %s375 = sphi 0, %s374
    %s389 = sphi 0, %s375
  $region4: #{transformer_forward.2} parent=0 // loop_header_branch
    %23 = sbr.rel (%p21) target = $region8
  $region5: #{transformer_forward.2} parent=0 // loop_body
    %s25 = ssub.s32 %s20, 1
    %s26 = ssub.s32 %s20, 2
    %s27 = sadd.s32 %s20, 1
    %s29 = sadd.s32 %s28, 1
    %p32 = scmp.eq.s32.totalorder %s20, 1
    %p33 = scmp.ne.s32.totalorder %s28, %s30
    %p34 = scmp.eq.s32.totalorder %s20, 0
    %p35 = por %p33, %p34
    %p36 = scmp.ne.s32.totalorder %s28, %s30
    %p37 = scmp.eq.s32.totalorder %s25, 1
    %p38 = por %p36, %p37
    %p39 = scmp.ne.s32.totalorder %s30, %s31
    %p40 = scmp.eq.s32.totalorder %s25, 0
    %p41 = por %p39, %p40
    %p42 = scmp.ne.s32.totalorder %s30, %s31
    %p43 = scmp.eq.s32.totalorder %s26, 1
    %p44 = por %p42, %p43
    %p46 = scmp.ne.s32.totalorder %s31, %s45
    %p47 = scmp.eq.s32.totalorder %s26, 0
    %p48 = por %p46, %p47
    %s50 = sadd.s32 %s49, 1
    %p53 = scmp.eq.s32.totalorder %s20, 1
    %p54 = scmp.ne.s32.totalorder %s49, %s51
    %p55 = scmp.eq.s32.totalorder %s20, 0
    %p56 = por %p54, %p55
    %p57 = scmp.ne.s32.totalorder %s49, %s51
    %p58 = scmp.eq.s32.totalorder %s25, 1
    %p59 = por %p57, %p58
    %p60 = scmp.ne.s32.totalorder %s51, %s52
    %p61 = scmp.eq.s32.totalorder %s25, 0
    %p62 = por %p60, %p61
    %p63 = scmp.ne.s32.totalorder %s51, %s52
    %p64 = scmp.eq.s32.totalorder %s26, 1
    %p65 = por %p63, %p64
    %p67 = scmp.ne.s32.totalorder %s52, %s66
    %p68 = scmp.eq.s32.totalorder %s26, 0
    %p69 = por %p67, %p68
    %s70 = ssub.s32 %s20, %s27
    %p71 = scmp.eq.s32.totalorder %s70, 0
    %s73 = sadd.s32 %s72, 1
    %s74 = scalar_select %p71, %s72, %s73
    %p77 = pneg %p71
    %p78 = scmp.eq.s32.totalorder %s20, 1
    %p79 = por %p77, %p78
    %p80 = scmp.ne.s32.totalorder %s72, %s75
    %p81 = scmp.eq.s32.totalorder %s20, 0
    %p82 = por %p80, %p81
    %p83 = scmp.ne.s32.totalorder %s72, %s75
    %p84 = scmp.eq.s32.totalorder %s25, 1
    %p85 = por %p83, %p84
    %p86 = scmp.ne.s32.totalorder %s75, %s76
    %p87 = scmp.eq.s32.totalorder %s25, 0
    %p88 = por %p86, %p87
    %p89 = scmp.ne.s32.totalorder %s75, %s76
    %p90 = scmp.eq.s32.totalorder %s26, 1
    %p91 = por %p89, %p90
    %p93 = scmp.ne.s32.totalorder %s76, %s92
    %p94 = scmp.eq.s32.totalorder %s26, 0
    %p95 = por %p93, %p94
    %s96 = ssub.s32 %s20, %s27
    %p97 = scmp.eq.s32.totalorder %s96, 0
    %s99 = sadd.s32 %s98, 1
    %s100 = scalar_select %p97, %s98, %s99
    %p103 = pneg %p97
    %p104 = scmp.eq.s32.totalorder %s20, 1
    %p105 = por %p103, %p104
    %p106 = scmp.ne.s32.totalorder %s98, %s101
    %p107 = scmp.eq.s32.totalorder %s20, 0
    %p108 = por %p106, %p107
    %p109 = scmp.ne.s32.totalorder %s98, %s101
    %p110 = scmp.eq.s32.totalorder %s25, 1
    %p111 = por %p109, %p110
    %p112 = scmp.ne.s32.totalorder %s101, %s102
    %p113 = scmp.eq.s32.totalorder %s25, 0
    %p114 = por %p112, %p113
    %p115 = scmp.ne.s32.totalorder %s101, %s102
    %p116 = scmp.eq.s32.totalorder %s26, 1
    %p117 = por %p115, %p116
    %p119 = scmp.ne.s32.totalorder %s102, %s118
    %p120 = scmp.eq.s32.totalorder %s26, 0
    %p121 = por %p119, %p120
    %s122 = ssub.s32 %s20, %s27
    %p123 = scmp.eq.s32.totalorder %s122, 0
    %s125 = sadd.s32 %s124, 1
    %s126 = scalar_select %p123, %s124, %s125
    %p129 = pneg %p123
    %p130 = scmp.eq.s32.totalorder %s20, 1
    %p131 = por %p129, %p130
    %p132 = scmp.ne.s32.totalorder %s124, %s127
    %p133 = scmp.eq.s32.totalorder %s20, 0
    %p134 = por %p132, %p133
    %p135 = scmp.ne.s32.totalorder %s124, %s127
    %p136 = scmp.eq.s32.totalorder %s25, 1
    %p137 = por %p135, %p136
    %p138 = scmp.ne.s32.totalorder %s127, %s128
    %p139 = scmp.eq.s32.totalorder %s25, 0
    %p140 = por %p138, %p139
    %p141 = scmp.ne.s32.totalorder %s127, %s128
    %p142 = scmp.eq.s32.totalorder %s26, 1
    %p143 = por %p141, %p142
    %p145 = scmp.ne.s32.totalorder %s128, %s144
    %p146 = scmp.eq.s32.totalorder %s26, 0
    %p147 = por %p145, %p146
    %s148 = ssub.s32 %s20, %s27
    %p149 = scmp.eq.s32.totalorder %s148, 0
    %s151 = sadd.s32 %s150, 1
    %s152 = scalar_select %p149, %s150, %s151
    %p155 = pneg %p149
    %p156 = scmp.eq.s32.totalorder %s20, 1
    %p157 = por %p155, %p156
    %p158 = scmp.ne.s32.totalorder %s150, %s153
    %p159 = scmp.eq.s32.totalorder %s20, 0
    %p160 = por %p158, %p159
    %p161 = scmp.ne.s32.totalorder %s150, %s153
    %p162 = scmp.eq.s32.totalorder %s25, 1
    %p163 = por %p161, %p162
    %p164 = scmp.ne.s32.totalorder %s153, %s154
    %p165 = scmp.eq.s32.totalorder %s25, 0
    %p166 = por %p164, %p165
    %p167 = scmp.ne.s32.totalorder %s153, %s154
    %p168 = scmp.eq.s32.totalorder %s26, 1
    %p169 = por %p167, %p168
    %p171 = scmp.ne.s32.totalorder %s154, %s170
    %p172 = scmp.eq.s32.totalorder %s26, 0
    %p173 = por %p171, %p172
    %s174 = ssub.s32 %s20, %s27
    %p175 = scmp.eq.s32.totalorder %s174, 0
    %s177 = sadd.s32 %s176, 1
    %s178 = scalar_select %p175, %s176, %s177
    %p181 = pneg %p175
    %p182 = scmp.eq.s32.totalorder %s20, 1
    %p183 = por %p181, %p182
    %p184 = scmp.ne.s32.totalorder %s176, %s179
    %p185 = scmp.eq.s32.totalorder %s20, 0
    %p186 = por %p184, %p185
    %p187 = scmp.ne.s32.totalorder %s176, %s179
    %p188 = scmp.eq.s32.totalorder %s25, 1
    %p189 = por %p187, %p188
    %p190 = scmp.ne.s32.totalorder %s179, %s180
    %p191 = scmp.eq.s32.totalorder %s25, 0
    %p192 = por %p190, %p191
    %p193 = scmp.ne.s32.totalorder %s179, %s180
    %p194 = scmp.eq.s32.totalorder %s26, 1
    %p195 = por %p193, %p194
    %p197 = scmp.ne.s32.totalorder %s180, %s196
    %p198 = scmp.eq.s32.totalorder %s26, 0
    %p199 = por %p197, %p198
    %s200 = ssub.s32 %s20, %s27
    %p201 = scmp.eq.s32.totalorder %s200, 0
    %s203 = sadd.s32 %s202, 1
    %s204 = scalar_select %p201, %s202, %s203
    %p207 = pneg %p201
    %p208 = scmp.eq.s32.totalorder %s20, 1
    %p209 = por %p207, %p208
    %p210 = scmp.ne.s32.totalorder %s202, %s205
    %p211 = scmp.eq.s32.totalorder %s20, 0
    %p212 = por %p210, %p211
    %p213 = scmp.ne.s32.totalorder %s202, %s205
    %p214 = scmp.eq.s32.totalorder %s25, 1
    %p215 = por %p213, %p214
    %p216 = scmp.ne.s32.totalorder %s205, %s206
    %p217 = scmp.eq.s32.totalorder %s25, 0
    %p218 = por %p216, %p217
    %p219 = scmp.ne.s32.totalorder %s205, %s206
    %p220 = scmp.eq.s32.totalorder %s26, 1
    %p221 = por %p219, %p220
    %p223 = scmp.ne.s32.totalorder %s206, %s222
    %p224 = scmp.eq.s32.totalorder %s26, 0
    %p225 = por %p223, %p224
    %s226 = ssub.s32 %s20, %s27
    %p227 = scmp.eq.s32.totalorder %s226, 0
    %s229 = sadd.s32 %s228, 1
    %s230 = scalar_select %p227, %s228, %s229
    %p233 = pneg %p227
    %p234 = scmp.eq.s32.totalorder %s20, 1
    %p235 = por %p233, %p234
    %p236 = scmp.ne.s32.totalorder %s228, %s231
    %p237 = scmp.eq.s32.totalorder %s20, 0
    %p238 = por %p236, %p237
    %p239 = scmp.ne.s32.totalorder %s228, %s231
    %p240 = scmp.eq.s32.totalorder %s25, 1
    %p241 = por %p239, %p240
    %p242 = scmp.ne.s32.totalorder %s231, %s232
    %p243 = scmp.eq.s32.totalorder %s25, 0
    %p244 = por %p242, %p243
    %p245 = scmp.ne.s32.totalorder %s231, %s232
    %p246 = scmp.eq.s32.totalorder %s26, 1
    %p247 = por %p245, %p246
    %p249 = scmp.ne.s32.totalorder %s232, %s248
    %p250 = scmp.eq.s32.totalorder %s26, 0
    %p251 = por %p249, %p250
    %s252 = ssub.s32 %s20, %s27
    %p253 = scmp.eq.s32.totalorder %s252, 0
    %s255 = sadd.s32 %s254, 1
    %s256 = scalar_select %p253, %s254, %s255
    %p259 = pneg %p253
    %p260 = scmp.eq.s32.totalorder %s20, 1
    %p261 = por %p259, %p260
    %p262 = scmp.ne.s32.totalorder %s254, %s257
    %p263 = scmp.eq.s32.totalorder %s20, 0
    %p264 = por %p262, %p263
    %p265 = scmp.ne.s32.totalorder %s254, %s257
    %p266 = scmp.eq.s32.totalorder %s25, 1
    %p267 = por %p265, %p266
    %p268 = scmp.ne.s32.totalorder %s257, %s258
    %p269 = scmp.eq.s32.totalorder %s25, 0
    %p270 = por %p268, %p269
    %p271 = scmp.ne.s32.totalorder %s257, %s258
    %p272 = scmp.eq.s32.totalorder %s26, 1
    %p273 = por %p271, %p272
    %p275 = scmp.ne.s32.totalorder %s258, %s274
    %p276 = scmp.eq.s32.totalorder %s26, 0
    %p277 = por %p275, %p276
    %s278 = ssub.s32 %s20, %s27
    %p279 = scmp.eq.s32.totalorder %s278, 0
    %s281 = sadd.s32 %s280, 1
    %s282 = scalar_select %p279, %s280, %s281
    %p285 = pneg %p279
    %p286 = scmp.eq.s32.totalorder %s20, 1
    %p287 = por %p285, %p286
    %p288 = scmp.ne.s32.totalorder %s280, %s283
    %p289 = scmp.eq.s32.totalorder %s20, 0
    %p290 = por %p288, %p289
    %p291 = scmp.ne.s32.totalorder %s280, %s283
    %p292 = scmp.eq.s32.totalorder %s25, 1
    %p293 = por %p291, %p292
    %p294 = scmp.ne.s32.totalorder %s283, %s284
    %p295 = scmp.eq.s32.totalorder %s25, 0
    %p296 = por %p294, %p295
    %p297 = scmp.ne.s32.totalorder %s283, %s284
    %p298 = scmp.eq.s32.totalorder %s26, 1
    %p299 = por %p297, %p298
    %p301 = scmp.ne.s32.totalorder %s284, %s300
    %p302 = scmp.eq.s32.totalorder %s26, 0
    %p303 = por %p301, %p302
    %s304 = ssub.s32 %s20, %s27
    %p305 = scmp.eq.s32.totalorder %s304, 0
    %s307 = sadd.s32 %s306, 1
    %s308 = scalar_select %p305, %s306, %s307
    %p311 = pneg %p305
    %p312 = scmp.eq.s32.totalorder %s20, 1
    %p313 = por %p311, %p312
    %p314 = scmp.ne.s32.totalorder %s306, %s309
    %p315 = scmp.eq.s32.totalorder %s20, 0
    %p316 = por %p314, %p315
    %p317 = scmp.ne.s32.totalorder %s306, %s309
    %p318 = scmp.eq.s32.totalorder %s25, 1
    %p319 = por %p317, %p318
    %p320 = scmp.ne.s32.totalorder %s309, %s310
    %p321 = scmp.eq.s32.totalorder %s25, 0
    %p322 = por %p320, %p321
    %p323 = scmp.ne.s32.totalorder %s309, %s310
    %p324 = scmp.eq.s32.totalorder %s26, 1
    %p325 = por %p323, %p324
    %p327 = scmp.ne.s32.totalorder %s310, %s326
    %p328 = scmp.eq.s32.totalorder %s26, 0
    %p329 = por %p327, %p328
    %s331 = sadd.s32 %s330, 1
    %p334 = scmp.eq.s32.totalorder %s20, 1
    %p335 = scmp.ne.s32.totalorder %s330, %s332
    %p336 = scmp.eq.s32.totalorder %s20, 0
    %p337 = por %p335, %p336
    %p338 = scmp.ne.s32.totalorder %s330, %s332
    %p339 = scmp.eq.s32.totalorder %s25, 1
    %p340 = por %p338, %p339
    %p341 = scmp.ne.s32.totalorder %s332, %s333
    %p342 = scmp.eq.s32.totalorder %s25, 0
    %p343 = por %p341, %p342
    %p344 = scmp.ne.s32.totalorder %s332, %s333
    %p345 = scmp.eq.s32.totalorder %s26, 1
    %p346 = por %p344, %p345
    %p348 = scmp.ne.s32.totalorder %s333, %s347
    %p349 = scmp.eq.s32.totalorder %s26, 0
    %p350 = por %p348, %p349
    %s352 = sadd.s32 %s351, 1
    %p355 = scmp.eq.s32.totalorder %s20, 1
    %p356 = scmp.ne.s32.totalorder %s351, %s353
    %p357 = scmp.eq.s32.totalorder %s20, 0
    %p358 = por %p356, %p357
    %p359 = scmp.ne.s32.totalorder %s351, %s353
    %p360 = scmp.eq.s32.totalorder %s25, 1
    %p361 = por %p359, %p360
    %p362 = scmp.ne.s32.totalorder %s353, %s354
    %p363 = scmp.eq.s32.totalorder %s25, 0
    %p364 = por %p362, %p363
    %p365 = scmp.ne.s32.totalorder %s353, %s354
    %p366 = scmp.eq.s32.totalorder %s26, 1
    %p367 = por %p365, %p366
    %p369 = scmp.ne.s32.totalorder %s354, %s368
    %p370 = scmp.eq.s32.totalorder %s26, 0
    %p371 = por %p369, %p370
    %s373 = sadd.s32 %s372, 1
    %p376 = scmp.eq.s32.totalorder %s20, 1
    %p377 = scmp.ne.s32.totalorder %s372, %s374
    %p378 = scmp.eq.s32.totalorder %s20, 0
    %p379 = por %p377, %p378
    %p380 = scmp.ne.s32.totalorder %s372, %s374
    %p381 = scmp.eq.s32.totalorder %s25, 1
    %p382 = por %p380, %p381
    %p383 = scmp.ne.s32.totalorder %s374, %s375
    %p384 = scmp.eq.s32.totalorder %s25, 0
    %p385 = por %p383, %p384
    %p386 = scmp.ne.s32.totalorder %s374, %s375
    %p387 = scmp.eq.s32.totalorder %s26, 1
    %p388 = por %p386, %p387
    %p390 = scmp.ne.s32.totalorder %s375, %s389
    %p391 = scmp.eq.s32.totalorder %s26, 0
    %p392 = por %p390, %p391
    %p393 = scmp.le.s32.totalorder 1, %s20
    %p394 = scmp.lt.s32.totalorder %s20, 3
    %p395 = pnand %p393, %p394
    %p396 = pneg %p395
    // Predicated region
    $region9: #{transformer_forward.2} parent=5 // pred_check
      _
    $region10: #{transformer_forward.2} parent=5 // pred_check_branch
      %398 = sbr.rel (%p395) target = $region12
    $region11: #{transformer_forward.2} parent=5 // pred_region
      %s399 = ssub.s32 %s20, 1
      // Predicated region
      $region13: #{transformer_forward.2} parent=11 // pred_check
        %p400 = pneg %p41
      $region14: #{transformer_forward.2} parent=11 // pred_check_branch
        %402 = sbr.rel (%p400) target = $region16
      $region15: #{transformer_forward.2} parent=11 // pred_region
        _
      $region16: #{transformer_forward.2} parent=11 // pred_fallthru
        _
      // Predicated region
      $region17: #{transformer_forward.2} parent=11 // pred_check
        %p403 = pneg %p62
      $region18: #{transformer_forward.2} parent=11 // pred_check_branch
        %405 = sbr.rel (%p403) target = $region20
      $region19: #{transformer_forward.2} parent=11 // pred_region
        _
      $region20: #{transformer_forward.2} parent=11 // pred_fallthru
        _
      // Predicated region
      $region21: #{transformer_forward.2} parent=11 // pred_check
        %p406 = pneg %p343
      $region22: #{transformer_forward.2} parent=11 // pred_check_branch
        %408 = sbr.rel (%p406) target = $region24
      $region23: #{transformer_forward.2} parent=11 // pred_region
        _
      $region24: #{transformer_forward.2} parent=11 // pred_fallthru
        _
      // Predicated region
      $region25: #{transformer_forward.2} parent=11 // pred_check
        %p409 = pneg %p364
      $region26: #{transformer_forward.2} parent=11 // pred_check_branch
        %411 = sbr.rel (%p409) target = $region28
      $region27: #{transformer_forward.2} parent=11 // pred_region
        _
      $region28: #{transformer_forward.2} parent=11 // pred_fallthru
        _
    $region12: #{transformer_forward.2} parent=5 // pred_fallthru
      _
    %p412 = scmp.lt.s32.totalorder %s20, 2
    // Predicated region
    $region29: #{transformer_forward.2} parent=5 // pred_check
      %p413 = pneg %p412
    $region30: #{transformer_forward.2} parent=5 // pred_check_branch
      %415 = sbr.rel (%p413) target = $region32
    $region31: #{transformer_forward.2} parent=5 // pred_region
      // Predicated region
      $region33: #{transformer_forward.2} parent=31 // pred_check
        %p416 = pneg %p82
      $region34: #{transformer_forward.2} parent=31 // pred_check_branch
        %418 = sbr.rel (%p416) target = $region36
      $region35: #{transformer_forward.2} parent=31 // pred_region
        %p419 = scmp.lt.s32.totalorder %s20, 1
        %s420 = scalar_select %p419, %s20, 1
        %s421 = scalar_lea.vmem %s2, %s420
      $region36: #{transformer_forward.2} parent=31 // pred_fallthru
        _
      // Predicated region
      $region37: #{transformer_forward.2} parent=31 // pred_check
        %p422 = pneg %p108
      $region38: #{transformer_forward.2} parent=31 // pred_check_branch
        %424 = sbr.rel (%p422) target = $region40
      $region39: #{transformer_forward.2} parent=31 // pred_region
        %p425 = scmp.lt.s32.totalorder %s20, 1
        %s426 = scalar_select %p425, %s20, 1
        %s427 = scalar_lea.vmem %s3, %s426
      $region40: #{transformer_forward.2} parent=31 // pred_fallthru
        _
      // Predicated region
      $region41: #{transformer_forward.2} parent=31 // pred_check
        %p428 = pneg %p134
      $region42: #{transformer_forward.2} parent=31 // pred_check_branch
        %430 = sbr.rel (%p428) target = $region44
      $region43: #{transformer_forward.2} parent=31 // pred_region
        %p431 = scmp.lt.s32.totalorder %s20, 1
        %s432 = scalar_select %p431, %s20, 1
        %s433 = smul.addr %s432, 4
        %s434 = smul.addr %s433, 8
        %s435 = scalar_lea.vmem %s4, %s434
      $region44: #{transformer_forward.2} parent=31 // pred_fallthru
        _
      // Predicated region
      $region45: #{transformer_forward.2} parent=31 // pred_check
        %p436 = pneg %p160
      $region46: #{transformer_forward.2} parent=31 // pred_check_branch
        %438 = sbr.rel (%p436) target = $region48
      $region47: #{transformer_forward.2} parent=31 // pred_region
        %p439 = scmp.lt.s32.totalorder %s20, 1
        %s440 = scalar_select %p439, %s20, 1
        %s441 = smul.addr %s440, 4
        %s442 = smul.addr %s441, 8
        %s443 = scalar_lea.vmem %s5, %s442
      $region48: #{transformer_forward.2} parent=31 // pred_fallthru
        _
      // Predicated region
      $region49: #{transformer_forward.2} parent=31 // pred_check
        %p444 = pneg %p186
      $region50: #{transformer_forward.2} parent=31 // pred_check_branch
        %446 = sbr.rel (%p444) target = $region52
      $region51: #{transformer_forward.2} parent=31 // pred_region
        %p447 = scmp.lt.s32.totalorder %s20, 1
        %s448 = scalar_select %p447, %s20, 1
        %s449 = scalar_lea.vmem %s6, %s448
      $region52: #{transformer_forward.2} parent=31 // pred_fallthru
        _
      // Predicated region
      $region53: #{transformer_forward.2} parent=31 // pred_check
        %p450 = pneg %p212
      $region54: #{transformer_forward.2} parent=31 // pred_check_branch
        %452 = sbr.rel (%p450) target = $region56
      $region55: #{transformer_forward.2} parent=31 // pred_region
        %p453 = scmp.lt.s32.totalorder %s20, 1
        %s454 = scalar_select %p453, %s20, 1
        %s455 = scalar_lea.vmem %s7, %s454
      $region56: #{transformer_forward.2} parent=31 // pred_fallthru
        _
      // Predicated region
      $region57: #{transformer_forward.2} parent=31 // pred_check
        %p456 = pneg %p238
      $region58: #{transformer_forward.2} parent=31 // pred_check_branch
        %458 = sbr.rel (%p456) target = $region60
      $region59: #{transformer_forward.2} parent=31 // pred_region
        %p459 = scmp.lt.s32.totalorder %s20, 1
        %s460 = scalar_select %p459, %s20, 1
        %s461 = smul.addr %s460, 4
        %s462 = smul.addr %s461, 8
        %s463 = scalar_lea.vmem %s8, %s462
      $region60: #{transformer_forward.2} parent=31 // pred_fallthru
        _
      // Predicated region
      $region61: #{transformer_forward.2} parent=31 // pred_check
        %p464 = pneg %p264
      $region62: #{transformer_forward.2} parent=31 // pred_check_branch
        %466 = sbr.rel (%p464) target = $region64
      $region63: #{transformer_forward.2} parent=31 // pred_region
        %p467 = scmp.lt.s32.totalorder %s20, 1
        %s468 = scalar_select %p467, %s20, 1
        %s469 = scalar_lea.vmem %s9, %s468
      $region64: #{transformer_forward.2} parent=31 // pred_fallthru
        _
      // Predicated region
      $region65: #{transformer_forward.2} parent=31 // pred_check
        %p470 = pneg %p290
      $region66: #{transformer_forward.2} parent=31 // pred_check_branch
        %472 = sbr.rel (%p470) target = $region68
      $region67: #{transformer_forward.2} parent=31 // pred_region
        %p473 = scmp.lt.s32.totalorder %s20, 1
        %s474 = scalar_select %p473, %s20, 1
        %s475 = smul.addr %s474, 8
        %s476 = smul.addr %s475, 8
        %s477 = scalar_lea.vmem %s10, %s476
      $region68: #{transformer_forward.2} parent=31 // pred_fallthru
        _
      // Predicated region
      $region69: #{transformer_forward.2} parent=31 // pred_check
        %p478 = pneg %p316
      $region70: #{transformer_forward.2} parent=31 // pred_check_branch
        %480 = sbr.rel (%p478) target = $region72
      $region71: #{transformer_forward.2} parent=31 // pred_region
        %p481 = scmp.lt.s32.totalorder %s20, 1
        %s482 = scalar_select %p481, %s20, 1
        %s483 = scalar_lea.vmem %s11, %s482
      $region72: #{transformer_forward.2} parent=31 // pred_fallthru
        _
    $region32: #{transformer_forward.2} parent=5 // pred_fallthru
      _
    %p484 = scmp.le.s32.totalorder 1, %s20
    %p485 = scmp.lt.s32.totalorder %s20, 3
    %p486 = pnand %p484, %p485
    %p487 = pneg %p486
    // Predicated region
    $region73: #{transformer_forward.2} parent=5 // pred_check
      _
    $region74: #{transformer_forward.2} parent=5 // pred_check_branch
      %489 = sbr.rel (%p486) target = $region76
    $region75: #{transformer_forward.2} parent=5 // pred_region
      %s490 = ssub.s32 %s20, 1
      %p491 = pneg %p41
      %p492 = pneg %p38
      %p493 = pneg %p62
      %p494 = pneg %p59
      %p495 = scmp.lt.s32.totalorder %s25, 1
      %s496 = scalar_select %p495, %s25, 1
      %s497 = scalar_lea.vmem %s2, %s496
      %p498 = pneg %p88
      %p499 = pneg %p85
      %p500 = scmp.lt.s32.totalorder %s25, 1
      %s501 = scalar_select %p500, %s25, 1
      %s502 = scalar_lea.vmem %s3, %s501
      %p503 = pneg %p114
      %p504 = pneg %p111
      %p505 = scmp.lt.s32.totalorder %s25, 1
      %s506 = scalar_select %p505, %s25, 1
      %s507 = smul.addr %s506, 4
      %s508 = smul.addr %s507, 8
      %s509 = scalar_lea.vmem %s4, %s508
      %p510 = pneg %p140
      %p511 = pneg %p137
      %p512 = scmp.lt.s32.totalorder %s25, 1
      %s513 = scalar_select %p512, %s25, 1
      %s514 = smul.addr %s513, 4
      %s515 = smul.addr %s514, 8
      %s516 = scalar_lea.vmem %s5, %s515
      %p517 = pneg %p166
      %p518 = pneg %p163
      %p519 = scmp.lt.s32.totalorder %s25, 1
      %s520 = scalar_select %p519, %s25, 1
      %s521 = scalar_lea.vmem %s6, %s520
      %p522 = pneg %p192
      %p523 = pneg %p189
      %p524 = scmp.lt.s32.totalorder %s25, 1
      %s525 = scalar_select %p524, %s25, 1
      %s526 = scalar_lea.vmem %s7, %s525
      %p527 = pneg %p218
      %p528 = pneg %p215
      %p529 = scmp.lt.s32.totalorder %s25, 1
      %s530 = scalar_select %p529, %s25, 1
      %s531 = smul.addr %s530, 4
      %s532 = smul.addr %s531, 8
      %s533 = scalar_lea.vmem %s8, %s532
      %p534 = pneg %p244
      %p535 = pneg %p241
      %p536 = scmp.lt.s32.totalorder %s25, 1
      %s537 = scalar_select %p536, %s25, 1
      %s538 = scalar_lea.vmem %s9, %s537
      %p539 = pneg %p270
      %p540 = pneg %p267
      %p541 = scmp.lt.s32.totalorder %s25, 1
      %s542 = scalar_select %p541, %s25, 1
      %s543 = smul.addr %s542, 8
      %s544 = smul.addr %s543, 8
      %s545 = scalar_lea.vmem %s10, %s544
      %p546 = pneg %p296
      %p547 = pneg %p293
      %p548 = scmp.lt.s32.totalorder %s25, 1
      %s549 = scalar_select %p548, %s25, 1
      %s550 = scalar_lea.vmem %s11, %s549
      %p551 = pneg %p322
      %p552 = pneg %p319
      %p553 = pneg %p343
      %p554 = pneg %p340
      %p555 = pneg %p364
      %p556 = pneg %p361
      %p557 = pneg %p385
      %p558 = pneg %p382
      %p559 = scmp.lt.s32.totalorder %s25, 1
      %s560 = scalar_select %p559, %s25, 1
      %s561 = scalar_lea.vmem %s2, %s560
      %p562 = scmp.lt.s32.totalorder %s25, 1
      %s563 = scalar_select %p562, %s25, 1
      %s564 = scalar_lea.vmem %s3, %s563
      %p565 = scmp.lt.s32.totalorder %s25, 1
      %s566 = scalar_select %p565, %s25, 1
      %s567 = smul.addr %s566, 4
      %s568 = smul.addr %s567, 8
      %s569 = scalar_lea.vmem %s4, %s568
      %p570 = scmp.lt.s32.totalorder %s25, 1
      %s571 = scalar_select %p570, %s25, 1
      %s572 = smul.addr %s571, 4
      %s573 = smul.addr %s572, 8
      %s574 = scalar_lea.vmem %s5, %s573
      %p575 = scmp.lt.s32.totalorder %s25, 1
      %s576 = scalar_select %p575, %s25, 1
      %s577 = scalar_lea.vmem %s6, %s576
      %p578 = scmp.lt.s32.totalorder %s25, 1
      %s579 = scalar_select %p578, %s25, 1
      %s580 = scalar_lea.vmem %s7, %s579
      %p581 = scmp.lt.s32.totalorder %s25, 1
      %s582 = scalar_select %p581, %s25, 1
      %s583 = smul.addr %s582, 4
      %s584 = smul.addr %s583, 8
      %s585 = scalar_lea.vmem %s8, %s584
      %p586 = scmp.lt.s32.totalorder %s25, 1
      %s587 = scalar_select %p586, %s25, 1
      %s588 = scalar_lea.vmem %s9, %s587
      %p589 = scmp.lt.s32.totalorder %s25, 1
      %s590 = scalar_select %p589, %s25, 1
      %s591 = smul.addr %s590, 8
      %s592 = smul.addr %s591, 8
      %s593 = scalar_lea.vmem %s10, %s592
      %p594 = scmp.lt.s32.totalorder %s25, 1
      %s595 = scalar_select %p594, %s25, 1
      %s596 = scalar_lea.vmem %s11, %s595
      %p597 = scmp.eq.s32.totalorder %s25, 0
      // Predicated region
      $region77: #{transformer_forward.2} parent=75 // pred_check
        %p598 = pneg %p597
      $region78: #{transformer_forward.2} parent=75 // pred_check_branch
        %600 = sbr.rel (%p598) target = $region80
      $region79: #{transformer_forward.2} parent=75 // pred_region
        %v601 = vld [vmem:[%s0] sm:$0xff]
        %v602 = vld [vmem:[%s0 + $0x8] sm:$0xff]
        %vm603 = vcmask 261120
        %604 = vst.msk [vmem:[#allocation2] sm:$0xff] %vm603, %v601
        %605 = vst.msk [vmem:[#allocation2 + $0x8] sm:$0xff] %vm603, %v602
        %606 = vst.msk [vmem:[%s14] sm:$0xff] %vm603, 0.0
        %607 = vst.msk [vmem:[%s14 + $0x8] sm:$0xff] %vm603, 0.0
      $region80: #{transformer_forward.2} parent=75 // pred_fallthru
        _
      %v608 = vld [vmem:[#allocation2] sm:$0xff]
      %v609 = vld [vmem:[#allocation2 + $0x8] sm:$0xff]
      %v610 = vld [vmem:[%s1] sm:$0xff]
      %v611 = vld [vmem:[%s1 + $0x8] sm:$0xff]
      %v612 = vld [vmem:[%s561] sm:$0x1]
      %v613 = vld [vmem:[%s564] sm:$0x1]
      %vm614 = vcmask 261120
      %v615 = vsel %vm614, %v608, 0.0
      %616 = vadd.xlane.f32.xlu0 %v615
      %v617 = vpop.xlane.xlu0 %616
      %v618 = vsel %vm614, %v609, 0.0
      %619 = vadd.xlane.f32.xlu0 %v618
      %v620 = vpop.xlane.xlu0 %619
      %v621 = vrcp.pop 32.0
      %v622 = vmul.f32 %v617, %v621
      %v623 = vmul.f32 %v620, %v621
      %v624 = vsub.f32 %v608, %v622
      %v625 = vsub.f32 %v609, %v623
      %v626 = vmul.f32 %v624, %v624
      %v627 = vmul.f32 %v625, %v625
      %v628 = vsel %vm614, %v626, 0.0
      %629 = vadd.xlane.f32.xlu0 %v628
      %v630 = vpop.xlane.xlu0 %629
      %v631 = vsel %vm614, %v627, 0.0
      %632 = vadd.xlane.f32.xlu0 %v631
      %v633 = vpop.xlane.xlu0 %632
      %v634 = vmul.f32 %v630, 0.032258064
      %v635 = vmul.f32 %v633, 0.032258064
      %v636 = vrsqrt.pop %v634
      %v637 = vmul.f32 %v634, %v636
      %vm638 = vcmp.eq.f32.partialorder %v634, inf
      %v639 = vsel %vm638, %v634, %v637
      %vm640 = vcmp.eq.f32.partialorder %v634, 0.0
      %v641 = vand.u32 %v634, 2147483648
      %v642 = vsel %vm640, %v641, %v639
      %v643 = vrsqrt.pop %v635
      %v644 = vmul.f32 %v635, %v643
      %vm645 = vcmp.eq.f32.partialorder %v635, inf
      %v646 = vsel %vm645, %v635, %v644
      %vm647 = vcmp.eq.f32.partialorder %v635, 0.0
      %v648 = vand.u32 %v635, 2147483648
      %v649 = vsel %vm647, %v648, %v646
      %v651 = vlaneseq
      %v652 = vshrl.u32 %v651, 7
      %v653 = vsub.s32 0, %v652
      %v654 = vrot.slane %v612, %v653
      %v656 = vmul.f32 %v654, %v624
      %v657 = vmul.f32 %v654, %v625
      %v658 = vadd.f32 %v642, 1e-06
      %v659 = vadd.f32 %v649, 1e-06
      %v660 = vrcp.pop %v658
      %v661 = vmul.f32 %v656, %v660
      %v662 = vrcp.pop %v659
      %v663 = vmul.f32 %v657, %v662
      %v665 = vlaneseq
      %v666 = vshrl.u32 %v665, 7
      %v667 = vsub.s32 0, %v666
      %v668 = vrot.slane %v613, %v667
      %v670 = vadd.f32 %v661, %v668
      %v671 = vadd.f32 %v663, %v668
      %v672 = vld [vmem:[%s569] sm:$0xff]
      %v673 = vld [vmem:[%s569 + $0x8] sm:$0xff]
      %v674 = vld [vmem:[%s569 + $0x10] sm:$0xff]
      %v675 = vld [vmem:[%s569 + $0x18] sm:$0xff]
      %v677 = vsel %vm614, %v670, 0
      %v680 = vsel %vm614, %v671, 0
      %682 = vmatprep.subr.mxu0 0.0
      %683 = vmatpush1.msra.mxu0 %v672
      %684 = vmatprep.subr.mxu0 0.0
      %685 = vmatpush1.msra.mxu0 %v673
      %686 = vmatprep.subr.mxu0 0.0
      %687 = vmatpush1.msra.mxu0 %v674
      %688 = vmatprep.subr.mxu0 0.0
      %689 = vmatpush1.msra.mxu0 %v675
      %690 = vmatprep.subr.mxu0 0.0
      %691 = vmatpush1.msra.mxu0 0.0
      %692 = vmatprep.subr.mxu0 0.0
      %693 = vmatpush1.msra.mxu0 0.0
      %694 = vmatprep.subr.mxu0 0.0
      %695 = vmatpush1.msra.mxu0 0.0
      %696 = vmatprep.subr.mxu0 0.0
      %697 = vmatpush1.msra.mxu0 0.0
      %698 = vmatprep.subr.mxu0 0.0
      %699 = vmatpush1.msra.mxu0 0.0
      %700 = vmatprep.subr.mxu0 0.0
      %701 = vmatpush1.msra.mxu0 0.0
      %702 = vmatprep.subr.mxu0 0.0
      %703 = vmatpush1.msra.mxu0 0.0
      %704 = vmatprep.subr.mxu0 0.0
      %705 = vmatpush1.msra.mxu0 0.0
      %706 = vmatprep.subr.mxu0 0.0
      %707 = vmatpush1.msra.mxu0 0.0
      %708 = vmatprep.subr.mxu0 0.0
      %709 = vmatpush1.msra.mxu0 0.0
      %710 = vmatprep.subr.mxu0 0.0
      %711 = vmatpush1.msra.mxu0 0.0
      %712 = vmatprep.subr.mxu0 0.0
      %713 = vmatpush1.msra.mxu0 0.0
      %714 = vmatprep.subr.mxu0 0.0
      %715 = vmatpush1.msra.mxu0 0.0
      %716 = vmatprep.subr.mxu0 0.0
      %717 = vmatpush1.msra.mxu0 0.0
      %718 = vmatprep.subr.mxu0 0.0
      %719 = vmatpush1.msra.mxu0 0.0
      %720 = vmatprep.subr.mxu0 0.0
      %721 = vmatpush1.msra.mxu0 0.0
      %722 = vmatprep.subr.mxu0 0.0
      %723 = vmatpush1.msra.mxu0 0.0
      %724 = vmatprep.subr.mxu0 0.0
      %725 = vmatpush1.msra.mxu0 0.0
      %726 = vmatprep.subr.mxu0 0.0
      %727 = vmatpush1.msra.mxu0 0.0
      %728 = vmatprep.subr.mxu0 0.0
      %729 = vmatpush1.msra.mxu0 0.0
      %730 = vmatprep.subr.mxu0 0.0
      %731 = vmatpush1.msra.mxu0 0.0
      %732 = vmatprep.subr.mxu0 0.0
      %733 = vmatpush1.msra.mxu0 0.0
      %734 = vmatprep.subr.mxu0 0.0
      %735 = vmatpush1.msra.mxu0 0.0
      %736 = vmatprep.subr.mxu0 0.0
      %737 = vmatpush1.msra.mxu0 0.0
      %738 = vmatprep.subr.mxu0 0.0
      %739 = vmatpush1.msra.mxu0 0.0
      %740 = vmatprep.subr.mxu0 0.0
      %741 = vmatpush1.msra.mxu0 0.0
      %742 = vmatprep.subr.mxu0 0.0
      %743 = vmatpush1.msra.mxu0 0.0
      %744 = vmatprep.subr.mxu0 0.0
      %745 = vmatpush1.msra.mxu0 0.0
      %746 = vmatprep.mubr.f32.mxu0 0.0
      %747 = vmatmul.mubr.f32.gmra.mrb[0].mxu0 %v677
      %v748 = vpop.f32.mrb[0].mxu0
      %v749 = vadd.f32 0.0, %v748
      %v750 = vpop.f32.mrb[0].mxu0
      %751 = vmatprep.mubr.f32.mxu0 0.0
      %752 = vmatmul.mubr.f32.gmra.mrb[0].mxu0 %v680
      %v753 = vpop.f32.mrb[0].mxu0
      %v754 = vadd.f32 0.0, %v753
      %v755 = vpop.f32.mrb[0].mxu0
      %756 = vdwg.mxu0
      %758 = vrot.lane.b32.xlu0 %v749, 96
      %v759 = vpop.permute.xlu0 %758
      %vm760 = vcmask 64512
      %v761 = vsel %vm760, %v749, 0
      %v763 = vsel %vm760, %v759, 0
      %765 = vmatprep.subr.mxu0 0.0
      %766 = vmatpush1.xpose.msra.mxu0 %v763
      %767 = vmatprep.subr.mxu0 0.0
      %768 = vmatpush1.xpose.msra.mxu0 0.0
      %769 = vmatprep.subr.mxu0 0.0
      %770 = vmatpush1.xpose.msra.mxu0 0.0
      %771 = vmatprep.subr.mxu0 0.0
      %772 = vmatpush1.xpose.msra.mxu0 0.0
      %773 = vmatprep.subr.mxu0 0.0
      %774 = vmatpush1.xpose.msra.mxu0 0.0
      %775 = vmatprep.subr.mxu0 0.0
      %776 = vmatpush1.xpose.msra.mxu0 0.0
      %777 = vmatprep.subr.mxu0 0.0
      %778 = vmatpush1.xpose.msra.mxu0 0.0
      %779 = vmatprep.subr.mxu0 0.0
      %780 = vmatpush1.xpose.msra.mxu0 0.0
      %781 = vmatprep.subr.mxu0 0.0
      %782 = vmatpush1.xpose.msra.mxu0 0.0
      %783 = vmatprep.subr.mxu0 0.0
      %784 = vmatpush1.xpose.msra.mxu0 0.0
      %785 = vmatprep.subr.mxu0 0.0
      %786 = vmatpush1.xpose.msra.mxu0 0.0
      %787 = vmatprep.subr.mxu0 0.0
      %788 = vmatpush1.xpose.msra.mxu0 0.0
      %789 = vmatprep.subr.mxu0 0.0
      %790 = vmatpush1.xpose.msra.mxu0 0.0
      %791 = vmatprep.subr.mxu0 0.0
      %792 = vmatpush1.xpose.msra.mxu0 0.0
      %793 = vmatprep.subr.mxu0 0.0
      %794 = vmatpush1.xpose.msra.mxu0 0.0
      %795 = vmatprep.subr.mxu0 0.0
      %796 = vmatpush1.xpose.msra.mxu0 0.0
      %797 = vmatprep.subr.mxu0 0.0
      %798 = vmatpush1.xpose.msra.mxu0 0.0
      %799 = vmatprep.subr.mxu0 0.0
      %800 = vmatpush1.xpose.msra.mxu0 0.0
      %801 = vmatprep.subr.mxu0 0.0
      %802 = vmatpush1.xpose.msra.mxu0 0.0
      %803 = vmatprep.subr.mxu0 0.0
      %804 = vmatpush1.xpose.msra.mxu0 0.0
      %805 = vmatprep.subr.mxu0 0.0
      %806 = vmatpush1.xpose.msra.mxu0 0.0
      %807 = vmatprep.subr.mxu0 0.0
      %808 = vmatpush1.xpose.msra.mxu0 0.0
      %809 = vmatprep.subr.mxu0 0.0
      %810 = vmatpush1.xpose.msra.mxu0 0.0
      %811 = vmatprep.subr.mxu0 0.0
      %812 = vmatpush1.xpose.msra.mxu0 0.0
      %813 = vmatprep.subr.mxu0 0.0
      %814 = vmatpush1.xpose.msra.mxu0 0.0
      %815 = vmatprep.subr.mxu0 0.0
      %816 = vmatpush1.xpose.msra.mxu0 0.0
      %817 = vmatprep.subr.mxu0 0.0
      %818 = vmatpush1.xpose.msra.mxu0 0.0
      %819 = vmatprep.subr.mxu0 0.0
      %820 = vmatpush1.xpose.msra.mxu0 0.0
      %821 = vmatprep.subr.mxu0 0.0
      %822 = vmatpush1.xpose.msra.mxu0 0.0
      %823 = vmatprep.subr.mxu0 0.0
      %824 = vmatpush1.xpose.msra.mxu0 0.0
      %825 = vmatprep.subr.mxu0 0.0
      %826 = vmatpush1.xpose.msra.mxu0 0.0
      %827 = vmatprep.subr.mxu0 0.0
      %828 = vmatpush1.xpose.msra.mxu0 0.0
      %829 = vmatprep.mubr.f32.mxu0 0.0
      %830 = vmatmul.mubr.f32.gmra.mrb[0].mxu0 %v761
      %v831 = vpop.f32.mrb[0].mxu0
      %v832 = vadd.f32 0.0, %v831
      %v833 = vpop.f32.mrb[0].mxu0
      %834 = vdwg.mxu0
      %v835 = vmul.f32 %v832, 0.35355338
      %v836 = vadd.f32 %v835, %v610
      %v837 = vsel %vm760, %v836, -inf
      %838 = vmax.xlane.f32.xlu0 %v837
      %v839 = vpop.xlane.xlu0 %838
      %v840 = vsub.f32 %v836, %v839
      %v841 = vmul.f32 %v840, 1.442695
      %v842 = vpow.pop %v841
      %v843 = vsel %vm760, %v842, 0.0
      %844 = vadd.xlane.f32.xlu0 %v843
      %v845 = vpop.xlane.xlu0 %844
      %v846 = vrcp.pop %v845
      %v847 = vmul.f32 %v842, %v846
      %848 = vrot.lane.b32.xlu0 %v749, 64
      %v849 = vpop.permute.xlu0 %848
      %v852 = vsel %vm760, %v847, 0
      %854 = vmatprep.subr.mxu0 0.0
      %855 = vmatpush1.msra.mxu0 %v849
      %856 = vmatprep.subr.mxu0 0.0
      %857 = vmatpush1.msra.mxu0 0.0
      %858 = vmatprep.subr.mxu0 0.0
      %859 = vmatpush1.msra.mxu0 0.0
      %860 = vmatprep.subr.mxu0 0.0
      %861 = vmatpush1.msra.mxu0 0.0
      %862 = vmatprep.subr.mxu0 0.0
      %863 = vmatpush1.msra.mxu0 0.0
      %864 = vmatprep.subr.mxu0 0.0
      %865 = vmatpush1.msra.mxu0 0.0
      %866 = vmatprep.subr.mxu0 0.0
      %867 = vmatpush1.msra.mxu0 0.0
      %868 = vmatprep.subr.mxu0 0.0
      %869 = vmatpush1.msra.mxu0 0.0
      %870 = vmatprep.subr.mxu0 0.0
      %871 = vmatpush1.msra.mxu0 0.0
      %872 = vmatprep.subr.mxu0 0.0
      %873 = vmatpush1.msra.mxu0 0.0
      %874 = vmatprep.subr.mxu0 0.0
      %875 = vmatpush1.msra.mxu0 0.0
      %876 = vmatprep.subr.mxu0 0.0
      %877 = vmatpush1.msra.mxu0 0.0
      %878 = vmatprep.subr.mxu0 0.0
      %879 = vmatpush1.msra.mxu0 0.0
      %880 = vmatprep.subr.mxu0 0.0
      %881 = vmatpush1.msra.mxu0 0.0
      %882 = vmatprep.subr.mxu0 0.0
      %883 = vmatpush1.msra.mxu0 0.0
      %884 = vmatprep.subr.mxu0 0.0
      %885 = vmatpush1.msra.mxu0 0.0
      %886 = vmatprep.subr.mxu0 0.0
      %887 = vmatpush1.msra.mxu0 0.0
      %888 = vmatprep.subr.mxu0 0.0
      %889 = vmatpush1.msra.mxu0 0.0
      %890 = vmatprep.subr.mxu0 0.0
      %891 = vmatpush1.msra.mxu0 0.0
      %892 = vmatprep.subr.mxu0 0.0
      %893 = vmatpush1.msra.mxu0 0.0
      %894 = vmatprep.subr.mxu0 0.0
      %895 = vmatpush1.msra.mxu0 0.0
      %896 = vmatprep.subr.mxu0 0.0
      %897 = vmatpush1.msra.mxu0 0.0
      %898 = vmatprep.subr.mxu0 0.0
      %899 = vmatpush1.msra.mxu0 0.0
      %900 = vmatprep.subr.mxu0 0.0
      %901 = vmatpush1.msra.mxu0 0.0
      %902 = vmatprep.subr.mxu0 0.0
      %903 = vmatpush1.msra.mxu0 0.0
      %904 = vmatprep.subr.mxu0 0.0
      %905 = vmatpush1.msra.mxu0 0.0
      %906 = vmatprep.subr.mxu0 0.0
      %907 = vmatpush1.msra.mxu0 0.0
      %908 = vmatprep.subr.mxu0 0.0
      %909 = vmatpush1.msra.mxu0 0.0
      %910 = vmatprep.subr.mxu0 0.0
      %911 = vmatpush1.msra.mxu0 0.0
      %912 = vmatprep.subr.mxu0 0.0
      %913 = vmatpush1.msra.mxu0 0.0
      %914 = vmatprep.subr.mxu0 0.0
      %915 = vmatpush1.msra.mxu0 0.0
      %916 = vmatprep.subr.mxu0 0.0
      %917 = vmatpush1.msra.mxu0 0.0
      %918 = vmatprep.mubr.f32.mxu0 0.0
      %919 = vmatmul.mubr.f32.gmra.mrb[0].mxu0 %v852
      %v920 = vpop.f32.mrb[0].mxu0
      %v921 = vadd.f32 0.0, %v920
      %v922 = vpop.f32.mrb[0].mxu0
      %923 = vdwg.mxu0
      %924 = vrot.lane.b32.xlu0 %v749, 120
      %v925 = vpop.permute.xlu0 %924
      %926 = vrot.lane.b32.xlu0 %v749, 88
      %v927 = vpop.permute.xlu0 %926
      %v928 = vsel %vm760, %v925, 0
      %v930 = vsel %vm760, %v927, 0
      %932 = vmatprep.subr.mxu0 0.0
      %933 = vmatpush1.xpose.msra.mxu0 %v930
      %934 = vmatprep.subr.mxu0 0.0
      %935 = vmatpush1.xpose.msra.mxu0 0.0
      %936 = vmatprep.subr.mxu0 0.0
      %937 = vmatpush1.xpose.msra.mxu0 0.0
      %938 = vmatprep.subr.mxu0 0.0
      %939 = vmatpush1.xpose.msra.mxu0 0.0
      %940 = vmatprep.subr.mxu0 0.0
      %941 = vmatpush1.xpose.msra.mxu0 0.0
      %942 = vmatprep.subr.mxu0 0.0
      %943 = vmatpush1.xpose.msra.mxu0 0.0
      %944 = vmatprep.subr.mxu0 0.0
      %945 = vmatpush1.xpose.msra.mxu0 0.0
      %946 = vmatprep.subr.mxu0 0.0
      %947 = vmatpush1.xpose.msra.mxu0 0.0
      %948 = vmatprep.subr.mxu0 0.0
      %949 = vmatpush1.xpose.msra.mxu0 0.0
      %950 = vmatprep.subr.mxu0 0.0
      %951 = vmatpush1.xpose.msra.mxu0 0.0
      %952 = vmatprep.subr.mxu0 0.0
      %953 = vmatpush1.xpose.msra.mxu0 0.0
      %954 = vmatprep.subr.mxu0 0.0
      %955 = vmatpush1.xpose.msra.mxu0 0.0
      %956 = vmatprep.subr.mxu0 0.0
      %957 = vmatpush1.xpose.msra.mxu0 0.0
      %958 = vmatprep.subr.mxu0 0.0
      %959 = vmatpush1.xpose.msra.mxu0 0.0
      %960 = vmatprep.subr.mxu0 0.0
      %961 = vmatpush1.xpose.msra.mxu0 0.0
      %962 = vmatprep.subr.mxu0 0.0
      %963 = vmatpush1.xpose.msra.mxu0 0.0
      %964 = vmatprep.subr.mxu0 0.0
      %965 = vmatpush1.xpose.msra.mxu0 0.0
      %966 = vmatprep.subr.mxu0 0.0
      %967 = vmatpush1.xpose.msra.mxu0 0.0
      %968 = vmatprep.subr.mxu0 0.0
      %969 = vmatpush1.xpose.msra.mxu0 0.0
      %970 = vmatprep.subr.mxu0 0.0
      %971 = vmatpush1.xpose.msra.mxu0 0.0
      %972 = vmatprep.subr.mxu0 0.0
      %973 = vmatpush1.xpose.msra.mxu0 0.0
      %974 = vmatprep.subr.mxu0 0.0
      %975 = vmatpush1.xpose.msra.mxu0 0.0
      %976 = vmatprep.subr.mxu0 0.0
      %977 = vmatpush1.xpose.msra.mxu0 0.0
      %978 = vmatprep.subr.mxu0 0.0
      %979 = vmatpush1.xpose.msra.mxu0 0.0
      %980 = vmatprep.subr.mxu0 0.0
      %981 = vmatpush1.xpose.msra.mxu0 0.0
      %982 = vmatprep.subr.mxu0 0.0
      %983 = vmatpush1.xpose.msra.mxu0 0.0
      %984 = vmatprep.subr.mxu0 0.0
      %985 = vmatpush1.xpose.msra.mxu0 0.0
      %986 = vmatprep.subr.mxu0 0.0
      %987 = vmatpush1.xpose.msra.mxu0 0.0
      %988 = vmatprep.subr.mxu0 0.0
      %989 = vmatpush1.xpose.msra.mxu0 0.0
      %990 = vmatprep.subr.mxu0 0.0
      %991 = vmatpush1.xpose.msra.mxu0 0.0
      %992 = vmatprep.subr.mxu0 0.0
      %993 = vmatpush1.xpose.msra.mxu0 0.0
      %994 = vmatprep.subr.mxu0 0.0
      %995 = vmatpush1.xpose.msra.mxu0 0.0
      %996 = vmatprep.mubr.f32.mxu0 0.0
      %997 = vmatmul.mubr.f32.gmra.mrb[0].mxu0 %v928
      %v998 = vpop.f32.mrb[0].mxu0
      %v999 = vadd.f32 0.0, %v998
      %v1000 = vpop.f32.mrb[0].mxu0
      %1001 = vdwg.mxu0
      %v1002 = vmul.f32 %v999, 0.35355338
      %v1003 = vadd.f32 %v1002, %v610
      %v1004 = vsel %vm760, %v1003, -inf
      %1005 = vmax.xlane.f32.xlu0 %v1004
      %v1006 = vpop.xlane.xlu0 %1005
      %v1007 = vsub.f32 %v1003, %v1006
      %v1008 = vmul.f32 %v1007, 1.442695
      %v1009 = vpow.pop %v1008
      %v1010 = vsel %vm760, %v1009, 0.0
      %1011 = vadd.xlane.f32.xlu0 %v1010
      %v1012 = vpop.xlane.xlu0 %1011
      %v1013 = vrcp.pop %v1012
      %v1014 = vmul.f32 %v1009, %v1013
      %1015 = vrot.lane.b32.xlu0 %v749, 56
      %v1016 = vpop.permute.xlu0 %1015
      %v1019 = vsel %vm760, %v1014, 0
      %1021 = vmatprep.subr.mxu0 0.0
      %1022 = vmatpush1.msra.mxu0 %v1016
      %1023 = vmatprep.subr.mxu0 0.0
      %1024 = vmatpush1.msra.mxu0 0.0
      %1025 = vmatprep.subr.mxu0 0.0
      %1026 = vmatpush1.msra.mxu0 0.0
      %1027 = vmatprep.subr.mxu0 0.0
      %1028 = vmatpush1.msra.mxu0 0.0
      %1029 = vmatprep.subr.mxu0 0.0
      %1030 = vmatpush1.msra.mxu0 0.0
      %1031 = vmatprep.subr.mxu0 0.0
      %1032 = vmatpush1.msra.mxu0 0.0
      %1033 = vmatprep.subr.mxu0 0.0
      %1034 = vmatpush1.msra.mxu0 0.0
      %1035 = vmatprep.subr.mxu0 0.0
      %1036 = vmatpush1.msra.mxu0 0.0
      %1037 = vmatprep.subr.mxu0 0.0
      %1038 = vmatpush1.msra.mxu0 0.0
      %1039 = vmatprep.subr.mxu0 0.0
      %1040 = vmatpush1.msra.mxu0 0.0
      %1041 = vmatprep.subr.mxu0 0.0
      %1042 = vmatpush1.msra.mxu0 0.0
      %1043 = vmatprep.subr.mxu0 0.0
      %1044 = vmatpush1.msra.mxu0 0.0
      %1045 = vmatprep.subr.mxu0 0.0
      %1046 = vmatpush1.msra.mxu0 0.0
      %1047 = vmatprep.subr.mxu0 0.0
      %1048 = vmatpush1.msra.mxu0 0.0
      %1049 = vmatprep.subr.mxu0 0.0
      %1050 = vmatpush1.msra.mxu0 0.0
      %1051 = vmatprep.subr.mxu0 0.0
      %1052 = vmatpush1.msra.mxu0 0.0
      %1053 = vmatprep.subr.mxu0 0.0
      %1054 = vmatpush1.msra.mxu0 0.0
      %1055 = vmatprep.subr.mxu0 0.0
      %1056 = vmatpush1.msra.mxu0 0.0
      %1057 = vmatprep.subr.mxu0 0.0
      %1058 = vmatpush1.msra.mxu0 0.0
      %1059 = vmatprep.subr.mxu0 0.0
      %1060 = vmatpush1.msra.mxu0 0.0
      %1061 = vmatprep.subr.mxu0 0.0
      %1062 = vmatpush1.msra.mxu0 0.0
      %1063 = vmatprep.subr.mxu0 0.0
      %1064 = vmatpush1.msra.mxu0 0.0
      %1065 = vmatprep.subr.mxu0 0.0
      %1066 = vmatpush1.msra.mxu0 0.0
      %1067 = vmatprep.subr.mxu0 0.0
      %1068 = vmatpush1.msra.mxu0 0.0
      %1069 = vmatprep.subr.mxu0 0.0
      %1070 = vmatpush1.msra.mxu0 0.0
      %1071 = vmatprep.subr.mxu0 0.0
      %1072 = vmatpush1.msra.mxu0 0.0
      %1073 = vmatprep.subr.mxu0 0.0
      %1074 = vmatpush1.msra.mxu0 0.0
      %1075 = vmatprep.subr.mxu0 0.0
      %1076 = vmatpush1.msra.mxu0 0.0
      %1077 = vmatprep.subr.mxu0 0.0
      %1078 = vmatpush1.msra.mxu0 0.0
      %1079 = vmatprep.subr.mxu0 0.0
      %1080 = vmatpush1.msra.mxu0 0.0
      %1081 = vmatprep.subr.mxu0 0.0
      %1082 = vmatpush1.msra.mxu0 0.0
      %1083 = vmatprep.subr.mxu0 0.0
      %1084 = vmatpush1.msra.mxu0 0.0
      %1085 = vmatprep.mubr.f32.mxu0 0.0
      %1086 = vmatmul.mubr.f32.gmra.mrb[0].mxu0 %v1019
      %v1087 = vpop.f32.mrb[0].mxu0
      %v1088 = vadd.f32 0.0, %v1087
      %v1089 = vpop.f32.mrb[0].mxu0
      %1090 = vdwg.mxu0
      %1091 = vrot.lane.b32.xlu0 %v749, 112
      %v1092 = vpop.permute.xlu0 %1091
      %1093 = vrot.lane.b32.xlu0 %v749, 80
      %v1094 = vpop.permute.xlu0 %1093
      %v1095 = vsel %vm760, %v1092, 0
      %v1097 = vsel %vm760, %v1094, 0
      %1099 = vmatprep.subr.mxu0 0.0
      %1100 = vmatpush1.xpose.msra.mxu0 %v1097
      %1101 = vmatprep.subr.mxu0 0.0
      %1102 = vmatpush1.xpose.msra.mxu0 0.0
      %1103 = vmatprep.subr.mxu0 0.0
      %1104 = vmatpush1.xpose.msra.mxu0 0.0
      %1105 = vmatprep.subr.mxu0 0.0
      %1106 = vmatpush1.xpose.msra.mxu0 0.0
      %1107 = vmatprep.subr.mxu0 0.0
      %1108 = vmatpush1.xpose.msra.mxu0 0.0
      %1109 = vmatprep.subr.mxu0 0.0
      %1110 = vmatpush1.xpose.msra.mxu0 0.0
      %1111 = vmatprep.subr.mxu0 0.0
      %1112 = vmatpush1.xpose.msra.mxu0 0.0
      %1113 = vmatprep.subr.mxu0 0.0
      %1114 = vmatpush1.xpose.msra.mxu0 0.0
      %1115 = vmatprep.subr.mxu0 0.0
      %1116 = vmatpush1.xpose.msra.mxu0 0.0
      %1117 = vmatprep.subr.mxu0 0.0
      %1118 = vmatpush1.xpose.msra.mxu0 0.0
      %1119 = vmatprep.subr.mxu0 0.0
      %1120 = vmatpush1.xpose.msra.mxu0 0.0
      %1121 = vmatprep.subr.mxu0 0.0
      %1122 = vmatpush1.xpose.msra.mxu0 0.0
      %1123 = vmatprep.subr.mxu0 0.0
      %1124 = vmatpush1.xpose.msra.mxu0 0.0
      %1125 = vmatprep.subr.mxu0 0.0
      %1126 = vmatpush1.xpose.msra.mxu0 0.0
      %1127 = vmatprep.subr.mxu0 0.0
      %1128 = vmatpush1.xpose.msra.mxu0 0.0
      %1129 = vmatprep.subr.mxu0 0.0
      %1130 = vmatpush1.xpose.msra.mxu0 0.0
      %1131 = vmatprep.subr.mxu0 0.0
      %1132 = vmatpush1.xpose.msra.mxu0 0.0
      %1133 = vmatprep.subr.mxu0 0.0
      %1134 = vmatpush1.xpose.msra.mxu0 0.0
      %1135 = vmatprep.subr.mxu0 0.0
      %1136 = vmatpush1.xpose.msra.mxu0 0.0
      %1137 = vmatprep.subr.mxu0 0.0
      %1138 = vmatpush1.xpose.msra.mxu0 0.0
      %1139 = vmatprep.subr.mxu0 0.0
      %1140 = vmatpush1.xpose.msra.mxu0 0.0
      %1141 = vmatprep.subr.mxu0 0.0
      %1142 = vmatpush1.xpose.msra.mxu0 0.0
      %1143 = vmatprep.subr.mxu0 0.0
      %1144 = vmatpush1.xpose.msra.mxu0 0.0
      %1145 = vmatprep.subr.mxu0 0.0
      %1146 = vmatpush1.xpose.msra.mxu0 0.0
      %1147 = vmatprep.subr.mxu0 0.0
      %1148 = vmatpush1.xpose.msra.mxu0 0.0
      %1149 = vmatprep.subr.mxu0 0.0
      %1150 = vmatpush1.xpose.msra.mxu0 0.0
      %1151 = vmatprep.subr.mxu0 0.0
      %1152 = vmatpush1.xpose.msra.mxu0 0.0
      %1153 = vmatprep.subr.mxu0 0.0
      %1154 = vmatpush1.xpose.msra.mxu0 0.0
      %1155 = vmatprep.subr.mxu0 0.0
      %1156 = vmatpush1.xpose.msra.mxu0 0.0
      %1157 = vmatprep.subr.mxu0 0.0
      %1158 = vmatpush1.xpose.msra.mxu0 0.0
      %1159 = vmatprep.subr.mxu0 0.0
      %1160 = vmatpush1.xpose.msra.mxu0 0.0
      %1161 = vmatprep.subr.mxu0 0.0
      %1162 = vmatpush1.xpose.msra.mxu0 0.0
      %1163 = vmatprep.mubr.f32.mxu0 0.0
      %1164 = vmatmul.mubr.f32.gmra.mrb[0].mxu0 %v1095
      %v1165 = vpop.f32.mrb[0].mxu0
      %v1166 = vadd.f32 0.0, %v1165
      %v1167 = vpop.f32.mrb[0].mxu0
      %1168 = vdwg.mxu0
      %v1169 = vmul.f32 %v1166, 0.35355338
      %v1170 = vadd.f32 %v1169, %v610
      %v1171 = vsel %vm760, %v1170, -inf
      %1172 = vmax.xlane.f32.xlu0 %v1171
      %v1173 = vpop.xlane.xlu0 %1172
      %v1174 = vsub.f32 %v1170, %v1173
      %v1175 = vmul.f32 %v1174, 1.442695
      %v1176 = vpow.pop %v1175
      %v1177 = vsel %vm760, %v1176, 0.0
      %1178 = vadd.xlane.f32.xlu0 %v1177
      %v1179 = vpop.xlane.xlu0 %1178
      %v1180 = vrcp.pop %v1179
      %v1181 = vmul.f32 %v1176, %v1180
      %1182 = vrot.lane.b32.xlu0 %v749, 48
      %v1183 = vpop.permute.xlu0 %1182
      %v1186 = vsel %vm760, %v1181, 0
      %1188 = vmatprep.subr.mxu0 0.0
      %1189 = vmatpush1.msra.mxu0 %v1183
      %1190 = vmatprep.subr.mxu0 0.0
      %1191 = vmatpush1.msra.mxu0 0.0
      %1192 = vmatprep.subr.mxu0 0.0
      %1193 = vmatpush1.msra.mxu0 0.0
      %1194 = vmatprep.subr.mxu0 0.0
      %1195 = vmatpush1.msra.mxu0 0.0
      %1196 = vmatprep.subr.mxu0 0.0
      %1197 = vmatpush1.msra.mxu0 0.0
      %1198 = vmatprep.subr.mxu0 0.0
      %1199 = vmatpush1.msra.mxu0 0.0
      %1200 = vmatprep.subr.mxu0 0.0
      %1201 = vmatpush1.msra.mxu0 0.0
      %1202 = vmatprep.subr.mxu0 0.0
      %1203 = vmatpush1.msra.mxu0 0.0
      %1204 = vmatprep.subr.mxu0 0.0
      %1205 = vmatpush1.msra.mxu0 0.0
      %1206 = vmatprep.subr.mxu0 0.0
      %1207 = vmatpush1.msra.mxu0 0.0
      %1208 = vmatprep.subr.mxu0 0.0
      %1209 = vmatpush1.msra.mxu0 0.0
      %1210 = vmatprep.subr.mxu0 0.0
      %1211 = vmatpush1.msra.mxu0 0.0
      %1212 = vmatprep.subr.mxu0 0.0
      %1213 = vmatpush1.msra.mxu0 0.0
      %1214 = vmatprep.subr.mxu0 0.0
      %1215 = vmatpush1.msra.mxu0 0.0
      %1216 = vmatprep.subr.mxu0 0.0
      %1217 = vmatpush1.msra.mxu0 0.0
      %1218 = vmatprep.subr.mxu0 0.0
      %1219 = vmatpush1.msra.mxu0 0.0
      %1220 = vmatprep.subr.mxu0 0.0
      %1221 = vmatpush1.msra.mxu0 0.0
      %1222 = vmatprep.subr.mxu0 0.0
      %1223 = vmatpush1.msra.mxu0 0.0
      %1224 = vmatprep.subr.mxu0 0.0
      %1225 = vmatpush1.msra.mxu0 0.0
      %1226 = vmatprep.subr.mxu0 0.0
      %1227 = vmatpush1.msra.mxu0 0.0
      %1228 = vmatprep.subr.mxu0 0.0
      %1229 = vmatpush1.msra.mxu0 0.0
      %1230 = vmatprep.subr.mxu0 0.0
      %1231 = vmatpush1.msra.mxu0 0.0
      %1232 = vmatprep.subr.mxu0 0.0
      %1233 = vmatpush1.msra.mxu0 0.0
      %1234 = vmatprep.subr.mxu0 0.0
      %1235 = vmatpush1.msra.mxu0 0.0
      %1236 = vmatprep.subr.mxu0 0.0
      %1237 = vmatpush1.msra.mxu0 0.0
      %1238 = vmatprep.subr.mxu0 0.0
      %1239 = vmatpush1.msra.mxu0 0.0
      %1240 = vmatprep.subr.mxu0 0.0
      %1241 = vmatpush1.msra.mxu0 0.0
      %1242 = vmatprep.subr.mxu0 0.0
      %1243 = vmatpush1.msra.mxu0 0.0
      %1244 = vmatprep.subr.mxu0 0.0
      %1245 = vmatpush1.msra.mxu0 0.0
      %1246 = vmatprep.subr.mxu0 0.0
      %1247 = vmatpush1.msra.mxu0 0.0
      %1248 = vmatprep.subr.mxu0 0.0
      %1249 = vmatpush1.msra.mxu0 0.0
      %1250 = vmatprep.subr.mxu0 0.0
      %1251 = vmatpush1.msra.mxu0 0.0
      %1252 = vmatprep.mubr.f32.mxu0 0.0
      %1253 = vmatmul.mubr.f32.gmra.mrb[0].mxu0 %v1186
      %v1254 = vpop.f32.mrb[0].mxu0
      %v1255 = vadd.f32 0.0, %v1254
      %v1256 = vpop.f32.mrb[0].mxu0
      %1257 = vdwg.mxu0
      %1258 = vrot.lane.b32.xlu0 %v749, 104
      %v1259 = vpop.permute.xlu0 %1258
      %1260 = vrot.lane.b32.xlu0 %v749, 72
      %v1261 = vpop.permute.xlu0 %1260
      %v1262 = vsel %vm760, %v1259, 0
      %v1264 = vsel %vm760, %v1261, 0
      %1266 = vmatprep.subr.mxu0 0.0
      %1267 = vmatpush1.xpose.msra.mxu0 %v1264
      %1268 = vmatprep.subr.mxu0 0.0
      %1269 = vmatpush1.xpose.msra.mxu0 0.0
      %1270 = vmatprep.subr.mxu0 0.0
      %1271 = vmatpush1.xpose.msra.mxu0 0.0
      %1272 = vmatprep.subr.mxu0 0.0
      %1273 = vmatpush1.xpose.msra.mxu0 0.0
      %1274 = vmatprep.subr.mxu0 0.0
      %1275 = vmatpush1.xpose.msra.mxu0 0.0
      %1276 = vmatprep.subr.mxu0 0.0
      %1277 = vmatpush1.xpose.msra.mxu0 0.0
      %1278 = vmatprep.subr.mxu0 0.0
      %1279 = vmatpush1.xpose.msra.mxu0 0.0
      %1280 = vmatprep.subr.mxu0 0.0
      %1281 = vmatpush1.xpose.msra.mxu0 0.0
      %1282 = vmatprep.subr.mxu0 0.0
      %1283 = vmatpush1.xpose.msra.mxu0 0.0
      %1284 = vmatprep.subr.mxu0 0.0
      %1285 = vmatpush1.xpose.msra.mxu0 0.0
      %1286 = vmatprep.subr.mxu0 0.0
      %1287 = vmatpush1.xpose.msra.mxu0 0.0
      %1288 = vmatprep.subr.mxu0 0.0
      %1289 = vmatpush1.xpose.msra.mxu0 0.0
      %1290 = vmatprep.subr.mxu0 0.0
      %1291 = vmatpush1.xpose.msra.mxu0 0.0
      %1292 = vmatprep.subr.mxu0 0.0
      %1293 = vmatpush1.xpose.msra.mxu0 0.0
      %1294 = vmatprep.subr.mxu0 0.0
      %1295 = vmatpush1.xpose.msra.mxu0 0.0
      %1296 = vmatprep.subr.mxu0 0.0
      %1297 = vmatpush1.xpose.msra.mxu0 0.0
      %1298 = vmatprep.subr.mxu0 0.0
      %1299 = vmatpush1.xpose.msra.mxu0 0.0
      %1300 = vmatprep.subr.mxu0 0.0
      %1301 = vmatpush1.xpose.msra.mxu0 0.0
      %1302 = vmatprep.subr.mxu0 0.0
      %1303 = vmatpush1.xpose.msra.mxu0 0.0
      %1304 = vmatprep.subr.mxu0 0.0
      %1305 = vmatpush1.xpose.msra.mxu0 0.0
      %1306 = vmatprep.subr.mxu0 0.0
      %1307 = vmatpush1.xpose.msra.mxu0 0.0
      %1308 = vmatprep.subr.mxu0 0.0
      %1309 = vmatpush1.xpose.msra.mxu0 0.0
      %1310 = vmatprep.subr.mxu0 0.0
      %1311 = vmatpush1.xpose.msra.mxu0 0.0
      %1312 = vmatprep.subr.mxu0 0.0
      %1313 = vmatpush1.xpose.msra.mxu0 0.0
      %1314 = vmatprep.subr.mxu0 0.0
      %1315 = vmatpush1.xpose.msra.mxu0 0.0
      %1316 = vmatprep.subr.mxu0 0.0
      %1317 = vmatpush1.xpose.msra.mxu0 0.0
      %1318 = vmatprep.subr.mxu0 0.0
      %1319 = vmatpush1.xpose.msra.mxu0 0.0
      %1320 = vmatprep.subr.mxu0 0.0
      %1321 = vmatpush1.xpose.msra.mxu0 0.0
      %1322 = vmatprep.subr.mxu0 0.0
      %1323 = vmatpush1.xpose.msra.mxu0 0.0
      %1324 = vmatprep.subr.mxu0 0.0
      %1325 = vmatpush1.xpose.msra.mxu0 0.0
      %1326 = vmatprep.subr.mxu0 0.0
      %1327 = vmatpush1.xpose.msra.mxu0 0.0
      %1328 = vmatprep.subr.mxu0 0.0
      %1329 = vmatpush1.xpose.msra.mxu0 0.0
      %1330 = vmatprep.mubr.f32.mxu0 0.0
      %1331 = vmatmul.mubr.f32.gmra.mrb[0].mxu0 %v1262
      %v1332 = vpop.f32.mrb[0].mxu0
      %v1333 = vadd.f32 0.0, %v1332
      %v1334 = vpop.f32.mrb[0].mxu0
      %1335 = vdwg.mxu0
      %v1336 = vmul.f32 %v1333, 0.35355338
      %v1337 = vadd.f32 %v1336, %v610
      %v1338 = vsel %vm760, %v1337, -inf
      %1339 = vmax.xlane.f32.xlu0 %v1338
      %v1340 = vpop.xlane.xlu0 %1339
      %v1341 = vsub.f32 %v1337, %v1340
      %v1342 = vmul.f32 %v1341, 1.442695
      %v1343 = vpow.pop %v1342
      %v1344 = vsel %vm760, %v1343, 0.0
      %1345 = vadd.xlane.f32.xlu0 %v1344
      %v1346 = vpop.xlane.xlu0 %1345
      %v1347 = vrcp.pop %v1346
      %v1348 = vmul.f32 %v1343, %v1347
      %1349 = vrot.lane.b32.xlu0 %v749, 40
      %v1350 = vpop.permute.xlu0 %1349
      %v1353 = vsel %vm760, %v1348, 0
      %1355 = vmatprep.subr.mxu0 0.0
      %1356 = vmatpush1.msra.mxu0 %v1350
      %1357 = vmatprep.subr.mxu0 0.0
      %1358 = vmatpush1.msra.mxu0 0.0
      %1359 = vmatprep.subr.mxu0 0.0
      %1360 = vmatpush1.msra.mxu0 0.0
      %1361 = vmatprep.subr.mxu0 0.0
      %1362 = vmatpush1.msra.mxu0 0.0
      %1363 = vmatprep.subr.mxu0 0.0
      %1364 = vmatpush1.msra.mxu0 0.0
      %1365 = vmatprep.subr.mxu0 0.0
      %1366 = vmatpush1.msra.mxu0 0.0
      %1367 = vmatprep.subr.mxu0 0.0
      %1368 = vmatpush1.msra.mxu0 0.0
      %1369 = vmatprep.subr.mxu0 0.0
      %1370 = vmatpush1.msra.mxu0 0.0
      %1371 = vmatprep.subr.mxu0 0.0
      %1372 = vmatpush1.msra.mxu0 0.0
      %1373 = vmatprep.subr.mxu0 0.0
      %1374 = vmatpush1.msra.mxu0 0.0
      %1375 = vmatprep.subr.mxu0 0.0
      %1376 = vmatpush1.msra.mxu0 0.0
      %1377 = vmatprep.subr.mxu0 0.0
      %1378 = vmatpush1.msra.mxu0 0.0
      %1379 = vmatprep.subr.mxu0 0.0
      %1380 = vmatpush1.msra.mxu0 0.0
      %1381 = vmatprep.subr.mxu0 0.0
      %1382 = vmatpush1.msra.mxu0 0.0
      %1383 = vmatprep.subr.mxu0 0.0
      %1384 = vmatpush1.msra.mxu0 0.0
      %1385 = vmatprep.subr.mxu0 0.0
      %1386 = vmatpush1.msra.mxu0 0.0
      %1387 = vmatprep.subr.mxu0 0.0
      %1388 = vmatpush1.msra.mxu0 0.0
      %1389 = vmatprep.subr.mxu0 0.0
      %1390 = vmatpush1.msra.mxu0 0.0
      %1391 = vmatprep.subr.mxu0 0.0
      %1392 = vmatpush1.msra.mxu0 0.0
      %1393 = vmatprep.subr.mxu0 0.0
      %1394 = vmatpush1.msra.mxu0 0.0
      %1395 = vmatprep.subr.mxu0 0.0
      %1396 = vmatpush1.msra.mxu0 0.0
      %1397 = vmatprep.subr.mxu0 0.0
      %1398 = vmatpush1.msra.mxu0 0.0
      %1399 = vmatprep.subr.mxu0 0.0
      %1400 = vmatpush1.msra.mxu0 0.0
      %1401 = vmatprep.subr.mxu0 0.0
      %1402 = vmatpush1.msra.mxu0 0.0
      %1403 = vmatprep.subr.mxu0 0.0
      %1404 = vmatpush1.msra.mxu0 0.0
      %1405 = vmatprep.subr.mxu0 0.0
      %1406 = vmatpush1.msra.mxu0 0.0
      %1407 = vmatprep.subr.mxu0 0.0
      %1408 = vmatpush1.msra.mxu0 0.0
      %1409 = vmatprep.subr.mxu0 0.0
      %1410 = vmatpush1.msra.mxu0 0.0
      %1411 = vmatprep.subr.mxu0 0.0
      %1412 = vmatpush1.msra.mxu0 0.0
      %1413 = vmatprep.subr.mxu0 0.0
      %1414 = vmatpush1.msra.mxu0 0.0
      %1415 = vmatprep.subr.mxu0 0.0
      %1416 = vmatpush1.msra.mxu0 0.0
      %1417 = vmatprep.subr.mxu0 0.0
      %1418 = vmatpush1.msra.mxu0 0.0
      %1419 = vmatprep.mubr.f32.mxu0 0.0
      %1420 = vmatmul.mubr.f32.gmra.mrb[0].mxu0 %v1353
      %v1421 = vpop.f32.mrb[0].mxu0
      %v1422 = vadd.f32 0.0, %v1421
      %v1423 = vpop.f32.mrb[0].mxu0
      %1424 = vdwg.mxu0
      %1426 = vrot.lane.b32.xlu0 %v1088, 8
      %v1427 = vpop.permute.xlu0 %1426
      %1430 = vrot.lane.b32.xlu0 %v1255, 16
      %v1431 = vpop.permute.xlu0 %1430
      %1434 = vrot.lane.b32.xlu0 %v1422, 24
      %v1435 = vpop.permute.xlu0 %1434
      %v1437 = vsel %vm760, %v921, %v1427
      %vm1438 = vcmask 130048
      %v1439 = vsel %vm1438, %v1437, %v1431
      %vm1440 = vcmask 195584
      %v1441 = vsel %vm1440, %v1439, %v1435
      %1443 = vrot.lane.b32.xlu0 %v754, 96
      %v1444 = vpop.permute.xlu0 %1443
      %v1445 = vsel %vm760, %v754, 0
      %v1447 = vsel %vm760, %v1444, 0
      %1449 = vmatprep.subr.mxu0 0.0
      %1450 = vmatpush1.xpose.msra.mxu0 %v1447
      %1451 = vmatprep.subr.mxu0 0.0
      %1452 = vmatpush1.xpose.msra.mxu0 0.0
      %1453 = vmatprep.subr.mxu0 0.0
      %1454 = vmatpush1.xpose.msra.mxu0 0.0
      %1455 = vmatprep.subr.mxu0 0.0
      %1456 = vmatpush1.xpose.msra.mxu0 0.0
      %1457 = vmatprep.subr.mxu0 0.0
      %1458 = vmatpush1.xpose.msra.mxu0 0.0
      %1459 = vmatprep.subr.mxu0 0.0
      %1460 = vmatpush1.xpose.msra.mxu0 0.0
      %1461 = vmatprep.subr.mxu0 0.0
      %1462 = vmatpush1.xpose.msra.mxu0 0.0
      %1463 = vmatprep.subr.mxu0 0.0
      %1464 = vmatpush1.xpose.msra.mxu0 0.0
      %1465 = vmatprep.subr.mxu0 0.0
      %1466 = vmatpush1.xpose.msra.mxu0 0.0
      %1467 = vmatprep.subr.mxu0 0.0
      %1468 = vmatpush1.xpose.msra.mxu0 0.0
      %1469 = vmatprep.subr.mxu0 0.0
      %1470 = vmatpush1.xpose.msra.mxu0 0.0
      %1471 = vmatprep.subr.mxu0 0.0
      %1472 = vmatpush1.xpose.msra.mxu0 0.0
      %1473 = vmatprep.subr.mxu0 0.0
      %1474 = vmatpush1.xpose.msra.mxu0 0.0
      %1475 = vmatprep.subr.mxu0 0.0
      %1476 = vmatpush1.xpose.msra.mxu0 0.0
      %1477 = vmatprep.subr.mxu0 0.0
      %1478 = vmatpush1.xpose.msra.mxu0 0.0
      %1479 = vmatprep.subr.mxu0 0.0
      %1480 = vmatpush1.xpose.msra.mxu0 0.0
      %1481 = vmatprep.subr.mxu0 0.0
      %1482 = vmatpush1.xpose.msra.mxu0 0.0
      %1483 = vmatprep.subr.mxu0 0.0
      %1484 = vmatpush1.xpose.msra.mxu0 0.0
      %1485 = vmatprep.subr.mxu0 0.0
      %1486 = vmatpush1.xpose.msra.mxu0 0.0
      %1487 = vmatprep.subr.mxu0 0.0
      %1488 = vmatpush1.xpose.msra.mxu0 0.0
      %1489 = vmatprep.subr.mxu0 0.0
      %1490 = vmatpush1.xpose.msra.mxu0 0.0
      %1491 = vmatprep.subr.mxu0 0.0
      %1492 = vmatpush1.xpose.msra.mxu0 0.0
      %1493 = vmatprep.subr.mxu0 0.0
      %1494 = vmatpush1.xpose.msra.mxu0 0.0
      %1495 = vmatprep.subr.mxu0 0.0
      %1496 = vmatpush1.xpose.msra.mxu0 0.0
      %1497 = vmatprep.subr.mxu0 0.0
      %1498 = vmatpush1.xpose.msra.mxu0 0.0
      %1499 = vmatprep.subr.mxu0 0.0
      %1500 = vmatpush1.xpose.msra.mxu0 0.0
      %1501 = vmatprep.subr.mxu0 0.0
      %1502 = vmatpush1.xpose.msra.mxu0 0.0
      %1503 = vmatprep.subr.mxu0 0.0
      %1504 = vmatpush1.xpose.msra.mxu0 0.0
      %1505 = vmatprep.subr.mxu0 0.0
      %1506 = vmatpush1.xpose.msra.mxu0 0.0
      %1507 = vmatprep.subr.mxu0 0.0
      %1508 = vmatpush1.xpose.msra.mxu0 0.0
      %1509 = vmatprep.subr.mxu0 0.0
      %1510 = vmatpush1.xpose.msra.mxu0 0.0
      %1511 = vmatprep.subr.mxu0 0.0
      %1512 = vmatpush1.xpose.msra.mxu0 0.0
      %1513 = vmatprep.mubr.f32.mxu0 0.0
      %1514 = vmatmul.mubr.f32.gmra.mrb[0].mxu0 %v1445
      %v1515 = vpop.f32.mrb[0].mxu0
      %v1516 = vadd.f32 0.0, %v1515
      %v1517 = vpop.f32.mrb[0].mxu0
      %1518 = vdwg.mxu0
      %v1519 = vmul.f32 %v1516, 0.35355338
      %v1520 = vadd.f32 %v1519, %v611
      %v1521 = vsel %vm760, %v1520, -inf
      %1522 = vmax.xlane.f32.xlu0 %v1521
      %v1523 = vpop.xlane.xlu0 %1522
      %v1524 = vsub.f32 %v1520, %v1523
      %v1525 = vmul.f32 %v1524, 1.442695
      %v1526 = vpow.pop %v1525
      %v1527 = vsel %vm760, %v1526, 0.0
      %1528 = vadd.xlane.f32.xlu0 %v1527
      %v1529 = vpop.xlane.xlu0 %1528
      %v1530 = vrcp.pop %v1529
      %v1531 = vmul.f32 %v1526, %v1530
      %1532 = vrot.lane.b32.xlu0 %v754, 64
      %v1533 = vpop.permute.xlu0 %1532
      %v1536 = vsel %vm760, %v1531, 0
      %1538 = vmatprep.subr.mxu0 0.0
      %1539 = vmatpush1.msra.mxu0 %v1533
      %1540 = vmatprep.subr.mxu0 0.0
      %1541 = vmatpush1.msra.mxu0 0.0
      %1542 = vmatprep.subr.mxu0 0.0
      %1543 = vmatpush1.msra.mxu0 0.0
      %1544 = vmatprep.subr.mxu0 0.0
      %1545 = vmatpush1.msra.mxu0 0.0
      %1546 = vmatprep.subr.mxu0 0.0
      %1547 = vmatpush1.msra.mxu0 0.0
      %1548 = vmatprep.subr.mxu0 0.0
      %1549 = vmatpush1.msra.mxu0 0.0
      %1550 = vmatprep.subr.mxu0 0.0
      %1551 = vmatpush1.msra.mxu0 0.0
      %1552 = vmatprep.subr.mxu0 0.0
      %1553 = vmatpush1.msra.mxu0 0.0
      %1554 = vmatprep.subr.mxu0 0.0
      %1555 = vmatpush1.msra.mxu0 0.0
      %1556 = vmatprep.subr.mxu0 0.0
      %1557 = vmatpush1.msra.mxu0 0.0
      %1558 = vmatprep.subr.mxu0 0.0
      %1559 = vmatpush1.msra.mxu0 0.0
      %1560 = vmatprep.subr.mxu0 0.0
      %1561 = vmatpush1.msra.mxu0 0.0
      %1562 = vmatprep.subr.mxu0 0.0
      %1563 = vmatpush1.msra.mxu0 0.0
      %1564 = vmatprep.subr.mxu0 0.0
      %1565 = vmatpush1.msra.mxu0 0.0
      %1566 = vmatprep.subr.mxu0 0.0
      %1567 = vmatpush1.msra.mxu0 0.0
      %1568 = vmatprep.subr.mxu0 0.0
      %1569 = vmatpush1.msra.mxu0 0.0
      %1570 = vmatprep.subr.mxu0 0.0
      %1571 = vmatpush1.msra.mxu0 0.0
      %1572 = vmatprep.subr.mxu0 0.0
      %1573 = vmatpush1.msra.mxu0 0.0
      %1574 = vmatprep.subr.mxu0 0.0
      %1575 = vmatpush1.msra.mxu0 0.0
      %1576 = vmatprep.subr.mxu0 0.0
      %1577 = vmatpush1.msra.mxu0 0.0
      %1578 = vmatprep.subr.mxu0 0.0
      %1579 = vmatpush1.msra.mxu0 0.0
      %1580 = vmatprep.subr.mxu0 0.0
      %1581 = vmatpush1.msra.mxu0 0.0
      %1582 = vmatprep.subr.mxu0 0.0
      %1583 = vmatpush1.msra.mxu0 0.0
      %1584 = vmatprep.subr.mxu0 0.0
      %1585 = vmatpush1.msra.mxu0 0.0
      %1586 = vmatprep.subr.mxu0 0.0
      %1587 = vmatpush1.msra.mxu0 0.0
      %1588 = vmatprep.subr.mxu0 0.0
      %1589 = vmatpush1.msra.mxu0 0.0
      %1590 = vmatprep.subr.mxu0 0.0
      %1591 = vmatpush1.msra.mxu0 0.0
      %1592 = vmatprep.subr.mxu0 0.0
      %1593 = vmatpush1.msra.mxu0 0.0
      %1594 = vmatprep.subr.mxu0 0.0
      %1595 = vmatpush1.msra.mxu0 0.0
      %1596 = vmatprep.subr.mxu0 0.0
      %1597 = vmatpush1.msra.mxu0 0.0
      %1598 = vmatprep.subr.mxu0 0.0
      %1599 = vmatpush1.msra.mxu0 0.0
      %1600 = vmatprep.subr.mxu0 0.0
      %1601 = vmatpush1.msra.mxu0 0.0
      %1602 = vmatprep.mubr.f32.mxu0 0.0
      %1603 = vmatmul.mubr.f32.gmra.mrb[0].mxu0 %v1536
      %v1604 = vpop.f32.mrb[0].mxu0
      %v1605 = vadd.f32 0.0, %v1604
      %v1606 = vpop.f32.mrb[0].mxu0
      %1607 = vdwg.mxu0
      %1608 = vrot.lane.b32.xlu0 %v754, 120
      %v1609 = vpop.permute.xlu0 %1608
      %1610 = vrot.lane.b32.xlu0 %v754, 88
      %v1611 = vpop.permute.xlu0 %1610
      %v1612 = vsel %vm760, %v1609, 0
      %v1614 = vsel %vm760, %v1611, 0
      %1616 = vmatprep.subr.mxu0 0.0
      %1617 = vmatpush1.xpose.msra.mxu0 %v1614
      %1618 = vmatprep.subr.mxu0 0.0
      %1619 = vmatpush1.xpose.msra.mxu0 0.0
      %1620 = vmatprep.subr.mxu0 0.0
      %1621 = vmatpush1.xpose.msra.mxu0 0.0
      %1622 = vmatprep.subr.mxu0 0.0
      %1623 = vmatpush1.xpose.msra.mxu0 0.0
      %1624 = vmatprep.subr.mxu0 0.0
      %1625 = vmatpush1.xpose.msra.mxu0 0.0
      %1626 = vmatprep.subr.mxu0 0.0
      %1627 = vmatpush1.xpose.msra.mxu0 0.0
      %1628 = vmatprep.subr.mxu0 0.0
      %1629 = vmatpush1.xpose.msra.mxu0 0.0
      %1630 = vmatprep.subr.mxu0 0.0
      %1631 = vmatpush1.xpose.msra.mxu0 0.0
      %1632 = vmatprep.subr.mxu0 0.0
      %1633 = vmatpush1.xpose.msra.mxu0 0.0
      %1634 = vmatprep.subr.mxu0 0.0
      %1635 = vmatpush1.xpose.msra.mxu0 0.0
      %1636 = vmatprep.subr.mxu0 0.0
      %1637 = vmatpush1.xpose.msra.mxu0 0.0
      %1638 = vmatprep.subr.mxu0 0.0
      %1639 = vmatpush1.xpose.msra.mxu0 0.0
      %1640 = vmatprep.subr.mxu0 0.0
      %1641 = vmatpush1.xpose.msra.mxu0 0.0
      %1642 = vmatprep.subr.mxu0 0.0
      %1643 = vmatpush1.xpose.msra.mxu0 0.0
      %1644 = vmatprep.subr.mxu0 0.0
      %1645 = vmatpush1.xpose.msra.mxu0 0.0
      %1646 = vmatprep.subr.mxu0 0.0
      %1647 = vmatpush1.xpose.msra.mxu0 0.0
      %1648 = vmatprep.subr.mxu0 0.0
      %1649 = vmatpush1.xpose.msra.mxu0 0.0
      %1650 = vmatprep.subr.mxu0 0.0
      %1651 = vmatpush1.xpose.msra.mxu0 0.0
      %1652 = vmatprep.subr.mxu0 0.0
      %1653 = vmatpush1.xpose.msra.mxu0 0.0
      %1654 = vmatprep.subr.mxu0 0.0
      %1655 = vmatpush1.xpose.msra.mxu0 0.0
      %1656 = vmatprep.subr.mxu0 0.0
      %1657 = vmatpush1.xpose.msra.mxu0 0.0
      %1658 = vmatprep.subr.mxu0 0.0
      %1659 = vmatpush1.xpose.msra.mxu0 0.0
      %1660 = vmatprep.subr.mxu0 0.0
      %1661 = vmatpush1.xpose.msra.mxu0 0.0
      %1662 = vmatprep.subr.mxu0 0.0
      %1663 = vmatpush1.xpose.msra.mxu0 0.0
      %1664 = vmatprep.subr.mxu0 0.0
      %1665 = vmatpush1.xpose.msra.mxu0 0.0
      %1666 = vmatprep.subr.mxu0 0.0
      %1667 = vmatpush1.xpose.msra.mxu0 0.0
      %1668 = vmatprep.subr.mxu0 0.0
      %1669 = vmatpush1.xpose.msra.mxu0 0.0
      %1670 = vmatprep.subr.mxu0 0.0
      %1671 = vmatpush1.xpose.msra.mxu0 0.0
      %1672 = vmatprep.subr.mxu0 0.0
      %1673 = vmatpush1.xpose.msra.mxu0 0.0
      %1674 = vmatprep.subr.mxu0 0.0
      %1675 = vmatpush1.xpose.msra.mxu0 0.0
      %1676 = vmatprep.subr.mxu0 0.0
      %1677 = vmatpush1.xpose.msra.mxu0 0.0
      %1678 = vmatprep.subr.mxu0 0.0
      %1679 = vmatpush1.xpose.msra.mxu0 0.0
      %1680 = vmatprep.mubr.f32.mxu0 0.0
      %1681 = vmatmul.mubr.f32.gmra.mrb[0].mxu0 %v1612
      %v1682 = vpop.f32.mrb[0].mxu0
      %v1683 = vadd.f32 0.0, %v1682
      %v1684 = vpop.f32.mrb[0].mxu0
      %1685 = vdwg.mxu0
      %v1686 = vmul.f32 %v1683, 0.35355338
      %v1687 = vadd.f32 %v1686, %v611
      %v1688 = vsel %vm760, %v1687, -inf
      %1689 = vmax.xlane.f32.xlu0 %v1688
      %v1690 = vpop.xlane.xlu0 %1689
      %v1691 = vsub.f32 %v1687, %v1690
      %v1692 = vmul.f32 %v1691, 1.442695
      %v1693 = vpow.pop %v1692
      %v1694 = vsel %vm760, %v1693, 0.0
      %1695 = vadd.xlane.f32.xlu0 %v1694
      %v1696 = vpop.xlane.xlu0 %1695
      %v1697 = vrcp.pop %v1696
      %v1698 = vmul.f32 %v1693, %v1697
      %1699 = vrot.lane.b32.xlu0 %v754, 56
      %v1700 = vpop.permute.xlu0 %1699
      %v1703 = vsel %vm760, %v1698, 0
      %1705 = vmatprep.subr.mxu0 0.0
      %1706 = vmatpush1.msra.mxu0 %v1700
      %1707 = vmatprep.subr.mxu0 0.0
      %1708 = vmatpush1.msra.mxu0 0.0
      %1709 = vmatprep.subr.mxu0 0.0
      %1710 = vmatpush1.msra.mxu0 0.0
      %1711 = vmatprep.subr.mxu0 0.0
      %1712 = vmatpush1.msra.mxu0 0.0
      %1713 = vmatprep.subr.mxu0 0.0
      %1714 = vmatpush1.msra.mxu0 0.0
      %1715 = vmatprep.subr.mxu0 0.0
      %1716 = vmatpush1.msra.mxu0 0.0
      %1717 = vmatprep.subr.mxu0 0.0
      %1718 = vmatpush1.msra.mxu0 0.0
      %1719 = vmatprep.subr.mxu0 0.0
      %1720 = vmatpush1.msra.mxu0 0.0
      %1721 = vmatprep.subr.mxu0 0.0
      %1722 = vmatpush1.msra.mxu0 0.0
      %1723 = vmatprep.subr.mxu0 0.0
      %1724 = vmatpush1.msra.mxu0 0.0
      %1725 = vmatprep.subr.mxu0 0.0
      %1726 = vmatpush1.msra.mxu0 0.0
      %1727 = vmatprep.subr.mxu0 0.0
      %1728 = vmatpush1.msra.mxu0 0.0
      %1729 = vmatprep.subr.mxu0 0.0
      %1730 = vmatpush1.msra.mxu0 0.0
      %1731 = vmatprep.subr.mxu0 0.0
      %1732 = vmatpush1.msra.mxu0 0.0
      %1733 = vmatprep.subr.mxu0 0.0
      %1734 = vmatpush1.msra.mxu0 0.0
      %1735 = vmatprep.subr.mxu0 0.0
      %1736 = vmatpush1.msra.mxu0 0.0
      %1737 = vmatprep.subr.mxu0 0.0
      %1738 = vmatpush1.msra.mxu0 0.0
      %1739 = vmatprep.subr.mxu0 0.0
      %1740 = vmatpush1.msra.mxu0 0.0
      %1741 = vmatprep.subr.mxu0 0.0
      %1742 = vmatpush1.msra.mxu0 0.0
      %1743 = vmatprep.subr.mxu0 0.0
      %1744 = vmatpush1.msra.mxu0 0.0
      %1745 = vmatprep.subr.mxu0 0.0
      %1746 = vmatpush1.msra.mxu0 0.0
      %1747 = vmatprep.subr.mxu0 0.0
      %1748 = vmatpush1.msra.mxu0 0.0
      %1749 = vmatprep.subr.mxu0 0.0
      %1750 = vmatpush1.msra.mxu0 0.0
      %1751 = vmatprep.subr.mxu0 0.0
      %1752 = vmatpush1.msra.mxu0 0.0
      %1753 = vmatprep.subr.mxu0 0.0
      %1754 = vmatpush1.msra.mxu0 0.0
      %1755 = vmatprep.subr.mxu0 0.0
      %1756 = vmatpush1.msra.mxu0 0.0
      %1757 = vmatprep.subr.mxu0 0.0
      %1758 = vmatpush1.msra.mxu0 0.0
      %1759 = vmatprep.subr.mxu0 0.0
      %1760 = vmatpush1.msra.mxu0 0.0
      %1761 = vmatprep.subr.mxu0 0.0
      %1762 = vmatpush1.msra.mxu0 0.0
      %1763 = vmatprep.subr.mxu0 0.0
      %1764 = vmatpush1.msra.mxu0 0.0
      %1765 = vmatprep.subr.mxu0 0.0
      %1766 = vmatpush1.msra.mxu0 0.0
      %1767 = vmatprep.subr.mxu0 0.0
      %1768 = vmatpush1.msra.mxu0 0.0
      %1769 = vmatprep.mubr.f32.mxu0 0.0
      %1770 = vmatmul.mubr.f32.gmra.mrb[0].mxu0 %v1703
      %v1771 = vpop.f32.mrb[0].mxu0
      %v1772 = vadd.f32 0.0, %v1771
      %v1773 = vpop.f32.mrb[0].mxu0
      %1774 = vdwg.mxu0
      %1775 = vrot.lane.b32.xlu0 %v754, 112
      %v1776 = vpop.permute.xlu0 %1775
      %1777 = vrot.lane.b32.xlu0 %v754, 80
      %v1778 = vpop.permute.xlu0 %1777
      %v1779 = vsel %vm760, %v1776, 0
      %v1781 = vsel %vm760, %v1778, 0
      %1783 = vmatprep.subr.mxu0 0.0
      %1784 = vmatpush1.xpose.msra.mxu0 %v1781
      %1785 = vmatprep.subr.mxu0 0.0
      %1786 = vmatpush1.xpose.msra.mxu0 0.0
      %1787 = vmatprep.subr.mxu0 0.0
      %1788 = vmatpush1.xpose.msra.mxu0 0.0
      %1789 = vmatprep.subr.mxu0 0.0
      %1790 = vmatpush1.xpose.msra.mxu0 0.0
      %1791 = vmatprep.subr.mxu0 0.0
      %1792 = vmatpush1.xpose.msra.mxu0 0.0
      %1793 = vmatprep.subr.mxu0 0.0
      %1794 = vmatpush1.xpose.msra.mxu0 0.0
      %1795 = vmatprep.subr.mxu0 0.0
      %1796 = vmatpush1.xpose.msra.mxu0 0.0
      %1797 = vmatprep.subr.mxu0 0.0
      %1798 = vmatpush1.xpose.msra.mxu0 0.0
      %1799 = vmatprep.subr.mxu0 0.0
      %1800 = vmatpush1.xpose.msra.mxu0 0.0
      %1801 = vmatprep.subr.mxu0 0.0
      %1802 = vmatpush1.xpose.msra.mxu0 0.0
      %1803 = vmatprep.subr.mxu0 0.0
      %1804 = vmatpush1.xpose.msra.mxu0 0.0
      %1805 = vmatprep.subr.mxu0 0.0
      %1806 = vmatpush1.xpose.msra.mxu0 0.0
      %1807 = vmatprep.subr.mxu0 0.0
      %1808 = vmatpush1.xpose.msra.mxu0 0.0
      %1809 = vmatprep.subr.mxu0 0.0
      %1810 = vmatpush1.xpose.msra.mxu0 0.0
      %1811 = vmatprep.subr.mxu0 0.0
      %1812 = vmatpush1.xpose.msra.mxu0 0.0
      %1813 = vmatprep.subr.mxu0 0.0
      %1814 = vmatpush1.xpose.msra.mxu0 0.0
      %1815 = vmatprep.subr.mxu0 0.0
      %1816 = vmatpush1.xpose.msra.mxu0 0.0
      %1817 = vmatprep.subr.mxu0 0.0
      %1818 = vmatpush1.xpose.msra.mxu0 0.0
      %1819 = vmatprep.subr.mxu0 0.0
      %1820 = vmatpush1.xpose.msra.mxu0 0.0
      %1821 = vmatprep.subr.mxu0 0.0
      %1822 = vmatpush1.xpose.msra.mxu0 0.0
      %1823 = vmatprep.subr.mxu0 0.0
      %1824 = vmatpush1.xpose.msra.mxu0 0.0
      %1825 = vmatprep.subr.mxu0 0.0
      %1826 = vmatpush1.xpose.msra.mxu0 0.0
      %1827 = vmatprep.subr.mxu0 0.0
      %1828 = vmatpush1.xpose.msra.mxu0 0.0
      %1829 = vmatprep.subr.mxu0 0.0
      %1830 = vmatpush1.xpose.msra.mxu0 0.0
      %1831 = vmatprep.subr.mxu0 0.0
      %1832 = vmatpush1.xpose.msra.mxu0 0.0
      %1833 = vmatprep.subr.mxu0 0.0
      %1834 = vmatpush1.xpose.msra.mxu0 0.0
      %1835 = vmatprep.subr.mxu0 0.0
      %1836 = vmatpush1.xpose.msra.mxu0 0.0
      %1837 = vmatprep.subr.mxu0 0.0
      %1838 = vmatpush1.xpose.msra.mxu0 0.0
      %1839 = vmatprep.subr.mxu0 0.0
      %1840 = vmatpush1.xpose.msra.mxu0 0.0
      %1841 = vmatprep.subr.mxu0 0.0
      %1842 = vmatpush1.xpose.msra.mxu0 0.0
      %1843 = vmatprep.subr.mxu0 0.0
      %1844 = vmatpush1.xpose.msra.mxu0 0.0
      %1845 = vmatprep.subr.mxu0 0.0
      %1846 = vmatpush1.xpose.msra.mxu0 0.0
      %1847 = vmatprep.mubr.f32.mxu0 0.0
      %1848 = vmatmul.mubr.f32.gmra.mrb[0].mxu0 %v1779
      %v1849 = vpop.f32.mrb[0].mxu0
      %v1850 = vadd.f32 0.0, %v1849
      %v1851 = vpop.f32.mrb[0].mxu0
      %1852 = vdwg.mxu0
      %v1853 = vmul.f32 %v1850, 0.35355338
      %v1854 = vadd.f32 %v1853, %v611
      %v1855 = vsel %vm760, %v1854, -inf
      %1856 = vmax.xlane.f32.xlu0 %v1855
      %v1857 = vpop.xlane.xlu0 %1856
      %v1858 = vsub.f32 %v1854, %v1857
      %v1859 = vmul.f32 %v1858, 1.442695
      %v1860 = vpow.pop %v1859
      %v1861 = vsel %vm760, %v1860, 0.0
      %1862 = vadd.xlane.f32.xlu0 %v1861
      %v1863 = vpop.xlane.xlu0 %1862
      %v1864 = vrcp.pop %v1863
      %v1865 = vmul.f32 %v1860, %v1864
      %1866 = vrot.lane.b32.xlu0 %v754, 48
      %v1867 = vpop.permute.xlu0 %1866
      %v1870 = vsel %vm760, %v1865, 0
      %1872 = vmatprep.subr.mxu0 0.0
      %1873 = vmatpush1.msra.mxu0 %v1867
      %1874 = vmatprep.subr.mxu0 0.0
      %1875 = vmatpush1.msra.mxu0 0.0
      %1876 = vmatprep.subr.mxu0 0.0
      %1877 = vmatpush1.msra.mxu0 0.0
      %1878 = vmatprep.subr.mxu0 0.0
      %1879 = vmatpush1.msra.mxu0 0.0
      %1880 = vmatprep.subr.mxu0 0.0
      %1881 = vmatpush1.msra.mxu0 0.0
      %1882 = vmatprep.subr.mxu0 0.0
      %1883 = vmatpush1.msra.mxu0 0.0
      %1884 = vmatprep.subr.mxu0 0.0
      %1885 = vmatpush1.msra.mxu0 0.0
      %1886 = vmatprep.subr.mxu0 0.0
      %1887 = vmatpush1.msra.mxu0 0.0
      %1888 = vmatprep.subr.mxu0 0.0
      %1889 = vmatpush1.msra.mxu0 0.0
      %1890 = vmatprep.subr.mxu0 0.0
      %1891 = vmatpush1.msra.mxu0 0.0
      %1892 = vmatprep.subr.mxu0 0.0
      %1893 = vmatpush1.msra.mxu0 0.0
      %1894 = vmatprep.subr.mxu0 0.0
      %1895 = vmatpush1.msra.mxu0 0.0
      %1896 = vmatprep.subr.mxu0 0.0
      %1897 = vmatpush1.msra.mxu0 0.0
      %1898 = vmatprep.subr.mxu0 0.0
      %1899 = vmatpush1.msra.mxu0 0.0
      %1900 = vmatprep.subr.mxu0 0.0
      %1901 = vmatpush1.msra.mxu0 0.0
      %1902 = vmatprep.subr.mxu0 0.0
      %1903 = vmatpush1.msra.mxu0 0.0
      %1904 = vmatprep.subr.mxu0 0.0
      %1905 = vmatpush1.msra.mxu0 0.0
      %1906 = vmatprep.subr.mxu0 0.0
      %1907 = vmatpush1.msra.mxu0 0.0
      %1908 = vmatprep.subr.mxu0 0.0
      %1909 = vmatpush1.msra.mxu0 0.0
      %1910 = vmatprep.subr.mxu0 0.0
      %1911 = vmatpush1.msra.mxu0 0.0
      %1912 = vmatprep.subr.mxu0 0.0
      %1913 = vmatpush1.msra.mxu0 0.0
      %1914 = vmatprep.subr.mxu0 0.0
      %1915 = vmatpush1.msra.mxu0 0.0
      %1916 = vmatprep.subr.mxu0 0.0
      %1917 = vmatpush1.msra.mxu0 0.0
      %1918 = vmatprep.subr.mxu0 0.0
      %1919 = vmatpush1.msra.mxu0 0.0
      %1920 = vmatprep.subr.mxu0 0.0
      %1921 = vmatpush1.msra.mxu0 0.0
      %1922 = vmatprep.subr.mxu0 0.0
      %1923 = vmatpush1.msra.mxu0 0.0
      %1924 = vmatprep.subr.mxu0 0.0
      %1925 = vmatpush1.msra.mxu0 0.0
      %1926 = vmatprep.subr.mxu0 0.0
      %1927 = vmatpush1.msra.mxu0 0.0
      %1928 = vmatprep.subr.mxu0 0.0
      %1929 = vmatpush1.msra.mxu0 0.0
      %1930 = vmatprep.subr.mxu0 0.0
      %1931 = vmatpush1.msra.mxu0 0.0
      %1932 = vmatprep.subr.mxu0 0.0
      %1933 = vmatpush1.msra.mxu0 0.0
      %1934 = vmatprep.subr.mxu0 0.0
      %1935 = vmatpush1.msra.mxu0 0.0
      %1936 = vmatprep.mubr.f32.mxu0 0.0
      %1937 = vmatmul.mubr.f32.gmra.mrb[0].mxu0 %v1870
      %v1938 = vpop.f32.mrb[0].mxu0
      %v1939 = vadd.f32 0.0, %v1938
      %v1940 = vpop.f32.mrb[0].mxu0
      %1941 = vdwg.mxu0
      %1942 = vrot.lane.b32.xlu0 %v754, 104
      %v1943 = vpop.permute.xlu0 %1942
      %1944 = vrot.lane.b32.xlu0 %v754, 72
      %v1945 = vpop.permute.xlu0 %1944
      %v1946 = vsel %vm760, %v1943, 0
      %v1948 = vsel %vm760, %v1945, 0
      %1950 = vmatprep.subr.mxu0 0.0
      %1951 = vmatpush1.xpose.msra.mxu0 %v1948
      %1952 = vmatprep.subr.mxu0 0.0
      %1953 = vmatpush1.xpose.msra.mxu0 0.0
      %1954 = vmatprep.subr.mxu0 0.0
      %1955 = vmatpush1.xpose.msra.mxu0 0.0
      %1956 = vmatprep.subr.mxu0 0.0
      %1957 = vmatpush1.xpose.msra.mxu0 0.0
      %1958 = vmatprep.subr.mxu0 0.0
      %1959 = vmatpush1.xpose.msra.mxu0 0.0
      %1960 = vmatprep.subr.mxu0 0.0
      %1961 = vmatpush1.xpose.msra.mxu0 0.0
      %1962 = vmatprep.subr.mxu0 0.0
      %1963 = vmatpush1.xpose.msra.mxu0 0.0
      %1964 = vmatprep.subr.mxu0 0.0
      %1965 = vmatpush1.xpose.msra.mxu0 0.0
      %1966 = vmatprep.subr.mxu0 0.0
      %1967 = vmatpush1.xpose.msra.mxu0 0.0
      %1968 = vmatprep.subr.mxu0 0.0
      %1969 = vmatpush1.xpose.msra.mxu0 0.0
      %1970 = vmatprep.subr.mxu0 0.0
      %1971 = vmatpush1.xpose.msra.mxu0 0.0
      %1972 = vmatprep.subr.mxu0 0.0
      %1973 = vmatpush1.xpose.msra.mxu0 0.0
      %1974 = vmatprep.subr.mxu0 0.0
      %1975 = vmatpush1.xpose.msra.mxu0 0.0
      %1976 = vmatprep.subr.mxu0 0.0
      %1977 = vmatpush1.xpose.msra.mxu0 0.0
      %1978 = vmatprep.subr.mxu0 0.0
      %1979 = vmatpush1.xpose.msra.mxu0 0.0
      %1980 = vmatprep.subr.mxu0 0.0
      %1981 = vmatpush1.xpose.msra.mxu0 0.0
      %1982 = vmatprep.subr.mxu0 0.0
      %1983 = vmatpush1.xpose.msra.mxu0 0.0
      %1984 = vmatprep.subr.mxu0 0.0
      %1985 = vmatpush1.xpose.msra.mxu0 0.0
      %1986 = vmatprep.subr.mxu0 0.0
      %1987 = vmatpush1.xpose.msra.mxu0 0.0
      %1988 = vmatprep.subr.mxu0 0.0
      %1989 = vmatpush1.xpose.msra.mxu0 0.0
      %1990 = vmatprep.subr.mxu0 0.0
      %1991 = vmatpush1.xpose.msra.mxu0 0.0
      %1992 = vmatprep.subr.mxu0 0.0
      %1993 = vmatpush1.xpose.msra.mxu0 0.0
      %1994 = vmatprep.subr.mxu0 0.0
      %1995 = vmatpush1.xpose.msra.mxu0 0.0
      %1996 = vmatprep.subr.mxu0 0.0
      %1997 = vmatpush1.xpose.msra.mxu0 0.0
      %1998 = vmatprep.subr.mxu0 0.0
      %1999 = vmatpush1.xpose.msra.mxu0 0.0
      %2000 = vmatprep.subr.mxu0 0.0
      %2001 = vmatpush1.xpose.msra.mxu0 0.0
      %2002 = vmatprep.subr.mxu0 0.0
      %2003 = vmatpush1.xpose.msra.mxu0 0.0
      %2004 = vmatprep.subr.mxu0 0.0
      %2005 = vmatpush1.xpose.msra.mxu0 0.0
      %2006 = vmatprep.subr.mxu0 0.0
      %2007 = vmatpush1.xpose.msra.mxu0 0.0
      %2008 = vmatprep.subr.mxu0 0.0
      %2009 = vmatpush1.xpose.msra.mxu0 0.0
      %2010 = vmatprep.subr.mxu0 0.0
      %2011 = vmatpush1.xpose.msra.mxu0 0.0
      %2012 = vmatprep.subr.mxu0 0.0
      %2013 = vmatpush1.xpose.msra.mxu0 0.0
      %2014 = vmatprep.mubr.f32.mxu0 0.0
      %2015 = vmatmul.mubr.f32.gmra.mrb[0].mxu0 %v1946
      %v2016 = vpop.f32.mrb[0].mxu0
      %v2017 = vadd.f32 0.0, %v2016
      %v2018 = vpop.f32.mrb[0].mxu0
      %2019 = vdwg.mxu0
      %v2020 = vmul.f32 %v2017, 0.35355338
      %v2021 = vadd.f32 %v2020, %v611
      %v2022 = vsel %vm760, %v2021, -inf
      %2023 = vmax.xlane.f32.xlu0 %v2022
      %v2024 = vpop.xlane.xlu0 %2023
      %v2025 = vsub.f32 %v2021, %v2024
      %v2026 = vmul.f32 %v2025, 1.442695
      %v2027 = vpow.pop %v2026
      %v2028 = vsel %vm760, %v2027, 0.0
      %2029 = vadd.xlane.f32.xlu0 %v2028
      %v2030 = vpop.xlane.xlu0 %2029
      %v2031 = vrcp.pop %v2030
      %v2032 = vmul.f32 %v2027, %v2031
      %2033 = vrot.lane.b32.xlu0 %v754, 40
      %v2034 = vpop.permute.xlu0 %2033
      %v2037 = vsel %vm760, %v2032, 0
      %2039 = vmatprep.subr.mxu0 0.0
      %2040 = vmatpush1.msra.mxu0 %v2034
      %2041 = vmatprep.subr.mxu0 0.0
      %2042 = vmatpush1.msra.mxu0 0.0
      %2043 = vmatprep.subr.mxu0 0.0
      %2044 = vmatpush1.msra.mxu0 0.0
      %2045 = vmatprep.subr.mxu0 0.0
      %2046 = vmatpush1.msra.mxu0 0.0
      %2047 = vmatprep.subr.mxu0 0.0
      %2048 = vmatpush1.msra.mxu0 0.0
      %2049 = vmatprep.subr.mxu0 0.0
      %2050 = vmatpush1.msra.mxu0 0.0
      %2051 = vmatprep.subr.mxu0 0.0
      %2052 = vmatpush1.msra.mxu0 0.0
      %2053 = vmatprep.subr.mxu0 0.0
      %2054 = vmatpush1.msra.mxu0 0.0
      %2055 = vmatprep.subr.mxu0 0.0
      %2056 = vmatpush1.msra.mxu0 0.0
      %2057 = vmatprep.subr.mxu0 0.0
      %2058 = vmatpush1.msra.mxu0 0.0
      %2059 = vmatprep.subr.mxu0 0.0
      %2060 = vmatpush1.msra.mxu0 0.0
      %2061 = vmatprep.subr.mxu0 0.0
      %2062 = vmatpush1.msra.mxu0 0.0
      %2063 = vmatprep.subr.mxu0 0.0
      %2064 = vmatpush1.msra.mxu0 0.0
      %2065 = vmatprep.subr.mxu0 0.0
      %2066 = vmatpush1.msra.mxu0 0.0
      %2067 = vmatprep.subr.mxu0 0.0
      %2068 = vmatpush1.msra.mxu0 0.0
      %2069 = vmatprep.subr.mxu0 0.0
      %2070 = vmatpush1.msra.mxu0 0.0
      %2071 = vmatprep.subr.mxu0 0.0
      %2072 = vmatpush1.msra.mxu0 0.0
      %2073 = vmatprep.subr.mxu0 0.0
      %2074 = vmatpush1.msra.mxu0 0.0
      %2075 = vmatprep.subr.mxu0 0.0
      %2076 = vmatpush1.msra.mxu0 0.0
      %2077 = vmatprep.subr.mxu0 0.0
      %2078 = vmatpush1.msra.mxu0 0.0
      %2079 = vmatprep.subr.mxu0 0.0
      %2080 = vmatpush1.msra.mxu0 0.0
      %2081 = vmatprep.subr.mxu0 0.0
      %2082 = vmatpush1.msra.mxu0 0.0
      %2083 = vmatprep.subr.mxu0 0.0
      %2084 = vmatpush1.msra.mxu0 0.0
      %2085 = vmatprep.subr.mxu0 0.0
      %2086 = vmatpush1.msra.mxu0 0.0
      %2087 = vmatprep.subr.mxu0 0.0
      %2088 = vmatpush1.msra.mxu0 0.0
      %2089 = vmatprep.subr.mxu0 0.0
      %2090 = vmatpush1.msra.mxu0 0.0
      %2091 = vmatprep.subr.mxu0 0.0
      %2092 = vmatpush1.msra.mxu0 0.0
      %2093 = vmatprep.subr.mxu0 0.0
      %2094 = vmatpush1.msra.mxu0 0.0
      %2095 = vmatprep.subr.mxu0 0.0
      %2096 = vmatpush1.msra.mxu0 0.0
      %2097 = vmatprep.subr.mxu0 0.0
      %2098 = vmatpush1.msra.mxu0 0.0
      %2099 = vmatprep.subr.mxu0 0.0
      %2100 = vmatpush1.msra.mxu0 0.0
      %2101 = vmatprep.subr.mxu0 0.0
      %2102 = vmatpush1.msra.mxu0 0.0
      %2103 = vmatprep.mubr.f32.mxu0 0.0
      %2104 = vmatmul.mubr.f32.gmra.mrb[0].mxu0 %v2037
      %v2105 = vpop.f32.mrb[0].mxu0
      %v2106 = vadd.f32 0.0, %v2105
      %v2107 = vpop.f32.mrb[0].mxu0
      %2108 = vdwg.mxu0
      %2110 = vrot.lane.b32.xlu0 %v1772, 8
      %v2111 = vpop.permute.xlu0 %2110
      %2114 = vrot.lane.b32.xlu0 %v1939, 16
      %v2115 = vpop.permute.xlu0 %2114
      %2118 = vrot.lane.b32.xlu0 %v2106, 24
      %v2119 = vpop.permute.xlu0 %2118
      %v2121 = vsel %vm760, %v1605, %v2111
      %v2122 = vsel %vm1438, %v2121, %v2115
      %v2123 = vsel %vm1440, %v2122, %v2119
      %v2124 = vld [vmem:[%s574] sm:$0xff]
      %v2125 = vld [vmem:[%s574 + $0x8] sm:$0xff]
      %v2126 = vld [vmem:[%s574 + $0x10] sm:$0xff]
      %v2127 = vld [vmem:[%s574 + $0x18] sm:$0xff]
      %v2129 = vsel %vm614, %v1441, 0
      %v2132 = vsel %vm614, %v2123, 0
      %2134 = vmatprep.subr.mxu0 0.0
      %2135 = vmatpush1.msra.mxu0 %v2124
      %2136 = vmatprep.subr.mxu0 0.0
      %2137 = vmatpush1.msra.mxu0 %v2125
      %2138 = vmatprep.subr.mxu0 0.0
      %2139 = vmatpush1.msra.mxu0 %v2126
      %2140 = vmatprep.subr.mxu0 0.0
      %2141 = vmatpush1.msra.mxu0 %v2127
      %2142 = vmatprep.subr.mxu0 0.0
      %2143 = vmatpush1.msra.mxu0 0.0
      %2144 = vmatprep.subr.mxu0 0.0
      %2145 = vmatpush1.msra.mxu0 0.0
      %2146 = vmatprep.subr.mxu0 0.0
      %2147 = vmatpush1.msra.mxu0 0.0
      %2148 = vmatprep.subr.mxu0 0.0
      %2149 = vmatpush1.msra.mxu0 0.0
      %2150 = vmatprep.subr.mxu0 0.0
      %2151 = vmatpush1.msra.mxu0 0.0
      %2152 = vmatprep.subr.mxu0 0.0
      %2153 = vmatpush1.msra.mxu0 0.0
      %2154 = vmatprep.subr.mxu0 0.0
      %2155 = vmatpush1.msra.mxu0 0.0
      %2156 = vmatprep.subr.mxu0 0.0
      %2157 = vmatpush1.msra.mxu0 0.0
      %2158 = vmatprep.subr.mxu0 0.0
      %2159 = vmatpush1.msra.mxu0 0.0
      %2160 = vmatprep.subr.mxu0 0.0
      %2161 = vmatpush1.msra.mxu0 0.0
      %2162 = vmatprep.subr.mxu0 0.0
      %2163 = vmatpush1.msra.mxu0 0.0
      %2164 = vmatprep.subr.mxu0 0.0
      %2165 = vmatpush1.msra.mxu0 0.0
      %2166 = vmatprep.subr.mxu0 0.0
      %2167 = vmatpush1.msra.mxu0 0.0
      %2168 = vmatprep.subr.mxu0 0.0
      %2169 = vmatpush1.msra.mxu0 0.0
      %2170 = vmatprep.subr.mxu0 0.0
      %2171 = vmatpush1.msra.mxu0 0.0
      %2172 = vmatprep.subr.mxu0 0.0
      %2173 = vmatpush1.msra.mxu0 0.0
      %2174 = vmatprep.subr.mxu0 0.0
      %2175 = vmatpush1.msra.mxu0 0.0
      %2176 = vmatprep.subr.mxu0 0.0
      %2177 = vmatpush1.msra.mxu0 0.0
      %2178 = vmatprep.subr.mxu0 0.0
      %2179 = vmatpush1.msra.mxu0 0.0
      %2180 = vmatprep.subr.mxu0 0.0
      %2181 = vmatpush1.msra.mxu0 0.0
      %2182 = vmatprep.subr.mxu0 0.0
      %2183 = vmatpush1.msra.mxu0 0.0
      %2184 = vmatprep.subr.mxu0 0.0
      %2185 = vmatpush1.msra.mxu0 0.0
      %2186 = vmatprep.subr.mxu0 0.0
      %2187 = vmatpush1.msra.mxu0 0.0
      %2188 = vmatprep.subr.mxu0 0.0
      %2189 = vmatpush1.msra.mxu0 0.0
      %2190 = vmatprep.subr.mxu0 0.0
      %2191 = vmatpush1.msra.mxu0 0.0
      %2192 = vmatprep.subr.mxu0 0.0
      %2193 = vmatpush1.msra.mxu0 0.0
      %2194 = vmatprep.subr.mxu0 0.0
      %2195 = vmatpush1.msra.mxu0 0.0
      %2196 = vmatprep.subr.mxu0 0.0
      %2197 = vmatpush1.msra.mxu0 0.0
      %2198 = vmatprep.mubr.f32.mxu0 0.0
      %2199 = vmatmul.mubr.f32.gmra.mrb[0].mxu0 %v2129
      %v2200 = vpop.f32.mrb[0].mxu0
      %v2201 = vadd.f32 0.0, %v2200
      %v2202 = vpop.f32.mrb[0].mxu0
      %2203 = vmatprep.mubr.f32.mxu0 0.0
      %2204 = vmatmul.mubr.f32.gmra.mrb[0].mxu0 %v2132
      %v2205 = vpop.f32.mrb[0].mxu0
      %v2206 = vadd.f32 0.0, %v2205
      %v2207 = vpop.f32.mrb[0].mxu0
      %2208 = vdwg.mxu0
      %v2209 = vadd.f32 %v608, %v2201
      %v2210 = vadd.f32 %v609, %v2206
      %v2211 = vld [vmem:[%s577] sm:$0x1]
      %v2212 = vld [vmem:[%s580] sm:$0x1]
      %v2213 = vsel %vm614, %v2209, 0.0
      %2214 = vadd.xlane.f32.xlu0 %v2213
      %v2215 = vpop.xlane.xlu0 %2214
      %v2216 = vsel %vm614, %v2210, 0.0
      %2217 = vadd.xlane.f32.xlu0 %v2216
      %v2218 = vpop.xlane.xlu0 %2217
      %v2219 = vmul.f32 %v2215, %v621
      %v2220 = vmul.f32 %v2218, %v621
      %v2221 = vsub.f32 %v2209, %v2219
      %v2222 = vsub.f32 %v2210, %v2220
      %v2223 = vmul.f32 %v2221, %v2221
      %v2224 = vmul.f32 %v2222, %v2222
      %v2225 = vsel %vm614, %v2223, 0.0
      %2226 = vadd.xlane.f32.xlu0 %v2225
      %v2227 = vpop.xlane.xlu0 %2226
      %v2228 = vsel %vm614, %v2224, 0.0
      %2229 = vadd.xlane.f32.xlu0 %v2228
      %v2230 = vpop.xlane.xlu0 %2229
      %v2231 = vmul.f32 %v2227, 0.032258064
      %v2232 = vmul.f32 %v2230, 0.032258064
      %v2233 = vrsqrt.pop %v2231
      %v2234 = vmul.f32 %v2231, %v2233
      %vm2235 = vcmp.eq.f32.partialorder %v2231, inf
      %v2236 = vsel %vm2235, %v2231, %v2234
      %vm2237 = vcmp.eq.f32.partialorder %v2231, 0.0
      %v2238 = vand.u32 %v2231, 2147483648
      %v2239 = vsel %vm2237, %v2238, %v2236
      %v2240 = vrsqrt.pop %v2232
      %v2241 = vmul.f32 %v2232, %v2240
      %vm2242 = vcmp.eq.f32.partialorder %v2232, inf
      %v2243 = vsel %vm2242, %v2232, %v2241
      %vm2244 = vcmp.eq.f32.partialorder %v2232, 0.0
      %v2245 = vand.u32 %v2232, 2147483648
      %v2246 = vsel %vm2244, %v2245, %v2243
      %v2248 = vlaneseq
      %v2249 = vshrl.u32 %v2248, 7
      %v2250 = vsub.s32 0, %v2249
      %v2251 = vrot.slane %v2211, %v2250
      %v2253 = vmul.f32 %v2251, %v2221
      %v2254 = vmul.f32 %v2251, %v2222
      %v2255 = vadd.f32 %v2239, 1e-06
      %v2256 = vadd.f32 %v2246, 1e-06
      %v2257 = vrcp.pop %v2255
      %v2258 = vmul.f32 %v2253, %v2257
      %v2259 = vrcp.pop %v2256
      %v2260 = vmul.f32 %v2254, %v2259
      %v2262 = vlaneseq
      %v2263 = vshrl.u32 %v2262, 7
      %v2264 = vsub.s32 0, %v2263
      %v2265 = vrot.slane %v2212, %v2264
      %v2267 = vadd.f32 %v2258, %v2265
      %v2268 = vadd.f32 %v2260, %v2265
      %v2269 = vld [vmem:[%s585] sm:$0xff]
      %v2270 = vld [vmem:[%s585 + $0x8] sm:$0xff]
      %v2271 = vld [vmem:[%s585 + $0x10] sm:$0xff]
      %v2272 = vld [vmem:[%s585 + $0x18] sm:$0xff]
      %v2273 = vld [vmem:[%s588] sm:$0x1]
      %v2275 = vlaneseq
      %v2276 = vshrl.u32 %v2275, 7
      %v2277 = vsub.s32 0, %v2276
      %v2278 = vrot.slane %v2273, %v2277
      %v2281 = vsel %vm614, %v2267, 0
      %v2284 = vsel %vm614, %v2268, 0
      %2286 = vmatprep.subr.mxu0 0.0
      %2287 = vmatpush1.msra.mxu0 %v2269
      %2288 = vmatprep.subr.mxu0 0.0
      %2289 = vmatpush1.msra.mxu0 %v2270
      %2290 = vmatprep.subr.mxu0 0.0
      %2291 = vmatpush1.msra.mxu0 %v2271
      %2292 = vmatprep.subr.mxu0 0.0
      %2293 = vmatpush1.msra.mxu0 %v2272
      %2294 = vmatprep.subr.mxu0 0.0
      %2295 = vmatpush1.msra.mxu0 0.0
      %2296 = vmatprep.subr.mxu0 0.0
      %2297 = vmatpush1.msra.mxu0 0.0
      %2298 = vmatprep.subr.mxu0 0.0
      %2299 = vmatpush1.msra.mxu0 0.0
      %2300 = vmatprep.subr.mxu0 0.0
      %2301 = vmatpush1.msra.mxu0 0.0
      %2302 = vmatprep.subr.mxu0 0.0
      %2303 = vmatpush1.msra.mxu0 0.0
      %2304 = vmatprep.subr.mxu0 0.0
      %2305 = vmatpush1.msra.mxu0 0.0
      %2306 = vmatprep.subr.mxu0 0.0
      %2307 = vmatpush1.msra.mxu0 0.0
      %2308 = vmatprep.subr.mxu0 0.0
      %2309 = vmatpush1.msra.mxu0 0.0
      %2310 = vmatprep.subr.mxu0 0.0
      %2311 = vmatpush1.msra.mxu0 0.0
      %2312 = vmatprep.subr.mxu0 0.0
      %2313 = vmatpush1.msra.mxu0 0.0
      %2314 = vmatprep.subr.mxu0 0.0
      %2315 = vmatpush1.msra.mxu0 0.0
      %2316 = vmatprep.subr.mxu0 0.0
      %2317 = vmatpush1.msra.mxu0 0.0
      %2318 = vmatprep.subr.mxu0 0.0
      %2319 = vmatpush1.msra.mxu0 0.0
      %2320 = vmatprep.subr.mxu0 0.0
      %2321 = vmatpush1.msra.mxu0 0.0
      %2322 = vmatprep.subr.mxu0 0.0
      %2323 = vmatpush1.msra.mxu0 0.0
      %2324 = vmatprep.subr.mxu0 0.0
      %2325 = vmatpush1.msra.mxu0 0.0
      %2326 = vmatprep.subr.mxu0 0.0
      %2327 = vmatpush1.msra.mxu0 0.0
      %2328 = vmatprep.subr.mxu0 0.0
      %2329 = vmatpush1.msra.mxu0 0.0
      %2330 = vmatprep.subr.mxu0 0.0
      %2331 = vmatpush1.msra.mxu0 0.0
      %2332 = vmatprep.subr.mxu0 0.0
      %2333 = vmatpush1.msra.mxu0 0.0
      %2334 = vmatprep.subr.mxu0 0.0
      %2335 = vmatpush1.msra.mxu0 0.0
      %2336 = vmatprep.subr.mxu0 0.0
      %2337 = vmatpush1.msra.mxu0 0.0
      %2338 = vmatprep.subr.mxu0 0.0
      %2339 = vmatpush1.msra.mxu0 0.0
      %2340 = vmatprep.subr.mxu0 0.0
      %2341 = vmatpush1.msra.mxu0 0.0
      %2342 = vmatprep.subr.mxu0 0.0
      %2343 = vmatpush1.msra.mxu0 0.0
      %2344 = vmatprep.subr.mxu0 0.0
      %2345 = vmatpush1.msra.mxu0 0.0
      %2346 = vmatprep.subr.mxu0 0.0
      %2347 = vmatpush1.msra.mxu0 0.0
      %2348 = vmatprep.subr.mxu0 0.0
      %2349 = vmatpush1.msra.mxu0 0.0
      %2350 = vmatprep.mubr.f32.mxu0 0.0
      %2351 = vmatmul.mubr.f32.gmra.mrb[0].mxu0 %v2281
      %v2352 = vpop.f32.mrb[0].mxu0
      %v2353 = vadd.f32 %v2278, %v2352
      %v2354 = vpop.f32.mrb[0].mxu0
      %2355 = vmatprep.mubr.f32.mxu0 0.0
      %2356 = vmatmul.mubr.f32.gmra.mrb[0].mxu0 %v2284
      %v2357 = vpop.f32.mrb[0].mxu0
      %v2358 = vadd.f32 %v2278, %v2357
      %v2359 = vpop.f32.mrb[0].mxu0
      %2360 = vdwg.mxu0
      %v2361 = vmax.f32 %v2353, 0.0
      %v2362 = vmax.f32 %v2358, 0.0
      %v2363 = vld [vmem:[%s593] sm:$0xff]
      %v2364 = vld [vmem:[%s593 + $0x8] sm:$0xff]
      %v2365 = vld [vmem:[%s593 + $0x10] sm:$0xff]
      %v2366 = vld [vmem:[%s593 + $0x18] sm:$0xff]
      %v2367 = vld [vmem:[%s593 + $0x20] sm:$0xff]
      %v2368 = vld [vmem:[%s593 + $0x28] sm:$0xff]
      %v2369 = vld [vmem:[%s593 + $0x30] sm:$0xff]
      %v2370 = vld [vmem:[%s593 + $0x38] sm:$0xff]
      %vm2371 = vcmask 523264
      %v2373 = vsel %vm2371, %v2361, 0
      %v2376 = vsel %vm2371, %v2362, 0
      %2378 = vmatprep.subr.mxu0 0.0
      %2379 = vmatpush1.msra.mxu0 %v2363
      %2380 = vmatprep.subr.mxu0 0.0
      %2381 = vmatpush1.msra.mxu0 %v2364
      %2382 = vmatprep.subr.mxu0 0.0
      %2383 = vmatpush1.msra.mxu0 %v2365
      %2384 = vmatprep.subr.mxu0 0.0
      %2385 = vmatpush1.msra.mxu0 %v2366
      %2386 = vmatprep.subr.mxu0 0.0
      %2387 = vmatpush1.msra.mxu0 %v2367
      %2388 = vmatprep.subr.mxu0 0.0
      %2389 = vmatpush1.msra.mxu0 %v2368
      %2390 = vmatprep.subr.mxu0 0.0
      %2391 = vmatpush1.msra.mxu0 %v2369
      %2392 = vmatprep.subr.mxu0 0.0
      %2393 = vmatpush1.msra.mxu0 %v2370
      %2394 = vmatprep.subr.mxu0 0.0
      %2395 = vmatpush1.msra.mxu0 0.0
      %2396 = vmatprep.subr.mxu0 0.0
      %2397 = vmatpush1.msra.mxu0 0.0
      %2398 = vmatprep.subr.mxu0 0.0
      %2399 = vmatpush1.msra.mxu0 0.0
      %2400 = vmatprep.subr.mxu0 0.0
      %2401 = vmatpush1.msra.mxu0 0.0
      %2402 = vmatprep.subr.mxu0 0.0
      %2403 = vmatpush1.msra.mxu0 0.0
      %2404 = vmatprep.subr.mxu0 0.0
      %2405 = vmatpush1.msra.mxu0 0.0
      %2406 = vmatprep.subr.mxu0 0.0
      %2407 = vmatpush1.msra.mxu0 0.0
      %2408 = vmatprep.subr.mxu0 0.0
      %2409 = vmatpush1.msra.mxu0 0.0
      %2410 = vmatprep.subr.mxu0 0.0
      %2411 = vmatpush1.msra.mxu0 0.0
      %2412 = vmatprep.subr.mxu0 0.0
      %2413 = vmatpush1.msra.mxu0 0.0
      %2414 = vmatprep.subr.mxu0 0.0
      %2415 = vmatpush1.msra.mxu0 0.0
      %2416 = vmatprep.subr.mxu0 0.0
      %2417 = vmatpush1.msra.mxu0 0.0
      %2418 = vmatprep.subr.mxu0 0.0
      %2419 = vmatpush1.msra.mxu0 0.0
      %2420 = vmatprep.subr.mxu0 0.0
      %2421 = vmatpush1.msra.mxu0 0.0
      %2422 = vmatprep.subr.mxu0 0.0
      %2423 = vmatpush1.msra.mxu0 0.0
      %2424 = vmatprep.subr.mxu0 0.0
      %2425 = vmatpush1.msra.mxu0 0.0
      %2426 = vmatprep.subr.mxu0 0.0
      %2427 = vmatpush1.msra.mxu0 0.0
      %2428 = vmatprep.subr.mxu0 0.0
      %2429 = vmatpush1.msra.mxu0 0.0
      %2430 = vmatprep.subr.mxu0 0.0
      %2431 = vmatpush1.msra.mxu0 0.0
      %2432 = vmatprep.subr.mxu0 0.0
      %2433 = vmatpush1.msra.mxu0 0.0
      %2434 = vmatprep.subr.mxu0 0.0
      %2435 = vmatpush1.msra.mxu0 0.0
      %2436 = vmatprep.subr.mxu0 0.0
      %2437 = vmatpush1.msra.mxu0 0.0
      %2438 = vmatprep.subr.mxu0 0.0
      %2439 = vmatpush1.msra.mxu0 0.0
      %2440 = vmatprep.subr.mxu0 0.0
      %2441 = vmatpush1.msra.mxu0 0.0
      %2442 = vmatprep.mubr.f32.mxu0 0.0
      %2443 = vmatmul.mubr.f32.gmra.mrb[0].mxu0 %v2373
      %v2444 = vpop.f32.mrb[0].mxu0
      %v2445 = vadd.f32 0.0, %v2444
      %v2446 = vpop.f32.mrb[0].mxu0
      %2447 = vmatprep.mubr.f32.mxu0 0.0
      %2448 = vmatmul.mubr.f32.gmra.mrb[0].mxu0 %v2376
      %v2449 = vpop.f32.mrb[0].mxu0
      %v2450 = vadd.f32 0.0, %v2449
      %v2451 = vpop.f32.mrb[0].mxu0
      %2452 = vdwg.mxu0
      %v2453 = vadd.f32 %v2209, %v2445
      %v2454 = vadd.f32 %v2210, %v2450
      %v2455 = vld [vmem:[%s596] sm:$0x1]
      %v2457 = vlaneseq
      %v2458 = vshrl.u32 %v2457, 7
      %v2459 = vsub.s32 0, %v2458
      %v2460 = vrot.slane %v2455, %v2459
      %v2462 = vadd.f32 %v2453, %v2460
      %v2463 = vadd.f32 %v2454, %v2460
      %2464 = vst.msk [vmem:[#allocation2] sm:$0xff] %vm614, %v2462
      %2465 = vst.msk [vmem:[#allocation2 + $0x8] sm:$0xff] %vm614, %v2463
      %p2466 = scmp.eq.s32.totalorder %s25, 1
      // Predicated region
      $region81: #{transformer_forward.2} parent=75 // pred_check
        %p2467 = pneg %p2466
      $region82: #{transformer_forward.2} parent=75 // pred_check_branch
        %2469 = sbr.rel (%p2467) target = $region84
      $region83: #{transformer_forward.2} parent=75 // pred_region
        %v2470 = vld [vmem:[%s12] sm:$0x1]
        %v2471 = vld [vmem:[%s13] sm:$0x1]
        %v2472 = vsel %vm614, %v2462, 0.0
        %2473 = vadd.xlane.f32.xlu0 %v2472
        %v2474 = vpop.xlane.xlu0 %2473
        %v2475 = vsel %vm614, %v2463, 0.0
        %2476 = vadd.xlane.f32.xlu0 %v2475
        %v2477 = vpop.xlane.xlu0 %2476
        %v2478 = vmul.f32 %v2474, %v621
        %v2479 = vmul.f32 %v2477, %v621
        %v2480 = vsub.f32 %v2462, %v2478
        %v2481 = vsub.f32 %v2463, %v2479
        %v2482 = vmul.f32 %v2480, %v2480
        %v2483 = vmul.f32 %v2481, %v2481
        %v2484 = vsel %vm614, %v2482, 0.0
        %2485 = vadd.xlane.f32.xlu0 %v2484
        %v2486 = vpop.xlane.xlu0 %2485
        %v2487 = vsel %vm614, %v2483, 0.0
        %2488 = vadd.xlane.f32.xlu0 %v2487
        %v2489 = vpop.xlane.xlu0 %2488
        %v2490 = vmul.f32 %v2486, 0.032258064
        %v2491 = vmul.f32 %v2489, 0.032258064
        %v2492 = vrsqrt.pop %v2490
        %v2493 = vmul.f32 %v2490, %v2492
        %vm2494 = vcmp.eq.f32.partialorder %v2490, inf
        %v2495 = vsel %vm2494, %v2490, %v2493
        %vm2496 = vcmp.eq.f32.partialorder %v2490, 0.0
        %v2497 = vand.u32 %v2490, 2147483648
        %v2498 = vsel %vm2496, %v2497, %v2495
        %v2499 = vrsqrt.pop %v2491
        %v2500 = vmul.f32 %v2491, %v2499
        %vm2501 = vcmp.eq.f32.partialorder %v2491, inf
        %v2502 = vsel %vm2501, %v2491, %v2500
        %vm2503 = vcmp.eq.f32.partialorder %v2491, 0.0
        %v2504 = vand.u32 %v2491, 2147483648
        %v2505 = vsel %vm2503, %v2504, %v2502
        %v2507 = vlaneseq
        %v2508 = vshrl.u32 %v2507, 7
        %v2509 = vsub.s32 0, %v2508
        %v2510 = vrot.slane %v2470, %v2509
        %v2512 = vmul.f32 %v2510, %v2480
        %v2513 = vmul.f32 %v2510, %v2481
        %v2514 = vadd.f32 %v2498, 1e-06
        %v2515 = vadd.f32 %v2505, 1e-06
        %v2516 = vrcp.pop %v2514
        %v2517 = vmul.f32 %v2512, %v2516
        %v2518 = vrcp.pop %v2515
        %v2519 = vmul.f32 %v2513, %v2518
        %v2521 = vlaneseq
        %v2522 = vshrl.u32 %v2521, 7
        %v2523 = vsub.s32 0, %v2522
        %v2524 = vrot.slane %v2471, %v2523
        %v2526 = vadd.f32 %v2517, %v2524
        %v2527 = vadd.f32 %v2519, %v2524
        %2528 = vst.msk [vmem:[%s14] sm:$0xff] %vm614, %v2526
        %2529 = vst.msk [vmem:[%s14 + $0x8] sm:$0xff] %vm614, %v2527
      $region84: #{transformer_forward.2} parent=75 // pred_fallthru
        _
      // Predicated region
      $region85: #{transformer_forward.2} parent=75 // pred_check
        %p2530 = pneg %p382
      $region86: #{transformer_forward.2} parent=75 // pred_check_branch
        %2532 = sbr.rel (%p2530) target = $region88
      $region87: #{transformer_forward.2} parent=75 // pred_region
        _
      $region88: #{transformer_forward.2} parent=75 // pred_fallthru
        _
      // Predicated region
      $region89: #{transformer_forward.2} parent=75 // pred_check
        %p2533 = pneg %p382
      $region90: #{transformer_forward.2} parent=75 // pred_check_branch
        %2535 = sbr.rel (%p2533) target = $region92
      $region91: #{transformer_forward.2} parent=75 // pred_region
        _
      $region92: #{transformer_forward.2} parent=75 // pred_fallthru
        _
    $region76: #{transformer_forward.2} parent=5 // pred_fallthru
      _
    %p2536 = scmp.le.s32.totalorder 2, %s20
    // Predicated region
    $region93: #{transformer_forward.2} parent=5 // pred_check
      %p2537 = pneg %p2536
    $region94: #{transformer_forward.2} parent=5 // pred_check_branch
      %2539 = sbr.rel (%p2537) target = $region96
    $region95: #{transformer_forward.2} parent=5 // pred_region
      %s2540 = ssub.s32 %s20, 2
    $region96: #{transformer_forward.2} parent=5 // pred_fallthru
      _
  $region6: #{transformer_forward.2} parent=0 // loop_footer
    %s24 = sadd.s32 1, %s20
  $region7: #{transformer_forward.2} parent=0 // loop_footer_branch
    %19 = sbr.rel target = $region3
  $region8: #{transformer_forward.2} parent=0 // loop_exit
    _

// kernel: transformer_forward.3
$region0: #{transformer_forward.3}
  #allocation0 [shape = 'u32[]', space=smem, size = 0x4, offset = 0x4, fixed_abs, tag = 'smem constant byte address 0x4 - core index']
  #allocation1 [shape = 'u32[144,128]{1,0:T(1,128)}', space=vmem, size = 0x12000, scoped, tag = 'internal scratch']
  #allocation2 [shape = 'f32[16,32]{1,0:T(8,128)}', space=vmem, size = 0x2000, scoped, tag = 'scratch operand']
  %s0 = inlined_call_operand.vmem [shape: f32[16,32], index: 0, kind: input, shape index: {}]
  %s1 = inlined_call_operand.vmem [shape: f32[16,32], index: 1, kind: input, shape index: {}]
  %s2 = inlined_call_operand.vmem [shape: f32[16,8], index: 2, kind: input, shape index: {}]
  %s3 = inlined_call_operand.vmem [shape: f32[16,8], index: 3, kind: input, shape index: {}]
  %s4 = inlined_call_operand.vmem [shape: f32[2,1,32], index: 4, kind: input, shape index: {}]
  %s5 = inlined_call_operand.vmem [shape: f32[2,1,32], index: 5, kind: input, shape index: {}]
  %s6 = inlined_call_operand.vmem [shape: f32[2,32,96], index: 6, kind: input, shape index: {}]
  %s7 = inlined_call_operand.vmem [shape: f32[2,32,32], index: 7, kind: input, shape index: {}]
  %s8 = inlined_call_operand.vmem [shape: f32[2,1,32], index: 8, kind: input, shape index: {}]
  %s9 = inlined_call_operand.vmem [shape: f32[2,1,32], index: 9, kind: input, shape index: {}]
  %s10 = inlined_call_operand.vmem [shape: f32[2,32,32], index: 10, kind: input, shape index: {}]
  %s11 = inlined_call_operand.vmem [shape: f32[2,32,64], index: 11, kind: input, shape index: {}]
  %s12 = inlined_call_operand.vmem [shape: f32[2,32,32], index: 12, kind: input, shape index: {}]
  %s13 = inlined_call_operand.vmem [shape: f32[2,1,32], index: 13, kind: input, shape index: {}]
  %s14 = inlined_call_operand.vmem [shape: f32[2,1,32], index: 14, kind: input, shape index: {}]
  %s15 = inlined_call_operand.vmem [shape: f32[2,32,64], index: 15, kind: input, shape index: {}]
  %s16 = inlined_call_operand.vmem [shape: f32[2,1,64], index: 16, kind: input, shape index: {}]
  %s17 = inlined_call_operand.vmem [shape: f32[2,64,32], index: 17, kind: input, shape index: {}]
  %s18 = inlined_call_operand.vmem [shape: f32[2,1,32], index: 18, kind: input, shape index: {}]
  %s19 = inlined_call_operand.vmem [shape: f32[1,32], index: 19, kind: input, shape index: {}]
  %s20 = inlined_call_operand.vmem [shape: f32[1,32], index: 20, kind: input, shape index: {}]
  %s21 = inlined_call_operand.vmem [shape: f32[32,128], index: 21, kind: input, shape index: {}]
  %s22 = inlined_call_operand.vmem [shape: f32[1,128], index: 22, kind: input, shape index: {}]
  %s23 = inlined_call_operand.vmem [shape: f32[16,128], index: 23, kind: output, shape index: {}]
  %s24 = sld [smem:[#allocation0]]
  $region133: #{transformer_forward.3} parent=0
    _
  %s26 = ssub.s32 1, %s24
  %s27 = scalar_select 0, %s26, %s24
  loop: start=0, step=1, limit=4
  $region2: #{transformer_forward.3} parent=0 // loop_pre_header
    _
  $region3: #{transformer_forward.3} parent=0 // loop_header
    %s29 = sphi 0, %s33
    %p30 = scmp.ge.s32.totalorder %s29, 4
    %s37 = sphi 0, %s37
    %s39 = sphi 0, %s37
    %s40 = sphi 0, %s39
    %s54 = sphi 0, %s40
    %s58 = sphi 0, %s58
    %s60 = sphi 0, %s58
    %s61 = sphi 0, %s60
    %s75 = sphi 0, %s61
    %s79 = sphi 0, %s79
    %s81 = sphi 0, %s79
    %s82 = sphi 0, %s81
    %s96 = sphi 0, %s82
    %s100 = sphi 0, %s100
    %s102 = sphi 0, %s100
    %s103 = sphi 0, %s102
    %s117 = sphi 0, %s103
    %s123 = sphi 0, %s125
    %s126 = sphi 0, %s123
    %s127 = sphi 0, %s126
    %s143 = sphi 0, %s127
    %s149 = sphi 0, %s151
    %s152 = sphi 0, %s149
    %s153 = sphi 0, %s152
    %s169 = sphi 0, %s153
    %s175 = sphi 0, %s177
    %s178 = sphi 0, %s175
    %s179 = sphi 0, %s178
    %s195 = sphi 0, %s179
    %s201 = sphi 0, %s203
    %s204 = sphi 0, %s201
    %s205 = sphi 0, %s204
    %s221 = sphi 0, %s205
    %s227 = sphi 0, %s229
    %s230 = sphi 0, %s227
    %s231 = sphi 0, %s230
    %s247 = sphi 0, %s231
    %s253 = sphi 0, %s255
    %s256 = sphi 0, %s253
    %s257 = sphi 0, %s256
    %s273 = sphi 0, %s257
    %s279 = sphi 0, %s281
    %s282 = sphi 0, %s279
    %s283 = sphi 0, %s282
    %s299 = sphi 0, %s283
    %s305 = sphi 0, %s307
    %s308 = sphi 0, %s305
    %s309 = sphi 0, %s308
    %s325 = sphi 0, %s309
    %s331 = sphi 0, %s333
    %s334 = sphi 0, %s331
    %s335 = sphi 0, %s334
    %s351 = sphi 0, %s335
    %s357 = sphi 0, %s359
    %s360 = sphi 0, %s357
    %s361 = sphi 0, %s360
    %s377 = sphi 0, %s361
    %s383 = sphi 0, %s385
    %s386 = sphi 0, %s383
    %s387 = sphi 0, %s386
    %s403 = sphi 0, %s387
    %s409 = sphi 0, %s411
    %s412 = sphi 0, %s409
    %s413 = sphi 0, %s412
    %s429 = sphi 0, %s413
    %s435 = sphi 0, %s437
    %s438 = sphi 0, %s435
    %s439 = sphi 0, %s438
    %s455 = sphi 0, %s439
    %s461 = sphi 0, %s463
    %s464 = sphi 0, %s461
    %s465 = sphi 0, %s464
    %s481 = sphi 0, %s465
    %s487 = sphi 0, %s489
    %s490 = sphi 0, %s487
    %s491 = sphi 0, %s490
    %s507 = sphi 0, %s491
    %s511 = sphi 0, %s511
    %s513 = sphi 0, %s511
    %s514 = sphi 0, %s513
    %s528 = sphi 0, %s514
    %s532 = sphi 0, %s532
    %s534 = sphi 0, %s532
    %s535 = sphi 0, %s534
    %s549 = sphi 0, %s535
    %s553 = sphi 0, %s553
    %s555 = sphi 0, %s553
    %s556 = sphi 0, %s555
    %s570 = sphi 0, %s556
    %s574 = sphi 0, %s574
    %s576 = sphi 0, %s574
    %s577 = sphi 0, %s576
    %s591 = sphi 0, %s577
    %s595 = sphi 0, %s595
    %s597 = sphi 0, %s595
    %s598 = sphi 0, %s597
    %s612 = sphi 0, %s598
  $region4: #{transformer_forward.3} parent=0 // loop_header_branch
    %32 = sbr.rel (%p30) target = $region8
  $region5: #{transformer_forward.3} parent=0 // loop_body
    %s34 = ssub.s32 %s29, 1
    %s35 = ssub.s32 %s29, 2
    %s36 = sadd.s32 %s29, 1
    %s38 = sadd.s32 %s37, 1
    %p41 = scmp.eq.s32.totalorder %s29, 1
    %p42 = scmp.ne.s32.totalorder %s37, %s39
    %p43 = scmp.eq.s32.totalorder %s29, 0
    %p44 = por %p42, %p43
    %p45 = scmp.ne.s32.totalorder %s37, %s39
    %p46 = scmp.eq.s32.totalorder %s34, 1
    %p47 = por %p45, %p46
    %p48 = scmp.ne.s32.totalorder %s39, %s40
    %p49 = scmp.eq.s32.totalorder %s34, 0
    %p50 = por %p48, %p49
    %p51 = scmp.ne.s32.totalorder %s39, %s40
    %p52 = scmp.eq.s32.totalorder %s35, 1
    %p53 = por %p51, %p52
    %p55 = scmp.ne.s32.totalorder %s40, %s54
    %p56 = scmp.eq.s32.totalorder %s35, 0
    %p57 = por %p55, %p56
    %s59 = sadd.s32 %s58, 1
    %p62 = scmp.eq.s32.totalorder %s29, 1
    %p63 = scmp.ne.s32.totalorder %s58, %s60
    %p64 = scmp.eq.s32.totalorder %s29, 0
    %p65 = por %p63, %p64
    %p66 = scmp.ne.s32.totalorder %s58, %s60
    %p67 = scmp.eq.s32.totalorder %s34, 1
    %p68 = por %p66, %p67
    %p69 = scmp.ne.s32.totalorder %s60, %s61
    %p70 = scmp.eq.s32.totalorder %s34, 0
    %p71 = por %p69, %p70
    %p72 = scmp.ne.s32.totalorder %s60, %s61
    %p73 = scmp.eq.s32.totalorder %s35, 1
    %p74 = por %p72, %p73
    %p76 = scmp.ne.s32.totalorder %s61, %s75
    %p77 = scmp.eq.s32.totalorder %s35, 0
    %p78 = por %p76, %p77
    %s80 = sadd.s32 %s79, 1
    %p83 = scmp.eq.s32.totalorder %s29, 1
    %p84 = scmp.ne.s32.totalorder %s79, %s81
    %p85 = scmp.eq.s32.totalorder %s29, 0
    %p86 = por %p84, %p85
    %p87 = scmp.ne.s32.totalorder %s79, %s81
    %p88 = scmp.eq.s32.totalorder %s34, 1
    %p89 = por %p87, %p88
    %p90 = scmp.ne.s32.totalorder %s81, %s82
    %p91 = scmp.eq.s32.totalorder %s34, 0
    %p92 = por %p90, %p91
    %p93 = scmp.ne.s32.totalorder %s81, %s82
    %p94 = scmp.eq.s32.totalorder %s35, 1
    %p95 = por %p93, %p94
    %p97 = scmp.ne.s32.totalorder %s82, %s96
    %p98 = scmp.eq.s32.totalorder %s35, 0
    %p99 = por %p97, %p98
    %s101 = sadd.s32 %s100, 1
    %p104 = scmp.eq.s32.totalorder %s29, 1
    %p105 = scmp.ne.s32.totalorder %s100, %s102
    %p106 = scmp.eq.s32.totalorder %s29, 0
    %p107 = por %p105, %p106
    %p108 = scmp.ne.s32.totalorder %s100, %s102
    %p109 = scmp.eq.s32.totalorder %s34, 1
    %p110 = por %p108, %p109
    %p111 = scmp.ne.s32.totalorder %s102, %s103
    %p112 = scmp.eq.s32.totalorder %s34, 0
    %p113 = por %p111, %p112
    %p114 = scmp.ne.s32.totalorder %s102, %s103
    %p115 = scmp.eq.s32.totalorder %s35, 1
    %p116 = por %p114, %p115
    %p118 = scmp.ne.s32.totalorder %s103, %s117
    %p119 = scmp.eq.s32.totalorder %s35, 0
    %p120 = por %p118, %p119
    %s121 = ssub.s32 %s29, %s36
    %p122 = scmp.eq.s32.totalorder %s121, 0
    %s124 = sadd.s32 %s123, 1
    %s125 = scalar_select %p122, %s123, %s124
    %p128 = pneg %p122
    %p129 = scmp.eq.s32.totalorder %s29, 1
    %p130 = por %p128, %p129
    %p131 = scmp.ne.s32.totalorder %s123, %s126
    %p132 = scmp.eq.s32.totalorder %s29, 0
    %p133 = por %p131, %p132
    %p134 = scmp.ne.s32.totalorder %s123, %s126
    %p135 = scmp.eq.s32.totalorder %s34, 1
    %p136 = por %p134, %p135
    %p137 = scmp.ne.s32.totalorder %s126, %s127
    %p138 = scmp.eq.s32.totalorder %s34, 0
    %p139 = por %p137, %p138
    %p140 = scmp.ne.s32.totalorder %s126, %s127
    %p141 = scmp.eq.s32.totalorder %s35, 1
    %p142 = por %p140, %p141
    %p144 = scmp.ne.s32.totalorder %s127, %s143
    %p145 = scmp.eq.s32.totalorder %s35, 0
    %p146 = por %p144, %p145
    %s147 = ssub.s32 %s29, %s36
    %p148 = scmp.eq.s32.totalorder %s147, 0
    %s150 = sadd.s32 %s149, 1
    %s151 = scalar_select %p148, %s149, %s150
    %p154 = pneg %p148
    %p155 = scmp.eq.s32.totalorder %s29, 1
    %p156 = por %p154, %p155
    %p157 = scmp.ne.s32.totalorder %s149, %s152
    %p158 = scmp.eq.s32.totalorder %s29, 0
    %p159 = por %p157, %p158
    %p160 = scmp.ne.s32.totalorder %s149, %s152
    %p161 = scmp.eq.s32.totalorder %s34, 1
    %p162 = por %p160, %p161
    %p163 = scmp.ne.s32.totalorder %s152, %s153
    %p164 = scmp.eq.s32.totalorder %s34, 0
    %p165 = por %p163, %p164
    %p166 = scmp.ne.s32.totalorder %s152, %s153
    %p167 = scmp.eq.s32.totalorder %s35, 1
    %p168 = por %p166, %p167
    %p170 = scmp.ne.s32.totalorder %s153, %s169
    %p171 = scmp.eq.s32.totalorder %s35, 0
    %p172 = por %p170, %p171
    %s173 = ssub.s32 %s29, %s36
    %p174 = scmp.eq.s32.totalorder %s173, 0
    %s176 = sadd.s32 %s175, 1
    %s177 = scalar_select %p174, %s175, %s176
    %p180 = pneg %p174
    %p181 = scmp.eq.s32.totalorder %s29, 1
    %p182 = por %p180, %p181
    %p183 = scmp.ne.s32.totalorder %s175, %s178
    %p184 = scmp.eq.s32.totalorder %s29, 0
    %p185 = por %p183, %p184
    %p186 = scmp.ne.s32.totalorder %s175, %s178
    %p187 = scmp.eq.s32.totalorder %s34, 1
    %p188 = por %p186, %p187
    %p189 = scmp.ne.s32.totalorder %s178, %s179
    %p190 = scmp.eq.s32.totalorder %s34, 0
    %p191 = por %p189, %p190
    %p192 = scmp.ne.s32.totalorder %s178, %s179
    %p193 = scmp.eq.s32.totalorder %s35, 1
    %p194 = por %p192, %p193
    %p196 = scmp.ne.s32.totalorder %s179, %s195
    %p197 = scmp.eq.s32.totalorder %s35, 0
    %p198 = por %p196, %p197
    %s199 = ssub.s32 %s29, %s36
    %p200 = scmp.eq.s32.totalorder %s199, 0
    %s202 = sadd.s32 %s201, 1
    %s203 = scalar_select %p200, %s201, %s202
    %p206 = pneg %p200
    %p207 = scmp.eq.s32.totalorder %s29, 1
    %p208 = por %p206, %p207
    %p209 = scmp.ne.s32.totalorder %s201, %s204
    %p210 = scmp.eq.s32.totalorder %s29, 0
    %p211 = por %p209, %p210
    %p212 = scmp.ne.s32.totalorder %s201, %s204
    %p213 = scmp.eq.s32.totalorder %s34, 1
    %p214 = por %p212, %p213
    %p215 = scmp.ne.s32.totalorder %s204, %s205
    %p216 = scmp.eq.s32.totalorder %s34, 0
    %p217 = por %p215, %p216
    %p218 = scmp.ne.s32.totalorder %s204, %s205
    %p219 = scmp.eq.s32.totalorder %s35, 1
    %p220 = por %p218, %p219
    %p222 = scmp.ne.s32.totalorder %s205, %s221
    %p223 = scmp.eq.s32.totalorder %s35, 0
    %p224 = por %p222, %p223
    %s225 = ssub.s32 %s29, %s36
    %p226 = scmp.eq.s32.totalorder %s225, 0
    %s228 = sadd.s32 %s227, 1
    %s229 = scalar_select %p226, %s227, %s228
    %p232 = pneg %p226
    %p233 = scmp.eq.s32.totalorder %s29, 1
    %p234 = por %p232, %p233
    %p235 = scmp.ne.s32.totalorder %s227, %s230
    %p236 = scmp.eq.s32.totalorder %s29, 0
    %p237 = por %p235, %p236
    %p238 = scmp.ne.s32.totalorder %s227, %s230
    %p239 = scmp.eq.s32.totalorder %s34, 1
    %p240 = por %p238, %p239
    %p241 = scmp.ne.s32.totalorder %s230, %s231
    %p242 = scmp.eq.s32.totalorder %s34, 0
    %p243 = por %p241, %p242
    %p244 = scmp.ne.s32.totalorder %s230, %s231
    %p245 = scmp.eq.s32.totalorder %s35, 1
    %p246 = por %p244, %p245
    %p248 = scmp.ne.s32.totalorder %s231, %s247
    %p249 = scmp.eq.s32.totalorder %s35, 0
    %p250 = por %p248, %p249
    %s251 = ssub.s32 %s29, %s36
    %p252 = scmp.eq.s32.totalorder %s251, 0
    %s254 = sadd.s32 %s253, 1
    %s255 = scalar_select %p252, %s253, %s254
    %p258 = pneg %p252
    %p259 = scmp.eq.s32.totalorder %s29, 1
    %p260 = por %p258, %p259
    %p261 = scmp.ne.s32.totalorder %s253, %s256
    %p262 = scmp.eq.s32.totalorder %s29, 0
    %p263 = por %p261, %p262
    %p264 = scmp.ne.s32.totalorder %s253, %s256
    %p265 = scmp.eq.s32.totalorder %s34, 1
    %p266 = por %p264, %p265
    %p267 = scmp.ne.s32.totalorder %s256, %s257
    %p268 = scmp.eq.s32.totalorder %s34, 0
    %p269 = por %p267, %p268
    %p270 = scmp.ne.s32.totalorder %s256, %s257
    %p271 = scmp.eq.s32.totalorder %s35, 1
    %p272 = por %p270, %p271
    %p274 = scmp.ne.s32.totalorder %s257, %s273
    %p275 = scmp.eq.s32.totalorder %s35, 0
    %p276 = por %p274, %p275
    %s277 = ssub.s32 %s29, %s36
    %p278 = scmp.eq.s32.totalorder %s277, 0
    %s280 = sadd.s32 %s279, 1
    %s281 = scalar_select %p278, %s279, %s280
    %p284 = pneg %p278
    %p285 = scmp.eq.s32.totalorder %s29, 1
    %p286 = por %p284, %p285
    %p287 = scmp.ne.s32.totalorder %s279, %s282
    %p288 = scmp.eq.s32.totalorder %s29, 0
    %p289 = por %p287, %p288
    %p290 = scmp.ne.s32.totalorder %s279, %s282
    %p291 = scmp.eq.s32.totalorder %s34, 1
    %p292 = por %p290, %p291
    %p293 = scmp.ne.s32.totalorder %s282, %s283
    %p294 = scmp.eq.s32.totalorder %s34, 0
    %p295 = por %p293, %p294
    %p296 = scmp.ne.s32.totalorder %s282, %s283
    %p297 = scmp.eq.s32.totalorder %s35, 1
    %p298 = por %p296, %p297
    %p300 = scmp.ne.s32.totalorder %s283, %s299
    %p301 = scmp.eq.s32.totalorder %s35, 0
    %p302 = por %p300, %p301
    %s303 = ssub.s32 %s29, %s36
    %p304 = scmp.eq.s32.totalorder %s303, 0
    %s306 = sadd.s32 %s305, 1
    %s307 = scalar_select %p304, %s305, %s306
    %p310 = pneg %p304
    %p311 = scmp.eq.s32.totalorder %s29, 1
    %p312 = por %p310, %p311
    %p313 = scmp.ne.s32.totalorder %s305, %s308
    %p314 = scmp.eq.s32.totalorder %s29, 0
    %p315 = por %p313, %p314
    %p316 = scmp.ne.s32.totalorder %s305, %s308
    %p317 = scmp.eq.s32.totalorder %s34, 1
    %p318 = por %p316, %p317
    %p319 = scmp.ne.s32.totalorder %s308, %s309
    %p320 = scmp.eq.s32.totalorder %s34, 0
    %p321 = por %p319, %p320
    %p322 = scmp.ne.s32.totalorder %s308, %s309
    %p323 = scmp.eq.s32.totalorder %s35, 1
    %p324 = por %p322, %p323
    %p326 = scmp.ne.s32.totalorder %s309, %s325
    %p327 = scmp.eq.s32.totalorder %s35, 0
    %p328 = por %p326, %p327
    %s329 = ssub.s32 %s29, %s36
    %p330 = scmp.eq.s32.totalorder %s329, 0
    %s332 = sadd.s32 %s331, 1
    %s333 = scalar_select %p330, %s331, %s332
    %p336 = pneg %p330
    %p337 = scmp.eq.s32.totalorder %s29, 1
    %p338 = por %p336, %p337
    %p339 = scmp.ne.s32.totalorder %s331, %s334
    %p340 = scmp.eq.s32.totalorder %s29, 0
    %p341 = por %p339, %p340
    %p342 = scmp.ne.s32.totalorder %s331, %s334
    %p343 = scmp.eq.s32.totalorder %s34, 1
    %p344 = por %p342, %p343
    %p345 = scmp.ne.s32.totalorder %s334, %s335
    %p346 = scmp.eq.s32.totalorder %s34, 0
    %p347 = por %p345, %p346
    %p348 = scmp.ne.s32.totalorder %s334, %s335
    %p349 = scmp.eq.s32.totalorder %s35, 1
    %p350 = por %p348, %p349
    %p352 = scmp.ne.s32.totalorder %s335, %s351
    %p353 = scmp.eq.s32.totalorder %s35, 0
    %p354 = por %p352, %p353
    %s355 = ssub.s32 %s29, %s36
    %p356 = scmp.eq.s32.totalorder %s355, 0
    %s358 = sadd.s32 %s357, 1
    %s359 = scalar_select %p356, %s357, %s358
    %p362 = pneg %p356
    %p363 = scmp.eq.s32.totalorder %s29, 1
    %p364 = por %p362, %p363
    %p365 = scmp.ne.s32.totalorder %s357, %s360
    %p366 = scmp.eq.s32.totalorder %s29, 0
    %p367 = por %p365, %p366
    %p368 = scmp.ne.s32.totalorder %s357, %s360
    %p369 = scmp.eq.s32.totalorder %s34, 1
    %p370 = por %p368, %p369
    %p371 = scmp.ne.s32.totalorder %s360, %s361
    %p372 = scmp.eq.s32.totalorder %s34, 0
    %p373 = por %p371, %p372
    %p374 = scmp.ne.s32.totalorder %s360, %s361
    %p375 = scmp.eq.s32.totalorder %s35, 1
    %p376 = por %p374, %p375
    %p378 = scmp.ne.s32.totalorder %s361, %s377
    %p379 = scmp.eq.s32.totalorder %s35, 0
    %p380 = por %p378, %p379
    %s381 = ssub.s32 %s29, %s36
    %p382 = scmp.eq.s32.totalorder %s381, 0
    %s384 = sadd.s32 %s383, 1
    %s385 = scalar_select %p382, %s383, %s384
    %p388 = pneg %p382
    %p389 = scmp.eq.s32.totalorder %s29, 1
    %p390 = por %p388, %p389
    %p391 = scmp.ne.s32.totalorder %s383, %s386
    %p392 = scmp.eq.s32.totalorder %s29, 0
    %p393 = por %p391, %p392
    %p394 = scmp.ne.s32.totalorder %s383, %s386
    %p395 = scmp.eq.s32.totalorder %s34, 1
    %p396 = por %p394, %p395
    %p397 = scmp.ne.s32.totalorder %s386, %s387
    %p398 = scmp.eq.s32.totalorder %s34, 0
    %p399 = por %p397, %p398
    %p400 = scmp.ne.s32.totalorder %s386, %s387
    %p401 = scmp.eq.s32.totalorder %s35, 1
    %p402 = por %p400, %p401
    %p404 = scmp.ne.s32.totalorder %s387, %s403
    %p405 = scmp.eq.s32.totalorder %s35, 0
    %p406 = por %p404, %p405
    %s407 = ssub.s32 %s29, %s36
    %p408 = scmp.eq.s32.totalorder %s407, 0
    %s410 = sadd.s32 %s409, 1
    %s411 = scalar_select %p408, %s409, %s410
    %p414 = pneg %p408
    %p415 = scmp.eq.s32.totalorder %s29, 1
    %p416 = por %p414, %p415
    %p417 = scmp.ne.s32.totalorder %s409, %s412
    %p418 = scmp.eq.s32.totalorder %s29, 0
    %p419 = por %p417, %p418
    %p420 = scmp.ne.s32.totalorder %s409, %s412
    %p421 = scmp.eq.s32.totalorder %s34, 1
    %p422 = por %p420, %p421
    %p423 = scmp.ne.s32.totalorder %s412, %s413
    %p424 = scmp.eq.s32.totalorder %s34, 0
    %p425 = por %p423, %p424
    %p426 = scmp.ne.s32.totalorder %s412, %s413
    %p427 = scmp.eq.s32.totalorder %s35, 1
    %p428 = por %p426, %p427
    %p430 = scmp.ne.s32.totalorder %s413, %s429
    %p431 = scmp.eq.s32.totalorder %s35, 0
    %p432 = por %p430, %p431
    %s433 = ssub.s32 %s29, %s36
    %p434 = scmp.eq.s32.totalorder %s433, 0
    %s436 = sadd.s32 %s435, 1
    %s437 = scalar_select %p434, %s435, %s436
    %p440 = pneg %p434
    %p441 = scmp.eq.s32.totalorder %s29, 1
    %p442 = por %p440, %p441
    %p443 = scmp.ne.s32.totalorder %s435, %s438
    %p444 = scmp.eq.s32.totalorder %s29, 0
    %p445 = por %p443, %p444
    %p446 = scmp.ne.s32.totalorder %s435, %s438
    %p447 = scmp.eq.s32.totalorder %s34, 1
    %p448 = por %p446, %p447
    %p449 = scmp.ne.s32.totalorder %s438, %s439
    %p450 = scmp.eq.s32.totalorder %s34, 0
    %p451 = por %p449, %p450
    %p452 = scmp.ne.s32.totalorder %s438, %s439
    %p453 = scmp.eq.s32.totalorder %s35, 1
    %p454 = por %p452, %p453
    %p456 = scmp.ne.s32.totalorder %s439, %s455
    %p457 = scmp.eq.s32.totalorder %s35, 0
    %p458 = por %p456, %p457
    %s459 = ssub.s32 %s29, %s36
    %p460 = scmp.eq.s32.totalorder %s459, 0
    %s462 = sadd.s32 %s461, 1
    %s463 = scalar_select %p460, %s461, %s462
    %p466 = pneg %p460
    %p467 = scmp.eq.s32.totalorder %s29, 1
    %p468 = por %p466, %p467
    %p469 = scmp.ne.s32.totalorder %s461, %s464
    %p470 = scmp.eq.s32.totalorder %s29, 0
    %p471 = por %p469, %p470
    %p472 = scmp.ne.s32.totalorder %s461, %s464
    %p473 = scmp.eq.s32.totalorder %s34, 1
    %p474 = por %p472, %p473
    %p475 = scmp.ne.s32.totalorder %s464, %s465
    %p476 = scmp.eq.s32.totalorder %s34, 0
    %p477 = por %p475, %p476
    %p478 = scmp.ne.s32.totalorder %s464, %s465
    %p479 = scmp.eq.s32.totalorder %s35, 1
    %p480 = por %p478, %p479
    %p482 = scmp.ne.s32.totalorder %s465, %s481
    %p483 = scmp.eq.s32.totalorder %s35, 0
    %p484 = por %p482, %p483
    %s485 = ssub.s32 %s29, %s36
    %p486 = scmp.eq.s32.totalorder %s485, 0
    %s488 = sadd.s32 %s487, 1
    %s489 = scalar_select %p486, %s487, %s488
    %p492 = pneg %p486
    %p493 = scmp.eq.s32.totalorder %s29, 1
    %p494 = por %p492, %p493
    %p495 = scmp.ne.s32.totalorder %s487, %s490
    %p496 = scmp.eq.s32.totalorder %s29, 0
    %p497 = por %p495, %p496
    %p498 = scmp.ne.s32.totalorder %s487, %s490
    %p499 = scmp.eq.s32.totalorder %s34, 1
    %p500 = por %p498, %p499
    %p501 = scmp.ne.s32.totalorder %s490, %s491
    %p502 = scmp.eq.s32.totalorder %s34, 0
    %p503 = por %p501, %p502
    %p504 = scmp.ne.s32.totalorder %s490, %s491
    %p505 = scmp.eq.s32.totalorder %s35, 1
    %p506 = por %p504, %p505
    %p508 = scmp.ne.s32.totalorder %s491, %s507
    %p509 = scmp.eq.s32.totalorder %s35, 0
    %p510 = por %p508, %p509
    %s512 = sadd.s32 %s511, 1
    %p515 = scmp.eq.s32.totalorder %s29, 1
    %p516 = scmp.ne.s32.totalorder %s511, %s513
    %p517 = scmp.eq.s32.totalorder %s29, 0
    %p518 = por %p516, %p517
    %p519 = scmp.ne.s32.totalorder %s511, %s513
    %p520 = scmp.eq.s32.totalorder %s34, 1
    %p521 = por %p519, %p520
    %p522 = scmp.ne.s32.totalorder %s513, %s514
    %p523 = scmp.eq.s32.totalorder %s34, 0
    %p524 = por %p522, %p523
    %p525 = scmp.ne.s32.totalorder %s513, %s514
    %p526 = scmp.eq.s32.totalorder %s35, 1
    %p527 = por %p525, %p526
    %p529 = scmp.ne.s32.totalorder %s514, %s528
    %p530 = scmp.eq.s32.totalorder %s35, 0
    %p531 = por %p529, %p530
    %s533 = sadd.s32 %s532, 1
    %p536 = scmp.eq.s32.totalorder %s29, 1
    %p537 = scmp.ne.s32.totalorder %s532, %s534
    %p538 = scmp.eq.s32.totalorder %s29, 0
    %p539 = por %p537, %p538
    %p540 = scmp.ne.s32.totalorder %s532, %s534
    %p541 = scmp.eq.s32.totalorder %s34, 1
    %p542 = por %p540, %p541
    %p543 = scmp.ne.s32.totalorder %s534, %s535
    %p544 = scmp.eq.s32.totalorder %s34, 0
    %p545 = por %p543, %p544
    %p546 = scmp.ne.s32.totalorder %s534, %s535
    %p547 = scmp.eq.s32.totalorder %s35, 1
    %p548 = por %p546, %p547
    %p550 = scmp.ne.s32.totalorder %s535, %s549
    %p551 = scmp.eq.s32.totalorder %s35, 0
    %p552 = por %p550, %p551
    %s554 = sadd.s32 %s553, 1
    %p557 = scmp.eq.s32.totalorder %s29, 1
    %p558 = scmp.ne.s32.totalorder %s553, %s555
    %p559 = scmp.eq.s32.totalorder %s29, 0
    %p560 = por %p558, %p559
    %p561 = scmp.ne.s32.totalorder %s553, %s555
    %p562 = scmp.eq.s32.totalorder %s34, 1
    %p563 = por %p561, %p562
    %p564 = scmp.ne.s32.totalorder %s555, %s556
    %p565 = scmp.eq.s32.totalorder %s34, 0
    %p566 = por %p564, %p565
    %p567 = scmp.ne.s32.totalorder %s555, %s556
    %p568 = scmp.eq.s32.totalorder %s35, 1
    %p569 = por %p567, %p568
    %p571 = scmp.ne.s32.totalorder %s556, %s570
    %p572 = scmp.eq.s32.totalorder %s35, 0
    %p573 = por %p571, %p572
    %s575 = sadd.s32 %s574, 1
    %p578 = scmp.eq.s32.totalorder %s29, 1
    %p579 = scmp.ne.s32.totalorder %s574, %s576
    %p580 = scmp.eq.s32.totalorder %s29, 0
    %p581 = por %p579, %p580
    %p582 = scmp.ne.s32.totalorder %s574, %s576
    %p583 = scmp.eq.s32.totalorder %s34, 1
    %p584 = por %p582, %p583
    %p585 = scmp.ne.s32.totalorder %s576, %s577
    %p586 = scmp.eq.s32.totalorder %s34, 0
    %p587 = por %p585, %p586
    %p588 = scmp.ne.s32.totalorder %s576, %s577
    %p589 = scmp.eq.s32.totalorder %s35, 1
    %p590 = por %p588, %p589
    %p592 = scmp.ne.s32.totalorder %s577, %s591
    %p593 = scmp.eq.s32.totalorder %s35, 0
    %p594 = por %p592, %p593
    %s596 = sadd.s32 %s595, 1
    %p599 = scmp.eq.s32.totalorder %s29, 1
    %p600 = scmp.ne.s32.totalorder %s595, %s597
    %p601 = scmp.eq.s32.totalorder %s29, 0
    %p602 = por %p600, %p601
    %p603 = scmp.ne.s32.totalorder %s595, %s597
    %p604 = scmp.eq.s32.totalorder %s34, 1
    %p605 = por %p603, %p604
    %p606 = scmp.ne.s32.totalorder %s597, %s598
    %p607 = scmp.eq.s32.totalorder %s34, 0
    %p608 = por %p606, %p607
    %p609 = scmp.ne.s32.totalorder %s597, %s598
    %p610 = scmp.eq.s32.totalorder %s35, 1
    %p611 = por %p609, %p610
    %p613 = scmp.ne.s32.totalorder %s598, %s612
    %p614 = scmp.eq.s32.totalorder %s35, 0
    %p615 = por %p613, %p614
    %p616 = scmp.le.s32.totalorder 1, %s29
    %p617 = scmp.lt.s32.totalorder %s29, 3
    %p618 = pnand %p616, %p617
    %p619 = pneg %p618
    // Predicated region
    $region9: #{transformer_forward.3} parent=5 // pred_check
      _
    $region10: #{transformer_forward.3} parent=5 // pred_check_branch
      %621 = sbr.rel (%p618) target = $region12
    $region11: #{transformer_forward.3} parent=5 // pred_region
      %s622 = ssub.s32 %s29, 1
      // Predicated region
      $region13: #{transformer_forward.3} parent=11 // pred_check
        %p623 = pneg %p50
      $region14: #{transformer_forward.3} parent=11 // pred_check_branch
        %625 = sbr.rel (%p623) target = $region16
      $region15: #{transformer_forward.3} parent=11 // pred_region
        _
      $region16: #{transformer_forward.3} parent=11 // pred_fallthru
        _
      // Predicated region
      $region17: #{transformer_forward.3} parent=11 // pred_check
        %p626 = pneg %p71
      $region18: #{transformer_forward.3} parent=11 // pred_check_branch
        %628 = sbr.rel (%p626) target = $region20
      $region19: #{transformer_forward.3} parent=11 // pred_region
        _
      $region20: #{transformer_forward.3} parent=11 // pred_fallthru
        _
      // Predicated region
      $region21: #{transformer_forward.3} parent=11 // pred_check
        %p629 = pneg %p92
      $region22: #{transformer_forward.3} parent=11 // pred_check_branch
        %631 = sbr.rel (%p629) target = $region24
      $region23: #{transformer_forward.3} parent=11 // pred_region
        _
      $region24: #{transformer_forward.3} parent=11 // pred_fallthru
        _
      // Predicated region
      $region25: #{transformer_forward.3} parent=11 // pred_check
        %p632 = pneg %p113
      $region26: #{transformer_forward.3} parent=11 // pred_check_branch
        %634 = sbr.rel (%p632) target = $region28
      $region27: #{transformer_forward.3} parent=11 // pred_region
        _
      $region28: #{transformer_forward.3} parent=11 // pred_fallthru
        _
      // Predicated region
      $region29: #{transformer_forward.3} parent=11 // pred_check
        %p635 = pneg %p524
      $region30: #{transformer_forward.3} parent=11 // pred_check_branch
        %637 = sbr.rel (%p635) target = $region32
      $region31: #{transformer_forward.3} parent=11 // pred_region
        _
      $region32: #{transformer_forward.3} parent=11 // pred_fallthru
        _
      // Predicated region
      $region33: #{transformer_forward.3} parent=11 // pred_check
        %p638 = pneg %p545
      $region34: #{transformer_forward.3} parent=11 // pred_check_branch
        %640 = sbr.rel (%p638) target = $region36
      $region35: #{transformer_forward.3} parent=11 // pred_region
        _
      $region36: #{transformer_forward.3} parent=11 // pred_fallthru
        _
      // Predicated region
      $region37: #{transformer_forward.3} parent=11 // pred_check
        %p641 = pneg %p566
      $region38: #{transformer_forward.3} parent=11 // pred_check_branch
        %643 = sbr.rel (%p641) target = $region40
      $region39: #{transformer_forward.3} parent=11 // pred_region
        _
      $region40: #{transformer_forward.3} parent=11 // pred_fallthru
        _
      // Predicated region
      $region41: #{transformer_forward.3} parent=11 // pred_check
        %p644 = pneg %p587
      $region42: #{transformer_forward.3} parent=11 // pred_check_branch
        %646 = sbr.rel (%p644) target = $region44
      $region43: #{transformer_forward.3} parent=11 // pred_region
        _
      $region44: #{transformer_forward.3} parent=11 // pred_fallthru
        _
    $region12: #{transformer_forward.3} parent=5 // pred_fallthru
      _
    %p647 = scmp.lt.s32.totalorder %s29, 2
    // Predicated region
    $region45: #{transformer_forward.3} parent=5 // pred_check
      %p648 = pneg %p647
    $region46: #{transformer_forward.3} parent=5 // pred_check_branch
      %650 = sbr.rel (%p648) target = $region48
    $region47: #{transformer_forward.3} parent=5 // pred_region
      // Predicated region
      $region49: #{transformer_forward.3} parent=47 // pred_check
        %p651 = pneg %p133
      $region50: #{transformer_forward.3} parent=47 // pred_check_branch
        %653 = sbr.rel (%p651) target = $region52
      $region51: #{transformer_forward.3} parent=47 // pred_region
        %p654 = scmp.lt.s32.totalorder %s29, 1
        %s655 = scalar_select %p654, %s29, 1
        %s656 = scalar_lea.vmem %s4, %s655
      $region52: #{transformer_forward.3} parent=47 // pred_fallthru
        _
      // Predicated region
      $region53: #{transformer_forward.3} parent=47 // pred_check
        %p657 = pneg %p159
      $region54: #{transformer_forward.3} parent=47 // pred_check_branch
        %659 = sbr.rel (%p657) target = $region56
      $region55: #{transformer_forward.3} parent=47 // pred_region
        %p660 = scmp.lt.s32.totalorder %s29, 1
        %s661 = scalar_select %p660, %s29, 1
        %s662 = scalar_lea.vmem %s5, %s661
      $region56: #{transformer_forward.3} parent=47 // pred_fallthru
        _
      // Predicated region
      $region57: #{transformer_forward.3} parent=47 // pred_check
        %p663 = pneg %p185
      $region58: #{transformer_forward.3} parent=47 // pred_check_branch
        %665 = sbr.rel (%p663) target = $region60
      $region59: #{transformer_forward.3} parent=47 // pred_region
        %p666 = scmp.lt.s32.totalorder %s29, 1
        %s667 = scalar_select %p666, %s29, 1
        %s668 = smul.addr %s667, 4
        %s669 = smul.addr %s668, 8
        %s670 = scalar_lea.vmem %s6, %s669
      $region60: #{transformer_forward.3} parent=47 // pred_fallthru
        _
      // Predicated region
      $region61: #{transformer_forward.3} parent=47 // pred_check
        %p671 = pneg %p211
      $region62: #{transformer_forward.3} parent=47 // pred_check_branch
        %673 = sbr.rel (%p671) target = $region64
      $region63: #{transformer_forward.3} parent=47 // pred_region
        %p674 = scmp.lt.s32.totalorder %s29, 1
        %s675 = scalar_select %p674, %s29, 1
        %s676 = smul.addr %s675, 4
        %s677 = smul.addr %s676, 8
        %s678 = scalar_lea.vmem %s7, %s677
      $region64: #{transformer_forward.3} parent=47 // pred_fallthru
        _
      // Predicated region
      $region65: #{transformer_forward.3} parent=47 // pred_check
        %p679 = pneg %p237
      $region66: #{transformer_forward.3} parent=47 // pred_check_branch
        %681 = sbr.rel (%p679) target = $region68
      $region67: #{transformer_forward.3} parent=47 // pred_region
        %p682 = scmp.lt.s32.totalorder %s29, 1
        %s683 = scalar_select %p682, %s29, 1
        %s684 = scalar_lea.vmem %s8, %s683
      $region68: #{transformer_forward.3} parent=47 // pred_fallthru
        _
      // Predicated region
      $region69: #{transformer_forward.3} parent=47 // pred_check
        %p685 = pneg %p263
      $region70: #{transformer_forward.3} parent=47 // pred_check_branch
        %687 = sbr.rel (%p685) target = $region72
      $region71: #{transformer_forward.3} parent=47 // pred_region
        %p688 = scmp.lt.s32.totalorder %s29, 1
        %s689 = scalar_select %p688, %s29, 1
        %s690 = scalar_lea.vmem %s9, %s689
      $region72: #{transformer_forward.3} parent=47 // pred_fallthru
        _
      // Predicated region
      $region73: #{transformer_forward.3} parent=47 // pred_check
        %p691 = pneg %p289
      $region74: #{transformer_forward.3} parent=47 // pred_check_branch
        %693 = sbr.rel (%p691) target = $region76
      $region75: #{transformer_forward.3} parent=47 // pred_region
        %p694 = scmp.lt.s32.totalorder %s29, 1
        %s695 = scalar_select %p694, %s29, 1
        %s696 = smul.addr %s695, 4
        %s697 = smul.addr %s696, 8
        %s698 = scalar_lea.vmem %s10, %s697
      $region76: #{transformer_forward.3} parent=47 // pred_fallthru
        _
      // Predicated region
      $region77: #{transformer_forward.3} parent=47 // pred_check
        %p699 = pneg %p315
      $region78: #{transformer_forward.3} parent=47 // pred_check_branch
        %701 = sbr.rel (%p699) target = $region80
      $region79: #{transformer_forward.3} parent=47 // pred_region
        %p702 = scmp.lt.s32.totalorder %s29, 1
        %s703 = scalar_select %p702, %s29, 1
        %s704 = smul.addr %s703, 4
        %s705 = smul.addr %s704, 8
        %s706 = scalar_lea.vmem %s11, %s705
      $region80: #{transformer_forward.3} parent=47 // pred_fallthru
        _
      // Predicated region
      $region81: #{transformer_forward.3} parent=47 // pred_check
        %p707 = pneg %p341
      $region82: #{transformer_forward.3} parent=47 // pred_check_branch
        %709 = sbr.rel (%p707) target = $region84
      $region83: #{transformer_forward.3} parent=47 // pred_region
        %p710 = scmp.lt.s32.totalorder %s29, 1
        %s711 = scalar_select %p710, %s29, 1
        %s712 = smul.addr %s711, 4
        %s713 = smul.addr %s712, 8
        %s714 = scalar_lea.vmem %s12, %s713
      $region84: #{transformer_forward.3} parent=47 // pred_fallthru
        _
      // Predicated region
      $region85: #{transformer_forward.3} parent=47 // pred_check
        %p715 = pneg %p367
      $region86: #{transformer_forward.3} parent=47 // pred_check_branch
        %717 = sbr.rel (%p715) target = $region88
      $region87: #{transformer_forward.3} parent=47 // pred_region
        %p718 = scmp.lt.s32.totalorder %s29, 1
        %s719 = scalar_select %p718, %s29, 1
        %s720 = scalar_lea.vmem %s13, %s719
      $region88: #{transformer_forward.3} parent=47 // pred_fallthru
        _
      // Predicated region
      $region89: #{transformer_forward.3} parent=47 // pred_check
        %p721 = pneg %p393
      $region90: #{transformer_forward.3} parent=47 // pred_check_branch
        %723 = sbr.rel (%p721) target = $region92
      $region91: #{transformer_forward.3} parent=47 // pred_region
        %p724 = scmp.lt.s32.totalorder %s29, 1
        %s725 = scalar_select %p724, %s29, 1
        %s726 = scalar_lea.vmem %s14, %s725
      $region92: #{transformer_forward.3} parent=47 // pred_fallthru
        _
      // Predicated region
      $region93: #{transformer_forward.3} parent=47 // pred_check
        %p727 = pneg %p419
      $region94: #{transformer_forward.3} parent=47 // pred_check_branch
        %729 = sbr.rel (%p727) target = $region96
      $region95: #{transformer_forward.3} parent=47 // pred_region
        %p730 = scmp.lt.s32.totalorder %s29, 1
        %s731 = scalar_select %p730, %s29, 1
        %s732 = smul.addr %s731, 4
        %s733 = smul.addr %s732, 8
        %s734 = scalar_lea.vmem %s15, %s733
      $region96: #{transformer_forward.3} parent=47 // pred_fallthru
        _
      // Predicated region
      $region97: #{transformer_forward.3} parent=47 // pred_check
        %p735 = pneg %p445
      $region98: #{transformer_forward.3} parent=47 // pred_check_branch
        %737 = sbr.rel (%p735) target = $region100
      $region99: #{transformer_forward.3} parent=47 // pred_region
        %p738 = scmp.lt.s32.totalorder %s29, 1
        %s739 = scalar_select %p738, %s29, 1
        %s740 = scalar_lea.vmem %s16, %s739
      $region100: #{transformer_forward.3} parent=47 // pred_fallthru
        _
      // Predicated region
      $region101: #{transformer_forward.3} parent=47 // pred_check
        %p741 = pneg %p471
      $region102: #{transformer_forward.3} parent=47 // pred_check_branch
        %743 = sbr.rel (%p741) target = $region104
      $region103: #{transformer_forward.3} parent=47 // pred_region
        %p744 = scmp.lt.s32.totalorder %s29, 1
        %s745 = scalar_select %p744, %s29, 1
        %s746 = smul.addr %s745, 8
        %s747 = smul.addr %s746, 8
        %s748 = scalar_lea.vmem %s17, %s747
      $region104: #{transformer_forward.3} parent=47 // pred_fallthru
        _
      // Predicated region
      $region105: #{transformer_forward.3} parent=47 // pred_check
        %p749 = pneg %p497
      $region106: #{transformer_forward.3} parent=47 // pred_check_branch
        %751 = sbr.rel (%p749) target = $region108
      $region107: #{transformer_forward.3} parent=47 // pred_region
        %p752 = scmp.lt.s32.totalorder %s29, 1
        %s753 = scalar_select %p752, %s29, 1
        %s754 = scalar_lea.vmem %s18, %s753
      $region108: #{transformer_forward.3} parent=47 // pred_fallthru
        _
    $region48: #{transformer_forward.3} parent=5 // pred_fallthru
      _
    %p755 = scmp.le.s32.totalorder 1, %s29
    %p756 = scmp.lt.s32.totalorder %s29, 3
    %p757 = pnand %p755, %p756
    %p758 = pneg %p757
    // Predicated region
    $region109: #{transformer_forward.3} parent=5 // pred_check
      _
    $region110: #{transformer_forward.3} parent=5 // pred_check_branch
      %760 = sbr.rel (%p757) target = $region112
    $region111: #{transformer_forward.3} parent=5 // pred_region
      %s761 = ssub.s32 %s29, 1
      %p762 = pneg %p50
      %p763 = pneg %p47
      %p764 = pneg %p71
      %p765 = pneg %p68
      %p766 = pneg %p92
      %p767 = pneg %p89
      %p768 = pneg %p113
      %p769 = pneg %p110
      %p770 = scmp.lt.s32.totalorder %s34, 1
      %s771 = scalar_select %p770, %s34, 1
      %s772 = scalar_lea.vmem %s4, %s771
      %p773 = pneg %p139
      %p774 = pneg %p136
      %p775 = scmp.lt.s32.totalorder %s34, 1
      %s776 = scalar_select %p775, %s34, 1
      %s777 = scalar_lea.vmem %s5, %s776
      %p778 = pneg %p165
      %p779 = pneg %p162
      %p780 = scmp.lt.s32.totalorder %s34, 1
      %s781 = scalar_select %p780, %s34, 1
      %s782 = smul.addr %s781, 4
      %s783 = smul.addr %s782, 8
      %s784 = scalar_lea.vmem %s6, %s783
      %p785 = pneg %p191
      %p786 = pneg %p188
      %p787 = scmp.lt.s32.totalorder %s34, 1
      %s788 = scalar_select %p787, %s34, 1
      %s789 = smul.addr %s788, 4
      %s790 = smul.addr %s789, 8
      %s791 = scalar_lea.vmem %s7, %s790
      %p792 = pneg %p217
      %p793 = pneg %p214
      %p794 = scmp.lt.s32.totalorder %s34, 1
      %s795 = scalar_select %p794, %s34, 1
      %s796 = scalar_lea.vmem %s8, %s795
      %p797 = pneg %p243
      %p798 = pneg %p240
      %p799 = scmp.lt.s32.totalorder %s34, 1
      %s800 = scalar_select %p799, %s34, 1
      %s801 = scalar_lea.vmem %s9, %s800
      %p802 = pneg %p269
      %p803 = pneg %p266
      %p804 = scmp.lt.s32.totalorder %s34, 1
      %s805 = scalar_select %p804, %s34, 1
      %s806 = smul.addr %s805, 4
      %s807 = smul.addr %s806, 8
      %s808 = scalar_lea.vmem %s10, %s807
      %p809 = pneg %p295
      %p810 = pneg %p292
      %p811 = scmp.lt.s32.totalorder %s34, 1
      %s812 = scalar_select %p811, %s34, 1
      %s813 = smul.addr %s812, 4
      %s814 = smul.addr %s813, 8
      %s815 = scalar_lea.vmem %s11, %s814
      %p816 = pneg %p321
      %p817 = pneg %p318
      %p818 = scmp.lt.s32.totalorder %s34, 1
      %s819 = scalar_select %p818, %s34, 1
      %s820 = smul.addr %s819, 4
      %s821 = smul.addr %s820, 8
      %s822 = scalar_lea.vmem %s12, %s821
      %p823 = pneg %p347
      %p824 = pneg %p344
      %p825 = scmp.lt.s32.totalorder %s34, 1
      %s826 = scalar_select %p825, %s34, 1
      %s827 = scalar_lea.vmem %s13, %s826
      %p828 = pneg %p373
      %p829 = pneg %p370
      %p830 = scmp.lt.s32.totalorder %s34, 1
      %s831 = scalar_select %p830, %s34, 1
      %s832 = scalar_lea.vmem %s14, %s831
      %p833 = pneg %p399
      %p834 = pneg %p396
      %p835 = scmp.lt.s32.totalorder %s34, 1
      %s836 = scalar_select %p835, %s34, 1
      %s837 = smul.addr %s836, 4
      %s838 = smul.addr %s837, 8
      %s839 = scalar_lea.vmem %s15, %s838
      %p840 = pneg %p425
      %p841 = pneg %p422
      %p842 = scmp.lt.s32.totalorder %s34, 1
      %s843 = scalar_select %p842, %s34, 1
      %s844 = scalar_lea.vmem %s16, %s843
      %p845 = pneg %p451
      %p846 = pneg %p448
      %p847 = scmp.lt.s32.totalorder %s34, 1
      %s848 = scalar_select %p847, %s34, 1
      %s849 = smul.addr %s848, 8
      %s850 = smul.addr %s849, 8
      %s851 = scalar_lea.vmem %s17, %s850
      %p852 = pneg %p477
      %p853 = pneg %p474
      %p854 = scmp.lt.s32.totalorder %s34, 1
      %s855 = scalar_select %p854, %s34, 1
      %s856 = scalar_lea.vmem %s18, %s855
      %p857 = pneg %p503
      %p858 = pneg %p500
      %p859 = pneg %p524
      %p860 = pneg %p521
      %p861 = pneg %p545
      %p862 = pneg %p542
      %p863 = pneg %p566
      %p864 = pneg %p563
      %p865 = pneg %p587
      %p866 = pneg %p584
      %p867 = pneg %p608
      %p868 = pneg %p605
      %p869 = scmp.lt.s32.totalorder %s34, 1
      %s870 = scalar_select %p869, %s34, 1
      %s871 = scalar_lea.vmem %s4, %s870
      %p872 = scmp.lt.s32.totalorder %s34, 1
      %s873 = scalar_select %p872, %s34, 1
      %s874 = scalar_lea.vmem %s5, %s873
      %p875 = scmp.lt.s32.totalorder %s34, 1
      %s876 = scalar_select %p875, %s34, 1
      %s877 = smul.addr %s876, 4
      %s878 = smul.addr %s877, 8
      %s879 = scalar_lea.vmem %s6, %s878
      %p880 = scmp.lt.s32.totalorder %s34, 1
      %s881 = scalar_select %p880, %s34, 1
      %s882 = smul.addr %s881, 4
      %s883 = smul.addr %s882, 8
      %s884 = scalar_lea.vmem %s7, %s883
      %p885 = scmp.lt.s32.totalorder %s34, 1
      %s886 = scalar_select %p885, %s34, 1
      %s887 = scalar_lea.vmem %s8, %s886
      %p888 = scmp.lt.s32.totalorder %s34, 1
      %s889 = scalar_select %p888, %s34, 1
      %s890 = scalar_lea.vmem %s9, %s889
      %p891 = scmp.lt.s32.totalorder %s34, 1
      %s892 = scalar_select %p891, %s34, 1
      %s893 = smul.addr %s892, 4
      %s894 = smul.addr %s893, 8
      %s895 = scalar_lea.vmem %s10, %s894
      %p896 = scmp.lt.s32.totalorder %s34, 1
      %s897 = scalar_select %p896, %s34, 1
      %s898 = smul.addr %s897, 4
      %s899 = smul.addr %s898, 8
      %s900 = scalar_lea.vmem %s11, %s899
      %p901 = scmp.lt.s32.totalorder %s34, 1
      %s902 = scalar_select %p901, %s34, 1
      %s903 = smul.addr %s902, 4
      %s904 = smul.addr %s903, 8
      %s905 = scalar_lea.vmem %s12, %s904
      %p906 = scmp.lt.s32.totalorder %s34, 1
      %s907 = scalar_select %p906, %s34, 1
      %s908 = scalar_lea.vmem %s13, %s907
      %p909 = scmp.lt.s32.totalorder %s34, 1
      %s910 = scalar_select %p909, %s34, 1
      %s911 = scalar_lea.vmem %s14, %s910
      %p912 = scmp.lt.s32.totalorder %s34, 1
      %s913 = scalar_select %p912, %s34, 1
      %s914 = smul.addr %s913, 4
      %s915 = smul.addr %s914, 8
      %s916 = scalar_lea.vmem %s15, %s915
      %p917 = scmp.lt.s32.totalorder %s34, 1
      %s918 = scalar_select %p917, %s34, 1
      %s919 = scalar_lea.vmem %s16, %s918
      %p920 = scmp.lt.s32.totalorder %s34, 1
      %s921 = scalar_select %p920, %s34, 1
      %s922 = smul.addr %s921, 8
      %s923 = smul.addr %s922, 8
      %s924 = scalar_lea.vmem %s17, %s923
      %p925 = scmp.lt.s32.totalorder %s34, 1
      %s926 = scalar_select %p925, %s34, 1
      %s927 = scalar_lea.vmem %s18, %s926
      %p928 = scmp.eq.s32.totalorder %s34, 0
      // Predicated region
      $region113: #{transformer_forward.3} parent=111 // pred_check
        %p929 = pneg %p928
      $region114: #{transformer_forward.3} parent=111 // pred_check_branch
        %931 = sbr.rel (%p929) target = $region116
      $region115: #{transformer_forward.3} parent=111 // pred_region
        %v932 = vld [vmem:[%s0] sm:$0xff]
        %v933 = vld [vmem:[%s0 + $0x8] sm:$0xff]
        %vm934 = vcmask 261120
        %935 = vst.msk [vmem:[#allocation2] sm:$0xff] %vm934, %v932
        %936 = vst.msk [vmem:[#allocation2 + $0x8] sm:$0xff] %vm934, %v933
        %937 = vst [vmem:[%s23] sm:$0xff] 0.0
        %938 = vst [vmem:[%s23 + $0x8] sm:$0xff] 0.0
      $region116: #{transformer_forward.3} parent=111 // pred_fallthru
        _
      %v939 = vld [vmem:[#allocation2] sm:$0xff]
      %v940 = vld [vmem:[#allocation2 + $0x8] sm:$0xff]
      %v941 = vld [vmem:[%s871] sm:$0x1]
      %v942 = vld [vmem:[%s874] sm:$0x1]
      %vm943 = vcmask 261120
      %v944 = vsel %vm943, %v939, 0.0
      %945 = vadd.xlane.f32.xlu0 %v944
      %v946 = vpop.xlane.xlu0 %945
      %v947 = vsel %vm943, %v940, 0.0
      %948 = vadd.xlane.f32.xlu0 %v947
      %v949 = vpop.xlane.xlu0 %948
      %v950 = vrcp.pop 32.0
      %v951 = vmul.f32 %v946, %v950
      %v952 = vmul.f32 %v949, %v950
      %v953 = vsub.f32 %v939, %v951
      %v954 = vsub.f32 %v940, %v952
      %v955 = vmul.f32 %v953, %v953
      %v956 = vmul.f32 %v954, %v954
      %v957 = vsel %vm943, %v955, 0.0
      %958 = vadd.xlane.f32.xlu0 %v957
      %v959 = vpop.xlane.xlu0 %958
      %v960 = vsel %vm943, %v956, 0.0
      %961 = vadd.xlane.f32.xlu0 %v960
      %v962 = vpop.xlane.xlu0 %961
      %v963 = vmul.f32 %v959, 0.032258064
      %v964 = vmul.f32 %v962, 0.032258064
      %v965 = vrsqrt.pop %v963
      %v966 = vmul.f32 %v963, %v965
      %vm967 = vcmp.eq.f32.partialorder %v963, inf
      %v968 = vsel %vm967, %v963, %v966
      %vm969 = vcmp.eq.f32.partialorder %v963, 0.0
      %v970 = vand.u32 %v963, 2147483648
      %v971 = vsel %vm969, %v970, %v968
      %v972 = vrsqrt.pop %v964
      %v973 = vmul.f32 %v964, %v972
      %vm974 = vcmp.eq.f32.partialorder %v964, inf
      %v975 = vsel %vm974, %v964, %v973
      %vm976 = vcmp.eq.f32.partialorder %v964, 0.0
      %v977 = vand.u32 %v964, 2147483648
      %v978 = vsel %vm976, %v977, %v975
      %v980 = vlaneseq
      %v981 = vshrl.u32 %v980, 7
      %v982 = vsub.s32 0, %v981
      %v983 = vrot.slane %v941, %v982
      %v985 = vmul.f32 %v983, %v953
      %v986 = vmul.f32 %v983, %v954
      %v987 = vadd.f32 %v971, 1e-06
      %v988 = vadd.f32 %v978, 1e-06
      %v989 = vrcp.pop %v987
      %v990 = vmul.f32 %v985, %v989
      %v991 = vrcp.pop %v988
      %v992 = vmul.f32 %v986, %v991
      %v994 = vlaneseq
      %v995 = vshrl.u32 %v994, 7
      %v996 = vsub.s32 0, %v995
      %v997 = vrot.slane %v942, %v996
      %v999 = vadd.f32 %v990, %v997
      %v1000 = vadd.f32 %v992, %v997
      %v1001 = vld [vmem:[%s879] sm:$0xff]
      %v1002 = vld [vmem:[%s879 + $0x8] sm:$0xff]
      %v1003 = vld [vmem:[%s879 + $0x10] sm:$0xff]
      %v1004 = vld [vmem:[%s879 + $0x18] sm:$0xff]
      %v1006 = vsel %vm943, %v999, 0
      %v1009 = vsel %vm943, %v1000, 0
      %1011 = vmatprep.subr.mxu0 0.0
      %1012 = vmatpush1.msra.mxu0 %v1001
      %1013 = vmatprep.subr.mxu0 0.0
      %1014 = vmatpush1.msra.mxu0 %v1002
      %1015 = vmatprep.subr.mxu0 0.0
      %1016 = vmatpush1.msra.mxu0 %v1003
      %1017 = vmatprep.subr.mxu0 0.0
      %1018 = vmatpush1.msra.mxu0 %v1004
      %1019 = vmatprep.subr.mxu0 0.0
      %1020 = vmatpush1.msra.mxu0 0.0
      %1021 = vmatprep.subr.mxu0 0.0
      %1022 = vmatpush1.msra.mxu0 0.0
      %1023 = vmatprep.subr.mxu0 0.0
      %1024 = vmatpush1.msra.mxu0 0.0
      %1025 = vmatprep.subr.mxu0 0.0
      %1026 = vmatpush1.msra.mxu0 0.0
      %1027 = vmatprep.subr.mxu0 0.0
      %1028 = vmatpush1.msra.mxu0 0.0
      %1029 = vmatprep.subr.mxu0 0.0
      %1030 = vmatpush1.msra.mxu0 0.0
      %1031 = vmatprep.subr.mxu0 0.0
      %1032 = vmatpush1.msra.mxu0 0.0
      %1033 = vmatprep.subr.mxu0 0.0
      %1034 = vmatpush1.msra.mxu0 0.0
      %1035 = vmatprep.subr.mxu0 0.0
      %1036 = vmatpush1.msra.mxu0 0.0
      %1037 = vmatprep.subr.mxu0 0.0
      %1038 = vmatpush1.msra.mxu0 0.0
      %1039 = vmatprep.subr.mxu0 0.0
      %1040 = vmatpush1.msra.mxu0 0.0
      %1041 = vmatprep.subr.mxu0 0.0
      %1042 = vmatpush1.msra.mxu0 0.0
      %1043 = vmatprep.subr.mxu0 0.0
      %1044 = vmatpush1.msra.mxu0 0.0
      %1045 = vmatprep.subr.mxu0 0.0
      %1046 = vmatpush1.msra.mxu0 0.0
      %1047 = vmatprep.subr.mxu0 0.0
      %1048 = vmatpush1.msra.mxu0 0.0
      %1049 = vmatprep.subr.mxu0 0.0
      %1050 = vmatpush1.msra.mxu0 0.0
      %1051 = vmatprep.subr.mxu0 0.0
      %1052 = vmatpush1.msra.mxu0 0.0
      %1053 = vmatprep.subr.mxu0 0.0
      %1054 = vmatpush1.msra.mxu0 0.0
      %1055 = vmatprep.subr.mxu0 0.0
      %1056 = vmatpush1.msra.mxu0 0.0
      %1057 = vmatprep.subr.mxu0 0.0
      %1058 = vmatpush1.msra.mxu0 0.0
      %1059 = vmatprep.subr.mxu0 0.0
      %1060 = vmatpush1.msra.mxu0 0.0
      %1061 = vmatprep.subr.mxu0 0.0
      %1062 = vmatpush1.msra.mxu0 0.0
      %1063 = vmatprep.subr.mxu0 0.0
      %1064 = vmatpush1.msra.mxu0 0.0
      %1065 = vmatprep.subr.mxu0 0.0
      %1066 = vmatpush1.msra.mxu0 0.0
      %1067 = vmatprep.subr.mxu0 0.0
      %1068 = vmatpush1.msra.mxu0 0.0
      %1069 = vmatprep.subr.mxu0 0.0
      %1070 = vmatpush1.msra.mxu0 0.0
      %1071 = vmatprep.subr.mxu0 0.0
      %1072 = vmatpush1.msra.mxu0 0.0
      %1073 = vmatprep.subr.mxu0 0.0
      %1074 = vmatpush1.msra.mxu0 0.0
      %1075 = vmatprep.mubr.f32.mxu0 0.0
      %1076 = vmatmul.mubr.f32.gmra.mrb[0].mxu0 %v1006
      %v1077 = vpop.f32.mrb[0].mxu0
      %v1078 = vadd.f32 0.0, %v1077
      %v1079 = vpop.f32.mrb[0].mxu0
      %1080 = vmatprep.mubr.f32.mxu0 0.0
      %1081 = vmatmul.mubr.f32.gmra.mrb[0].mxu0 %v1009
      %v1082 = vpop.f32.mrb[0].mxu0
      %v1083 = vadd.f32 0.0, %v1082
      %v1084 = vpop.f32.mrb[0].mxu0
      %1085 = vdwg.mxu0
      %v1086 = vld [vmem:[%s2] sm:$0xff]
      %v1087 = vld [vmem:[%s2 + $0x8] sm:$0xff]
      %1089 = vrot.lane.b32.xlu0 %v1078, 96
      %v1090 = vpop.permute.xlu0 %1089
      %vm1091 = vcmask 64512
      %v1092 = vsel %vm1091, %v1078, 0
      %v1094 = vsel %vm1091, %v1090, 0
      %1096 = vmatprep.subr.mxu0 0.0
      %1097 = vmatpush1.xpose.msra.mxu0 %v1094
      %1098 = vmatprep.subr.mxu0 0.0
      %1099 = vmatpush1.xpose.msra.mxu0 0.0
      %1100 = vmatprep.subr.mxu0 0.0
      %1101 = vmatpush1.xpose.msra.mxu0 0.0
      %1102 = vmatprep.subr.mxu0 0.0
      %1103 = vmatpush1.xpose.msra.mxu0 0.0
      %1104 = vmatprep.subr.mxu0 0.0
      %1105 = vmatpush1.xpose.msra.mxu0 0.0
      %1106 = vmatprep.subr.mxu0 0.0
      %1107 = vmatpush1.xpose.msra.mxu0 0.0
      %1108 = vmatprep.subr.mxu0 0.0
      %1109 = vmatpush1.xpose.msra.mxu0 0.0
      %1110 = vmatprep.subr.mxu0 0.0
      %1111 = vmatpush1.xpose.msra.mxu0 0.0
      %1112 = vmatprep.subr.mxu0 0.0
      %1113 = vmatpush1.xpose.msra.mxu0 0.0
      %1114 = vmatprep.subr.mxu0 0.0
      %1115 = vmatpush1.xpose.msra.mxu0 0.0
      %1116 = vmatprep.subr.mxu0 0.0
      %1117 = vmatpush1.xpose.msra.mxu0 0.0
      %1118 = vmatprep.subr.mxu0 0.0
      %1119 = vmatpush1.xpose.msra.mxu0 0.0
      %1120 = vmatprep.subr.mxu0 0.0
      %1121 = vmatpush1.xpose.msra.mxu0 0.0
      %1122 = vmatprep.subr.mxu0 0.0
      %1123 = vmatpush1.xpose.msra.mxu0 0.0
      %1124 = vmatprep.subr.mxu0 0.0
      %1125 = vmatpush1.xpose.msra.mxu0 0.0
      %1126 = vmatprep.subr.mxu0 0.0
      %1127 = vmatpush1.xpose.msra.mxu0 0.0
      %1128 = vmatprep.subr.mxu0 0.0
      %1129 = vmatpush1.xpose.msra.mxu0 0.0
      %1130 = vmatprep.subr.mxu0 0.0
      %1131 = vmatpush1.xpose.msra.mxu0 0.0
      %1132 = vmatprep.subr.mxu0 0.0
      %1133 = vmatpush1.xpose.msra.mxu0 0.0
      %1134 = vmatprep.subr.mxu0 0.0
      %1135 = vmatpush1.xpose.msra.mxu0 0.0
      %1136 = vmatprep.subr.mxu0 0.0
      %1137 = vmatpush1.xpose.msra.mxu0 0.0
      %1138 = vmatprep.subr.mxu0 0.0
      %1139 = vmatpush1.xpose.msra.mxu0 0.0
      %1140 = vmatprep.subr.mxu0 0.0
      %1141 = vmatpush1.xpose.msra.mxu0 0.0
      %1142 = vmatprep.subr.mxu0 0.0
      %1143 = vmatpush1.xpose.msra.mxu0 0.0
      %1144 = vmatprep.subr.mxu0 0.0
      %1145 = vmatpush1.xpose.msra.mxu0 0.0
      %1146 = vmatprep.subr.mxu0 0.0
      %1147 = vmatpush1.xpose.msra.mxu0 0.0
      %1148 = vmatprep.subr.mxu0 0.0
      %1149 = vmatpush1.xpose.msra.mxu0 0.0
      %1150 = vmatprep.subr.mxu0 0.0
      %1151 = vmatpush1.xpose.msra.mxu0 0.0
      %1152 = vmatprep.subr.mxu0 0.0
      %1153 = vmatpush1.xpose.msra.mxu0 0.0
      %1154 = vmatprep.subr.mxu0 0.0
      %1155 = vmatpush1.xpose.msra.mxu0 0.0
      %1156 = vmatprep.subr.mxu0 0.0
      %1157 = vmatpush1.xpose.msra.mxu0 0.0
      %1158 = vmatprep.subr.mxu0 0.0
      %1159 = vmatpush1.xpose.msra.mxu0 0.0
      %1160 = vmatprep.mubr.f32.mxu0 0.0
      %1161 = vmatmul.mubr.f32.gmra.mrb[0].mxu0 %v1092
      %v1162 = vpop.f32.mrb[0].mxu0
      %v1163 = vadd.f32 0.0, %v1162
      %v1164 = vpop.f32.mrb[0].mxu0
      %1165 = vdwg.mxu0
      %v1166 = vmul.f32 %v1163, 0.35355338
      %v1167 = vadd.f32 %v1166, %v1086
      %v1168 = vsel %vm1091, %v1167, -inf
      %1169 = vmax.xlane.f32.xlu0 %v1168
      %v1170 = vpop.xlane.xlu0 %1169
      %v1171 = vsub.f32 %v1167, %v1170
      %v1172 = vmul.f32 %v1171, 1.442695
      %v1173 = vpow.pop %v1172
      %v1174 = vsel %vm1091, %v1173, 0.0
      %1175 = vadd.xlane.f32.xlu0 %v1174
      %v1176 = vpop.xlane.xlu0 %1175
      %v1177 = vrcp.pop %v1176
      %v1178 = vmul.f32 %v1173, %v1177
      %1179 = vrot.lane.b32.xlu0 %v1078, 64
      %v1180 = vpop.permute.xlu0 %1179
      %v1183 = vsel %vm1091, %v1178, 0
      %1185 = vmatprep.subr.mxu0 0.0
      %1186 = vmatpush1.msra.mxu0 %v1180
      %1187 = vmatprep.subr.mxu0 0.0
      %1188 = vmatpush1.msra.mxu0 0.0
      %1189 = vmatprep.subr.mxu0 0.0
      %1190 = vmatpush1.msra.mxu0 0.0
      %1191 = vmatprep.subr.mxu0 0.0
      %1192 = vmatpush1.msra.mxu0 0.0
      %1193 = vmatprep.subr.mxu0 0.0
      %1194 = vmatpush1.msra.mxu0 0.0
      %1195 = vmatprep.subr.mxu0 0.0
      %1196 = vmatpush1.msra.mxu0 0.0
      %1197 = vmatprep.subr.mxu0 0.0
      %1198 = vmatpush1.msra.mxu0 0.0
      %1199 = vmatprep.subr.mxu0 0.0
      %1200 = vmatpush1.msra.mxu0 0.0
      %1201 = vmatprep.subr.mxu0 0.0
      %1202 = vmatpush1.msra.mxu0 0.0
      %1203 = vmatprep.subr.mxu0 0.0
      %1204 = vmatpush1.msra.mxu0 0.0
      %1205 = vmatprep.subr.mxu0 0.0
      %1206 = vmatpush1.msra.mxu0 0.0
      %1207 = vmatprep.subr.mxu0 0.0
      %1208 = vmatpush1.msra.mxu0 0.0
      %1209 = vmatprep.subr.mxu0 0.0
      %1210 = vmatpush1.msra.mxu0 0.0
      %1211 = vmatprep.subr.mxu0 0.0
      %1212 = vmatpush1.msra.mxu0 0.0
      %1213 = vmatprep.subr.mxu0 0.0
      %1214 = vmatpush1.msra.mxu0 0.0
      %1215 = vmatprep.subr.mxu0 0.0
      %1216 = vmatpush1.msra.mxu0 0.0
      %1217 = vmatprep.subr.mxu0 0.0
      %1218 = vmatpush1.msra.mxu0 0.0
      %1219 = vmatprep.subr.mxu0 0.0
      %1220 = vmatpush1.msra.mxu0 0.0
      %1221 = vmatprep.subr.mxu0 0.0
      %1222 = vmatpush1.msra.mxu0 0.0
      %1223 = vmatprep.subr.mxu0 0.0
      %1224 = vmatpush1.msra.mxu0 0.0
      %1225 = vmatprep.subr.mxu0 0.0
      %1226 = vmatpush1.msra.mxu0 0.0
      %1227 = vmatprep.subr.mxu0 0.0
      %1228 = vmatpush1.msra.mxu0 0.0
      %1229 = vmatprep.subr.mxu0 0.0
      %1230 = vmatpush1.msra.mxu0 0.0
      %1231 = vmatprep.subr.mxu0 0.0
      %1232 = vmatpush1.msra.mxu0 0.0
      %1233 = vmatprep.subr.mxu0 0.0
      %1234 = vmatpush1.msra.mxu0 0.0
      %1235 = vmatprep.subr.mxu0 0.0
      %1236 = vmatpush1.msra.mxu0 0.0
      %1237 = vmatprep.subr.mxu0 0.0
      %1238 = vmatpush1.msra.mxu0 0.0
      %1239 = vmatprep.subr.mxu0 0.0
      %1240 = vmatpush1.msra.mxu0 0.0
      %1241 = vmatprep.subr.mxu0 0.0
      %1242 = vmatpush1.msra.mxu0 0.0
      %1243 = vmatprep.subr.mxu0 0.0
      %1244 = vmatpush1.msra.mxu0 0.0
      %1245 = vmatprep.subr.mxu0 0.0
      %1246 = vmatpush1.msra.mxu0 0.0
      %1247 = vmatprep.subr.mxu0 0.0
      %1248 = vmatpush1.msra.mxu0 0.0
      %1249 = vmatprep.mubr.f32.mxu0 0.0
      %1250 = vmatmul.mubr.f32.gmra.mrb[0].mxu0 %v1183
      %v1251 = vpop.f32.mrb[0].mxu0
      %v1252 = vadd.f32 0.0, %v1251
      %v1253 = vpop.f32.mrb[0].mxu0
      %1254 = vdwg.mxu0
      %1255 = vrot.lane.b32.xlu0 %v1078, 120
      %v1256 = vpop.permute.xlu0 %1255
      %1257 = vrot.lane.b32.xlu0 %v1078, 88
      %v1258 = vpop.permute.xlu0 %1257
      %v1259 = vsel %vm1091, %v1256, 0
      %v1261 = vsel %vm1091, %v1258, 0
      %1263 = vmatprep.subr.mxu0 0.0
      %1264 = vmatpush1.xpose.msra.mxu0 %v1261
      %1265 = vmatprep.subr.mxu0 0.0
      %1266 = vmatpush1.xpose.msra.mxu0 0.0
      %1267 = vmatprep.subr.mxu0 0.0
      %1268 = vmatpush1.xpose.msra.mxu0 0.0
      %1269 = vmatprep.subr.mxu0 0.0
      %1270 = vmatpush1.xpose.msra.mxu0 0.0
      %1271 = vmatprep.subr.mxu0 0.0
      %1272 = vmatpush1.xpose.msra.mxu0 0.0
      %1273 = vmatprep.subr.mxu0 0.0
      %1274 = vmatpush1.xpose.msra.mxu0 0.0
      %1275 = vmatprep.subr.mxu0 0.0
      %1276 = vmatpush1.xpose.msra.mxu0 0.0
      %1277 = vmatprep.subr.mxu0 0.0
      %1278 = vmatpush1.xpose.msra.mxu0 0.0
      %1279 = vmatprep.subr.mxu0 0.0
      %1280 = vmatpush1.xpose.msra.mxu0 0.0
      %1281 = vmatprep.subr.mxu0 0.0
      %1282 = vmatpush1.xpose.msra.mxu0 0.0
      %1283 = vmatprep.subr.mxu0 0.0
      %1284 = vmatpush1.xpose.msra.mxu0 0.0
      %1285 = vmatprep.subr.mxu0 0.0
      %1286 = vmatpush1.xpose.msra.mxu0 0.0
      %1287 = vmatprep.subr.mxu0 0.0
      %1288 = vmatpush1.xpose.msra.mxu0 0.0
      %1289 = vmatprep.subr.mxu0 0.0
      %1290 = vmatpush1.xpose.msra.mxu0 0.0
      %1291 = vmatprep.subr.mxu0 0.0
      %1292 = vmatpush1.xpose.msra.mxu0 0.0
      %1293 = vmatprep.subr.mxu0 0.0
      %1294 = vmatpush1.xpose.msra.mxu0 0.0
      %1295 = vmatprep.subr.mxu0 0.0
      %1296 = vmatpush1.xpose.msra.mxu0 0.0
      %1297 = vmatprep.subr.mxu0 0.0
      %1298 = vmatpush1.xpose.msra.mxu0 0.0
      %1299 = vmatprep.subr.mxu0 0.0
      %1300 = vmatpush1.xpose.msra.mxu0 0.0
      %1301 = vmatprep.subr.mxu0 0.0
      %1302 = vmatpush1.xpose.msra.mxu0 0.0
      %1303 = vmatprep.subr.mxu0 0.0
      %1304 = vmatpush1.xpose.msra.mxu0 0.0
      %1305 = vmatprep.subr.mxu0 0.0
      %1306 = vmatpush1.xpose.msra.mxu0 0.0
      %1307 = vmatprep.subr.mxu0 0.0
      %1308 = vmatpush1.xpose.msra.mxu0 0.0
      %1309 = vmatprep.subr.mxu0 0.0
      %1310 = vmatpush1.xpose.msra.mxu0 0.0
      %1311 = vmatprep.subr.mxu0 0.0
      %1312 = vmatpush1.xpose.msra.mxu0 0.0
      %1313 = vmatprep.subr.mxu0 0.0
      %1314 = vmatpush1.xpose.msra.mxu0 0.0
      %1315 = vmatprep.subr.mxu0 0.0
      %1316 = vmatpush1.xpose.msra.mxu0 0.0
      %1317 = vmatprep.subr.mxu0 0.0
      %1318 = vmatpush1.xpose.msra.mxu0 0.0
      %1319 = vmatprep.subr.mxu0 0.0
      %1320 = vmatpush1.xpose.msra.mxu0 0.0
      %1321 = vmatprep.subr.mxu0 0.0
      %1322 = vmatpush1.xpose.msra.mxu0 0.0
      %1323 = vmatprep.subr.mxu0 0.0
      %1324 = vmatpush1.xpose.msra.mxu0 0.0
      %1325 = vmatprep.subr.mxu0 0.0
      %1326 = vmatpush1.xpose.msra.mxu0 0.0
      %1327 = vmatprep.mubr.f32.mxu0 0.0
      %1328 = vmatmul.mubr.f32.gmra.mrb[0].mxu0 %v1259
      %v1329 = vpop.f32.mrb[0].mxu0
      %v1330 = vadd.f32 0.0, %v1329
      %v1331 = vpop.f32.mrb[0].mxu0
      %1332 = vdwg.mxu0
      %v1333 = vmul.f32 %v1330, 0.35355338
      %v1334 = vadd.f32 %v1333, %v1086
      %v1335 = vsel %vm1091, %v1334, -inf
      %1336 = vmax.xlane.f32.xlu0 %v1335
      %v1337 = vpop.xlane.xlu0 %1336
      %v1338 = vsub.f32 %v1334, %v1337
      %v1339 = vmul.f32 %v1338, 1.442695
      %v1340 = vpow.pop %v1339
      %v1341 = vsel %vm1091, %v1340, 0.0
      %1342 = vadd.xlane.f32.xlu0 %v1341
      %v1343 = vpop.xlane.xlu0 %1342
      %v1344 = vrcp.pop %v1343
      %v1345 = vmul.f32 %v1340, %v1344
      %1346 = vrot.lane.b32.xlu0 %v1078, 56
      %v1347 = vpop.permute.xlu0 %1346
      %v1350 = vsel %vm1091, %v1345, 0
      %1352 = vmatprep.subr.mxu0 0.0
      %1353 = vmatpush1.msra.mxu0 %v1347
      %1354 = vmatprep.subr.mxu0 0.0
      %1355 = vmatpush1.msra.mxu0 0.0
      %1356 = vmatprep.subr.mxu0 0.0
      %1357 = vmatpush1.msra.mxu0 0.0
      %1358 = vmatprep.subr.mxu0 0.0
      %1359 = vmatpush1.msra.mxu0 0.0
      %1360 = vmatprep.subr.mxu0 0.0
      %1361 = vmatpush1.msra.mxu0 0.0
      %1362 = vmatprep.subr.mxu0 0.0
      %1363 = vmatpush1.msra.mxu0 0.0
      %1364 = vmatprep.subr.mxu0 0.0
      %1365 = vmatpush1.msra.mxu0 0.0
      %1366 = vmatprep.subr.mxu0 0.0
      %1367 = vmatpush1.msra.mxu0 0.0
      %1368 = vmatprep.subr.mxu0 0.0
      %1369 = vmatpush1.msra.mxu0 0.0
      %1370 = vmatprep.subr.mxu0 0.0
      %1371 = vmatpush1.msra.mxu0 0.0
      %1372 = vmatprep.subr.mxu0 0.0
      %1373 = vmatpush1.msra.mxu0 0.0
      %1374 = vmatprep.subr.mxu0 0.0
      %1375 = vmatpush1.msra.mxu0 0.0
      %1376 = vmatprep.subr.mxu0 0.0
      %1377 = vmatpush1.msra.mxu0 0.0
      %1378 = vmatprep.subr.mxu0 0.0
      %1379 = vmatpush1.msra.mxu0 0.0
      %1380 = vmatprep.subr.mxu0 0.0
      %1381 = vmatpush1.msra.mxu0 0.0
      %1382 = vmatprep.subr.mxu0 0.0
      %1383 = vmatpush1.msra.mxu0 0.0
      %1384 = vmatprep.subr.mxu0 0.0
      %1385 = vmatpush1.msra.mxu0 0.0
      %1386 = vmatprep.subr.mxu0 0.0
      %1387 = vmatpush1.msra.mxu0 0.0
      %1388 = vmatprep.subr.mxu0 0.0
      %1389 = vmatpush1.msra.mxu0 0.0
      %1390 = vmatprep.subr.mxu0 0.0
      %1391 = vmatpush1.msra.mxu0 0.0
      %1392 = vmatprep.subr.mxu0 0.0
      %1393 = vmatpush1.msra.mxu0 0.0
      %1394 = vmatprep.subr.mxu0 0.0
      %1395 = vmatpush1.msra.mxu0 0.0
      %1396 = vmatprep.subr.mxu0 0.0
      %1397 = vmatpush1.msra.mxu0 0.0
      %1398 = vmatprep.subr.mxu0 0.0
      %1399 = vmatpush1.msra.mxu0 0.0
      %1400 = vmatprep.subr.mxu0 0.0
      %1401 = vmatpush1.msra.mxu0 0.0
      %1402 = vmatprep.subr.mxu0 0.0
      %1403 = vmatpush1.msra.mxu0 0.0
      %1404 = vmatprep.subr.mxu0 0.0
      %1405 = vmatpush1.msra.mxu0 0.0
      %1406 = vmatprep.subr.mxu0 0.0
      %1407 = vmatpush1.msra.mxu0 0.0
      %1408 = vmatprep.subr.mxu0 0.0
      %1409 = vmatpush1.msra.mxu0 0.0
      %1410 = vmatprep.subr.mxu0 0.0
      %1411 = vmatpush1.msra.mxu0 0.0
      %1412 = vmatprep.subr.mxu0 0.0
      %1413 = vmatpush1.msra.mxu0 0.0
      %1414 = vmatprep.subr.mxu0 0.0
      %1415 = vmatpush1.msra.mxu0 0.0
      %1416 = vmatprep.mubr.f32.mxu0 0.0
      %1417 = vmatmul.mubr.f32.gmra.mrb[0].mxu0 %v1350
      %v1418 = vpop.f32.mrb[0].mxu0
      %v1419 = vadd.f32 0.0, %v1418
      %v1420 = vpop.f32.mrb[0].mxu0
      %1421 = vdwg.mxu0
      %1422 = vrot.lane.b32.xlu0 %v1078, 112
      %v1423 = vpop.permute.xlu0 %1422
      %1424 = vrot.lane.b32.xlu0 %v1078, 80
      %v1425 = vpop.permute.xlu0 %1424
      %v1426 = vsel %vm1091, %v1423, 0
      %v1428 = vsel %vm1091, %v1425, 0
      %1430 = vmatprep.subr.mxu0 0.0
      %1431 = vmatpush1.xpose.msra.mxu0 %v1428
      %1432 = vmatprep.subr.mxu0 0.0
      %1433 = vmatpush1.xpose.msra.mxu0 0.0
      %1434 = vmatprep.subr.mxu0 0.0
      %1435 = vmatpush1.xpose.msra.mxu0 0.0
      %1436 = vmatprep.subr.mxu0 0.0
      %1437 = vmatpush1.xpose.msra.mxu0 0.0
      %1438 = vmatprep.subr.mxu0 0.0
      %1439 = vmatpush1.xpose.msra.mxu0 0.0
      %1440 = vmatprep.subr.mxu0 0.0
      %1441 = vmatpush1.xpose.msra.mxu0 0.0
      %1442 = vmatprep.subr.mxu0 0.0
      %1443 = vmatpush1.xpose.msra.mxu0 0.0
      %1444 = vmatprep.subr.mxu0 0.0
      %1445 = vmatpush1.xpose.msra.mxu0 0.0
      %1446 = vmatprep.subr.mxu0 0.0
      %1447 = vmatpush1.xpose.msra.mxu0 0.0
      %1448 = vmatprep.subr.mxu0 0.0
      %1449 = vmatpush1.xpose.msra.mxu0 0.0
      %1450 = vmatprep.subr.mxu0 0.0
      %1451 = vmatpush1.xpose.msra.mxu0 0.0
      %1452 = vmatprep.subr.mxu0 0.0
      %1453 = vmatpush1.xpose.msra.mxu0 0.0
      %1454 = vmatprep.subr.mxu0 0.0
      %1455 = vmatpush1.xpose.msra.mxu0 0.0
      %1456 = vmatprep.subr.mxu0 0.0
      %1457 = vmatpush1.xpose.msra.mxu0 0.0
      %1458 = vmatprep.subr.mxu0 0.0
      %1459 = vmatpush1.xpose.msra.mxu0 0.0
      %1460 = vmatprep.subr.mxu0 0.0
      %1461 = vmatpush1.xpose.msra.mxu0 0.0
      %1462 = vmatprep.subr.mxu0 0.0
      %1463 = vmatpush1.xpose.msra.mxu0 0.0
      %1464 = vmatprep.subr.mxu0 0.0
      %1465 = vmatpush1.xpose.msra.mxu0 0.0
      %1466 = vmatprep.subr.mxu0 0.0
      %1467 = vmatpush1.xpose.msra.mxu0 0.0
      %1468 = vmatprep.subr.mxu0 0.0
      %1469 = vmatpush1.xpose.msra.mxu0 0.0
      %1470 = vmatprep.subr.mxu0 0.0
      %1471 = vmatpush1.xpose.msra.mxu0 0.0
      %1472 = vmatprep.subr.mxu0 0.0
      %1473 = vmatpush1.xpose.msra.mxu0 0.0
      %1474 = vmatprep.subr.mxu0 0.0
      %1475 = vmatpush1.xpose.msra.mxu0 0.0
      %1476 = vmatprep.subr.mxu0 0.0
      %1477 = vmatpush1.xpose.msra.mxu0 0.0
      %1478 = vmatprep.subr.mxu0 0.0
      %1479 = vmatpush1.xpose.msra.mxu0 0.0
      %1480 = vmatprep.subr.mxu0 0.0
      %1481 = vmatpush1.xpose.msra.mxu0 0.0
      %1482 = vmatprep.subr.mxu0 0.0
      %1483 = vmatpush1.xpose.msra.mxu0 0.0
      %1484 = vmatprep.subr.mxu0 0.0
      %1485 = vmatpush1.xpose.msra.mxu0 0.0
      %1486 = vmatprep.subr.mxu0 0.0
      %1487 = vmatpush1.xpose.msra.mxu0 0.0
      %1488 = vmatprep.subr.mxu0 0.0
      %1489 = vmatpush1.xpose.msra.mxu0 0.0
      %1490 = vmatprep.subr.mxu0 0.0
      %1491 = vmatpush1.xpose.msra.mxu0 0.0
      %1492 = vmatprep.subr.mxu0 0.0
      %1493 = vmatpush1.xpose.msra.mxu0 0.0
      %1494 = vmatprep.mubr.f32.mxu0 0.0
      %1495 = vmatmul.mubr.f32.gmra.mrb[0].mxu0 %v1426
      %v1496 = vpop.f32.mrb[0].mxu0
      %v1497 = vadd.f32 0.0, %v1496
      %v1498 = vpop.f32.mrb[0].mxu0
      %1499 = vdwg.mxu0
      %v1500 = vmul.f32 %v1497, 0.35355338
      %v1501 = vadd.f32 %v1500, %v1086
      %v1502 = vsel %vm1091, %v1501, -inf
      %1503 = vmax.xlane.f32.xlu0 %v1502
      %v1504 = vpop.xlane.xlu0 %1503
      %v1505 = vsub.f32 %v1501, %v1504
      %v1506 = vmul.f32 %v1505, 1.442695
      %v1507 = vpow.pop %v1506
      %v1508 = vsel %vm1091, %v1507, 0.0
      %1509 = vadd.xlane.f32.xlu0 %v1508
      %v1510 = vpop.xlane.xlu0 %1509
      %v1511 = vrcp.pop %v1510
      %v1512 = vmul.f32 %v1507, %v1511
      %1513 = vrot.lane.b32.xlu0 %v1078, 48
      %v1514 = vpop.permute.xlu0 %1513
      %v1517 = vsel %vm1091, %v1512, 0
      %1519 = vmatprep.subr.mxu0 0.0
      %1520 = vmatpush1.msra.mxu0 %v1514
      %1521 = vmatprep.subr.mxu0 0.0
      %1522 = vmatpush1.msra.mxu0 0.0
      %1523 = vmatprep.subr.mxu0 0.0
      %1524 = vmatpush1.msra.mxu0 0.0
      %1525 = vmatprep.subr.mxu0 0.0
      %1526 = vmatpush1.msra.mxu0 0.0
      %1527 = vmatprep.subr.mxu0 0.0
      %1528 = vmatpush1.msra.mxu0 0.0
      %1529 = vmatprep.subr.mxu0 0.0
      %1530 = vmatpush1.msra.mxu0 0.0
      %1531 = vmatprep.subr.mxu0 0.0
      %1532 = vmatpush1.msra.mxu0 0.0
      %1533 = vmatprep.subr.mxu0 0.0
      %1534 = vmatpush1.msra.mxu0 0.0
      %1535 = vmatprep.subr.mxu0 0.0
      %1536 = vmatpush1.msra.mxu0 0.0
      %1537 = vmatprep.subr.mxu0 0.0
      %1538 = vmatpush1.msra.mxu0 0.0
      %1539 = vmatprep.subr.mxu0 0.0
      %1540 = vmatpush1.msra.mxu0 0.0
      %1541 = vmatprep.subr.mxu0 0.0
      %1542 = vmatpush1.msra.mxu0 0.0
      %1543 = vmatprep.subr.mxu0 0.0
      %1544 = vmatpush1.msra.mxu0 0.0
      %1545 = vmatprep.subr.mxu0 0.0
      %1546 = vmatpush1.msra.mxu0 0.0
      %1547 = vmatprep.subr.mxu0 0.0
      %1548 = vmatpush1.msra.mxu0 0.0
      %1549 = vmatprep.subr.mxu0 0.0
      %1550 = vmatpush1.msra.mxu0 0.0
      %1551 = vmatprep.subr.mxu0 0.0
      %1552 = vmatpush1.msra.mxu0 0.0
      %1553 = vmatprep.subr.mxu0 0.0
      %1554 = vmatpush1.msra.mxu0 0.0
      %1555 = vmatprep.subr.mxu0 0.0
      %1556 = vmatpush1.msra.mxu0 0.0
      %1557 = vmatprep.subr.mxu0 0.0
      %1558 = vmatpush1.msra.mxu0 0.0
      %1559 = vmatprep.subr.mxu0 0.0
      %1560 = vmatpush1.msra.mxu0 0.0
      %1561 = vmatprep.subr.mxu0 0.0
      %1562 = vmatpush1.msra.mxu0 0.0
      %1563 = vmatprep.subr.mxu0 0.0
      %1564 = vmatpush1.msra.mxu0 0.0
      %1565 = vmatprep.subr.mxu0 0.0
      %1566 = vmatpush1.msra.mxu0 0.0
      %1567 = vmatprep.subr.mxu0 0.0
      %1568 = vmatpush1.msra.mxu0 0.0
      %1569 = vmatprep.subr.mxu0 0.0
      %1570 = vmatpush1.msra.mxu0 0.0
      %1571 = vmatprep.subr.mxu0 0.0
      %1572 = vmatpush1.msra.mxu0 0.0
      %1573 = vmatprep.subr.mxu0 0.0
      %1574 = vmatpush1.msra.mxu0 0.0
      %1575 = vmatprep.subr.mxu0 0.0
      %1576 = vmatpush1.msra.mxu0 0.0
      %1577 = vmatprep.subr.mxu0 0.0
      %1578 = vmatpush1.msra.mxu0 0.0
      %1579 = vmatprep.subr.mxu0 0.0
      %1580 = vmatpush1.msra.mxu0 0.0
      %1581 = vmatprep.subr.mxu0 0.0
      %1582 = vmatpush1.msra.mxu0 0.0
      %1583 = vmatprep.mubr.f32.mxu0 0.0
      %1584 = vmatmul.mubr.f32.gmra.mrb[0].mxu0 %v1517
      %v1585 = vpop.f32.mrb[0].mxu0
      %v1586 = vadd.f32 0.0, %v1585
      %v1587 = vpop.f32.mrb[0].mxu0
      %1588 = vdwg.mxu0
      %1589 = vrot.lane.b32.xlu0 %v1078, 104
      %v1590 = vpop.permute.xlu0 %1589
      %1591 = vrot.lane.b32.xlu0 %v1078, 72
      %v1592 = vpop.permute.xlu0 %1591
      %v1593 = vsel %vm1091, %v1590, 0
      %v1595 = vsel %vm1091, %v1592, 0
      %1597 = vmatprep.subr.mxu0 0.0
      %1598 = vmatpush1.xpose.msra.mxu0 %v1595
      %1599 = vmatprep.subr.mxu0 0.0
      %1600 = vmatpush1.xpose.msra.mxu0 0.0
      %1601 = vmatprep.subr.mxu0 0.0
      %1602 = vmatpush1.xpose.msra.mxu0 0.0
      %1603 = vmatprep.subr.mxu0 0.0
      %1604 = vmatpush1.xpose.msra.mxu0 0.0
      %1605 = vmatprep.subr.mxu0 0.0
      %1606 = vmatpush1.xpose.msra.mxu0 0.0
      %1607 = vmatprep.subr.mxu0 0.0
      %1608 = vmatpush1.xpose.msra.mxu0 0.0
      %1609 = vmatprep.subr.mxu0 0.0
      %1610 = vmatpush1.xpose.msra.mxu0 0.0
      %1611 = vmatprep.subr.mxu0 0.0
      %1612 = vmatpush1.xpose.msra.mxu0 0.0
      %1613 = vmatprep.subr.mxu0 0.0
      %1614 = vmatpush1.xpose.msra.mxu0 0.0
      %1615 = vmatprep.subr.mxu0 0.0
      %1616 = vmatpush1.xpose.msra.mxu0 0.0
      %1617 = vmatprep.subr.mxu0 0.0
      %1618 = vmatpush1.xpose.msra.mxu0 0.0
      %1619 = vmatprep.subr.mxu0 0.0
      %1620 = vmatpush1.xpose.msra.mxu0 0.0
      %1621 = vmatprep.subr.mxu0 0.0
      %1622 = vmatpush1.xpose.msra.mxu0 0.0
      %1623 = vmatprep.subr.mxu0 0.0
      %1624 = vmatpush1.xpose.msra.mxu0 0.0
      %1625 = vmatprep.subr.mxu0 0.0
      %1626 = vmatpush1.xpose.msra.mxu0 0.0
      %1627 = vmatprep.subr.mxu0 0.0
      %1628 = vmatpush1.xpose.msra.mxu0 0.0
      %1629 = vmatprep.subr.mxu0 0.0
      %1630 = vmatpush1.xpose.msra.mxu0 0.0
      %1631 = vmatprep.subr.mxu0 0.0
      %1632 = vmatpush1.xpose.msra.mxu0 0.0
      %1633 = vmatprep.subr.mxu0 0.0
      %1634 = vmatpush1.xpose.msra.mxu0 0.0
      %1635 = vmatprep.subr.mxu0 0.0
      %1636 = vmatpush1.xpose.msra.mxu0 0.0
      %1637 = vmatprep.subr.mxu0 0.0
      %1638 = vmatpush1.xpose.msra.mxu0 0.0
      %1639 = vmatprep.subr.mxu0 0.0
      %1640 = vmatpush1.xpose.msra.mxu0 0.0
      %1641 = vmatprep.subr.mxu0 0.0
      %1642 = vmatpush1.xpose.msra.mxu0 0.0
      %1643 = vmatprep.subr.mxu0 0.0
      %1644 = vmatpush1.xpose.msra.mxu0 0.0
      %1645 = vmatprep.subr.mxu0 0.0
      %1646 = vmatpush1.xpose.msra.mxu0 0.0
      %1647 = vmatprep.subr.mxu0 0.0
      %1648 = vmatpush1.xpose.msra.mxu0 0.0
      %1649 = vmatprep.subr.mxu0 0.0
      %1650 = vmatpush1.xpose.msra.mxu0 0.0
      %1651 = vmatprep.subr.mxu0 0.0
      %1652 = vmatpush1.xpose.msra.mxu0 0.0
      %1653 = vmatprep.subr.mxu0 0.0
      %1654 = vmatpush1.xpose.msra.mxu0 0.0
      %1655 = vmatprep.subr.mxu0 0.0
      %1656 = vmatpush1.xpose.msra.mxu0 0.0
      %1657 = vmatprep.subr.mxu0 0.0
      %1658 = vmatpush1.xpose.msra.mxu0 0.0
      %1659 = vmatprep.subr.mxu0 0.0
      %1660 = vmatpush1.xpose.msra.mxu0 0.0
      %1661 = vmatprep.mubr.f32.mxu0 0.0
      %1662 = vmatmul.mubr.f32.gmra.mrb[0].mxu0 %v1593
      %v1663 = vpop.f32.mrb[0].mxu0
      %v1664 = vadd.f32 0.0, %v1663
      %v1665 = vpop.f32.mrb[0].mxu0
      %1666 = vdwg.mxu0
      %v1667 = vmul.f32 %v1664, 0.35355338
      %v1668 = vadd.f32 %v1667, %v1086
      %v1669 = vsel %vm1091, %v1668, -inf
      %1670 = vmax.xlane.f32.xlu0 %v1669
      %v1671 = vpop.xlane.xlu0 %1670
      %v1672 = vsub.f32 %v1668, %v1671
      %v1673 = vmul.f32 %v1672, 1.442695
      %v1674 = vpow.pop %v1673
      %v1675 = vsel %vm1091, %v1674, 0.0
      %1676 = vadd.xlane.f32.xlu0 %v1675
      %v1677 = vpop.xlane.xlu0 %1676
      %v1678 = vrcp.pop %v1677
      %v1679 = vmul.f32 %v1674, %v1678
      %1680 = vrot.lane.b32.xlu0 %v1078, 40
      %v1681 = vpop.permute.xlu0 %1680
      %v1684 = vsel %vm1091, %v1679, 0
      %1686 = vmatprep.subr.mxu0 0.0
      %1687 = vmatpush1.msra.mxu0 %v1681
      %1688 = vmatprep.subr.mxu0 0.0
      %1689 = vmatpush1.msra.mxu0 0.0
      %1690 = vmatprep.subr.mxu0 0.0
      %1691 = vmatpush1.msra.mxu0 0.0
      %1692 = vmatprep.subr.mxu0 0.0
      %1693 = vmatpush1.msra.mxu0 0.0
      %1694 = vmatprep.subr.mxu0 0.0
      %1695 = vmatpush1.msra.mxu0 0.0
      %1696 = vmatprep.subr.mxu0 0.0
      %1697 = vmatpush1.msra.mxu0 0.0
      %1698 = vmatprep.subr.mxu0 0.0
      %1699 = vmatpush1.msra.mxu0 0.0
      %1700 = vmatprep.subr.mxu0 0.0
      %1701 = vmatpush1.msra.mxu0 0.0
      %1702 = vmatprep.subr.mxu0 0.0
      %1703 = vmatpush1.msra.mxu0 0.0
      %1704 = vmatprep.subr.mxu0 0.0
      %1705 = vmatpush1.msra.mxu0 0.0
      %1706 = vmatprep.subr.mxu0 0.0
      %1707 = vmatpush1.msra.mxu0 0.0
      %1708 = vmatprep.subr.mxu0 0.0
      %1709 = vmatpush1.msra.mxu0 0.0
      %1710 = vmatprep.subr.mxu0 0.0
      %1711 = vmatpush1.msra.mxu0 0.0
      %1712 = vmatprep.subr.mxu0 0.0
      %1713 = vmatpush1.msra.mxu0 0.0
      %1714 = vmatprep.subr.mxu0 0.0
      %1715 = vmatpush1.msra.mxu0 0.0
      %1716 = vmatprep.subr.mxu0 0.0
      %1717 = vmatpush1.msra.mxu0 0.0
      %1718 = vmatprep.subr.mxu0 0.0
      %1719 = vmatpush1.msra.mxu0 0.0
      %1720 = vmatprep.subr.mxu0 0.0
      %1721 = vmatpush1.msra.mxu0 0.0
      %1722 = vmatprep.subr.mxu0 0.0
      %1723 = vmatpush1.msra.mxu0 0.0
      %1724 = vmatprep.subr.mxu0 0.0
      %1725 = vmatpush1.msra.mxu0 0.0
      %1726 = vmatprep.subr.mxu0 0.0
      %1727 = vmatpush1.msra.mxu0 0.0
      %1728 = vmatprep.subr.mxu0 0.0
      %1729 = vmatpush1.msra.mxu0 0.0
      %1730 = vmatprep.subr.mxu0 0.0
      %1731 = vmatpush1.msra.mxu0 0.0
      %1732 = vmatprep.subr.mxu0 0.0
      %1733 = vmatpush1.msra.mxu0 0.0
      %1734 = vmatprep.subr.mxu0 0.0
      %1735 = vmatpush1.msra.mxu0 0.0
      %1736 = vmatprep.subr.mxu0 0.0
      %1737 = vmatpush1.msra.mxu0 0.0
      %1738 = vmatprep.subr.mxu0 0.0
      %1739 = vmatpush1.msra.mxu0 0.0
      %1740 = vmatprep.subr.mxu0 0.0
      %1741 = vmatpush1.msra.mxu0 0.0
      %1742 = vmatprep.subr.mxu0 0.0
      %1743 = vmatpush1.msra.mxu0 0.0
      %1744 = vmatprep.subr.mxu0 0.0
      %1745 = vmatpush1.msra.mxu0 0.0
      %1746 = vmatprep.subr.mxu0 0.0
      %1747 = vmatpush1.msra.mxu0 0.0
      %1748 = vmatprep.subr.mxu0 0.0
      %1749 = vmatpush1.msra.mxu0 0.0
      %1750 = vmatprep.mubr.f32.mxu0 0.0
      %1751 = vmatmul.mubr.f32.gmra.mrb[0].mxu0 %v1684
      %v1752 = vpop.f32.mrb[0].mxu0
      %v1753 = vadd.f32 0.0, %v1752
      %v1754 = vpop.f32.mrb[0].mxu0
      %1755 = vdwg.mxu0
      %1757 = vrot.lane.b32.xlu0 %v1419, 8
      %v1758 = vpop.permute.xlu0 %1757
      %1761 = vrot.lane.b32.xlu0 %v1586, 16
      %v1762 = vpop.permute.xlu0 %1761
      %1765 = vrot.lane.b32.xlu0 %v1753, 24
      %v1766 = vpop.permute.xlu0 %1765
      %v1768 = vsel %vm1091, %v1252, %v1758
      %vm1769 = vcmask 130048
      %v1770 = vsel %vm1769, %v1768, %v1762
      %vm1771 = vcmask 195584
      %v1772 = vsel %vm1771, %v1770, %v1766
      %1774 = vrot.lane.b32.xlu0 %v1083, 96
      %v1775 = vpop.permute.xlu0 %1774
      %v1776 = vsel %vm1091, %v1083, 0
      %v1778 = vsel %vm1091, %v1775, 0
      %1780 = vmatprep.subr.mxu0 0.0
      %1781 = vmatpush1.xpose.msra.mxu0 %v1778
      %1782 = vmatprep.subr.mxu0 0.0
      %1783 = vmatpush1.xpose.msra.mxu0 0.0
      %1784 = vmatprep.subr.mxu0 0.0
      %1785 = vmatpush1.xpose.msra.mxu0 0.0
      %1786 = vmatprep.subr.mxu0 0.0
      %1787 = vmatpush1.xpose.msra.mxu0 0.0
      %1788 = vmatprep.subr.mxu0 0.0
      %1789 = vmatpush1.xpose.msra.mxu0 0.0
      %1790 = vmatprep.subr.mxu0 0.0
      %1791 = vmatpush1.xpose.msra.mxu0 0.0
      %1792 = vmatprep.subr.mxu0 0.0
      %1793 = vmatpush1.xpose.msra.mxu0 0.0
      %1794 = vmatprep.subr.mxu0 0.0
      %1795 = vmatpush1.xpose.msra.mxu0 0.0
      %1796 = vmatprep.subr.mxu0 0.0
      %1797 = vmatpush1.xpose.msra.mxu0 0.0
      %1798 = vmatprep.subr.mxu0 0.0
      %1799 = vmatpush1.xpose.msra.mxu0 0.0
      %1800 = vmatprep.subr.mxu0 0.0
      %1801 = vmatpush1.xpose.msra.mxu0 0.0
      %1802 = vmatprep.subr.mxu0 0.0
      %1803 = vmatpush1.xpose.msra.mxu0 0.0
      %1804 = vmatprep.subr.mxu0 0.0
      %1805 = vmatpush1.xpose.msra.mxu0 0.0
      %1806 = vmatprep.subr.mxu0 0.0
      %1807 = vmatpush1.xpose.msra.mxu0 0.0
      %1808 = vmatprep.subr.mxu0 0.0
      %1809 = vmatpush1.xpose.msra.mxu0 0.0
      %1810 = vmatprep.subr.mxu0 0.0
      %1811 = vmatpush1.xpose.msra.mxu0 0.0
      %1812 = vmatprep.subr.mxu0 0.0
      %1813 = vmatpush1.xpose.msra.mxu0 0.0
      %1814 = vmatprep.subr.mxu0 0.0
      %1815 = vmatpush1.xpose.msra.mxu0 0.0
      %1816 = vmatprep.subr.mxu0 0.0
      %1817 = vmatpush1.xpose.msra.mxu0 0.0
      %1818 = vmatprep.subr.mxu0 0.0
      %1819 = vmatpush1.xpose.msra.mxu0 0.0
      %1820 = vmatprep.subr.mxu0 0.0
      %1821 = vmatpush1.xpose.msra.mxu0 0.0
      %1822 = vmatprep.subr.mxu0 0.0
      %1823 = vmatpush1.xpose.msra.mxu0 0.0
      %1824 = vmatprep.subr.mxu0 0.0
      %1825 = vmatpush1.xpose.msra.mxu0 0.0
      %1826 = vmatprep.subr.mxu0 0.0
      %1827 = vmatpush1.xpose.msra.mxu0 0.0
      %1828 = vmatprep.subr.mxu0 0.0
      %1829 = vmatpush1.xpose.msra.mxu0 0.0
      %1830 = vmatprep.subr.mxu0 0.0
      %1831 = vmatpush1.xpose.msra.mxu0 0.0
      %1832 = vmatprep.subr.mxu0 0.0
      %1833 = vmatpush1.xpose.msra.mxu0 0.0
      %1834 = vmatprep.subr.mxu0 0.0
      %1835 = vmatpush1.xpose.msra.mxu0 0.0
      %1836 = vmatprep.subr.mxu0 0.0
      %1837 = vmatpush1.xpose.msra.mxu0 0.0
      %1838 = vmatprep.subr.mxu0 0.0
      %1839 = vmatpush1.xpose.msra.mxu0 0.0
      %1840 = vmatprep.subr.mxu0 0.0
      %1841 = vmatpush1.xpose.msra.mxu0 0.0
      %1842 = vmatprep.subr.mxu0 0.0
      %1843 = vmatpush1.xpose.msra.mxu0 0.0
      %1844 = vmatprep.mubr.f32.mxu0 0.0
      %1845 = vmatmul.mubr.f32.gmra.mrb[0].mxu0 %v1776
      %v1846 = vpop.f32.mrb[0].mxu0
      %v1847 = vadd.f32 0.0, %v1846
      %v1848 = vpop.f32.mrb[0].mxu0
      %1849 = vdwg.mxu0
      %v1850 = vmul.f32 %v1847, 0.35355338
      %v1851 = vadd.f32 %v1850, %v1087
      %v1852 = vsel %vm1091, %v1851, -inf
      %1853 = vmax.xlane.f32.xlu0 %v1852
      %v1854 = vpop.xlane.xlu0 %1853
      %v1855 = vsub.f32 %v1851, %v1854
      %v1856 = vmul.f32 %v1855, 1.442695
      %v1857 = vpow.pop %v1856
      %v1858 = vsel %vm1091, %v1857, 0.0
      %1859 = vadd.xlane.f32.xlu0 %v1858
      %v1860 = vpop.xlane.xlu0 %1859
      %v1861 = vrcp.pop %v1860
      %v1862 = vmul.f32 %v1857, %v1861
      %1863 = vrot.lane.b32.xlu0 %v1083, 64
      %v1864 = vpop.permute.xlu0 %1863
      %v1867 = vsel %vm1091, %v1862, 0
      %1869 = vmatprep.subr.mxu0 0.0
      %1870 = vmatpush1.msra.mxu0 %v1864
      %1871 = vmatprep.subr.mxu0 0.0
      %1872 = vmatpush1.msra.mxu0 0.0
      %1873 = vmatprep.subr.mxu0 0.0
      %1874 = vmatpush1.msra.mxu0 0.0
      %1875 = vmatprep.subr.mxu0 0.0
      %1876 = vmatpush1.msra.mxu0 0.0
      %1877 = vmatprep.subr.mxu0 0.0
      %1878 = vmatpush1.msra.mxu0 0.0
      %1879 = vmatprep.subr.mxu0 0.0
      %1880 = vmatpush1.msra.mxu0 0.0
      %1881 = vmatprep.subr.mxu0 0.0
      %1882 = vmatpush1.msra.mxu0 0.0
      %1883 = vmatprep.subr.mxu0 0.0
      %1884 = vmatpush1.msra.mxu0 0.0
      %1885 = vmatprep.subr.mxu0 0.0
      %1886 = vmatpush1.msra.mxu0 0.0
      %1887 = vmatprep.subr.mxu0 0.0
      %1888 = vmatpush1.msra.mxu0 0.0
      %1889 = vmatprep.subr.mxu0 0.0
      %1890 = vmatpush1.msra.mxu0 0.0
      %1891 = vmatprep.subr.mxu0 0.0
      %1892 = vmatpush1.msra.mxu0 0.0
      %1893 = vmatprep.subr.mxu0 0.0
      %1894 = vmatpush1.msra.mxu0 0.0
      %1895 = vmatprep.subr.mxu0 0.0
      %1896 = vmatpush1.msra.mxu0 0.0
      %1897 = vmatprep.subr.mxu0 0.0
      %1898 = vmatpush1.msra.mxu0 0.0
      %1899 = vmatprep.subr.mxu0 0.0
      %1900 = vmatpush1.msra.mxu0 0.0
      %1901 = vmatprep.subr.mxu0 0.0
      %1902 = vmatpush1.msra.mxu0 0.0
      %1903 = vmatprep.subr.mxu0 0.0
      %1904 = vmatpush1.msra.mxu0 0.0
      %1905 = vmatprep.subr.mxu0 0.0
      %1906 = vmatpush1.msra.mxu0 0.0
      %1907 = vmatprep.subr.mxu0 0.0
      %1908 = vmatpush1.msra.mxu0 0.0
      %1909 = vmatprep.subr.mxu0 0.0
      %1910 = vmatpush1.msra.mxu0 0.0
      %1911 = vmatprep.subr.mxu0 0.0
      %1912 = vmatpush1.msra.mxu0 0.0
      %1913 = vmatprep.subr.mxu0 0.0
      %1914 = vmatpush1.msra.mxu0 0.0
      %1915 = vmatprep.subr.mxu0 0.0
      %1916 = vmatpush1.msra.mxu0 0.0
      %1917 = vmatprep.subr.mxu0 0.0
      %1918 = vmatpush1.msra.mxu0 0.0
      %1919 = vmatprep.subr.mxu0 0.0
      %1920 = vmatpush1.msra.mxu0 0.0
      %1921 = vmatprep.subr.mxu0 0.0
      %1922 = vmatpush1.msra.mxu0 0.0
      %1923 = vmatprep.subr.mxu0 0.0
      %1924 = vmatpush1.msra.mxu0 0.0
      %1925 = vmatprep.subr.mxu0 0.0
      %1926 = vmatpush1.msra.mxu0 0.0
      %1927 = vmatprep.subr.mxu0 0.0
      %1928 = vmatpush1.msra.mxu0 0.0
      %1929 = vmatprep.subr.mxu0 0.0
      %1930 = vmatpush1.msra.mxu0 0.0
      %1931 = vmatprep.subr.mxu0 0.0
      %1932 = vmatpush1.msra.mxu0 0.0
      %1933 = vmatprep.mubr.f32.mxu0 0.0
      %1934 = vmatmul.mubr.f32.gmra.mrb[0].mxu0 %v1867
      %v1935 = vpop.f32.mrb[0].mxu0
      %v1936 = vadd.f32 0.0, %v1935
      %v1937 = vpop.f32.mrb[0].mxu0
      %1938 = vdwg.mxu0
      %1939 = vrot.lane.b32.xlu0 %v1083, 120
      %v1940 = vpop.permute.xlu0 %1939
      %1941 = vrot.lane.b32.xlu0 %v1083, 88
      %v1942 = vpop.permute.xlu0 %1941
      %v1943 = vsel %vm1091, %v1940, 0
      %v1945 = vsel %vm1091, %v1942, 0
      %1947 = vmatprep.subr.mxu0 0.0
      %1948 = vmatpush1.xpose.msra.mxu0 %v1945
      %1949 = vmatprep.subr.mxu0 0.0
      %1950 = vmatpush1.xpose.msra.mxu0 0.0
      %1951 = vmatprep.subr.mxu0 0.0
      %1952 = vmatpush1.xpose.msra.mxu0 0.0
      %1953 = vmatprep.subr.mxu0 0.0
      %1954 = vmatpush1.xpose.msra.mxu0 0.0
      %1955 = vmatprep.subr.mxu0 0.0
      %1956 = vmatpush1.xpose.msra.mxu0 0.0
      %1957 = vmatprep.subr.mxu0 0.0
      %1958 = vmatpush1.xpose.msra.mxu0 0.0
      %1959 = vmatprep.subr.mxu0 0.0
      %1960 = vmatpush1.xpose.msra.mxu0 0.0
      %1961 = vmatprep.subr.mxu0 0.0
      %1962 = vmatpush1.xpose.msra.mxu0 0.0
      %1963 = vmatprep.subr.mxu0 0.0
      %1964 = vmatpush1.xpose.msra.mxu0 0.0
      %1965 = vmatprep.subr.mxu0 0.0
      %1966 = vmatpush1.xpose.msra.mxu0 0.0
      %1967 = vmatprep.subr.mxu0 0.0
      %1968 = vmatpush1.xpose.msra.mxu0 0.0
      %1969 = vmatprep.subr.mxu0 0.0
      %1970 = vmatpush1.xpose.msra.mxu0 0.0
      %1971 = vmatprep.subr.mxu0 0.0
      %1972 = vmatpush1.xpose.msra.mxu0 0.0
      %1973 = vmatprep.subr.mxu0 0.0
      %1974 = vmatpush1.xpose.msra.mxu0 0.0
      %1975 = vmatprep.subr.mxu0 0.0
      %1976 = vmatpush1.xpose.msra.mxu0 0.0
      %1977 = vmatprep.subr.mxu0 0.0
      %1978 = vmatpush1.xpose.msra.mxu0 0.0
      %1979 = vmatprep.subr.mxu0 0.0
      %1980 = vmatpush1.xpose.msra.mxu0 0.0
      %1981 = vmatprep.subr.mxu0 0.0
      %1982 = vmatpush1.xpose.msra.mxu0 0.0
      %1983 = vmatprep.subr.mxu0 0.0
      %1984 = vmatpush1.xpose.msra.mxu0 0.0
      %1985 = vmatprep.subr.mxu0 0.0
      %1986 = vmatpush1.xpose.msra.mxu0 0.0
      %1987 = vmatprep.subr.mxu0 0.0
      %1988 = vmatpush1.xpose.msra.mxu0 0.0
      %1989 = vmatprep.subr.mxu0 0.0
      %1990 = vmatpush1.xpose.msra.mxu0 0.0
      %1991 = vmatprep.subr.mxu0 0.0
      %1992 = vmatpush1.xpose.msra.mxu0 0.0
      %1993 = vmatprep.subr.mxu0 0.0
      %1994 = vmatpush1.xpose.msra.mxu0 0.0
      %1995 = vmatprep.subr.mxu0 0.0
      %1996 = vmatpush1.xpose.msra.mxu0 0.0
      %1997 = vmatprep.subr.mxu0 0.0
      %1998 = vmatpush1.xpose.msra.mxu0 0.0
      %1999 = vmatprep.subr.mxu0 0.0
      %2000 = vmatpush1.xpose.msra.mxu0 0.0
      %2001 = vmatprep.subr.mxu0 0.0
      %2002 = vmatpush1.xpose.msra.mxu0 0.0
      %2003 = vmatprep.subr.mxu0 0.0
      %2004 = vmatpush1.xpose.msra.mxu0 0.0
      %2005 = vmatprep.subr.mxu0 0.0
      %2006 = vmatpush1.xpose.msra.mxu0 0.0
      %2007 = vmatprep.subr.mxu0 0.0
      %2008 = vmatpush1.xpose.msra.mxu0 0.0
      %2009 = vmatprep.subr.mxu0 0.0
      %2010 = vmatpush1.xpose.msra.mxu0 0.0
      %2011 = vmatprep.mubr.f32.mxu0 0.0
      %2012 = vmatmul.mubr.f32.gmra.mrb[0].mxu0 %v1943
      %v2013 = vpop.f32.mrb[0].mxu0
      %v2014 = vadd.f32 0.0, %v2013
      %v2015 = vpop.f32.mrb[0].mxu0
      %2016 = vdwg.mxu0
      %v2017 = vmul.f32 %v2014, 0.35355338
      %v2018 = vadd.f32 %v2017, %v1087
      %v2019 = vsel %vm1091, %v2018, -inf
      %2020 = vmax.xlane.f32.xlu0 %v2019
      %v2021 = vpop.xlane.xlu0 %2020
      %v2022 = vsub.f32 %v2018, %v2021
      %v2023 = vmul.f32 %v2022, 1.442695
      %v2024 = vpow.pop %v2023
      %v2025 = vsel %vm1091, %v2024, 0.0
      %2026 = vadd.xlane.f32.xlu0 %v2025
      %v2027 = vpop.xlane.xlu0 %2026
      %v2028 = vrcp.pop %v2027
      %v2029 = vmul.f32 %v2024, %v2028
      %2030 = vrot.lane.b32.xlu0 %v1083, 56
      %v2031 = vpop.permute.xlu0 %2030
      %v2034 = vsel %vm1091, %v2029, 0
      %2036 = vmatprep.subr.mxu0 0.0
      %2037 = vmatpush1.msra.mxu0 %v2031
      %2038 = vmatprep.subr.mxu0 0.0
      %2039 = vmatpush1.msra.mxu0 0.0
      %2040 = vmatprep.subr.mxu0 0.0
      %2041 = vmatpush1.msra.mxu0 0.0
      %2042 = vmatprep.subr.mxu0 0.0
      %2043 = vmatpush1.msra.mxu0 0.0
      %2044 = vmatprep.subr.mxu0 0.0
      %2045 = vmatpush1.msra.mxu0 0.0
      %2046 = vmatprep.subr.mxu0 0.0
      %2047 = vmatpush1.msra.mxu0 0.0
      %2048 = vmatprep.subr.mxu0 0.0
      %2049 = vmatpush1.msra.mxu0 0.0
      %2050 = vmatprep.subr.mxu0 0.0
      %2051 = vmatpush1.msra.mxu0 0.0
      %2052 = vmatprep.subr.mxu0 0.0
      %2053 = vmatpush1.msra.mxu0 0.0
      %2054 = vmatprep.subr.mxu0 0.0
      %2055 = vmatpush1.msra.mxu0 0.0
      %2056 = vmatprep.subr.mxu0 0.0
      %2057 = vmatpush1.msra.mxu0 0.0
      %2058 = vmatprep.subr.mxu0 0.0
      %2059 = vmatpush1.msra.mxu0 0.0
      %2060 = vmatprep.subr.mxu0 0.0
      %2061 = vmatpush1.msra.mxu0 0.0
      %2062 = vmatprep.subr.mxu0 0.0
      %2063 = vmatpush1.msra.mxu0 0.0
      %2064 = vmatprep.subr.mxu0 0.0
      %2065 = vmatpush1.msra.mxu0 0.0
      %2066 = vmatprep.subr.mxu0 0.0
      %2067 = vmatpush1.msra.mxu0 0.0
      %2068 = vmatprep.subr.mxu0 0.0
      %2069 = vmatpush1.msra.mxu0 0.0
      %2070 = vmatprep.subr.mxu0 0.0
      %2071 = vmatpush1.msra.mxu0 0.0
      %2072 = vmatprep.subr.mxu0 0.0
      %2073 = vmatpush1.msra.mxu0 0.0
      %2074 = vmatprep.subr.mxu0 0.0
      %2075 = vmatpush1.msra.mxu0 0.0
      %2076 = vmatprep.subr.mxu0 0.0
      %2077 = vmatpush1.msra.mxu0 0.0
      %2078 = vmatprep.subr.mxu0 0.0
      %2079 = vmatpush1.msra.mxu0 0.0
      %2080 = vmatprep.subr.mxu0 0.0
      %2081 = vmatpush1.msra.mxu0 0.0
      %2082 = vmatprep.subr.mxu0 0.0
      %2083 = vmatpush1.msra.mxu0 0.0
      %2084 = vmatprep.subr.mxu0 0.0
      %2085 = vmatpush1.msra.mxu0 0.0
      %2086 = vmatprep.subr.mxu0 0.0
      %2087 = vmatpush1.msra.mxu0 0.0
      %2088 = vmatprep.subr.mxu0 0.0
      %2089 = vmatpush1.msra.mxu0 0.0
      %2090 = vmatprep.subr.mxu0 0.0
      %2091 = vmatpush1.msra.mxu0 0.0
      %2092 = vmatprep.subr.mxu0 0.0
      %2093 = vmatpush1.msra.mxu0 0.0
      %2094 = vmatprep.subr.mxu0 0.0
      %2095 = vmatpush1.msra.mxu0 0.0
      %2096 = vmatprep.subr.mxu0 0.0
      %2097 = vmatpush1.msra.mxu0 0.0
      %2098 = vmatprep.subr.mxu0 0.0
      %2099 = vmatpush1.msra.mxu0 0.0
      %2100 = vmatprep.mubr.f32.mxu0 0.0
      %2101 = vmatmul.mubr.f32.gmra.mrb[0].mxu0 %v2034
      %v2102 = vpop.f32.mrb[0].mxu0
      %v2103 = vadd.f32 0.0, %v2102
      %v2104 = vpop.f32.mrb[0].mxu0
      %2105 = vdwg.mxu0
      %2106 = vrot.lane.b32.xlu0 %v1083, 112
      %v2107 = vpop.permute.xlu0 %2106
      %2108 = vrot.lane.b32.xlu0 %v1083, 80
      %v2109 = vpop.permute.xlu0 %2108
      %v2110 = vsel %vm1091, %v2107, 0
      %v2112 = vsel %vm1091, %v2109, 0
      %2114 = vmatprep.subr.mxu0 0.0
      %2115 = vmatpush1.xpose.msra.mxu0 %v2112
      %2116 = vmatprep.subr.mxu0 0.0
      %2117 = vmatpush1.xpose.msra.mxu0 0.0
      %2118 = vmatprep.subr.mxu0 0.0
      %2119 = vmatpush1.xpose.msra.mxu0 0.0
      %2120 = vmatprep.subr.mxu0 0.0
      %2121 = vmatpush1.xpose.msra.mxu0 0.0
      %2122 = vmatprep.subr.mxu0 0.0
      %2123 = vmatpush1.xpose.msra.mxu0 0.0
      %2124 = vmatprep.subr.mxu0 0.0
      %2125 = vmatpush1.xpose.msra.mxu0 0.0
      %2126 = vmatprep.subr.mxu0 0.0
      %2127 = vmatpush1.xpose.msra.mxu0 0.0
      %2128 = vmatprep.subr.mxu0 0.0
      %2129 = vmatpush1.xpose.msra.mxu0 0.0
      %2130 = vmatprep.subr.mxu0 0.0
      %2131 = vmatpush1.xpose.msra.mxu0 0.0
      %2132 = vmatprep.subr.mxu0 0.0
      %2133 = vmatpush1.xpose.msra.mxu0 0.0
      %2134 = vmatprep.subr.mxu0 0.0
      %2135 = vmatpush1.xpose.msra.mxu0 0.0
      %2136 = vmatprep.subr.mxu0 0.0
      %2137 = vmatpush1.xpose.msra.mxu0 0.0
      %2138 = vmatprep.subr.mxu0 0.0
      %2139 = vmatpush1.xpose.msra.mxu0 0.0
      %2140 = vmatprep.subr.mxu0 0.0
      %2141 = vmatpush1.xpose.msra.mxu0 0.0
      %2142 = vmatprep.subr.mxu0 0.0
      %2143 = vmatpush1.xpose.msra.mxu0 0.0
      %2144 = vmatprep.subr.mxu0 0.0
      %2145 = vmatpush1.xpose.msra.mxu0 0.0
      %2146 = vmatprep.subr.mxu0 0.0
      %2147 = vmatpush1.xpose.msra.mxu0 0.0
      %2148 = vmatprep.subr.mxu0 0.0
      %2149 = vmatpush1.xpose.msra.mxu0 0.0
      %2150 = vmatprep.subr.mxu0 0.0
      %2151 = vmatpush1.xpose.msra.mxu0 0.0
      %2152 = vmatprep.subr.mxu0 0.0
      %2153 = vmatpush1.xpose.msra.mxu0 0.0
      %2154 = vmatprep.subr.mxu0 0.0
      %2155 = vmatpush1.xpose.msra.mxu0 0.0
      %2156 = vmatprep.subr.mxu0 0.0
      %2157 = vmatpush1.xpose.msra.mxu0 0.0
      %2158 = vmatprep.subr.mxu0 0.0
      %2159 = vmatpush1.xpose.msra.mxu0 0.0
      %2160 = vmatprep.subr.mxu0 0.0
      %2161 = vmatpush1.xpose.msra.mxu0 0.0
      %2162 = vmatprep.subr.mxu0 0.0
      %2163 = vmatpush1.xpose.msra.mxu0 0.0
      %2164 = vmatprep.subr.mxu0 0.0
      %2165 = vmatpush1.xpose.msra.mxu0 0.0
      %2166 = vmatprep.subr.mxu0 0.0
      %2167 = vmatpush1.xpose.msra.mxu0 0.0
      %2168 = vmatprep.subr.mxu0 0.0
      %2169 = vmatpush1.xpose.msra.mxu0 0.0
      %2170 = vmatprep.subr.mxu0 0.0
      %2171 = vmatpush1.xpose.msra.mxu0 0.0
      %2172 = vmatprep.subr.mxu0 0.0
      %2173 = vmatpush1.xpose.msra.mxu0 0.0
      %2174 = vmatprep.subr.mxu0 0.0
      %2175 = vmatpush1.xpose.msra.mxu0 0.0
      %2176 = vmatprep.subr.mxu0 0.0
      %2177 = vmatpush1.xpose.msra.mxu0 0.0
      %2178 = vmatprep.mubr.f32.mxu0 0.0
      %2179 = vmatmul.mubr.f32.gmra.mrb[0].mxu0 %v2110
      %v2180 = vpop.f32.mrb[0].mxu0
      %v2181 = vadd.f32 0.0, %v2180
      %v2182 = vpop.f32.mrb[0].mxu0
      %2183 = vdwg.mxu0
      %v2184 = vmul.f32 %v2181, 0.35355338
      %v2185 = vadd.f32 %v2184, %v1087
      %v2186 = vsel %vm1091, %v2185, -inf
      %2187 = vmax.xlane.f32.xlu0 %v2186
      %v2188 = vpop.xlane.xlu0 %2187
      %v2189 = vsub.f32 %v2185, %v2188
      %v2190 = vmul.f32 %v2189, 1.442695
      %v2191 = vpow.pop %v2190
      %v2192 = vsel %vm1091, %v2191, 0.0
      %2193 = vadd.xlane.f32.xlu0 %v2192
      %v2194 = vpop.xlane.xlu0 %2193
      %v2195 = vrcp.pop %v2194
      %v2196 = vmul.f32 %v2191, %v2195
      %2197 = vrot.lane.b32.xlu0 %v1083, 48
      %v2198 = vpop.permute.xlu0 %2197
      %v2201 = vsel %vm1091, %v2196, 0
      %2203 = vmatprep.subr.mxu0 0.0
      %2204 = vmatpush1.msra.mxu0 %v2198
      %2205 = vmatprep.subr.mxu0 0.0
      %2206 = vmatpush1.msra.mxu0 0.0
      %2207 = vmatprep.subr.mxu0 0.0
      %2208 = vmatpush1.msra.mxu0 0.0
      %2209 = vmatprep.subr.mxu0 0.0
      %2210 = vmatpush1.msra.mxu0 0.0
      %2211 = vmatprep.subr.mxu0 0.0
      %2212 = vmatpush1.msra.mxu0 0.0
      %2213 = vmatprep.subr.mxu0 0.0
      %2214 = vmatpush1.msra.mxu0 0.0
      %2215 = vmatprep.subr.mxu0 0.0
      %2216 = vmatpush1.msra.mxu0 0.0
      %2217 = vmatprep.subr.mxu0 0.0
      %2218 = vmatpush1.msra.mxu0 0.0
      %2219 = vmatprep.subr.mxu0 0.0
      %2220 = vmatpush1.msra.mxu0 0.0
      %2221 = vmatprep.subr.mxu0 0.0
      %2222 = vmatpush1.msra.mxu0 0.0
      %2223 = vmatprep.subr.mxu0 0.0
      %2224 = vmatpush1.msra.mxu0 0.0
      %2225 = vmatprep.subr.mxu0 0.0
      %2226 = vmatpush1.msra.mxu0 0.0
      %2227 = vmatprep.subr.mxu0 0.0
      %2228 = vmatpush1.msra.mxu0 0.0
      %2229 = vmatprep.subr.mxu0 0.0
      %2230 = vmatpush1.msra.mxu0 0.0
      %2231 = vmatprep.subr.mxu0 0.0
      %2232 = vmatpush1.msra.mxu0 0.0
      %2233 = vmatprep.subr.mxu0 0.0
      %2234 = vmatpush1.msra.mxu0 0.0
      %2235 = vmatprep.subr.mxu0 0.0
      %2236 = vmatpush1.msra.mxu0 0.0
      %2237 = vmatprep.subr.mxu0 0.0
      %2238 = vmatpush1.msra.mxu0 0.0
      %2239 = vmatprep.subr.mxu0 0.0
      %2240 = vmatpush1.msra.mxu0 0.0
      %2241 = vmatprep.subr.mxu0 0.0
      %2242 = vmatpush1.msra.mxu0 0.0
      %2243 = vmatprep.subr.mxu0 0.0
      %2244 = vmatpush1.msra.mxu0 0.0
      %2245 = vmatprep.subr.mxu0 0.0
      %2246 = vmatpush1.msra.mxu0 0.0
      %2247 = vmatprep.subr.mxu0 0.0
      %2248 = vmatpush1.msra.mxu0 0.0
      %2249 = vmatprep.subr.mxu0 0.0
      %2250 = vmatpush1.msra.mxu0 0.0
      %2251 = vmatprep.subr.mxu0 0.0
      %2252 = vmatpush1.msra.mxu0 0.0
      %2253 = vmatprep.subr.mxu0 0.0
      %2254 = vmatpush1.msra.mxu0 0.0
      %2255 = vmatprep.subr.mxu0 0.0
      %2256 = vmatpush1.msra.mxu0 0.0
      %2257 = vmatprep.subr.mxu0 0.0
      %2258 = vmatpush1.msra.mxu0 0.0
      %2259 = vmatprep.subr.mxu0 0.0
      %2260 = vmatpush1.msra.mxu0 0.0
      %2261 = vmatprep.subr.mxu0 0.0
      %2262 = vmatpush1.msra.mxu0 0.0
      %2263 = vmatprep.subr.mxu0 0.0
      %2264 = vmatpush1.msra.mxu0 0.0
      %2265 = vmatprep.subr.mxu0 0.0
      %2266 = vmatpush1.msra.mxu0 0.0
      %2267 = vmatprep.mubr.f32.mxu0 0.0
      %2268 = vmatmul.mubr.f32.gmra.mrb[0].mxu0 %v2201
      %v2269 = vpop.f32.mrb[0].mxu0
      %v2270 = vadd.f32 0.0, %v2269
      %v2271 = vpop.f32.mrb[0].mxu0
      %2272 = vdwg.mxu0
      %2273 = vrot.lane.b32.xlu0 %v1083, 104
      %v2274 = vpop.permute.xlu0 %2273
      %2275 = vrot.lane.b32.xlu0 %v1083, 72
      %v2276 = vpop.permute.xlu0 %2275
      %v2277 = vsel %vm1091, %v2274, 0
      %v2279 = vsel %vm1091, %v2276, 0
      %2281 = vmatprep.subr.mxu0 0.0
      %2282 = vmatpush1.xpose.msra.mxu0 %v2279
      %2283 = vmatprep.subr.mxu0 0.0
      %2284 = vmatpush1.xpose.msra.mxu0 0.0
      %2285 = vmatprep.subr.mxu0 0.0
      %2286 = vmatpush1.xpose.msra.mxu0 0.0
      %2287 = vmatprep.subr.mxu0 0.0
      %2288 = vmatpush1.xpose.msra.mxu0 0.0
      %2289 = vmatprep.subr.mxu0 0.0
      %2290 = vmatpush1.xpose.msra.mxu0 0.0
      %2291 = vmatprep.subr.mxu0 0.0
      %2292 = vmatpush1.xpose.msra.mxu0 0.0
      %2293 = vmatprep.subr.mxu0 0.0
      %2294 = vmatpush1.xpose.msra.mxu0 0.0
      %2295 = vmatprep.subr.mxu0 0.0
      %2296 = vmatpush1.xpose.msra.mxu0 0.0
      %2297 = vmatprep.subr.mxu0 0.0
      %2298 = vmatpush1.xpose.msra.mxu0 0.0
      %2299 = vmatprep.subr.mxu0 0.0
      %2300 = vmatpush1.xpose.msra.mxu0 0.0
      %2301 = vmatprep.subr.mxu0 0.0
      %2302 = vmatpush1.xpose.msra.mxu0 0.0
      %2303 = vmatprep.subr.mxu0 0.0
      %2304 = vmatpush1.xpose.msra.mxu0 0.0
      %2305 = vmatprep.subr.mxu0 0.0
      %2306 = vmatpush1.xpose.msra.mxu0 0.0
      %2307 = vmatprep.subr.mxu0 0.0
      %2308 = vmatpush1.xpose.msra.mxu0 0.0
      %2309 = vmatprep.subr.mxu0 0.0
      %2310 = vmatpush1.xpose.msra.mxu0 0.0
      %2311 = vmatprep.subr.mxu0 0.0
      %2312 = vmatpush1.xpose.msra.mxu0 0.0
      %2313 = vmatprep.subr.mxu0 0.0
      %2314 = vmatpush1.xpose.msra.mxu0 0.0
      %2315 = vmatprep.subr.mxu0 0.0
      %2316 = vmatpush1.xpose.msra.mxu0 0.0
      %2317 = vmatprep.subr.mxu0 0.0
      %2318 = vmatpush1.xpose.msra.mxu0 0.0
      %2319 = vmatprep.subr.mxu0 0.0
      %2320 = vmatpush1.xpose.msra.mxu0 0.0
      %2321 = vmatprep.subr.mxu0 0.0
      %2322 = vmatpush1.xpose.msra.mxu0 0.0
      %2323 = vmatprep.subr.mxu0 0.0
      %2324 = vmatpush1.xpose.msra.mxu0 0.0
      %2325 = vmatprep.subr.mxu0 0.0
      %2326 = vmatpush1.xpose.msra.mxu0 0.0
      %2327 = vmatprep.subr.mxu0 0.0
      %2328 = vmatpush1.xpose.msra.mxu0 0.0
      %2329 = vmatprep.subr.mxu0 0.0
      %2330 = vmatpush1.xpose.msra.mxu0 0.0
      %2331 = vmatprep.subr.mxu0 0.0
      %2332 = vmatpush1.xpose.msra.mxu0 0.0
      %2333 = vmatprep.subr.mxu0 0.0
      %2334 = vmatpush1.xpose.msra.mxu0 0.0
      %2335 = vmatprep.subr.mxu0 0.0
      %2336 = vmatpush1.xpose.msra.mxu0 0.0
      %2337 = vmatprep.subr.mxu0 0.0
      %2338 = vmatpush1.xpose.msra.mxu0 0.0
      %2339 = vmatprep.subr.mxu0 0.0
      %2340 = vmatpush1.xpose.msra.mxu0 0.0
      %2341 = vmatprep.subr.mxu0 0.0
      %2342 = vmatpush1.xpose.msra.mxu0 0.0
      %2343 = vmatprep.subr.mxu0 0.0
      %2344 = vmatpush1.xpose.msra.mxu0 0.0
      %2345 = vmatprep.mubr.f32.mxu0 0.0
      %2346 = vmatmul.mubr.f32.gmra.mrb[0].mxu0 %v2277
      %v2347 = vpop.f32.mrb[0].mxu0
      %v2348 = vadd.f32 0.0, %v2347
      %v2349 = vpop.f32.mrb[0].mxu0
      %2350 = vdwg.mxu0
      %v2351 = vmul.f32 %v2348, 0.35355338
      %v2352 = vadd.f32 %v2351, %v1087
      %v2353 = vsel %vm1091, %v2352, -inf
      %2354 = vmax.xlane.f32.xlu0 %v2353
      %v2355 = vpop.xlane.xlu0 %2354
      %v2356 = vsub.f32 %v2352, %v2355
      %v2357 = vmul.f32 %v2356, 1.442695
      %v2358 = vpow.pop %v2357
      %v2359 = vsel %vm1091, %v2358, 0.0
      %2360 = vadd.xlane.f32.xlu0 %v2359
      %v2361 = vpop.xlane.xlu0 %2360
      %v2362 = vrcp.pop %v2361
      %v2363 = vmul.f32 %v2358, %v2362
      %2364 = vrot.lane.b32.xlu0 %v1083, 40
      %v2365 = vpop.permute.xlu0 %2364
      %v2368 = vsel %vm1091, %v2363, 0
      %2370 = vmatprep.subr.mxu0 0.0
      %2371 = vmatpush1.msra.mxu0 %v2365
      %2372 = vmatprep.subr.mxu0 0.0
      %2373 = vmatpush1.msra.mxu0 0.0
      %2374 = vmatprep.subr.mxu0 0.0
      %2375 = vmatpush1.msra.mxu0 0.0
      %2376 = vmatprep.subr.mxu0 0.0
      %2377 = vmatpush1.msra.mxu0 0.0
      %2378 = vmatprep.subr.mxu0 0.0
      %2379 = vmatpush1.msra.mxu0 0.0
      %2380 = vmatprep.subr.mxu0 0.0
      %2381 = vmatpush1.msra.mxu0 0.0
      %2382 = vmatprep.subr.mxu0 0.0
      %2383 = vmatpush1.msra.mxu0 0.0
      %2384 = vmatprep.subr.mxu0 0.0
      %2385 = vmatpush1.msra.mxu0 0.0
      %2386 = vmatprep.subr.mxu0 0.0
      %2387 = vmatpush1.msra.mxu0 0.0
      %2388 = vmatprep.subr.mxu0 0.0
      %2389 = vmatpush1.msra.mxu0 0.0
      %2390 = vmatprep.subr.mxu0 0.0
      %2391 = vmatpush1.msra.mxu0 0.0
      %2392 = vmatprep.subr.mxu0 0.0
      %2393 = vmatpush1.msra.mxu0 0.0
      %2394 = vmatprep.subr.mxu0 0.0
      %2395 = vmatpush1.msra.mxu0 0.0
      %2396 = vmatprep.subr.mxu0 0.0
      %2397 = vmatpush1.msra.mxu0 0.0
      %2398 = vmatprep.subr.mxu0 0.0
      %2399 = vmatpush1.msra.mxu0 0.0
      %2400 = vmatprep.subr.mxu0 0.0
      %2401 = vmatpush1.msra.mxu0 0.0
      %2402 = vmatprep.subr.mxu0 0.0
      %2403 = vmatpush1.msra.mxu0 0.0
      %2404 = vmatprep.subr.mxu0 0.0
      %2405 = vmatpush1.msra.mxu0 0.0
      %2406 = vmatprep.subr.mxu0 0.0
      %2407 = vmatpush1.msra.mxu0 0.0
      %2408 = vmatprep.subr.mxu0 0.0
      %2409 = vmatpush1.msra.mxu0 0.0
      %2410 = vmatprep.subr.mxu0 0.0
      %2411 = vmatpush1.msra.mxu0 0.0
      %2412 = vmatprep.subr.mxu0 0.0
      %2413 = vmatpush1.msra.mxu0 0.0
      %2414 = vmatprep.subr.mxu0 0.0
      %2415 = vmatpush1.msra.mxu0 0.0
      %2416 = vmatprep.subr.mxu0 0.0
      %2417 = vmatpush1.msra.mxu0 0.0
      %2418 = vmatprep.subr.mxu0 0.0
      %2419 = vmatpush1.msra.mxu0 0.0
      %2420 = vmatprep.subr.mxu0 0.0
      %2421 = vmatpush1.msra.mxu0 0.0
      %2422 = vmatprep.subr.mxu0 0.0
      %2423 = vmatpush1.msra.mxu0 0.0
      %2424 = vmatprep.subr.mxu0 0.0
      %2425 = vmatpush1.msra.mxu0 0.0
      %2426 = vmatprep.subr.mxu0 0.0
      %2427 = vmatpush1.msra.mxu0 0.0
      %2428 = vmatprep.subr.mxu0 0.0
      %2429 = vmatpush1.msra.mxu0 0.0
      %2430 = vmatprep.subr.mxu0 0.0
      %2431 = vmatpush1.msra.mxu0 0.0
      %2432 = vmatprep.subr.mxu0 0.0
      %2433 = vmatpush1.msra.mxu0 0.0
      %2434 = vmatprep.mubr.f32.mxu0 0.0
      %2435 = vmatmul.mubr.f32.gmra.mrb[0].mxu0 %v2368
      %v2436 = vpop.f32.mrb[0].mxu0
      %v2437 = vadd.f32 0.0, %v2436
      %v2438 = vpop.f32.mrb[0].mxu0
      %2439 = vdwg.mxu0
      %2441 = vrot.lane.b32.xlu0 %v2103, 8
      %v2442 = vpop.permute.xlu0 %2441
      %2445 = vrot.lane.b32.xlu0 %v2270, 16
      %v2446 = vpop.permute.xlu0 %2445
      %2449 = vrot.lane.b32.xlu0 %v2437, 24
      %v2450 = vpop.permute.xlu0 %2449
      %v2452 = vsel %vm1091, %v1936, %v2442
      %v2453 = vsel %vm1769, %v2452, %v2446
      %v2454 = vsel %vm1771, %v2453, %v2450
      %v2455 = vld [vmem:[%s884] sm:$0xff]
      %v2456 = vld [vmem:[%s884 + $0x8] sm:$0xff]
      %v2457 = vld [vmem:[%s884 + $0x10] sm:$0xff]
      %v2458 = vld [vmem:[%s884 + $0x18] sm:$0xff]
      %v2460 = vsel %vm943, %v1772, 0
      %v2463 = vsel %vm943, %v2454, 0
      %2465 = vmatprep.subr.mxu0 0.0
      %2466 = vmatpush1.msra.mxu0 %v2455
      %2467 = vmatprep.subr.mxu0 0.0
      %2468 = vmatpush1.msra.mxu0 %v2456
      %2469 = vmatprep.subr.mxu0 0.0
      %2470 = vmatpush1.msra.mxu0 %v2457
      %2471 = vmatprep.subr.mxu0 0.0
      %2472 = vmatpush1.msra.mxu0 %v2458
      %2473 = vmatprep.subr.mxu0 0.0
      %2474 = vmatpush1.msra.mxu0 0.0
      %2475 = vmatprep.subr.mxu0 0.0
      %2476 = vmatpush1.msra.mxu0 0.0
      %2477 = vmatprep.subr.mxu0 0.0
      %2478 = vmatpush1.msra.mxu0 0.0
      %2479 = vmatprep.subr.mxu0 0.0
      %2480 = vmatpush1.msra.mxu0 0.0
      %2481 = vmatprep.subr.mxu0 0.0
      %2482 = vmatpush1.msra.mxu0 0.0
      %2483 = vmatprep.subr.mxu0 0.0
      %2484 = vmatpush1.msra.mxu0 0.0
      %2485 = vmatprep.subr.mxu0 0.0
      %2486 = vmatpush1.msra.mxu0 0.0
      %2487 = vmatprep.subr.mxu0 0.0
      %2488 = vmatpush1.msra.mxu0 0.0
      %2489 = vmatprep.subr.mxu0 0.0
      %2490 = vmatpush1.msra.mxu0 0.0
      %2491 = vmatprep.subr.mxu0 0.0
      %2492 = vmatpush1.msra.mxu0 0.0
      %2493 = vmatprep.subr.mxu0 0.0
      %2494 = vmatpush1.msra.mxu0 0.0
      %2495 = vmatprep.subr.mxu0 0.0
      %2496 = vmatpush1.msra.mxu0 0.0
      %2497 = vmatprep.subr.mxu0 0.0
      %2498 = vmatpush1.msra.mxu0 0.0
      %2499 = vmatprep.subr.mxu0 0.0
      %2500 = vmatpush1.msra.mxu0 0.0
      %2501 = vmatprep.subr.mxu0 0.0
      %2502 = vmatpush1.msra.mxu0 0.0
      %2503 = vmatprep.subr.mxu0 0.0
      %2504 = vmatpush1.msra.mxu0 0.0
      %2505 = vmatprep.subr.mxu0 0.0
      %2506 = vmatpush1.msra.mxu0 0.0
      %2507 = vmatprep.subr.mxu0 0.0
      %2508 = vmatpush1.msra.mxu0 0.0
      %2509 = vmatprep.subr.mxu0 0.0
      %2510 = vmatpush1.msra.mxu0 0.0
      %2511 = vmatprep.subr.mxu0 0.0
      %2512 = vmatpush1.msra.mxu0 0.0
      %2513 = vmatprep.subr.mxu0 0.0
      %2514 = vmatpush1.msra.mxu0 0.0
      %2515 = vmatprep.subr.mxu0 0.0
      %2516 = vmatpush1.msra.mxu0 0.0
      %2517 = vmatprep.subr.mxu0 0.0
      %2518 = vmatpush1.msra.mxu0 0.0
      %2519 = vmatprep.subr.mxu0 0.0
      %2520 = vmatpush1.msra.mxu0 0.0
      %2521 = vmatprep.subr.mxu0 0.0
      %2522 = vmatpush1.msra.mxu0 0.0
      %2523 = vmatprep.subr.mxu0 0.0
      %2524 = vmatpush1.msra.mxu0 0.0
      %2525 = vmatprep.subr.mxu0 0.0
      %2526 = vmatpush1.msra.mxu0 0.0
      %2527 = vmatprep.subr.mxu0 0.0
      %2528 = vmatpush1.msra.mxu0 0.0
      %2529 = vmatprep.mubr.f32.mxu0 0.0
      %2530 = vmatmul.mubr.f32.gmra.mrb[0].mxu0 %v2460
      %v2531 = vpop.f32.mrb[0].mxu0
      %v2532 = vadd.f32 0.0, %v2531
      %v2533 = vpop.f32.mrb[0].mxu0
      %2534 = vmatprep.mubr.f32.mxu0 0.0
      %2535 = vmatmul.mubr.f32.gmra.mrb[0].mxu0 %v2463
      %v2536 = vpop.f32.mrb[0].mxu0
      %v2537 = vadd.f32 0.0, %v2536
      %v2538 = vpop.f32.mrb[0].mxu0
      %2539 = vdwg.mxu0
      %v2540 = vadd.f32 %v939, %v2532
      %v2541 = vadd.f32 %v940, %v2537
      %v2542 = vld [vmem:[%s887] sm:$0x1]
      %v2543 = vld [vmem:[%s890] sm:$0x1]
      %v2544 = vsel %vm943, %v2540, 0.0
      %2545 = vadd.xlane.f32.xlu0 %v2544
      %v2546 = vpop.xlane.xlu0 %2545
      %v2547 = vsel %vm943, %v2541, 0.0
      %2548 = vadd.xlane.f32.xlu0 %v2547
      %v2549 = vpop.xlane.xlu0 %2548
      %v2550 = vmul.f32 %v2546, %v950
      %v2551 = vmul.f32 %v2549, %v950
      %v2552 = vsub.f32 %v2540, %v2550
      %v2553 = vsub.f32 %v2541, %v2551
      %v2554 = vmul.f32 %v2552, %v2552
      %v2555 = vmul.f32 %v2553, %v2553
      %v2556 = vsel %vm943, %v2554, 0.0
      %2557 = vadd.xlane.f32.xlu0 %v2556
      %v2558 = vpop.xlane.xlu0 %2557
      %v2559 = vsel %vm943, %v2555, 0.0
      %2560 = vadd.xlane.f32.xlu0 %v2559
      %v2561 = vpop.xlane.xlu0 %2560
      %v2562 = vmul.f32 %v2558, 0.032258064
      %v2563 = vmul.f32 %v2561, 0.032258064
      %v2564 = vrsqrt.pop %v2562
      %v2565 = vmul.f32 %v2562, %v2564
      %vm2566 = vcmp.eq.f32.partialorder %v2562, inf
      %v2567 = vsel %vm2566, %v2562, %v2565
      %vm2568 = vcmp.eq.f32.partialorder %v2562, 0.0
      %v2569 = vand.u32 %v2562, 2147483648
      %v2570 = vsel %vm2568, %v2569, %v2567
      %v2571 = vrsqrt.pop %v2563
      %v2572 = vmul.f32 %v2563, %v2571
      %vm2573 = vcmp.eq.f32.partialorder %v2563, inf
      %v2574 = vsel %vm2573, %v2563, %v2572
      %vm2575 = vcmp.eq.f32.partialorder %v2563, 0.0
      %v2576 = vand.u32 %v2563, 2147483648
      %v2577 = vsel %vm2575, %v2576, %v2574
      %v2579 = vlaneseq
      %v2580 = vshrl.u32 %v2579, 7
      %v2581 = vsub.s32 0, %v2580
      %v2582 = vrot.slane %v2542, %v2581
      %v2584 = vmul.f32 %v2582, %v2552
      %v2585 = vmul.f32 %v2582, %v2553
      %v2586 = vadd.f32 %v2570, 1e-06
      %v2587 = vadd.f32 %v2577, 1e-06
      %v2588 = vrcp.pop %v2586
      %v2589 = vmul.f32 %v2584, %v2588
      %v2590 = vrcp.pop %v2587
      %v2591 = vmul.f32 %v2585, %v2590
      %v2593 = vlaneseq
      %v2594 = vshrl.u32 %v2593, 7
      %v2595 = vsub.s32 0, %v2594
      %v2596 = vrot.slane %v2543, %v2595
      %v2598 = vadd.f32 %v2589, %v2596
      %v2599 = vadd.f32 %v2591, %v2596
      %v2600 = vld [vmem:[%s895] sm:$0xff]
      %v2601 = vld [vmem:[%s895 + $0x8] sm:$0xff]
      %v2602 = vld [vmem:[%s895 + $0x10] sm:$0xff]
      %v2603 = vld [vmem:[%s895 + $0x18] sm:$0xff]
      %v2605 = vsel %vm943, %v2598, 0
      %v2608 = vsel %vm943, %v2599, 0
      %2610 = vmatprep.subr.mxu0 0.0
      %2611 = vmatpush1.msra.mxu0 %v2600
      %2612 = vmatprep.subr.mxu0 0.0
      %2613 = vmatpush1.msra.mxu0 %v2601
      %2614 = vmatprep.subr.mxu0 0.0
      %2615 = vmatpush1.msra.mxu0 %v2602
      %2616 = vmatprep.subr.mxu0 0.0
      %2617 = vmatpush1.msra.mxu0 %v2603
      %2618 = vmatprep.subr.mxu0 0.0
      %2619 = vmatpush1.msra.mxu0 0.0
      %2620 = vmatprep.subr.mxu0 0.0
      %2621 = vmatpush1.msra.mxu0 0.0
      %2622 = vmatprep.subr.mxu0 0.0
      %2623 = vmatpush1.msra.mxu0 0.0
      %2624 = vmatprep.subr.mxu0 0.0
      %2625 = vmatpush1.msra.mxu0 0.0
      %2626 = vmatprep.subr.mxu0 0.0
      %2627 = vmatpush1.msra.mxu0 0.0
      %2628 = vmatprep.subr.mxu0 0.0
      %2629 = vmatpush1.msra.mxu0 0.0
      %2630 = vmatprep.subr.mxu0 0.0
      %2631 = vmatpush1.msra.mxu0 0.0
      %2632 = vmatprep.subr.mxu0 0.0
      %2633 = vmatpush1.msra.mxu0 0.0
      %2634 = vmatprep.subr.mxu0 0.0
      %2635 = vmatpush1.msra.mxu0 0.0
      %2636 = vmatprep.subr.mxu0 0.0
      %2637 = vmatpush1.msra.mxu0 0.0
      %2638 = vmatprep.subr.mxu0 0.0
      %2639 = vmatpush1.msra.mxu0 0.0
      %2640 = vmatprep.subr.mxu0 0.0
      %2641 = vmatpush1.msra.mxu0 0.0
      %2642 = vmatprep.subr.mxu0 0.0
      %2643 = vmatpush1.msra.mxu0 0.0
      %2644 = vmatprep.subr.mxu0 0.0
      %2645 = vmatpush1.msra.mxu0 0.0
      %2646 = vmatprep.subr.mxu0 0.0
      %2647 = vmatpush1.msra.mxu0 0.0
      %2648 = vmatprep.subr.mxu0 0.0
      %2649 = vmatpush1.msra.mxu0 0.0
      %2650 = vmatprep.subr.mxu0 0.0
      %2651 = vmatpush1.msra.mxu0 0.0
      %2652 = vmatprep.subr.mxu0 0.0
      %2653 = vmatpush1.msra.mxu0 0.0
      %2654 = vmatprep.subr.mxu0 0.0
      %2655 = vmatpush1.msra.mxu0 0.0
      %2656 = vmatprep.subr.mxu0 0.0
      %2657 = vmatpush1.msra.mxu0 0.0
      %2658 = vmatprep.subr.mxu0 0.0
      %2659 = vmatpush1.msra.mxu0 0.0
      %2660 = vmatprep.subr.mxu0 0.0
      %2661 = vmatpush1.msra.mxu0 0.0
      %2662 = vmatprep.subr.mxu0 0.0
      %2663 = vmatpush1.msra.mxu0 0.0
      %2664 = vmatprep.subr.mxu0 0.0
      %2665 = vmatpush1.msra.mxu0 0.0
      %2666 = vmatprep.subr.mxu0 0.0
      %2667 = vmatpush1.msra.mxu0 0.0
      %2668 = vmatprep.subr.mxu0 0.0
      %2669 = vmatpush1.msra.mxu0 0.0
      %2670 = vmatprep.subr.mxu0 0.0
      %2671 = vmatpush1.msra.mxu0 0.0
      %2672 = vmatprep.subr.mxu0 0.0
      %2673 = vmatpush1.msra.mxu0 0.0
      %2674 = vmatprep.mubr.f32.mxu0 0.0
      %2675 = vmatmul.mubr.f32.gmra.mrb[0].mxu0 %v2605
      %v2676 = vpop.f32.mrb[0].mxu0
      %v2677 = vadd.f32 0.0, %v2676
      %v2678 = vpop.f32.mrb[0].mxu0
      %2679 = vmatprep.mubr.f32.mxu0 0.0
      %2680 = vmatmul.mubr.f32.gmra.mrb[0].mxu0 %v2608
      %v2681 = vpop.f32.mrb[0].mxu0
      %v2682 = vadd.f32 0.0, %v2681
      %v2683 = vpop.f32.mrb[0].mxu0
      %2684 = vdwg.mxu0
      %v2685 = vld [vmem:[%s1] sm:$0xff]
      %v2686 = vld [vmem:[%s1 + $0x8] sm:$0xff]
      %v2687 = vld [vmem:[%s900] sm:$0xff]
      %v2688 = vld [vmem:[%s900 + $0x8] sm:$0xff]
      %v2689 = vld [vmem:[%s900 + $0x10] sm:$0xff]
      %v2690 = vld [vmem:[%s900 + $0x18] sm:$0xff]
      %v2692 = vsel %vm943, %v2685, 0
      %v2695 = vsel %vm943, %v2686, 0
      %2697 = vmatprep.subr.mxu0 0.0
      %2698 = vmatpush1.msra.mxu0 %v2687
      %2699 = vmatprep.subr.mxu0 0.0
      %2700 = vmatpush1.msra.mxu0 %v2688
      %2701 = vmatprep.subr.mxu0 0.0
      %2702 = vmatpush1.msra.mxu0 %v2689
      %2703 = vmatprep.subr.mxu0 0.0
      %2704 = vmatpush1.msra.mxu0 %v2690
      %2705 = vmatprep.subr.mxu0 0.0
      %2706 = vmatpush1.msra.mxu0 0.0
      %2707 = vmatprep.subr.mxu0 0.0
      %2708 = vmatpush1.msra.mxu0 0.0
      %2709 = vmatprep.subr.mxu0 0.0
      %2710 = vmatpush1.msra.mxu0 0.0
      %2711 = vmatprep.subr.mxu0 0.0
      %2712 = vmatpush1.msra.mxu0 0.0
      %2713 = vmatprep.subr.mxu0 0.0
      %2714 = vmatpush1.msra.mxu0 0.0
      %2715 = vmatprep.subr.mxu0 0.0
      %2716 = vmatpush1.msra.mxu0 0.0
      %2717 = vmatprep.subr.mxu0 0.0
      %2718 = vmatpush1.msra.mxu0 0.0
      %2719 = vmatprep.subr.mxu0 0.0
      %2720 = vmatpush1.msra.mxu0 0.0
      %2721 = vmatprep.subr.mxu0 0.0
      %2722 = vmatpush1.msra.mxu0 0.0
      %2723 = vmatprep.subr.mxu0 0.0
      %2724 = vmatpush1.msra.mxu0 0.0
      %2725 = vmatprep.subr.mxu0 0.0
      %2726 = vmatpush1.msra.mxu0 0.0
      %2727 = vmatprep.subr.mxu0 0.0
      %2728 = vmatpush1.msra.mxu0 0.0
      %2729 = vmatprep.subr.mxu0 0.0
      %2730 = vmatpush1.msra.mxu0 0.0
      %2731 = vmatprep.subr.mxu0 0.0
      %2732 = vmatpush1.msra.mxu0 0.0
      %2733 = vmatprep.subr.mxu0 0.0
      %2734 = vmatpush1.msra.mxu0 0.0
      %2735 = vmatprep.subr.mxu0 0.0
      %2736 = vmatpush1.msra.mxu0 0.0
      %2737 = vmatprep.subr.mxu0 0.0
      %2738 = vmatpush1.msra.mxu0 0.0
      %2739 = vmatprep.subr.mxu0 0.0
      %2740 = vmatpush1.msra.mxu0 0.0
      %2741 = vmatprep.subr.mxu0 0.0
      %2742 = vmatpush1.msra.mxu0 0.0
      %2743 = vmatprep.subr.mxu0 0.0
      %2744 = vmatpush1.msra.mxu0 0.0
      %2745 = vmatprep.subr.mxu0 0.0
      %2746 = vmatpush1.msra.mxu0 0.0
      %2747 = vmatprep.subr.mxu0 0.0
      %2748 = vmatpush1.msra.mxu0 0.0
      %2749 = vmatprep.subr.mxu0 0.0
      %2750 = vmatpush1.msra.mxu0 0.0
      %2751 = vmatprep.subr.mxu0 0.0
      %2752 = vmatpush1.msra.mxu0 0.0
      %2753 = vmatprep.subr.mxu0 0.0
      %2754 = vmatpush1.msra.mxu0 0.0
      %2755 = vmatprep.subr.mxu0 0.0
      %2756 = vmatpush1.msra.mxu0 0.0
      %2757 = vmatprep.subr.mxu0 0.0
      %2758 = vmatpush1.msra.mxu0 0.0
      %2759 = vmatprep.subr.mxu0 0.0
      %2760 = vmatpush1.msra.mxu0 0.0
      %2761 = vmatprep.mubr.f32.mxu0 0.0
      %2762 = vmatmul.mubr.f32.gmra.mrb[0].mxu0 %v2692
      %v2763 = vpop.f32.mrb[0].mxu0
      %v2764 = vadd.f32 0.0, %v2763
      %v2765 = vpop.f32.mrb[0].mxu0
      %2766 = vmatprep.mubr.f32.mxu0 0.0
      %2767 = vmatmul.mubr.f32.gmra.mrb[0].mxu0 %v2695
      %v2768 = vpop.f32.mrb[0].mxu0
      %v2769 = vadd.f32 0.0, %v2768
      %v2770 = vpop.f32.mrb[0].mxu0
      %2771 = vdwg.mxu0
      %v2772 = vld [vmem:[%s3] sm:$0xff]
      %v2773 = vld [vmem:[%s3 + $0x8] sm:$0xff]
      %v2775 = vsel %vm1091, %v2677, 0
      %v2778 = vsel %vm1091, %v2764, 0
      %2780 = vmatprep.subr.mxu0 0.0
      %2781 = vmatpush1.xpose.msra.mxu0 %v2778
      %2782 = vmatprep.subr.mxu0 0.0
      %2783 = vmatpush1.xpose.msra.mxu0 0.0
      %2784 = vmatprep.subr.mxu0 0.0
      %2785 = vmatpush1.xpose.msra.mxu0 0.0
      %2786 = vmatprep.subr.mxu0 0.0
      %2787 = vmatpush1.xpose.msra.mxu0 0.0
      %2788 = vmatprep.subr.mxu0 0.0
      %2789 = vmatpush1.xpose.msra.mxu0 0.0
      %2790 = vmatprep.subr.mxu0 0.0
      %2791 = vmatpush1.xpose.msra.mxu0 0.0
      %2792 = vmatprep.subr.mxu0 0.0
      %2793 = vmatpush1.xpose.msra.mxu0 0.0
      %2794 = vmatprep.subr.mxu0 0.0
      %2795 = vmatpush1.xpose.msra.mxu0 0.0
      %2796 = vmatprep.subr.mxu0 0.0
      %2797 = vmatpush1.xpose.msra.mxu0 0.0
      %2798 = vmatprep.subr.mxu0 0.0
      %2799 = vmatpush1.xpose.msra.mxu0 0.0
      %2800 = vmatprep.subr.mxu0 0.0
      %2801 = vmatpush1.xpose.msra.mxu0 0.0
      %2802 = vmatprep.subr.mxu0 0.0
      %2803 = vmatpush1.xpose.msra.mxu0 0.0
      %2804 = vmatprep.subr.mxu0 0.0
      %2805 = vmatpush1.xpose.msra.mxu0 0.0
      %2806 = vmatprep.subr.mxu0 0.0
      %2807 = vmatpush1.xpose.msra.mxu0 0.0
      %2808 = vmatprep.subr.mxu0 0.0
      %2809 = vmatpush1.xpose.msra.mxu0 0.0
      %2810 = vmatprep.subr.mxu0 0.0
      %2811 = vmatpush1.xpose.msra.mxu0 0.0
      %2812 = vmatprep.subr.mxu0 0.0
      %2813 = vmatpush1.xpose.msra.mxu0 0.0
      %2814 = vmatprep.subr.mxu0 0.0
      %2815 = vmatpush1.xpose.msra.mxu0 0.0
      %2816 = vmatprep.subr.mxu0 0.0
      %2817 = vmatpush1.xpose.msra.mxu0 0.0
      %2818 = vmatprep.subr.mxu0 0.0
      %2819 = vmatpush1.xpose.msra.mxu0 0.0
      %2820 = vmatprep.subr.mxu0 0.0
      %2821 = vmatpush1.xpose.msra.mxu0 0.0
      %2822 = vmatprep.subr.mxu0 0.0
      %2823 = vmatpush1.xpose.msra.mxu0 0.0
      %2824 = vmatprep.subr.mxu0 0.0
      %2825 = vmatpush1.xpose.msra.mxu0 0.0
      %2826 = vmatprep.subr.mxu0 0.0
      %2827 = vmatpush1.xpose.msra.mxu0 0.0
      %2828 = vmatprep.subr.mxu0 0.0
      %2829 = vmatpush1.xpose.msra.mxu0 0.0
      %2830 = vmatprep.subr.mxu0 0.0
      %2831 = vmatpush1.xpose.msra.mxu0 0.0
      %2832 = vmatprep.subr.mxu0 0.0
      %2833 = vmatpush1.xpose.msra.mxu0 0.0
      %2834 = vmatprep.subr.mxu0 0.0
      %2835 = vmatpush1.xpose.msra.mxu0 0.0
      %2836 = vmatprep.subr.mxu0 0.0
      %2837 = vmatpush1.xpose.msra.mxu0 0.0
      %2838 = vmatprep.subr.mxu0 0.0
      %2839 = vmatpush1.xpose.msra.mxu0 0.0
      %2840 = vmatprep.subr.mxu0 0.0
      %2841 = vmatpush1.xpose.msra.mxu0 0.0
      %2842 = vmatprep.subr.mxu0 0.0
      %2843 = vmatpush1.xpose.msra.mxu0 0.0
      %2844 = vmatprep.mubr.f32.mxu0 0.0
      %2845 = vmatmul.mubr.f32.gmra.mrb[0].mxu0 %v2775
      %v2846 = vpop.f32.mrb[0].mxu0
      %v2847 = vadd.f32 0.0, %v2846
      %v2848 = vpop.f32.mrb[0].mxu0
      %2849 = vdwg.mxu0
      %v2850 = vmul.f32 %v2847, 0.35355338
      %v2851 = vadd.f32 %v2850, %v2772
      %v2852 = vsel %vm1091, %v2851, -inf
      %2853 = vmax.xlane.f32.xlu0 %v2852
      %v2854 = vpop.xlane.xlu0 %2853
      %v2855 = vsub.f32 %v2851, %v2854
      %v2856 = vmul.f32 %v2855, 1.442695
      %v2857 = vpow.pop %v2856
      %v2858 = vsel %vm1091, %v2857, 0.0
      %2859 = vadd.xlane.f32.xlu0 %v2858
      %v2860 = vpop.xlane.xlu0 %2859
      %v2861 = vrcp.pop %v2860
      %v2862 = vmul.f32 %v2857, %v2861
      %2863 = vrot.lane.b32.xlu0 %v2764, 96
      %v2864 = vpop.permute.xlu0 %2863
      %v2867 = vsel %vm1091, %v2862, 0
      %2869 = vmatprep.subr.mxu0 0.0
      %2870 = vmatpush1.msra.mxu0 %v2864
      %2871 = vmatprep.subr.mxu0 0.0
      %2872 = vmatpush1.msra.mxu0 0.0
      %2873 = vmatprep.subr.mxu0 0.0
      %2874 = vmatpush1.msra.mxu0 0.0
      %2875 = vmatprep.subr.mxu0 0.0
      %2876 = vmatpush1.msra.mxu0 0.0
      %2877 = vmatprep.subr.mxu0 0.0
      %2878 = vmatpush1.msra.mxu0 0.0
      %2879 = vmatprep.subr.mxu0 0.0
      %2880 = vmatpush1.msra.mxu0 0.0
      %2881 = vmatprep.subr.mxu0 0.0
      %2882 = vmatpush1.msra.mxu0 0.0
      %2883 = vmatprep.subr.mxu0 0.0
      %2884 = vmatpush1.msra.mxu0 0.0
      %2885 = vmatprep.subr.mxu0 0.0
      %2886 = vmatpush1.msra.mxu0 0.0
      %2887 = vmatprep.subr.mxu0 0.0
      %2888 = vmatpush1.msra.mxu0 0.0
      %2889 = vmatprep.subr.mxu0 0.0
      %2890 = vmatpush1.msra.mxu0 0.0
      %2891 = vmatprep.subr.mxu0 0.0
      %2892 = vmatpush1.msra.mxu0 0.0
      %2893 = vmatprep.subr.mxu0 0.0
      %2894 = vmatpush1.msra.mxu0 0.0
      %2895 = vmatprep.subr.mxu0 0.0
      %2896 = vmatpush1.msra.mxu0 0.0
      %2897 = vmatprep.subr.mxu0 0.0
      %2898 = vmatpush1.msra.mxu0 0.0
      %2899 = vmatprep.subr.mxu0 0.0
      %2900 = vmatpush1.msra.mxu0 0.0
      %2901 = vmatprep.subr.mxu0 0.0
      %2902 = vmatpush1.msra.mxu0 0.0
      %2903 = vmatprep.subr.mxu0 0.0
      %2904 = vmatpush1.msra.mxu0 0.0
      %2905 = vmatprep.subr.mxu0 0.0
      %2906 = vmatpush1.msra.mxu0 0.0
      %2907 = vmatprep.subr.mxu0 0.0
      %2908 = vmatpush1.msra.mxu0 0.0
      %2909 = vmatprep.subr.mxu0 0.0
      %2910 = vmatpush1.msra.mxu0 0.0
      %2911 = vmatprep.subr.mxu0 0.0
      %2912 = vmatpush1.msra.mxu0 0.0
      %2913 = vmatprep.subr.mxu0 0.0
      %2914 = vmatpush1.msra.mxu0 0.0
      %2915 = vmatprep.subr.mxu0 0.0
      %2916 = vmatpush1.msra.mxu0 0.0
      %2917 = vmatprep.subr.mxu0 0.0
      %2918 = vmatpush1.msra.mxu0 0.0
      %2919 = vmatprep.subr.mxu0 0.0
      %2920 = vmatpush1.msra.mxu0 0.0
      %2921 = vmatprep.subr.mxu0 0.0
      %2922 = vmatpush1.msra.mxu0 0.0
      %2923 = vmatprep.subr.mxu0 0.0
      %2924 = vmatpush1.msra.mxu0 0.0
      %2925 = vmatprep.subr.mxu0 0.0
      %2926 = vmatpush1.msra.mxu0 0.0
      %2927 = vmatprep.subr.mxu0 0.0
      %2928 = vmatpush1.msra.mxu0 0.0
      %2929 = vmatprep.subr.mxu0 0.0
      %2930 = vmatpush1.msra.mxu0 0.0
      %2931 = vmatprep.subr.mxu0 0.0
      %2932 = vmatpush1.msra.mxu0 0.0
      %2933 = vmatprep.mubr.f32.mxu0 0.0
      %2934 = vmatmul.mubr.f32.gmra.mrb[0].mxu0 %v2867
      %v2935 = vpop.f32.mrb[0].mxu0
      %v2936 = vadd.f32 0.0, %v2935
      %v2937 = vpop.f32.mrb[0].mxu0
      %2938 = vdwg.mxu0
      %2939 = vrot.lane.b32.xlu0 %v2677, 120
      %v2940 = vpop.permute.xlu0 %2939
      %2941 = vrot.lane.b32.xlu0 %v2764, 120
      %v2942 = vpop.permute.xlu0 %2941
      %v2943 = vsel %vm1091, %v2940, 0
      %v2945 = vsel %vm1091, %v2942, 0
      %2947 = vmatprep.subr.mxu0 0.0
      %2948 = vmatpush1.xpose.msra.mxu0 %v2945
      %2949 = vmatprep.subr.mxu0 0.0
      %2950 = vmatpush1.xpose.msra.mxu0 0.0
      %2951 = vmatprep.subr.mxu0 0.0
      %2952 = vmatpush1.xpose.msra.mxu0 0.0
      %2953 = vmatprep.subr.mxu0 0.0
      %2954 = vmatpush1.xpose.msra.mxu0 0.0
      %2955 = vmatprep.subr.mxu0 0.0
      %2956 = vmatpush1.xpose.msra.mxu0 0.0
      %2957 = vmatprep.subr.mxu0 0.0
      %2958 = vmatpush1.xpose.msra.mxu0 0.0
      %2959 = vmatprep.subr.mxu0 0.0
      %2960 = vmatpush1.xpose.msra.mxu0 0.0
      %2961 = vmatprep.subr.mxu0 0.0
      %2962 = vmatpush1.xpose.msra.mxu0 0.0
      %2963 = vmatprep.subr.mxu0 0.0
      %2964 = vmatpush1.xpose.msra.mxu0 0.0
      %2965 = vmatprep.subr.mxu0 0.0
      %2966 = vmatpush1.xpose.msra.mxu0 0.0
      %2967 = vmatprep.subr.mxu0 0.0
      %2968 = vmatpush1.xpose.msra.mxu0 0.0
      %2969 = vmatprep.subr.mxu0 0.0
      %2970 = vmatpush1.xpose.msra.mxu0 0.0
      %2971 = vmatprep.subr.mxu0 0.0
      %2972 = vmatpush1.xpose.msra.mxu0 0.0
      %2973 = vmatprep.subr.mxu0 0.0
      %2974 = vmatpush1.xpose.msra.mxu0 0.0
      %2975 = vmatprep.subr.mxu0 0.0
      %2976 = vmatpush1.xpose.msra.mxu0 0.0
      %2977 = vmatprep.subr.mxu0 0.0
      %2978 = vmatpush1.xpose.msra.mxu0 0.0
      %2979 = vmatprep.subr.mxu0 0.0
      %2980 = vmatpush1.xpose.msra.mxu0 0.0
      %2981 = vmatprep.subr.mxu0 0.0
      %2982 = vmatpush1.xpose.msra.mxu0 0.0
      %2983 = vmatprep.subr.mxu0 0.0
      %2984 = vmatpush1.xpose.msra.mxu0 0.0
      %2985 = vmatprep.subr.mxu0 0.0
      %2986 = vmatpush1.xpose.msra.mxu0 0.0
      %2987 = vmatprep.subr.mxu0 0.0
      %2988 = vmatpush1.xpose.msra.mxu0 0.0
      %2989 = vmatprep.subr.mxu0 0.0
      %2990 = vmatpush1.xpose.msra.mxu0 0.0
      %2991 = vmatprep.subr.mxu0 0.0
      %2992 = vmatpush1.xpose.msra.mxu0 0.0
      %2993 = vmatprep.subr.mxu0 0.0
      %2994 = vmatpush1.xpose.msra.mxu0 0.0
      %2995 = vmatprep.subr.mxu0 0.0
      %2996 = vmatpush1.xpose.msra.mxu0 0.0
      %2997 = vmatprep.subr.mxu0 0.0
      %2998 = vmatpush1.xpose.msra.mxu0 0.0
      %2999 = vmatprep.subr.mxu0 0.0
      %3000 = vmatpush1.xpose.msra.mxu0 0.0
      %3001 = vmatprep.subr.mxu0 0.0
      %3002 = vmatpush1.xpose.msra.mxu0 0.0
      %3003 = vmatprep.subr.mxu0 0.0
      %3004 = vmatpush1.xpose.msra.mxu0 0.0
      %3005 = vmatprep.subr.mxu0 0.0
      %3006 = vmatpush1.xpose.msra.mxu0 0.0
      %3007 = vmatprep.subr.mxu0 0.0
      %3008 = vmatpush1.xpose.msra.mxu0 0.0
      %3009 = vmatprep.subr.mxu0 0.0
      %3010 = vmatpush1.xpose.msra.mxu0 0.0
      %3011 = vmatprep.mubr.f32.mxu0 0.0
      %3012 = vmatmul.mubr.f32.gmra.mrb[0].mxu0 %v2943
      %v3013 = vpop.f32.mrb[0].mxu0
      %v3014 = vadd.f32 0.0, %v3013
      %v3015 = vpop.f32.mrb[0].mxu0
      %3016 = vdwg.mxu0
      %v3017 = vmul.f32 %v3014, 0.35355338
      %v3018 = vadd.f32 %v3017, %v2772
      %v3019 = vsel %vm1091, %v3018, -inf
      %3020 = vmax.xlane.f32.xlu0 %v3019
      %v3021 = vpop.xlane.xlu0 %3020
      %v3022 = vsub.f32 %v3018, %v3021
      %v3023 = vmul.f32 %v3022, 1.442695
      %v3024 = vpow.pop %v3023
      %v3025 = vsel %vm1091, %v3024, 0.0
      %3026 = vadd.xlane.f32.xlu0 %v3025
      %v3027 = vpop.xlane.xlu0 %3026
      %v3028 = vrcp.pop %v3027
      %v3029 = vmul.f32 %v3024, %v3028
      %3030 = vrot.lane.b32.xlu0 %v2764, 88
      %v3031 = vpop.permute.xlu0 %3030
      %v3034 = vsel %vm1091, %v3029, 0
      %3036 = vmatprep.subr.mxu0 0.0
      %3037 = vmatpush1.msra.mxu0 %v3031
      %3038 = vmatprep.subr.mxu0 0.0
      %3039 = vmatpush1.msra.mxu0 0.0
      %3040 = vmatprep.subr.mxu0 0.0
      %3041 = vmatpush1.msra.mxu0 0.0
      %3042 = vmatprep.subr.mxu0 0.0
      %3043 = vmatpush1.msra.mxu0 0.0
      %3044 = vmatprep.subr.mxu0 0.0
      %3045 = vmatpush1.msra.mxu0 0.0
      %3046 = vmatprep.subr.mxu0 0.0
      %3047 = vmatpush1.msra.mxu0 0.0
      %3048 = vmatprep.subr.mxu0 0.0
      %3049 = vmatpush1.msra.mxu0 0.0
      %3050 = vmatprep.subr.mxu0 0.0
      %3051 = vmatpush1.msra.mxu0 0.0
      %3052 = vmatprep.subr.mxu0 0.0
      %3053 = vmatpush1.msra.mxu0 0.0
      %3054 = vmatprep.subr.mxu0 0.0
      %3055 = vmatpush1.msra.mxu0 0.0
      %3056 = vmatprep.subr.mxu0 0.0
      %3057 = vmatpush1.msra.mxu0 0.0
      %3058 = vmatprep.subr.mxu0 0.0
      %3059 = vmatpush1.msra.mxu0 0.0
      %3060 = vmatprep.subr.mxu0 0.0
      %3061 = vmatpush1.msra.mxu0 0.0
      %3062 = vmatprep.subr.mxu0 0.0
      %3063 = vmatpush1.msra.mxu0 0.0
      %3064 = vmatprep.subr.mxu0 0.0
      %3065 = vmatpush1.msra.mxu0 0.0
      %3066 = vmatprep.subr.mxu0 0.0
      %3067 = vmatpush1.msra.mxu0 0.0
      %3068 = vmatprep.subr.mxu0 0.0
      %3069 = vmatpush1.msra.mxu0 0.0
      %3070 = vmatprep.subr.mxu0 0.0
      %3071 = vmatpush1.msra.mxu0 0.0
      %3072 = vmatprep.subr.mxu0 0.0
      %3073 = vmatpush1.msra.mxu0 0.0
      %3074 = vmatprep.subr.mxu0 0.0
      %3075 = vmatpush1.msra.mxu0 0.0
      %3076 = vmatprep.subr.mxu0 0.0
      %3077 = vmatpush1.msra.mxu0 0.0
      %3078 = vmatprep.subr.mxu0 0.0
      %3079 = vmatpush1.msra.mxu0 0.0
      %3080 = vmatprep.subr.mxu0 0.0
      %3081 = vmatpush1.msra.mxu0 0.0
      %3082 = vmatprep.subr.mxu0 0.0
      %3083 = vmatpush1.msra.mxu0 0.0
      %3084 = vmatprep.subr.mxu0 0.0
      %3085 = vmatpush1.msra.mxu0 0.0
      %3086 = vmatprep.subr.mxu0 0.0
      %3087 = vmatpush1.msra.mxu0 0.0
      %3088 = vmatprep.subr.mxu0 0.0
      %3089 = vmatpush1.msra.mxu0 0.0
      %3090 = vmatprep.subr.mxu0 0.0
      %3091 = vmatpush1.msra.mxu0 0.0
      %3092 = vmatprep.subr.mxu0 0.0
      %3093 = vmatpush1.msra.mxu0 0.0
      %3094 = vmatprep.subr.mxu0 0.0
      %3095 = vmatpush1.msra.mxu0 0.0
      %3096 = vmatprep.subr.mxu0 0.0
      %3097 = vmatpush1.msra.mxu0 0.0
      %3098 = vmatprep.subr.mxu0 0.0
      %3099 = vmatpush1.msra.mxu0 0.0
      %3100 = vmatprep.mubr.f32.mxu0 0.0
      %3101 = vmatmul.mubr.f32.gmra.mrb[0].mxu0 %v3034
      %v3102 = vpop.f32.mrb[0].mxu0
      %v3103 = vadd.f32 0.0, %v3102
      %v3104 = vpop.f32.mrb[0].mxu0
      %3105 = vdwg.mxu0
      %3106 = vrot.lane.b32.xlu0 %v2677, 112
      %v3107 = vpop.permute.xlu0 %3106
      %3108 = vrot.lane.b32.xlu0 %v2764, 112
      %v3109 = vpop.permute.xlu0 %3108
      %v3110 = vsel %vm1091, %v3107, 0
      %v3112 = vsel %vm1091, %v3109, 0
      %3114 = vmatprep.subr.mxu0 0.0
      %3115 = vmatpush1.xpose.msra.mxu0 %v3112
      %3116 = vmatprep.subr.mxu0 0.0
      %3117 = vmatpush1.xpose.msra.mxu0 0.0
      %3118 = vmatprep.subr.mxu0 0.0
      %3119 = vmatpush1.xpose.msra.mxu0 0.0
      %3120 = vmatprep.subr.mxu0 0.0
      %3121 = vmatpush1.xpose.msra.mxu0 0.0
      %3122 = vmatprep.subr.mxu0 0.0
      %3123 = vmatpush1.xpose.msra.mxu0 0.0
      %3124 = vmatprep.subr.mxu0 0.0
      %3125 = vmatpush1.xpose.msra.mxu0 0.0
      %3126 = vmatprep.subr.mxu0 0.0
      %3127 = vmatpush1.xpose.msra.mxu0 0.0
      %3128 = vmatprep.subr.mxu0 0.0
      %3129 = vmatpush1.xpose.msra.mxu0 0.0
      %3130 = vmatprep.subr.mxu0 0.0
      %3131 = vmatpush1.xpose.msra.mxu0 0.0
      %3132 = vmatprep.subr.mxu0 0.0
      %3133 = vmatpush1.xpose.msra.mxu0 0.0
      %3134 = vmatprep.subr.mxu0 0.0
      %3135 = vmatpush1.xpose.msra.mxu0 0.0
      %3136 = vmatprep.subr.mxu0 0.0
      %3137 = vmatpush1.xpose.msra.mxu0 0.0
      %3138 = vmatprep.subr.mxu0 0.0
      %3139 = vmatpush1.xpose.msra.mxu0 0.0
      %3140 = vmatprep.subr.mxu0 0.0
      %3141 = vmatpush1.xpose.msra.mxu0 0.0
      %3142 = vmatprep.subr.mxu0 0.0
      %3143 = vmatpush1.xpose.msra.mxu0 0.0
      %3144 = vmatprep.subr.mxu0 0.0
      %3145 = vmatpush1.xpose.msra.mxu0 0.0
      %3146 = vmatprep.subr.mxu0 0.0
      %3147 = vmatpush1.xpose.msra.mxu0 0.0
      %3148 = vmatprep.subr.mxu0 0.0
      %3149 = vmatpush1.xpose.msra.mxu0 0.0
      %3150 = vmatprep.subr.mxu0 0.0
      %3151 = vmatpush1.xpose.msra.mxu0 0.0
      %3152 = vmatprep.subr.mxu0 0.0
      %3153 = vmatpush1.xpose.msra.mxu0 0.0
      %3154 = vmatprep.subr.mxu0 0.0
      %3155 = vmatpush1.xpose.msra.mxu0 0.0
      %3156 = vmatprep.subr.mxu0 0.0
      %3157 = vmatpush1.xpose.msra.mxu0 0.0
      %3158 = vmatprep.subr.mxu0 0.0
      %3159 = vmatpush1.xpose.msra.mxu0 0.0
      %3160 = vmatprep.subr.mxu0 0.0
      %3161 = vmatpush1.xpose.msra.mxu0 0.0
      %3162 = vmatprep.subr.mxu0 0.0
      %3163 = vmatpush1.xpose.msra.mxu0 0.0
      %3164 = vmatprep.subr.mxu0 0.0
      %3165 = vmatpush1.xpose.msra.mxu0 0.0
      %3166 = vmatprep.subr.mxu0 0.0
      %3167 = vmatpush1.xpose.msra.mxu0 0.0
      %3168 = vmatprep.subr.mxu0 0.0
      %3169 = vmatpush1.xpose.msra.mxu0 0.0
      %3170 = vmatprep.subr.mxu0 0.0
      %3171 = vmatpush1.xpose.msra.mxu0 0.0
      %3172 = vmatprep.subr.mxu0 0.0
      %3173 = vmatpush1.xpose.msra.mxu0 0.0
      %3174 = vmatprep.subr.mxu0 0.0
      %3175 = vmatpush1.xpose.msra.mxu0 0.0
      %3176 = vmatprep.subr.mxu0 0.0
      %3177 = vmatpush1.xpose.msra.mxu0 0.0
      %3178 = vmatprep.mubr.f32.mxu0 0.0
      %3179 = vmatmul.mubr.f32.gmra.mrb[0].mxu0 %v3110
      %v3180 = vpop.f32.mrb[0].mxu0
      %v3181 = vadd.f32 0.0, %v3180
      %v3182 = vpop.f32.mrb[0].mxu0
      %3183 = vdwg.mxu0
      %v3184 = vmul.f32 %v3181, 0.35355338
      %v3185 = vadd.f32 %v3184, %v2772
      %v3186 = vsel %vm1091, %v3185, -inf
      %3187 = vmax.xlane.f32.xlu0 %v3186
      %v3188 = vpop.xlane.xlu0 %3187
      %v3189 = vsub.f32 %v3185, %v3188
      %v3190 = vmul.f32 %v3189, 1.442695
      %v3191 = vpow.pop %v3190
      %v3192 = vsel %vm1091, %v3191, 0.0
      %3193 = vadd.xlane.f32.xlu0 %v3192
      %v3194 = vpop.xlane.xlu0 %3193
      %v3195 = vrcp.pop %v3194
      %v3196 = vmul.f32 %v3191, %v3195
      %3197 = vrot.lane.b32.xlu0 %v2764, 80
      %v3198 = vpop.permute.xlu0 %3197
      %v3201 = vsel %vm1091, %v3196, 0
      %3203 = vmatprep.subr.mxu0 0.0
      %3204 = vmatpush1.msra.mxu0 %v3198
      %3205 = vmatprep.subr.mxu0 0.0
      %3206 = vmatpush1.msra.mxu0 0.0
      %3207 = vmatprep.subr.mxu0 0.0
      %3208 = vmatpush1.msra.mxu0 0.0
      %3209 = vmatprep.subr.mxu0 0.0
      %3210 = vmatpush1.msra.mxu0 0.0
      %3211 = vmatprep.subr.mxu0 0.0
      %3212 = vmatpush1.msra.mxu0 0.0
      %3213 = vmatprep.subr.mxu0 0.0
      %3214 = vmatpush1.msra.mxu0 0.0
      %3215 = vmatprep.subr.mxu0 0.0
      %3216 = vmatpush1.msra.mxu0 0.0
      %3217 = vmatprep.subr.mxu0 0.0
      %3218 = vmatpush1.msra.mxu0 0.0
      %3219 = vmatprep.subr.mxu0 0.0
      %3220 = vmatpush1.msra.mxu0 0.0
      %3221 = vmatprep.subr.mxu0 0.0
      %3222 = vmatpush1.msra.mxu0 0.0
      %3223 = vmatprep.subr.mxu0 0.0
      %3224 = vmatpush1.msra.mxu0 0.0
      %3225 = vmatprep.subr.mxu0 0.0
      %3226 = vmatpush1.msra.mxu0 0.0
      %3227 = vmatprep.subr.mxu0 0.0
      %3228 = vmatpush1.msra.mxu0 0.0
      %3229 = vmatprep.subr.mxu0 0.0
      %3230 = vmatpush1.msra.mxu0 0.0
      %3231 = vmatprep.subr.mxu0 0.0
      %3232 = vmatpush1.msra.mxu0 0.0
      %3233 = vmatprep.subr.mxu0 0.0
      %3234 = vmatpush1.msra.mxu0 0.0
      %3235 = vmatprep.subr.mxu0 0.0
      %3236 = vmatpush1.msra.mxu0 0.0
      %3237 = vmatprep.subr.mxu0 0.0
      %3238 = vmatpush1.msra.mxu0 0.0
      %3239 = vmatprep.subr.mxu0 0.0
      %3240 = vmatpush1.msra.mxu0 0.0
      %3241 = vmatprep.subr.mxu0 0.0
      %3242 = vmatpush1.msra.mxu0 0.0
      %3243 = vmatprep.subr.mxu0 0.0
      %3244 = vmatpush1.msra.mxu0 0.0
      %3245 = vmatprep.subr.mxu0 0.0
      %3246 = vmatpush1.msra.mxu0 0.0
      %3247 = vmatprep.subr.mxu0 0.0
      %3248 = vmatpush1.msra.mxu0 0.0
      %3249 = vmatprep.subr.mxu0 0.0
      %3250 = vmatpush1.msra.mxu0 0.0
      %3251 = vmatprep.subr.mxu0 0.0
      %3252 = vmatpush1.msra.mxu0 0.0
      %3253 = vmatprep.subr.mxu0 0.0
      %3254 = vmatpush1.msra.mxu0 0.0
      %3255 = vmatprep.subr.mxu0 0.0
      %3256 = vmatpush1.msra.mxu0 0.0
      %3257 = vmatprep.subr.mxu0 0.0
      %3258 = vmatpush1.msra.mxu0 0.0
      %3259 = vmatprep.subr.mxu0 0.0
      %3260 = vmatpush1.msra.mxu0 0.0
      %3261 = vmatprep.subr.mxu0 0.0
      %3262 = vmatpush1.msra.mxu0 0.0
      %3263 = vmatprep.subr.mxu0 0.0
      %3264 = vmatpush1.msra.mxu0 0.0
      %3265 = vmatprep.subr.mxu0 0.0
      %3266 = vmatpush1.msra.mxu0 0.0
      %3267 = vmatprep.mubr.f32.mxu0 0.0
      %3268 = vmatmul.mubr.f32.gmra.mrb[0].mxu0 %v3201
      %v3269 = vpop.f32.mrb[0].mxu0
      %v3270 = vadd.f32 0.0, %v3269
      %v3271 = vpop.f32.mrb[0].mxu0
      %3272 = vdwg.mxu0
      %3273 = vrot.lane.b32.xlu0 %v2677, 104
      %v3274 = vpop.permute.xlu0 %3273
      %3275 = vrot.lane.b32.xlu0 %v2764, 104
      %v3276 = vpop.permute.xlu0 %3275
      %v3277 = vsel %vm1091, %v3274, 0
      %v3279 = vsel %vm1091, %v3276, 0
      %3281 = vmatprep.subr.mxu0 0.0
      %3282 = vmatpush1.xpose.msra.mxu0 %v3279
      %3283 = vmatprep.subr.mxu0 0.0
      %3284 = vmatpush1.xpose.msra.mxu0 0.0
      %3285 = vmatprep.subr.mxu0 0.0
      %3286 = vmatpush1.xpose.msra.mxu0 0.0
      %3287 = vmatprep.subr.mxu0 0.0
      %3288 = vmatpush1.xpose.msra.mxu0 0.0
      %3289 = vmatprep.subr.mxu0 0.0
      %3290 = vmatpush1.xpose.msra.mxu0 0.0
      %3291 = vmatprep.subr.mxu0 0.0
      %3292 = vmatpush1.xpose.msra.mxu0 0.0
      %3293 = vmatprep.subr.mxu0 0.0
      %3294 = vmatpush1.xpose.msra.mxu0 0.0
      %3295 = vmatprep.subr.mxu0 0.0
      %3296 = vmatpush1.xpose.msra.mxu0 0.0
      %3297 = vmatprep.subr.mxu0 0.0
      %3298 = vmatpush1.xpose.msra.mxu0 0.0
      %3299 = vmatprep.subr.mxu0 0.0
      %3300 = vmatpush1.xpose.msra.mxu0 0.0
      %3301 = vmatprep.subr.mxu0 0.0
      %3302 = vmatpush1.xpose.msra.mxu0 0.0
      %3303 = vmatprep.subr.mxu0 0.0
      %3304 = vmatpush1.xpose.msra.mxu0 0.0
      %3305 = vmatprep.subr.mxu0 0.0
      %3306 = vmatpush1.xpose.msra.mxu0 0.0
      %3307 = vmatprep.subr.mxu0 0.0
      %3308 = vmatpush1.xpose.msra.mxu0 0.0
      %3309 = vmatprep.subr.mxu0 0.0
      %3310 = vmatpush1.xpose.msra.mxu0 0.0
      %3311 = vmatprep.subr.mxu0 0.0
      %3312 = vmatpush1.xpose.msra.mxu0 0.0
      %3313 = vmatprep.subr.mxu0 0.0
      %3314 = vmatpush1.xpose.msra.mxu0 0.0
      %3315 = vmatprep.subr.mxu0 0.0
      %3316 = vmatpush1.xpose.msra.mxu0 0.0
      %3317 = vmatprep.subr.mxu0 0.0
      %3318 = vmatpush1.xpose.msra.mxu0 0.0
      %3319 = vmatprep.subr.mxu0 0.0
      %3320 = vmatpush1.xpose.msra.mxu0 0.0
      %3321 = vmatprep.subr.mxu0 0.0
      %3322 = vmatpush1.xpose.msra.mxu0 0.0
      %3323 = vmatprep.subr.mxu0 0.0
      %3324 = vmatpush1.xpose.msra.mxu0 0.0
      %3325 = vmatprep.subr.mxu0 0.0
      %3326 = vmatpush1.xpose.msra.mxu0 0.0
      %3327 = vmatprep.subr.mxu0 0.0
      %3328 = vmatpush1.xpose.msra.mxu0 0.0
      %3329 = vmatprep.subr.mxu0 0.0
      %3330 = vmatpush1.xpose.msra.mxu0 0.0
      %3331 = vmatprep.subr.mxu0 0.0
      %3332 = vmatpush1.xpose.msra.mxu0 0.0
      %3333 = vmatprep.subr.mxu0 0.0
      %3334 = vmatpush1.xpose.msra.mxu0 0.0
      %3335 = vmatprep.subr.mxu0 0.0
      %3336 = vmatpush1.xpose.msra.mxu0 0.0
      %3337 = vmatprep.subr.mxu0 0.0
      %3338 = vmatpush1.xpose.msra.mxu0 0.0
      %3339 = vmatprep.subr.mxu0 0.0
      %3340 = vmatpush1.xpose.msra.mxu0 0.0
      %3341 = vmatprep.subr.mxu0 0.0
      %3342 = vmatpush1.xpose.msra.mxu0 0.0
      %3343 = vmatprep.subr.mxu0 0.0
      %3344 = vmatpush1.xpose.msra.mxu0 0.0
      %3345 = vmatprep.mubr.f32.mxu0 0.0
      %3346 = vmatmul.mubr.f32.gmra.mrb[0].mxu0 %v3277
      %v3347 = vpop.f32.mrb[0].mxu0
      %v3348 = vadd.f32 0.0, %v3347
      %v3349 = vpop.f32.mrb[0].mxu0
      %3350 = vdwg.mxu0
      %v3351 = vmul.f32 %v3348, 0.35355338
      %v3352 = vadd.f32 %v3351, %v2772
      %v3353 = vsel %vm1091, %v3352, -inf
      %3354 = vmax.xlane.f32.xlu0 %v3353
      %v3355 = vpop.xlane.xlu0 %3354
      %v3356 = vsub.f32 %v3352, %v3355
      %v3357 = vmul.f32 %v3356, 1.442695
      %v3358 = vpow.pop %v3357
      %v3359 = vsel %vm1091, %v3358, 0.0
      %3360 = vadd.xlane.f32.xlu0 %v3359
      %v3361 = vpop.xlane.xlu0 %3360
      %v3362 = vrcp.pop %v3361
      %v3363 = vmul.f32 %v3358, %v3362
      %3364 = vrot.lane.b32.xlu0 %v2764, 72
      %v3365 = vpop.permute.xlu0 %3364
      %v3368 = vsel %vm1091, %v3363, 0
      %3370 = vmatprep.subr.mxu0 0.0
      %3371 = vmatpush1.msra.mxu0 %v3365
      %3372 = vmatprep.subr.mxu0 0.0
      %3373 = vmatpush1.msra.mxu0 0.0
      %3374 = vmatprep.subr.mxu0 0.0
      %3375 = vmatpush1.msra.mxu0 0.0
      %3376 = vmatprep.subr.mxu0 0.0
      %3377 = vmatpush1.msra.mxu0 0.0
      %3378 = vmatprep.subr.mxu0 0.0
      %3379 = vmatpush1.msra.mxu0 0.0
      %3380 = vmatprep.subr.mxu0 0.0
      %3381 = vmatpush1.msra.mxu0 0.0
      %3382 = vmatprep.subr.mxu0 0.0
      %3383 = vmatpush1.msra.mxu0 0.0
      %3384 = vmatprep.subr.mxu0 0.0
      %3385 = vmatpush1.msra.mxu0 0.0
      %3386 = vmatprep.subr.mxu0 0.0
      %3387 = vmatpush1.msra.mxu0 0.0
      %3388 = vmatprep.subr.mxu0 0.0
      %3389 = vmatpush1.msra.mxu0 0.0
      %3390 = vmatprep.subr.mxu0 0.0
      %3391 = vmatpush1.msra.mxu0 0.0
      %3392 = vmatprep.subr.mxu0 0.0
      %3393 = vmatpush1.msra.mxu0 0.0
      %3394 = vmatprep.subr.mxu0 0.0
      %3395 = vmatpush1.msra.mxu0 0.0
      %3396 = vmatprep.subr.mxu0 0.0
      %3397 = vmatpush1.msra.mxu0 0.0
      %3398 = vmatprep.subr.mxu0 0.0
      %3399 = vmatpush1.msra.mxu0 0.0
      %3400 = vmatprep.subr.mxu0 0.0
      %3401 = vmatpush1.msra.mxu0 0.0
      %3402 = vmatprep.subr.mxu0 0.0
      %3403 = vmatpush1.msra.mxu0 0.0
      %3404 = vmatprep.subr.mxu0 0.0
      %3405 = vmatpush1.msra.mxu0 0.0
      %3406 = vmatprep.subr.mxu0 0.0
      %3407 = vmatpush1.msra.mxu0 0.0
      %3408 = vmatprep.subr.mxu0 0.0
      %3409 = vmatpush1.msra.mxu0 0.0
      %3410 = vmatprep.subr.mxu0 0.0
      %3411 = vmatpush1.msra.mxu0 0.0
      %3412 = vmatprep.subr.mxu0 0.0
      %3413 = vmatpush1.msra.mxu0 0.0
      %3414 = vmatprep.subr.mxu0 0.0
      %3415 = vmatpush1.msra.mxu0 0.0
      %3416 = vmatprep.subr.mxu0 0.0
      %3417 = vmatpush1.msra.mxu0 0.0
      %3418 = vmatprep.subr.mxu0 0.0
      %3419 = vmatpush1.msra.mxu0 0.0
      %3420 = vmatprep.subr.mxu0 0.0
      %3421 = vmatpush1.msra.mxu0 0.0
      %3422 = vmatprep.subr.mxu0 0.0
      %3423 = vmatpush1.msra.mxu0 0.0
      %3424 = vmatprep.subr.mxu0 0.0
      %3425 = vmatpush1.msra.mxu0 0.0
      %3426 = vmatprep.subr.mxu0 0.0
      %3427 = vmatpush1.msra.mxu0 0.0
      %3428 = vmatprep.subr.mxu0 0.0
      %3429 = vmatpush1.msra.mxu0 0.0
      %3430 = vmatprep.subr.mxu0 0.0
      %3431 = vmatpush1.msra.mxu0 0.0
      %3432 = vmatprep.subr.mxu0 0.0
      %3433 = vmatpush1.msra.mxu0 0.0
      %3434 = vmatprep.mubr.f32.mxu0 0.0
      %3435 = vmatmul.mubr.f32.gmra.mrb[0].mxu0 %v3368
      %v3436 = vpop.f32.mrb[0].mxu0
      %v3437 = vadd.f32 0.0, %v3436
      %v3438 = vpop.f32.mrb[0].mxu0
      %3439 = vdwg.mxu0
      %3441 = vrot.lane.b32.xlu0 %v3103, 8
      %v3442 = vpop.permute.xlu0 %3441
      %3445 = vrot.lane.b32.xlu0 %v3270, 16
      %v3446 = vpop.permute.xlu0 %3445
      %3449 = vrot.lane.b32.xlu0 %v3437, 24
      %v3450 = vpop.permute.xlu0 %3449
      %v3452 = vsel %vm1091, %v2936, %v3442
      %v3453 = vsel %vm1769, %v3452, %v3446
      %v3454 = vsel %vm1771, %v3453, %v3450
      %v3456 = vsel %vm1091, %v2682, 0
      %v3459 = vsel %vm1091, %v2769, 0
      %3461 = vmatprep.subr.mxu0 0.0
      %3462 = vmatpush1.xpose.msra.mxu0 %v3459
      %3463 = vmatprep.subr.mxu0 0.0
      %3464 = vmatpush1.xpose.msra.mxu0 0.0
      %3465 = vmatprep.subr.mxu0 0.0
      %3466 = vmatpush1.xpose.msra.mxu0 0.0
      %3467 = vmatprep.subr.mxu0 0.0
      %3468 = vmatpush1.xpose.msra.mxu0 0.0
      %3469 = vmatprep.subr.mxu0 0.0
      %3470 = vmatpush1.xpose.msra.mxu0 0.0
      %3471 = vmatprep.subr.mxu0 0.0
      %3472 = vmatpush1.xpose.msra.mxu0 0.0
      %3473 = vmatprep.subr.mxu0 0.0
      %3474 = vmatpush1.xpose.msra.mxu0 0.0
      %3475 = vmatprep.subr.mxu0 0.0
      %3476 = vmatpush1.xpose.msra.mxu0 0.0
      %3477 = vmatprep.subr.mxu0 0.0
      %3478 = vmatpush1.xpose.msra.mxu0 0.0
      %3479 = vmatprep.subr.mxu0 0.0
      %3480 = vmatpush1.xpose.msra.mxu0 0.0
      %3481 = vmatprep.subr.mxu0 0.0
      %3482 = vmatpush1.xpose.msra.mxu0 0.0
      %3483 = vmatprep.subr.mxu0 0.0
      %3484 = vmatpush1.xpose.msra.mxu0 0.0
      %3485 = vmatprep.subr.mxu0 0.0
      %3486 = vmatpush1.xpose.msra.mxu0 0.0
      %3487 = vmatprep.subr.mxu0 0.0
      %3488 = vmatpush1.xpose.msra.mxu0 0.0
      %3489 = vmatprep.subr.mxu0 0.0
      %3490 = vmatpush1.xpose.msra.mxu0 0.0
      %3491 = vmatprep.subr.mxu0 0.0
      %3492 = vmatpush1.xpose.msra.mxu0 0.0
      %3493 = vmatprep.subr.mxu0 0.0
      %3494 = vmatpush1.xpose.msra.mxu0 0.0
      %3495 = vmatprep.subr.mxu0 0.0
      %3496 = vmatpush1.xpose.msra.mxu0 0.0
      %3497 = vmatprep.subr.mxu0 0.0
      %3498 = vmatpush1.xpose.msra.mxu0 0.0
      %3499 = vmatprep.subr.mxu0 0.0
      %3500 = vmatpush1.xpose.msra.mxu0 0.0
      %3501 = vmatprep.subr.mxu0 0.0
      %3502 = vmatpush1.xpose.msra.mxu0 0.0
      %3503 = vmatprep.subr.mxu0 0.0
      %3504 = vmatpush1.xpose.msra.mxu0 0.0
      %3505 = vmatprep.subr.mxu0 0.0
      %3506 = vmatpush1.xpose.msra.mxu0 0.0
      %3507 = vmatprep.subr.mxu0 0.0
      %3508 = vmatpush1.xpose.msra.mxu0 0.0
      %3509 = vmatprep.subr.mxu0 0.0
      %3510 = vmatpush1.xpose.msra.mxu0 0.0
      %3511 = vmatprep.subr.mxu0 0.0
      %3512 = vmatpush1.xpose.msra.mxu0 0.0
      %3513 = vmatprep.subr.mxu0 0.0
      %3514 = vmatpush1.xpose.msra.mxu0 0.0
      %3515 = vmatprep.subr.mxu0 0.0
      %3516 = vmatpush1.xpose.msra.mxu0 0.0
      %3517 = vmatprep.subr.mxu0 0.0
      %3518 = vmatpush1.xpose.msra.mxu0 0.0
      %3519 = vmatprep.subr.mxu0 0.0
      %3520 = vmatpush1.xpose.msra.mxu0 0.0
      %3521 = vmatprep.subr.mxu0 0.0
      %3522 = vmatpush1.xpose.msra.mxu0 0.0
      %3523 = vmatprep.subr.mxu0 0.0
      %3524 = vmatpush1.xpose.msra.mxu0 0.0
      %3525 = vmatprep.mubr.f32.mxu0 0.0
      %3526 = vmatmul.mubr.f32.gmra.mrb[0].mxu0 %v3456
      %v3527 = vpop.f32.mrb[0].mxu0
      %v3528 = vadd.f32 0.0, %v3527
      %v3529 = vpop.f32.mrb[0].mxu0
      %3530 = vdwg.mxu0
      %v3531 = vmul.f32 %v3528, 0.35355338
      %v3532 = vadd.f32 %v3531, %v2773
      %v3533 = vsel %vm1091, %v3532, -inf
      %3534 = vmax.xlane.f32.xlu0 %v3533
      %v3535 = vpop.xlane.xlu0 %3534
      %v3536 = vsub.f32 %v3532, %v3535
      %v3537 = vmul.f32 %v3536, 1.442695
      %v3538 = vpow.pop %v3537
      %v3539 = vsel %vm1091, %v3538, 0.0
      %3540 = vadd.xlane.f32.xlu0 %v3539
      %v3541 = vpop.xlane.xlu0 %3540
      %v3542 = vrcp.pop %v3541
      %v3543 = vmul.f32 %v3538, %v3542
      %3544 = vrot.lane.b32.xlu0 %v2769, 96
      %v3545 = vpop.permute.xlu0 %3544
      %v3548 = vsel %vm1091, %v3543, 0
      %3550 = vmatprep.subr.mxu0 0.0
      %3551 = vmatpush1.msra.mxu0 %v3545
      %3552 = vmatprep.subr.mxu0 0.0
      %3553 = vmatpush1.msra.mxu0 0.0
      %3554 = vmatprep.subr.mxu0 0.0
      %3555 = vmatpush1.msra.mxu0 0.0
      %3556 = vmatprep.subr.mxu0 0.0
      %3557 = vmatpush1.msra.mxu0 0.0
      %3558 = vmatprep.subr.mxu0 0.0
      %3559 = vmatpush1.msra.mxu0 0.0
      %3560 = vmatprep.subr.mxu0 0.0
      %3561 = vmatpush1.msra.mxu0 0.0
      %3562 = vmatprep.subr.mxu0 0.0
      %3563 = vmatpush1.msra.mxu0 0.0
      %3564 = vmatprep.subr.mxu0 0.0
      %3565 = vmatpush1.msra.mxu0 0.0
      %3566 = vmatprep.subr.mxu0 0.0
      %3567 = vmatpush1.msra.mxu0 0.0
      %3568 = vmatprep.subr.mxu0 0.0
      %3569 = vmatpush1.msra.mxu0 0.0
      %3570 = vmatprep.subr.mxu0 0.0
      %3571 = vmatpush1.msra.mxu0 0.0
      %3572 = vmatprep.subr.mxu0 0.0
      %3573 = vmatpush1.msra.mxu0 0.0
      %3574 = vmatprep.subr.mxu0 0.0
      %3575 = vmatpush1.msra.mxu0 0.0
      %3576 = vmatprep.subr.mxu0 0.0
      %3577 = vmatpush1.msra.mxu0 0.0
      %3578 = vmatprep.subr.mxu0 0.0
      %3579 = vmatpush1.msra.mxu0 0.0
      %3580 = vmatprep.subr.mxu0 0.0
      %3581 = vmatpush1.msra.mxu0 0.0
      %3582 = vmatprep.subr.mxu0 0.0
      %3583 = vmatpush1.msra.mxu0 0.0
      %3584 = vmatprep.subr.mxu0 0.0
      %3585 = vmatpush1.msra.mxu0 0.0
      %3586 = vmatprep.subr.mxu0 0.0
      %3587 = vmatpush1.msra.mxu0 0.0
      %3588 = vmatprep.subr.mxu0 0.0
      %3589 = vmatpush1.msra.mxu0 0.0
      %3590 = vmatprep.subr.mxu0 0.0
      %3591 = vmatpush1.msra.mxu0 0.0
      %3592 = vmatprep.subr.mxu0 0.0
      %3593 = vmatpush1.msra.mxu0 0.0
      %3594 = vmatprep.subr.mxu0 0.0
      %3595 = vmatpush1.msra.mxu0 0.0
      %3596 = vmatprep.subr.mxu0 0.0
      %3597 = vmatpush1.msra.mxu0 0.0
      %3598 = vmatprep.subr.mxu0 0.0
      %3599 = vmatpush1.msra.mxu0 0.0
      %3600 = vmatprep.subr.mxu0 0.0
      %3601 = vmatpush1.msra.mxu0 0.0
      %3602 = vmatprep.subr.mxu0 0.0
      %3603 = vmatpush1.msra.mxu0 0.0
      %3604 = vmatprep.subr.mxu0 0.0
      %3605 = vmatpush1.msra.mxu0 0.0
      %3606 = vmatprep.subr.mxu0 0.0
      %3607 = vmatpush1.msra.mxu0 0.0
      %3608 = vmatprep.subr.mxu0 0.0
      %3609 = vmatpush1.msra.mxu0 0.0
      %3610 = vmatprep.subr.mxu0 0.0
      %3611 = vmatpush1.msra.mxu0 0.0
      %3612 = vmatprep.subr.mxu0 0.0
      %3613 = vmatpush1.msra.mxu0 0.0
      %3614 = vmatprep.mubr.f32.mxu0 0.0
      %3615 = vmatmul.mubr.f32.gmra.mrb[0].mxu0 %v3548
      %v3616 = vpop.f32.mrb[0].mxu0
      %v3617 = vadd.f32 0.0, %v3616
      %v3618 = vpop.f32.mrb[0].mxu0
      %3619 = vdwg.mxu0
      %3620 = vrot.lane.b32.xlu0 %v2682, 120
      %v3621 = vpop.permute.xlu0 %3620
      %3622 = vrot.lane.b32.xlu0 %v2769, 120
      %v3623 = vpop.permute.xlu0 %3622
      %v3624 = vsel %vm1091, %v3621, 0
      %v3626 = vsel %vm1091, %v3623, 0
      %3628 = vmatprep.subr.mxu0 0.0
      %3629 = vmatpush1.xpose.msra.mxu0 %v3626
      %3630 = vmatprep.subr.mxu0 0.0
      %3631 = vmatpush1.xpose.msra.mxu0 0.0
      %3632 = vmatprep.subr.mxu0 0.0
      %3633 = vmatpush1.xpose.msra.mxu0 0.0
      %3634 = vmatprep.subr.mxu0 0.0
      %3635 = vmatpush1.xpose.msra.mxu0 0.0
      %3636 = vmatprep.subr.mxu0 0.0
      %3637 = vmatpush1.xpose.msra.mxu0 0.0
      %3638 = vmatprep.subr.mxu0 0.0
      %3639 = vmatpush1.xpose.msra.mxu0 0.0
      %3640 = vmatprep.subr.mxu0 0.0
      %3641 = vmatpush1.xpose.msra.mxu0 0.0
      %3642 = vmatprep.subr.mxu0 0.0
      %3643 = vmatpush1.xpose.msra.mxu0 0.0
      %3644 = vmatprep.subr.mxu0 0.0
      %3645 = vmatpush1.xpose.msra.mxu0 0.0
      %3646 = vmatprep.subr.mxu0 0.0
      %3647 = vmatpush1.xpose.msra.mxu0 0.0
      %3648 = vmatprep.subr.mxu0 0.0
      %3649 = vmatpush1.xpose.msra.mxu0 0.0
      %3650 = vmatprep.subr.mxu0 0.0
      %3651 = vmatpush1.xpose.msra.mxu0 0.0
      %3652 = vmatprep.subr.mxu0 0.0
      %3653 = vmatpush1.xpose.msra.mxu0 0.0
      %3654 = vmatprep.subr.mxu0 0.0
      %3655 = vmatpush1.xpose.msra.mxu0 0.0
      %3656 = vmatprep.subr.mxu0 0.0
      %3657 = vmatpush1.xpose.msra.mxu0 0.0
      %3658 = vmatprep.subr.mxu0 0.0
      %3659 = vmatpush1.xpose.msra.mxu0 0.0
      %3660 = vmatprep.subr.mxu0 0.0
      %3661 = vmatpush1.xpose.msra.mxu0 0.0
      %3662 = vmatprep.subr.mxu0 0.0
      %3663 = vmatpush1.xpose.msra.mxu0 0.0
      %3664 = vmatprep.subr.mxu0 0.0
      %3665 = vmatpush1.xpose.msra.mxu0 0.0
      %3666 = vmatprep.subr.mxu0 0.0
      %3667 = vmatpush1.xpose.msra.mxu0 0.0
      %3668 = vmatprep.subr.mxu0 0.0
      %3669 = vmatpush1.xpose.msra.mxu0 0.0
      %3670 = vmatprep.subr.mxu0 0.0
      %3671 = vmatpush1.xpose.msra.mxu0 0.0
      %3672 = vmatprep.subr.mxu0 0.0
      %3673 = vmatpush1.xpose.msra.mxu0 0.0
      %3674 = vmatprep.subr.mxu0 0.0
      %3675 = vmatpush1.xpose.msra.mxu0 0.0
      %3676 = vmatprep.subr.mxu0 0.0
      %3677 = vmatpush1.xpose.msra.mxu0 0.0
      %3678 = vmatprep.subr.mxu0 0.0
      %3679 = vmatpush1.xpose.msra.mxu0 0.0
      %3680 = vmatprep.subr.mxu0 0.0
      %3681 = vmatpush1.xpose.msra.mxu0 0.0
      %3682 = vmatprep.subr.mxu0 0.0
      %3683 = vmatpush1.xpose.msra.mxu0 0.0
      %3684 = vmatprep.subr.mxu0 0.0
      %3685 = vmatpush1.xpose.msra.mxu0 0.0
      %3686 = vmatprep.subr.mxu0 0.0
      %3687 = vmatpush1.xpose.msra.mxu0 0.0
      %3688 = vmatprep.subr.mxu0 0.0
      %3689 = vmatpush1.xpose.msra.mxu0 0.0
      %3690 = vmatprep.subr.mxu0 0.0
      %3691 = vmatpush1.xpose.msra.mxu0 0.0
      %3692 = vmatprep.mubr.f32.mxu0 0.0
      %3693 = vmatmul.mubr.f32.gmra.mrb[0].mxu0 %v3624
      %v3694 = vpop.f32.mrb[0].mxu0
      %v3695 = vadd.f32 0.0, %v3694
      %v3696 = vpop.f32.mrb[0].mxu0
      %3697 = vdwg.mxu0
      %v3698 = vmul.f32 %v3695, 0.35355338
      %v3699 = vadd.f32 %v3698, %v2773
      %v3700 = vsel %vm1091, %v3699, -inf
      %3701 = vmax.xlane.f32.xlu0 %v3700
      %v3702 = vpop.xlane.xlu0 %3701
      %v3703 = vsub.f32 %v3699, %v3702
      %v3704 = vmul.f32 %v3703, 1.442695
      %v3705 = vpow.pop %v3704
      %v3706 = vsel %vm1091, %v3705, 0.0
      %3707 = vadd.xlane.f32.xlu0 %v3706
      %v3708 = vpop.xlane.xlu0 %3707
      %v3709 = vrcp.pop %v3708
      %v3710 = vmul.f32 %v3705, %v3709
      %3711 = vrot.lane.b32.xlu0 %v2769, 88
      %v3712 = vpop.permute.xlu0 %3711
      %v3715 = vsel %vm1091, %v3710, 0
      %3717 = vmatprep.subr.mxu0 0.0
      %3718 = vmatpush1.msra.mxu0 %v3712
      %3719 = vmatprep.subr.mxu0 0.0
      %3720 = vmatpush1.msra.mxu0 0.0
      %3721 = vmatprep.subr.mxu0 0.0
      %3722 = vmatpush1.msra.mxu0 0.0
      %3723 = vmatprep.subr.mxu0 0.0
      %3724 = vmatpush1.msra.mxu0 0.0
      %3725 = vmatprep.subr.mxu0 0.0
      %3726 = vmatpush1.msra.mxu0 0.0
      %3727 = vmatprep.subr.mxu0 0.0
      %3728 = vmatpush1.msra.mxu0 0.0
      %3729 = vmatprep.subr.mxu0 0.0
      %3730 = vmatpush1.msra.mxu0 0.0
      %3731 = vmatprep.subr.mxu0 0.0
      %3732 = vmatpush1.msra.mxu0 0.0
      %3733 = vmatprep.subr.mxu0 0.0
      %3734 = vmatpush1.msra.mxu0 0.0
      %3735 = vmatprep.subr.mxu0 0.0
      %3736 = vmatpush1.msra.mxu0 0.0
      %3737 = vmatprep.subr.mxu0 0.0
      %3738 = vmatpush1.msra.mxu0 0.0
      %3739 = vmatprep.subr.mxu0 0.0
      %3740 = vmatpush1.msra.mxu0 0.0
      %3741 = vmatprep.subr.mxu0 0.0
      %3742 = vmatpush1.msra.mxu0 0.0
      %3743 = vmatprep.subr.mxu0 0.0
      %3744 = vmatpush1.msra.mxu0 0.0
      %3745 = vmatprep.subr.mxu0 0.0
      %3746 = vmatpush1.msra.mxu0 0.0
      %3747 = vmatprep.subr.mxu0 0.0
      %3748 = vmatpush1.msra.mxu0 0.0
      %3749 = vmatprep.subr.mxu0 0.0
      %3750 = vmatpush1.msra.mxu0 0.0
      %3751 = vmatprep.subr.mxu0 0.0
      %3752 = vmatpush1.msra.mxu0 0.0
      %3753 = vmatprep.subr.mxu0 0.0
      %3754 = vmatpush1.msra.mxu0 0.0
      %3755 = vmatprep.subr.mxu0 0.0
      %3756 = vmatpush1.msra.mxu0 0.0
      %3757 = vmatprep.subr.mxu0 0.0
      %3758 = vmatpush1.msra.mxu0 0.0
      %3759 = vmatprep.subr.mxu0 0.0
      %3760 = vmatpush1.msra.mxu0 0.0
      %3761 = vmatprep.subr.mxu0 0.0
      %3762 = vmatpush1.msra.mxu0 0.0
      %3763 = vmatprep.subr.mxu0 0.0
      %3764 = vmatpush1.msra.mxu0 0.0
      %3765 = vmatprep.subr.mxu0 0.0
      %3766 = vmatpush1.msra.mxu0 0.0
      %3767 = vmatprep.subr.mxu0 0.0
      %3768 = vmatpush1.msra.mxu0 0.0
      %3769 = vmatprep.subr.mxu0 0.0
      %3770 = vmatpush1.msra.mxu0 0.0
      %3771 = vmatprep.subr.mxu0 0.0
      %3772 = vmatpush1.msra.mxu0 0.0
      %3773 = vmatprep.subr.mxu0 0.0
      %3774 = vmatpush1.msra.mxu0 0.0
      %3775 = vmatprep.subr.mxu0 0.0
      %3776 = vmatpush1.msra.mxu0 0.0
      %3777 = vmatprep.subr.mxu0 0.0
      %3778 = vmatpush1.msra.mxu0 0.0
      %3779 = vmatprep.subr.mxu0 0.0
      %3780 = vmatpush1.msra.mxu0 0.0
      %3781 = vmatprep.mubr.f32.mxu0 0.0
      %3782 = vmatmul.mubr.f32.gmra.mrb[0].mxu0 %v3715
      %v3783 = vpop.f32.mrb[0].mxu0
      %v3784 = vadd.f32 0.0, %v3783
      %v3785 = vpop.f32.mrb[0].mxu0
      %3786 = vdwg.mxu0
      %3787 = vrot.lane.b32.xlu0 %v2682, 112
      %v3788 = vpop.permute.xlu0 %3787
      %3789 = vrot.lane.b32.xlu0 %v2769, 112
      %v3790 = vpop.permute.xlu0 %3789
      %v3791 = vsel %vm1091, %v3788, 0
      %v3793 = vsel %vm1091, %v3790, 0
      %3795 = vmatprep.subr.mxu0 0.0
      %3796 = vmatpush1.xpose.msra.mxu0 %v3793
      %3797 = vmatprep.subr.mxu0 0.0
      %3798 = vmatpush1.xpose.msra.mxu0 0.0
      %3799 = vmatprep.subr.mxu0 0.0
      %3800 = vmatpush1.xpose.msra.mxu0 0.0
      %3801 = vmatprep.subr.mxu0 0.0
      %3802 = vmatpush1.xpose.msra.mxu0 0.0
      %3803 = vmatprep.subr.mxu0 0.0
      %3804 = vmatpush1.xpose.msra.mxu0 0.0
      %3805 = vmatprep.subr.mxu0 0.0
      %3806 = vmatpush1.xpose.msra.mxu0 0.0
      %3807 = vmatprep.subr.mxu0 0.0
      %3808 = vmatpush1.xpose.msra.mxu0 0.0
      %3809 = vmatprep.subr.mxu0 0.0
      %3810 = vmatpush1.xpose.msra.mxu0 0.0
      %3811 = vmatprep.subr.mxu0 0.0
      %3812 = vmatpush1.xpose.msra.mxu0 0.0
      %3813 = vmatprep.subr.mxu0 0.0
      %3814 = vmatpush1.xpose.msra.mxu0 0.0
      %3815 = vmatprep.subr.mxu0 0.0
      %3816 = vmatpush1.xpose.msra.mxu0 0.0
      %3817 = vmatprep.subr.mxu0 0.0
      %3818 = vmatpush1.xpose.msra.mxu0 0.0
      %3819 = vmatprep.subr.mxu0 0.0
      %3820 = vmatpush1.xpose.msra.mxu0 0.0
      %3821 = vmatprep.subr.mxu0 0.0
      %3822 = vmatpush1.xpose.msra.mxu0 0.0
      %3823 = vmatprep.subr.mxu0 0.0
      %3824 = vmatpush1.xpose.msra.mxu0 0.0
      %3825 = vmatprep.subr.mxu0 0.0
      %3826 = vmatpush1.xpose.msra.mxu0 0.0
      %3827 = vmatprep.subr.mxu0 0.0
      %3828 = vmatpush1.xpose.msra.mxu0 0.0
      %3829 = vmatprep.subr.mxu0 0.0
      %3830 = vmatpush1.xpose.msra.mxu0 0.0
      %3831 = vmatprep.subr.mxu0 0.0
      %3832 = vmatpush1.xpose.msra.mxu0 0.0
      %3833 = vmatprep.subr.mxu0 0.0
      %3834 = vmatpush1.xpose.msra.mxu0 0.0
      %3835 = vmatprep.subr.mxu0 0.0
      %3836 = vmatpush1.xpose.msra.mxu0 0.0
      %3837 = vmatprep.subr.mxu0 0.0
      %3838 = vmatpush1.xpose.msra.mxu0 0.0
      %3839 = vmatprep.subr.mxu0 0.0
      %3840 = vmatpush1.xpose.msra.mxu0 0.0
      %3841 = vmatprep.subr.mxu0 0.0
      %3842 = vmatpush1.xpose.msra.mxu0 0.0
      %3843 = vmatprep.subr.mxu0 0.0
      %3844 = vmatpush1.xpose.msra.mxu0 0.0
      %3845 = vmatprep.subr.mxu0 0.0
      %3846 = vmatpush1.xpose.msra.mxu0 0.0
      %3847 = vmatprep.subr.mxu0 0.0
      %3848 = vmatpush1.xpose.msra.mxu0 0.0
      %3849 = vmatprep.subr.mxu0 0.0
      %3850 = vmatpush1.xpose.msra.mxu0 0.0
      %3851 = vmatprep.subr.mxu0 0.0
      %3852 = vmatpush1.xpose.msra.mxu0 0.0
      %3853 = vmatprep.subr.mxu0 0.0
      %3854 = vmatpush1.xpose.msra.mxu0 0.0
      %3855 = vmatprep.subr.mxu0 0.0
      %3856 = vmatpush1.xpose.msra.mxu0 0.0
      %3857 = vmatprep.subr.mxu0 0.0
      %3858 = vmatpush1.xpose.msra.mxu0 0.0
      %3859 = vmatprep.mubr.f32.mxu0 0.0
      %3860 = vmatmul.mubr.f32.gmra.mrb[0].mxu0 %v3791
      %v3861 = vpop.f32.mrb[0].mxu0
      %v3862 = vadd.f32 0.0, %v3861
      %v3863 = vpop.f32.mrb[0].mxu0
      %3864 = vdwg.mxu0
      %v3865 = vmul.f32 %v3862, 0.35355338
      %v3866 = vadd.f32 %v3865, %v2773
      %v3867 = vsel %vm1091, %v3866, -inf
      %3868 = vmax.xlane.f32.xlu0 %v3867
      %v3869 = vpop.xlane.xlu0 %3868
      %v3870 = vsub.f32 %v3866, %v3869
      %v3871 = vmul.f32 %v3870, 1.442695
      %v3872 = vpow.pop %v3871
      %v3873 = vsel %vm1091, %v3872, 0.0
      %3874 = vadd.xlane.f32.xlu0 %v3873
      %v3875 = vpop.xlane.xlu0 %3874
      %v3876 = vrcp.pop %v3875
      %v3877 = vmul.f32 %v3872, %v3876
      %3878 = vrot.lane.b32.xlu0 %v2769, 80
      %v3879 = vpop.permute.xlu0 %3878
      %v3882 = vsel %vm1091, %v3877, 0
      %3884 = vmatprep.subr.mxu0 0.0
      %3885 = vmatpush1.msra.mxu0 %v3879
      %3886 = vmatprep.subr.mxu0 0.0
      %3887 = vmatpush1.msra.mxu0 0.0
      %3888 = vmatprep.subr.mxu0 0.0
      %3889 = vmatpush1.msra.mxu0 0.0
      %3890 = vmatprep.subr.mxu0 0.0
      %3891 = vmatpush1.msra.mxu0 0.0
      %3892 = vmatprep.subr.mxu0 0.0
      %3893 = vmatpush1.msra.mxu0 0.0
      %3894 = vmatprep.subr.mxu0 0.0
      %3895 = vmatpush1.msra.mxu0 0.0
      %3896 = vmatprep.subr.mxu0 0.0
      %3897 = vmatpush1.msra.mxu0 0.0
      %3898 = vmatprep.subr.mxu0 0.0
      %3899 = vmatpush1.msra.mxu0 0.0
      %3900 = vmatprep.subr.mxu0 0.0
      %3901 = vmatpush1.msra.mxu0 0.0
      %3902 = vmatprep.subr.mxu0 0.0
      %3903 = vmatpush1.msra.mxu0 0.0
      %3904 = vmatprep.subr.mxu0 0.0
      %3905 = vmatpush1.msra.mxu0 0.0
      %3906 = vmatprep.subr.mxu0 0.0
      %3907 = vmatpush1.msra.mxu0 0.0
      %3908 = vmatprep.subr.mxu0 0.0
      %3909 = vmatpush1.msra.mxu0 0.0
      %3910 = vmatprep.subr.mxu0 0.0
      %3911 = vmatpush1.msra.mxu0 0.0
      %3912 = vmatprep.subr.mxu0 0.0
      %3913 = vmatpush1.msra.mxu0 0.0
      %3914 = vmatprep.subr.mxu0 0.0
      %3915 = vmatpush1.msra.mxu0 0.0
      %3916 = vmatprep.subr.mxu0 0.0
      %3917 = vmatpush1.msra.mxu0 0.0
      %3918 = vmatprep.subr.mxu0 0.0
      %3919 = vmatpush1.msra.mxu0 0.0
      %3920 = vmatprep.subr.mxu0 0.0
      %3921 = vmatpush1.msra.mxu0 0.0
      %3922 = vmatprep.subr.mxu0 0.0
      %3923 = vmatpush1.msra.mxu0 0.0
      %3924 = vmatprep.subr.mxu0 0.0
      %3925 = vmatpush1.msra.mxu0 0.0
      %3926 = vmatprep.subr.mxu0 0.0
      %3927 = vmatpush1.msra.mxu0 0.0
      %3928 = vmatprep.subr.mxu0 0.0
      %3929 = vmatpush1.msra.mxu0 0.0
      %3930 = vmatprep.subr.mxu0 0.0
      %3931 = vmatpush1.msra.mxu0 0.0
      %3932 = vmatprep.subr.mxu0 0.0
      %3933 = vmatpush1.msra.mxu0 0.0
      %3934 = vmatprep.subr.mxu0 0.0
      %3935 = vmatpush1.msra.mxu0 0.0
      %3936 = vmatprep.subr.mxu0 0.0
      %3937 = vmatpush1.msra.mxu0 0.0
      %3938 = vmatprep.subr.mxu0 0.0
      %3939 = vmatpush1.msra.mxu0 0.0
      %3940 = vmatprep.subr.mxu0 0.0
      %3941 = vmatpush1.msra.mxu0 0.0
      %3942 = vmatprep.subr.mxu0 0.0
      %3943 = vmatpush1.msra.mxu0 0.0
      %3944 = vmatprep.subr.mxu0 0.0
      %3945 = vmatpush1.msra.mxu0 0.0
      %3946 = vmatprep.subr.mxu0 0.0
      %3947 = vmatpush1.msra.mxu0 0.0
      %3948 = vmatprep.mubr.f32.mxu0 0.0
      %3949 = vmatmul.mubr.f32.gmra.mrb[0].mxu0 %v3882
      %v3950 = vpop.f32.mrb[0].mxu0
      %v3951 = vadd.f32 0.0, %v3950
      %v3952 = vpop.f32.mrb[0].mxu0
      %3953 = vdwg.mxu0
      %3954 = vrot.lane.b32.xlu0 %v2682, 104
      %v3955 = vpop.permute.xlu0 %3954
      %3956 = vrot.lane.b32.xlu0 %v2769, 104
      %v3957 = vpop.permute.xlu0 %3956
      %v3958 = vsel %vm1091, %v3955, 0
      %v3960 = vsel %vm1091, %v3957, 0
      %3962 = vmatprep.subr.mxu0 0.0
      %3963 = vmatpush1.xpose.msra.mxu0 %v3960
      %3964 = vmatprep.subr.mxu0 0.0
      %3965 = vmatpush1.xpose.msra.mxu0 0.0
      %3966 = vmatprep.subr.mxu0 0.0
      %3967 = vmatpush1.xpose.msra.mxu0 0.0
      %3968 = vmatprep.subr.mxu0 0.0
      %3969 = vmatpush1.xpose.msra.mxu0 0.0
      %3970 = vmatprep.subr.mxu0 0.0
      %3971 = vmatpush1.xpose.msra.mxu0 0.0
      %3972 = vmatprep.subr.mxu0 0.0
      %3973 = vmatpush1.xpose.msra.mxu0 0.0
      %3974 = vmatprep.subr.mxu0 0.0
      %3975 = vmatpush1.xpose.msra.mxu0 0.0
      %3976 = vmatprep.subr.mxu0 0.0
      %3977 = vmatpush1.xpose.msra.mxu0 0.0
      %3978 = vmatprep.subr.mxu0 0.0
      %3979 = vmatpush1.xpose.msra.mxu0 0.0
      %3980 = vmatprep.subr.mxu0 0.0
      %3981 = vmatpush1.xpose.msra.mxu0 0.0
      %3982 = vmatprep.subr.mxu0 0.0
      %3983 = vmatpush1.xpose.msra.mxu0 0.0
      %3984 = vmatprep.subr.mxu0 0.0
      %3985 = vmatpush1.xpose.msra.mxu0 0.0
      %3986 = vmatprep.subr.mxu0 0.0
      %3987 = vmatpush1.xpose.msra.mxu0 0.0
      %3988 = vmatprep.subr.mxu0 0.0
      %3989 = vmatpush1.xpose.msra.mxu0 0.0
      %3990 = vmatprep.subr.mxu0 0.0
      %3991 = vmatpush1.xpose.msra.mxu0 0.0
      %3992 = vmatprep.subr.mxu0 0.0
      %3993 = vmatpush1.xpose.msra.mxu0 0.0
      %3994 = vmatprep.subr.mxu0 0.0
      %3995 = vmatpush1.xpose.msra.mxu0 0.0
      %3996 = vmatprep.subr.mxu0 0.0
      %3997 = vmatpush1.xpose.msra.mxu0 0.0
      %3998 = vmatprep.subr.mxu0 0.0
      %3999 = vmatpush1.xpose.msra.mxu0 0.0
      %4000 = vmatprep.subr.mxu0 0.0
      %4001 = vmatpush1.xpose.msra.mxu0 0.0
      %4002 = vmatprep.subr.mxu0 0.0
      %4003 = vmatpush1.xpose.msra.mxu0 0.0
      %4004 = vmatprep.subr.mxu0 0.0
      %4005 = vmatpush1.xpose.msra.mxu0 0.0
      %4006 = vmatprep.subr.mxu0 0.0
      %4007 = vmatpush1.xpose.msra.mxu0 0.0
      %4008 = vmatprep.subr.mxu0 0.0
      %4009 = vmatpush1.xpose.msra.mxu0 0.0
      %4010 = vmatprep.subr.mxu0 0.0
      %4011 = vmatpush1.xpose.msra.mxu0 0.0
      %4012 = vmatprep.subr.mxu0 0.0
      %4013 = vmatpush1.xpose.msra.mxu0 0.0
      %4014 = vmatprep.subr.mxu0 0.0
      %4015 = vmatpush1.xpose.msra.mxu0 0.0
      %4016 = vmatprep.subr.mxu0 0.0
      %4017 = vmatpush1.xpose.msra.mxu0 0.0
      %4018 = vmatprep.subr.mxu0 0.0
      %4019 = vmatpush1.xpose.msra.mxu0 0.0
      %4020 = vmatprep.subr.mxu0 0.0
      %4021 = vmatpush1.xpose.msra.mxu0 0.0
      %4022 = vmatprep.subr.mxu0 0.0
      %4023 = vmatpush1.xpose.msra.mxu0 0.0
      %4024 = vmatprep.subr.mxu0 0.0
      %4025 = vmatpush1.xpose.msra.mxu0 0.0
      %4026 = vmatprep.mubr.f32.mxu0 0.0
      %4027 = vmatmul.mubr.f32.gmra.mrb[0].mxu0 %v3958
      %v4028 = vpop.f32.mrb[0].mxu0
      %v4029 = vadd.f32 0.0, %v4028
      %v4030 = vpop.f32.mrb[0].mxu0
      %4031 = vdwg.mxu0
      %v4032 = vmul.f32 %v4029, 0.35355338
      %v4033 = vadd.f32 %v4032, %v2773
      %v4034 = vsel %vm1091, %v4033, -inf
      %4035 = vmax.xlane.f32.xlu0 %v4034
      %v4036 = vpop.xlane.xlu0 %4035
      %v4037 = vsub.f32 %v4033, %v4036
      %v4038 = vmul.f32 %v4037, 1.442695
      %v4039 = vpow.pop %v4038
      %v4040 = vsel %vm1091, %v4039, 0.0
      %4041 = vadd.xlane.f32.xlu0 %v4040
      %v4042 = vpop.xlane.xlu0 %4041
      %v4043 = vrcp.pop %v4042
      %v4044 = vmul.f32 %v4039, %v4043
      %4045 = vrot.lane.b32.xlu0 %v2769, 72
      %v4046 = vpop.permute.xlu0 %4045
      %v4049 = vsel %vm1091, %v4044, 0
      %4051 = vmatprep.subr.mxu0 0.0
      %4052 = vmatpush1.msra.mxu0 %v4046
      %4053 = vmatprep.subr.mxu0 0.0
      %4054 = vmatpush1.msra.mxu0 0.0
      %4055 = vmatprep.subr.mxu0 0.0
      %4056 = vmatpush1.msra.mxu0 0.0
      %4057 = vmatprep.subr.mxu0 0.0
      %4058 = vmatpush1.msra.mxu0 0.0
      %4059 = vmatprep.subr.mxu0 0.0
      %4060 = vmatpush1.msra.mxu0 0.0
      %4061 = vmatprep.subr.mxu0 0.0
      %4062 = vmatpush1.msra.mxu0 0.0
      %4063 = vmatprep.subr.mxu0 0.0
      %4064 = vmatpush1.msra.mxu0 0.0
      %4065 = vmatprep.subr.mxu0 0.0
      %4066 = vmatpush1.msra.mxu0 0.0
      %4067 = vmatprep.subr.mxu0 0.0
      %4068 = vmatpush1.msra.mxu0 0.0
      %4069 = vmatprep.subr.mxu0 0.0
      %4070 = vmatpush1.msra.mxu0 0.0
      %4071 = vmatprep.subr.mxu0 0.0
      %4072 = vmatpush1.msra.mxu0 0.0
      %4073 = vmatprep.subr.mxu0 0.0
      %4074 = vmatpush1.msra.mxu0 0.0
      %4075 = vmatprep.subr.mxu0 0.0
      %4076 = vmatpush1.msra.mxu0 0.0
      %4077 = vmatprep.subr.mxu0 0.0
      %4078 = vmatpush1.msra.mxu0 0.0
      %4079 = vmatprep.subr.mxu0 0.0
      %4080 = vmatpush1.msra.mxu0 0.0
      %4081 = vmatprep.subr.mxu0 0.0
      %4082 = vmatpush1.msra.mxu0 0.0
      %4083 = vmatprep.subr.mxu0 0.0
      %4084 = vmatpush1.msra.mxu0 0.0
      %4085 = vmatprep.subr.mxu0 0.0
      %4086 = vmatpush1.msra.mxu0 0.0
      %4087 = vmatprep.subr.mxu0 0.0
      %4088 = vmatpush1.msra.mxu0 0.0
      %4089 = vmatprep.subr.mxu0 0.0
      %4090 = vmatpush1.msra.mxu0 0.0
      %4091 = vmatprep.subr.mxu0 0.0
      %4092 = vmatpush1.msra.mxu0 0.0
      %4093 = vmatprep.subr.mxu0 0.0
      %4094 = vmatpush1.msra.mxu0 0.0
      %4095 = vmatprep.subr.mxu0 0.0
      %4096 = vmatpush1.msra.mxu0 0.0
      %4097 = vmatprep.subr.mxu0 0.0
      %4098 = vmatpush1.msra.mxu0 0.0
      %4099 = vmatprep.subr.mxu0 0.0
      %4100 = vmatpush1.msra.mxu0 0.0
      %4101 = vmatprep.subr.mxu0 0.0
      %4102 = vmatpush1.msra.mxu0 0.0
      %4103 = vmatprep.subr.mxu0 0.0
      %4104 = vmatpush1.msra.mxu0 0.0
      %4105 = vmatprep.subr.mxu0 0.0
      %4106 = vmatpush1.msra.mxu0 0.0
      %4107 = vmatprep.subr.mxu0 0.0
      %4108 = vmatpush1.msra.mxu0 0.0
      %4109 = vmatprep.subr.mxu0 0.0
      %4110 = vmatpush1.msra.mxu0 0.0
      %4111 = vmatprep.subr.mxu0 0.0
      %4112 = vmatpush1.msra.mxu0 0.0
      %4113 = vmatprep.subr.mxu0 0.0
      %4114 = vmatpush1.msra.mxu0 0.0
      %4115 = vmatprep.mubr.f32.mxu0 0.0
      %4116 = vmatmul.mubr.f32.gmra.mrb[0].mxu0 %v4049
      %v4117 = vpop.f32.mrb[0].mxu0
      %v4118 = vadd.f32 0.0, %v4117
      %v4119 = vpop.f32.mrb[0].mxu0
      %4120 = vdwg.mxu0
      %4122 = vrot.lane.b32.xlu0 %v3784, 8
      %v4123 = vpop.permute.xlu0 %4122
      %4126 = vrot.lane.b32.xlu0 %v3951, 16
      %v4127 = vpop.permute.xlu0 %4126
      %4130 = vrot.lane.b32.xlu0 %v4118, 24
      %v4131 = vpop.permute.xlu0 %4130
      %v4133 = vsel %vm1091, %v3617, %v4123
      %v4134 = vsel %vm1769, %v4133, %v4127
      %v4135 = vsel %vm1771, %v4134, %v4131
      %v4136 = vld [vmem:[%s905] sm:$0xff]
      %v4137 = vld [vmem:[%s905 + $0x8] sm:$0xff]
      %v4138 = vld [vmem:[%s905 + $0x10] sm:$0xff]
      %v4139 = vld [vmem:[%s905 + $0x18] sm:$0xff]
      %v4141 = vsel %vm943, %v3454, 0
      %v4144 = vsel %vm943, %v4135, 0
      %4146 = vmatprep.subr.mxu0 0.0
      %4147 = vmatpush1.msra.mxu0 %v4136
      %4148 = vmatprep.subr.mxu0 0.0
      %4149 = vmatpush1.msra.mxu0 %v4137
      %4150 = vmatprep.subr.mxu0 0.0
      %4151 = vmatpush1.msra.mxu0 %v4138
      %4152 = vmatprep.subr.mxu0 0.0
      %4153 = vmatpush1.msra.mxu0 %v4139
      %4154 = vmatprep.subr.mxu0 0.0
      %4155 = vmatpush1.msra.mxu0 0.0
      %4156 = vmatprep.subr.mxu0 0.0
      %4157 = vmatpush1.msra.mxu0 0.0
      %4158 = vmatprep.subr.mxu0 0.0
      %4159 = vmatpush1.msra.mxu0 0.0
      %4160 = vmatprep.subr.mxu0 0.0
      %4161 = vmatpush1.msra.mxu0 0.0
      %4162 = vmatprep.subr.mxu0 0.0
      %4163 = vmatpush1.msra.mxu0 0.0
      %4164 = vmatprep.subr.mxu0 0.0
      %4165 = vmatpush1.msra.mxu0 0.0
      %4166 = vmatprep.subr.mxu0 0.0
      %4167 = vmatpush1.msra.mxu0 0.0
      %4168 = vmatprep.subr.mxu0 0.0
      %4169 = vmatpush1.msra.mxu0 0.0
      %4170 = vmatprep.subr.mxu0 0.0
      %4171 = vmatpush1.msra.mxu0 0.0
      %4172 = vmatprep.subr.mxu0 0.0
      %4173 = vmatpush1.msra.mxu0 0.0
      %4174 = vmatprep.subr.mxu0 0.0
      %4175 = vmatpush1.msra.mxu0 0.0
      %4176 = vmatprep.subr.mxu0 0.0
      %4177 = vmatpush1.msra.mxu0 0.0
      %4178 = vmatprep.subr.mxu0 0.0
      %4179 = vmatpush1.msra.mxu0 0.0
      %4180 = vmatprep.subr.mxu0 0.0
      %4181 = vmatpush1.msra.mxu0 0.0
      %4182 = vmatprep.subr.mxu0 0.0
      %4183 = vmatpush1.msra.mxu0 0.0
      %4184 = vmatprep.subr.mxu0 0.0
      %4185 = vmatpush1.msra.mxu0 0.0
      %4186 = vmatprep.subr.mxu0 0.0
      %4187 = vmatpush1.msra.mxu0 0.0
      %4188 = vmatprep.subr.mxu0 0.0
      %4189 = vmatpush1.msra.mxu0 0.0
      %4190 = vmatprep.subr.mxu0 0.0
      %4191 = vmatpush1.msra.mxu0 0.0
      %4192 = vmatprep.subr.mxu0 0.0
      %4193 = vmatpush1.msra.mxu0 0.0
      %4194 = vmatprep.subr.mxu0 0.0
      %4195 = vmatpush1.msra.mxu0 0.0
      %4196 = vmatprep.subr.mxu0 0.0
      %4197 = vmatpush1.msra.mxu0 0.0
      %4198 = vmatprep.subr.mxu0 0.0
      %4199 = vmatpush1.msra.mxu0 0.0
      %4200 = vmatprep.subr.mxu0 0.0
      %4201 = vmatpush1.msra.mxu0 0.0
      %4202 = vmatprep.subr.mxu0 0.0
      %4203 = vmatpush1.msra.mxu0 0.0
      %4204 = vmatprep.subr.mxu0 0.0
      %4205 = vmatpush1.msra.mxu0 0.0
      %4206 = vmatprep.subr.mxu0 0.0
      %4207 = vmatpush1.msra.mxu0 0.0
      %4208 = vmatprep.subr.mxu0 0.0
      %4209 = vmatpush1.msra.mxu0 0.0
      %4210 = vmatprep.mubr.f32.mxu0 0.0
      %4211 = vmatmul.mubr.f32.gmra.mrb[0].mxu0 %v4141
      %v4212 = vpop.f32.mrb[0].mxu0
      %v4213 = vadd.f32 0.0, %v4212
      %v4214 = vpop.f32.mrb[0].mxu0
      %4215 = vmatprep.mubr.f32.mxu0 0.0
      %4216 = vmatmul.mubr.f32.gmra.mrb[0].mxu0 %v4144
      %v4217 = vpop.f32.mrb[0].mxu0
      %v4218 = vadd.f32 0.0, %v4217
      %v4219 = vpop.f32.mrb[0].mxu0
      %4220 = vdwg.mxu0
      %v4221 = vadd.f32 %v2540, %v4213
      %v4222 = vadd.f32 %v2541, %v4218
      %v4223 = vld [vmem:[%s908] sm:$0x1]
      %v4224 = vld [vmem:[%s911] sm:$0x1]
      %v4225 = vsel %vm943, %v4221, 0.0
      %4226 = vadd.xlane.f32.xlu0 %v4225
      %v4227 = vpop.xlane.xlu0 %4226
      %v4228 = vsel %vm943, %v4222, 0.0
      %4229 = vadd.xlane.f32.xlu0 %v4228
      %v4230 = vpop.xlane.xlu0 %4229
      %v4231 = vmul.f32 %v4227, %v950
      %v4232 = vmul.f32 %v4230, %v950
      %v4233 = vsub.f32 %v4221, %v4231
      %v4234 = vsub.f32 %v4222, %v4232
      %v4235 = vmul.f32 %v4233, %v4233
      %v4236 = vmul.f32 %v4234, %v4234
      %v4237 = vsel %vm943, %v4235, 0.0
      %4238 = vadd.xlane.f32.xlu0 %v4237
      %v4239 = vpop.xlane.xlu0 %4238
      %v4240 = vsel %vm943, %v4236, 0.0
      %4241 = vadd.xlane.f32.xlu0 %v4240
      %v4242 = vpop.xlane.xlu0 %4241
      %v4243 = vmul.f32 %v4239, 0.032258064
      %v4244 = vmul.f32 %v4242, 0.032258064
      %v4245 = vrsqrt.pop %v4243
      %v4246 = vmul.f32 %v4243, %v4245
      %vm4247 = vcmp.eq.f32.partialorder %v4243, inf
      %v4248 = vsel %vm4247, %v4243, %v4246
      %vm4249 = vcmp.eq.f32.partialorder %v4243, 0.0
      %v4250 = vand.u32 %v4243, 2147483648
      %v4251 = vsel %vm4249, %v4250, %v4248
      %v4252 = vrsqrt.pop %v4244
      %v4253 = vmul.f32 %v4244, %v4252
      %vm4254 = vcmp.eq.f32.partialorder %v4244, inf
      %v4255 = vsel %vm4254, %v4244, %v4253
      %vm4256 = vcmp.eq.f32.partialorder %v4244, 0.0
      %v4257 = vand.u32 %v4244, 2147483648
      %v4258 = vsel %vm4256, %v4257, %v4255
      %v4260 = vlaneseq
      %v4261 = vshrl.u32 %v4260, 7
      %v4262 = vsub.s32 0, %v4261
      %v4263 = vrot.slane %v4223, %v4262
      %v4265 = vmul.f32 %v4263, %v4233
      %v4266 = vmul.f32 %v4263, %v4234
      %v4267 = vadd.f32 %v4251, 1e-06
      %v4268 = vadd.f32 %v4258, 1e-06
      %v4269 = vrcp.pop %v4267
      %v4270 = vmul.f32 %v4265, %v4269
      %v4271 = vrcp.pop %v4268
      %v4272 = vmul.f32 %v4266, %v4271
      %v4274 = vlaneseq
      %v4275 = vshrl.u32 %v4274, 7
      %v4276 = vsub.s32 0, %v4275
      %v4277 = vrot.slane %v4224, %v4276
      %v4279 = vadd.f32 %v4270, %v4277
      %v4280 = vadd.f32 %v4272, %v4277
      %v4281 = vld [vmem:[%s916] sm:$0xff]
      %v4282 = vld [vmem:[%s916 + $0x8] sm:$0xff]
      %v4283 = vld [vmem:[%s916 + $0x10] sm:$0xff]
      %v4284 = vld [vmem:[%s916 + $0x18] sm:$0xff]
      %v4285 = vld [vmem:[%s919] sm:$0x1]
      %v4287 = vlaneseq
      %v4288 = vshrl.u32 %v4287, 7
      %v4289 = vsub.s32 0, %v4288
      %v4290 = vrot.slane %v4285, %v4289
      %v4293 = vsel %vm943, %v4279, 0
      %v4296 = vsel %vm943, %v4280, 0
      %4298 = vmatprep.subr.mxu0 0.0
      %4299 = vmatpush1.msra.mxu0 %v4281
      %4300 = vmatprep.subr.mxu0 0.0
      %4301 = vmatpush1.msra.mxu0 %v4282
      %4302 = vmatprep.subr.mxu0 0.0
      %4303 = vmatpush1.msra.mxu0 %v4283
      %4304 = vmatprep.subr.mxu0 0.0
      %4305 = vmatpush1.msra.mxu0 %v4284
      %4306 = vmatprep.subr.mxu0 0.0
      %4307 = vmatpush1.msra.mxu0 0.0
      %4308 = vmatprep.subr.mxu0 0.0
      %4309 = vmatpush1.msra.mxu0 0.0
      %4310 = vmatprep.subr.mxu0 0.0
      %4311 = vmatpush1.msra.mxu0 0.0
      %4312 = vmatprep.subr.mxu0 0.0
      %4313 = vmatpush1.msra.mxu0 0.0
      %4314 = vmatprep.subr.mxu0 0.0
      %4315 = vmatpush1.msra.mxu0 0.0
      %4316 = vmatprep.subr.mxu0 0.0
      %4317 = vmatpush1.msra.mxu0 0.0
      %4318 = vmatprep.subr.mxu0 0.0
      %4319 = vmatpush1.msra.mxu0 0.0
      %4320 = vmatprep.subr.mxu0 0.0
      %4321 = vmatpush1.msra.mxu0 0.0
      %4322 = vmatprep.subr.mxu0 0.0
      %4323 = vmatpush1.msra.mxu0 0.0
      %4324 = vmatprep.subr.mxu0 0.0
      %4325 = vmatpush1.msra.mxu0 0.0
      %4326 = vmatprep.subr.mxu0 0.0
      %4327 = vmatpush1.msra.mxu0 0.0
      %4328 = vmatprep.subr.mxu0 0.0
      %4329 = vmatpush1.msra.mxu0 0.0
      %4330 = vmatprep.subr.mxu0 0.0
      %4331 = vmatpush1.msra.mxu0 0.0
      %4332 = vmatprep.subr.mxu0 0.0
      %4333 = vmatpush1.msra.mxu0 0.0
      %4334 = vmatprep.subr.mxu0 0.0
      %4335 = vmatpush1.msra.mxu0 0.0
      %4336 = vmatprep.subr.mxu0 0.0
      %4337 = vmatpush1.msra.mxu0 0.0
      %4338 = vmatprep.subr.mxu0 0.0
      %4339 = vmatpush1.msra.mxu0 0.0
      %4340 = vmatprep.subr.mxu0 0.0
      %4341 = vmatpush1.msra.mxu0 0.0
      %4342 = vmatprep.subr.mxu0 0.0
      %4343 = vmatpush1.msra.mxu0 0.0
      %4344 = vmatprep.subr.mxu0 0.0
      %4345 = vmatpush1.msra.mxu0 0.0
      %4346 = vmatprep.subr.mxu0 0.0
      %4347 = vmatpush1.msra.mxu0 0.0
      %4348 = vmatprep.subr.mxu0 0.0
      %4349 = vmatpush1.msra.mxu0 0.0
      %4350 = vmatprep.subr.mxu0 0.0
      %4351 = vmatpush1.msra.mxu0 0.0
      %4352 = vmatprep.subr.mxu0 0.0
      %4353 = vmatpush1.msra.mxu0 0.0
      %4354 = vmatprep.subr.mxu0 0.0
      %4355 = vmatpush1.msra.mxu0 0.0
      %4356 = vmatprep.subr.mxu0 0.0
      %4357 = vmatpush1.msra.mxu0 0.0
      %4358 = vmatprep.subr.mxu0 0.0
      %4359 = vmatpush1.msra.mxu0 0.0
      %4360 = vmatprep.subr.mxu0 0.0
      %4361 = vmatpush1.msra.mxu0 0.0
      %4362 = vmatprep.mubr.f32.mxu0 0.0
      %4363 = vmatmul.mubr.f32.gmra.mrb[0].mxu0 %v4293
      %v4364 = vpop.f32.mrb[0].mxu0
      %v4365 = vadd.f32 %v4290, %v4364
      %v4366 = vpop.f32.mrb[0].mxu0
      %4367 = vmatprep.mubr.f32.mxu0 0.0
      %4368 = vmatmul.mubr.f32.gmra.mrb[0].mxu0 %v4296
      %v4369 = vpop.f32.mrb[0].mxu0
      %v4370 = vadd.f32 %v4290, %v4369
      %v4371 = vpop.f32.mrb[0].mxu0
      %4372 = vdwg.mxu0
      %v4373 = vmax.f32 %v4365, 0.0
      %v4374 = vmax.f32 %v4370, 0.0
      %v4375 = vld [vmem:[%s924] sm:$0xff]
      %v4376 = vld [vmem:[%s924 + $0x8] sm:$0xff]
      %v4377 = vld [vmem:[%s924 + $0x10] sm:$0xff]
      %v4378 = vld [vmem:[%s924 + $0x18] sm:$0xff]
      %v4379 = vld [vmem:[%s924 + $0x20] sm:$0xff]
      %v4380 = vld [vmem:[%s924 + $0x28] sm:$0xff]
      %v4381 = vld [vmem:[%s924 + $0x30] sm:$0xff]
      %v4382 = vld [vmem:[%s924 + $0x38] sm:$0xff]
      %vm4383 = vcmask 523264
      %v4385 = vsel %vm4383, %v4373, 0
      %v4388 = vsel %vm4383, %v4374, 0
      %4390 = vmatprep.subr.mxu0 0.0
      %4391 = vmatpush1.msra.mxu0 %v4375
      %4392 = vmatprep.subr.mxu0 0.0
      %4393 = vmatpush1.msra.mxu0 %v4376
      %4394 = vmatprep.subr.mxu0 0.0
      %4395 = vmatpush1.msra.mxu0 %v4377
      %4396 = vmatprep.subr.mxu0 0.0
      %4397 = vmatpush1.msra.mxu0 %v4378
      %4398 = vmatprep.subr.mxu0 0.0
      %4399 = vmatpush1.msra.mxu0 %v4379
      %4400 = vmatprep.subr.mxu0 0.0
      %4401 = vmatpush1.msra.mxu0 %v4380
      %4402 = vmatprep.subr.mxu0 0.0
      %4403 = vmatpush1.msra.mxu0 %v4381
      %4404 = vmatprep.subr.mxu0 0.0
      %4405 = vmatpush1.msra.mxu0 %v4382
      %4406 = vmatprep.subr.mxu0 0.0
      %4407 = vmatpush1.msra.mxu0 0.0
      %4408 = vmatprep.subr.mxu0 0.0
      %4409 = vmatpush1.msra.mxu0 0.0
      %4410 = vmatprep.subr.mxu0 0.0
      %4411 = vmatpush1.msra.mxu0 0.0
      %4412 = vmatprep.subr.mxu0 0.0
      %4413 = vmatpush1.msra.mxu0 0.0
      %4414 = vmatprep.subr.mxu0 0.0
      %4415 = vmatpush1.msra.mxu0 0.0
      %4416 = vmatprep.subr.mxu0 0.0
      %4417 = vmatpush1.msra.mxu0 0.0
      %4418 = vmatprep.subr.mxu0 0.0
      %4419 = vmatpush1.msra.mxu0 0.0
      %4420 = vmatprep.subr.mxu0 0.0
      %4421 = vmatpush1.msra.mxu0 0.0
      %4422 = vmatprep.subr.mxu0 0.0
      %4423 = vmatpush1.msra.mxu0 0.0
      %4424 = vmatprep.subr.mxu0 0.0
      %4425 = vmatpush1.msra.mxu0 0.0
      %4426 = vmatprep.subr.mxu0 0.0
      %4427 = vmatpush1.msra.mxu0 0.0
      %4428 = vmatprep.subr.mxu0 0.0
      %4429 = vmatpush1.msra.mxu0 0.0
      %4430 = vmatprep.subr.mxu0 0.0
      %4431 = vmatpush1.msra.mxu0 0.0
      %4432 = vmatprep.subr.mxu0 0.0
      %4433 = vmatpush1.msra.mxu0 0.0
      %4434 = vmatprep.subr.mxu0 0.0
      %4435 = vmatpush1.msra.mxu0 0.0
      %4436 = vmatprep.subr.mxu0 0.0
      %4437 = vmatpush1.msra.mxu0 0.0
      %4438 = vmatprep.subr.mxu0 0.0
      %4439 = vmatpush1.msra.mxu0 0.0
      %4440 = vmatprep.subr.mxu0 0.0
      %4441 = vmatpush1.msra.mxu0 0.0
      %4442 = vmatprep.subr.mxu0 0.0
      %4443 = vmatpush1.msra.mxu0 0.0
      %4444 = vmatprep.subr.mxu0 0.0
      %4445 = vmatpush1.msra.mxu0 0.0
      %4446 = vmatprep.subr.mxu0 0.0
      %4447 = vmatpush1.msra.mxu0 0.0
      %4448 = vmatprep.subr.mxu0 0.0
      %4449 = vmatpush1.msra.mxu0 0.0
      %4450 = vmatprep.subr.mxu0 0.0
      %4451 = vmatpush1.msra.mxu0 0.0
      %4452 = vmatprep.subr.mxu0 0.0
      %4453 = vmatpush1.msra.mxu0 0.0
      %4454 = vmatprep.mubr.f32.mxu0 0.0
      %4455 = vmatmul.mubr.f32.gmra.mrb[0].mxu0 %v4385
      %v4456 = vpop.f32.mrb[0].mxu0
      %v4457 = vadd.f32 0.0, %v4456
      %v4458 = vpop.f32.mrb[0].mxu0
      %4459 = vmatprep.mubr.f32.mxu0 0.0
      %4460 = vmatmul.mubr.f32.gmra.mrb[0].mxu0 %v4388
      %v4461 = vpop.f32.mrb[0].mxu0
      %v4462 = vadd.f32 0.0, %v4461
      %v4463 = vpop.f32.mrb[0].mxu0
      %4464 = vdwg.mxu0
      %v4465 = vadd.f32 %v4221, %v4457
      %v4466 = vadd.f32 %v4222, %v4462
      %v4467 = vld [vmem:[%s927] sm:$0x1]
      %v4469 = vlaneseq
      %v4470 = vshrl.u32 %v4469, 7
      %v4471 = vsub.s32 0, %v4470
      %v4472 = vrot.slane %v4467, %v4471
      %v4474 = vadd.f32 %v4465, %v4472
      %v4475 = vadd.f32 %v4466, %v4472
      %4476 = vst.msk [vmem:[#allocation2] sm:$0xff] %vm943, %v4474
      %4477 = vst.msk [vmem:[#allocation2 + $0x8] sm:$0xff] %vm943, %v4475
      %p4478 = scmp.eq.s32.totalorder %s34, 1
      // Predicated region
      $region117: #{transformer_forward.3} parent=111 // pred_check
        %p4479 = pneg %p4478
      $region118: #{transformer_forward.3} parent=111 // pred_check_branch
        %4481 = sbr.rel (%p4479) target = $region120
      $region119: #{transformer_forward.3} parent=111 // pred_region
        %v4482 = vld [vmem:[%s19] sm:$0x1]
        %v4483 = vld [vmem:[%s20] sm:$0x1]
        %v4484 = vsel %vm943, %v4474, 0.0
        %4485 = vadd.xlane.f32.xlu0 %v4484
        %v4486 = vpop.xlane.xlu0 %4485
        %v4487 = vsel %vm943, %v4475, 0.0
        %4488 = vadd.xlane.f32.xlu0 %v4487
        %v4489 = vpop.xlane.xlu0 %4488
        %v4490 = vmul.f32 %v4486, %v950
        %v4491 = vmul.f32 %v4489, %v950
        %v4492 = vsub.f32 %v4474, %v4490
        %v4493 = vsub.f32 %v4475, %v4491
        %v4494 = vmul.f32 %v4492, %v4492
        %v4495 = vmul.f32 %v4493, %v4493
        %v4496 = vsel %vm943, %v4494, 0.0
        %4497 = vadd.xlane.f32.xlu0 %v4496
        %v4498 = vpop.xlane.xlu0 %4497
        %v4499 = vsel %vm943, %v4495, 0.0
        %4500 = vadd.xlane.f32.xlu0 %v4499
        %v4501 = vpop.xlane.xlu0 %4500
        %v4502 = vmul.f32 %v4498, 0.032258064
        %v4503 = vmul.f32 %v4501, 0.032258064
        %v4504 = vrsqrt.pop %v4502
        %v4505 = vmul.f32 %v4502, %v4504
        %vm4506 = vcmp.eq.f32.partialorder %v4502, inf
        %v4507 = vsel %vm4506, %v4502, %v4505
        %vm4508 = vcmp.eq.f32.partialorder %v4502, 0.0
        %v4509 = vand.u32 %v4502, 2147483648
        %v4510 = vsel %vm4508, %v4509, %v4507
        %v4511 = vrsqrt.pop %v4503
        %v4512 = vmul.f32 %v4503, %v4511
        %vm4513 = vcmp.eq.f32.partialorder %v4503, inf
        %v4514 = vsel %vm4513, %v4503, %v4512
        %vm4515 = vcmp.eq.f32.partialorder %v4503, 0.0
        %v4516 = vand.u32 %v4503, 2147483648
        %v4517 = vsel %vm4515, %v4516, %v4514
        %v4519 = vlaneseq
        %v4520 = vshrl.u32 %v4519, 7
        %v4521 = vsub.s32 0, %v4520
        %v4522 = vrot.slane %v4482, %v4521
        %v4524 = vmul.f32 %v4522, %v4492
        %v4525 = vmul.f32 %v4522, %v4493
        %v4526 = vadd.f32 %v4510, 1e-06
        %v4527 = vadd.f32 %v4517, 1e-06
        %v4528 = vrcp.pop %v4526
        %v4529 = vmul.f32 %v4524, %v4528
        %v4530 = vrcp.pop %v4527
        %v4531 = vmul.f32 %v4525, %v4530
        %v4533 = vlaneseq
        %v4534 = vshrl.u32 %v4533, 7
        %v4535 = vsub.s32 0, %v4534
        %v4536 = vrot.slane %v4483, %v4535
        %v4538 = vadd.f32 %v4529, %v4536
        %v4539 = vadd.f32 %v4531, %v4536
        %v4540 = vld [vmem:[%s21] sm:$0xff]
        %v4541 = vld [vmem:[%s21 + $0x8] sm:$0xff]
        %v4542 = vld [vmem:[%s21 + $0x10] sm:$0xff]
        %v4543 = vld [vmem:[%s21 + $0x18] sm:$0xff]
        %v4544 = vld [vmem:[%s22] sm:$0x1]
        %v4546 = vlaneseq
        %v4547 = vshrl.u32 %v4546, 7
        %v4548 = vsub.s32 0, %v4547
        %v4549 = vrot.slane %v4544, %v4548
        %v4552 = vsel %vm943, %v4538, 0
        %v4555 = vsel %vm943, %v4539, 0
        %4557 = vmatprep.subr.mxu0 0.0
        %4558 = vmatpush1.msra.mxu0 %v4540
        %4559 = vmatprep.subr.mxu0 0.0
        %4560 = vmatpush1.msra.mxu0 %v4541
        %4561 = vmatprep.subr.mxu0 0.0
        %4562 = vmatpush1.msra.mxu0 %v4542
        %4563 = vmatprep.subr.mxu0 0.0
        %4564 = vmatpush1.msra.mxu0 %v4543
        %4565 = vmatprep.subr.mxu0 0.0
        %4566 = vmatpush1.msra.mxu0 0.0
        %4567 = vmatprep.subr.mxu0 0.0
        %4568 = vmatpush1.msra.mxu0 0.0
        %4569 = vmatprep.subr.mxu0 0.0
        %4570 = vmatpush1.msra.mxu0 0.0
        %4571 = vmatprep.subr.mxu0 0.0
        %4572 = vmatpush1.msra.mxu0 0.0
        %4573 = vmatprep.subr.mxu0 0.0
        %4574 = vmatpush1.msra.mxu0 0.0
        %4575 = vmatprep.subr.mxu0 0.0
        %4576 = vmatpush1.msra.mxu0 0.0
        %4577 = vmatprep.subr.mxu0 0.0
        %4578 = vmatpush1.msra.mxu0 0.0
        %4579 = vmatprep.subr.mxu0 0.0
        %4580 = vmatpush1.msra.mxu0 0.0
        %4581 = vmatprep.subr.mxu0 0.0
        %4582 = vmatpush1.msra.mxu0 0.0
        %4583 = vmatprep.subr.mxu0 0.0
        %4584 = vmatpush1.msra.mxu0 0.0
        %4585 = vmatprep.subr.mxu0 0.0
        %4586 = vmatpush1.msra.mxu0 0.0
        %4587 = vmatprep.subr.mxu0 0.0
        %4588 = vmatpush1.msra.mxu0 0.0
        %4589 = vmatprep.subr.mxu0 0.0
        %4590 = vmatpush1.msra.mxu0 0.0
        %4591 = vmatprep.subr.mxu0 0.0
        %4592 = vmatpush1.msra.mxu0 0.0
        %4593 = vmatprep.subr.mxu0 0.0
        %4594 = vmatpush1.msra.mxu0 0.0
        %4595 = vmatprep.subr.mxu0 0.0
        %4596 = vmatpush1.msra.mxu0 0.0
        %4597 = vmatprep.subr.mxu0 0.0
        %4598 = vmatpush1.msra.mxu0 0.0
        %4599 = vmatprep.subr.mxu0 0.0
        %4600 = vmatpush1.msra.mxu0 0.0
        %4601 = vmatprep.subr.mxu0 0.0
        %4602 = vmatpush1.msra.mxu0 0.0
        %4603 = vmatprep.subr.mxu0 0.0
        %4604 = vmatpush1.msra.mxu0 0.0
        %4605 = vmatprep.subr.mxu0 0.0
        %4606 = vmatpush1.msra.mxu0 0.0
        %4607 = vmatprep.subr.mxu0 0.0
        %4608 = vmatpush1.msra.mxu0 0.0
        %4609 = vmatprep.subr.mxu0 0.0
        %4610 = vmatpush1.msra.mxu0 0.0
        %4611 = vmatprep.subr.mxu0 0.0
        %4612 = vmatpush1.msra.mxu0 0.0
        %4613 = vmatprep.subr.mxu0 0.0
        %4614 = vmatpush1.msra.mxu0 0.0
        %4615 = vmatprep.subr.mxu0 0.0
        %4616 = vmatpush1.msra.mxu0 0.0
        %4617 = vmatprep.subr.mxu0 0.0
        %4618 = vmatpush1.msra.mxu0 0.0
        %4619 = vmatprep.subr.mxu0 0.0
        %4620 = vmatpush1.msra.mxu0 0.0
        %4621 = vmatprep.mubr.f32.mxu0 0.0
        %4622 = vmatmul.mubr.f32.gmra.mrb[0].mxu0 %v4552
        %v4623 = vpop.f32.mrb[0].mxu0
        %v4624 = vadd.f32 %v4549, %v4623
        %v4625 = vpop.f32.mrb[0].mxu0
        %4626 = vmatprep.mubr.f32.mxu0 0.0
        %4627 = vmatmul.mubr.f32.gmra.mrb[0].mxu0 %v4555
        %v4628 = vpop.f32.mrb[0].mxu0
        %v4629 = vadd.f32 %v4549, %v4628
        %v4630 = vpop.f32.mrb[0].mxu0
        %4631 = vdwg.mxu0
        %4632 = vmax.xlane.f32.xlu0 %v4624
        %v4633 = vpop.xlane.xlu0 %4632
        %4634 = vmax.xlane.f32.xlu0 %v4629
        %v4635 = vpop.xlane.xlu0 %4634
        %v4636 = vsub.f32 %v4624, %v4633
        %v4637 = vsub.f32 %v4629, %v4635
        %v4638 = vmul.f32 %v4636, 1.442695
        %v4639 = vpow.pop %v4638
        %v4640 = vmul.f32 %v4637, 1.442695
        %v4641 = vpow.pop %v4640
        %4642 = vadd.xlane.f32.xlu0 %v4639
        %v4643 = vpop.xlane.xlu0 %4642
        %4644 = vadd.xlane.f32.xlu0 %v4641
        %v4645 = vpop.xlane.xlu0 %4644
        %v4646 = vlog2.pop %v4643
        %v4647 = vmul.f32 %v4646, 0.6931472
        %v4648 = vlog2.pop %v4645
        %v4649 = vmul.f32 %v4648, 0.6931472
        %v4650 = vsub.f32 %v4636, %v4647
        %v4651 = vsub.f32 %v4637, %v4649
        %4652 = vst [vmem:[%s23] sm:$0xff] %v4650
        %4653 = vst [vmem:[%s23 + $0x8] sm:$0xff] %v4651
      $region120: #{transformer_forward.3} parent=111 // pred_fallthru
        _
      // Predicated region
      $region121: #{transformer_forward.3} parent=111 // pred_check
        %p4654 = pneg %p605
      $region122: #{transformer_forward.3} parent=111 // pred_check_branch
        %4656 = sbr.rel (%p4654) target = $region124
      $region123: #{transformer_forward.3} parent=111 // pred_region
        _
      $region124: #{transformer_forward.3} parent=111 // pred_fallthru
        _
      // Predicated region
      $region125: #{transformer_forward.3} parent=111 // pred_check
        %p4657 = pneg %p605
      $region126: #{transformer_forward.3} parent=111 // pred_check_branch
        %4659 = sbr.rel (%p4657) target = $region128
      $region127: #{transformer_forward.3} parent=111 // pred_region
        _
      $region128: #{transformer_forward.3} parent=111 // pred_fallthru
        _
    $region112: #{transformer_forward.3} parent=5 // pred_fallthru
      _
    %p4660 = scmp.le.s32.totalorder 2, %s29
    // Predicated region
    $region129: #{transformer_forward.3} parent=5 // pred_check
      %p4661 = pneg %p4660
    $region130: #{transformer_forward.3} parent=5 // pred_check_branch
      %4663 = sbr.rel (%p4661) target = $region132
    $region131: #{transformer_forward.3} parent=5 // pred_region
      %s4664 = ssub.s32 %s29, 2
    $region132: #{transformer_forward.3} parent=5 // pred_fallthru
      _
  $region6: #{transformer_forward.3} parent=0 // loop_footer
    %s33 = sadd.s32 1, %s29
  $region7: #{transformer_forward.3} parent=0 // loop_footer_branch
    %28 = sbr.rel target = $region3
  $region8: #{transformer_forward.3} parent=0 // loop_exit
    _

</llo_original>
